<compile_context>
chip_gen: v5e
topology: v5e:2x2
jax: 0.10.0
libtpu: 0.0.40
codegen_flags: <defaults>
</compile_context>

<pallas_src>
import functools

import jax
import jax.numpy as jnp
from jax import lax
from jax.experimental import pallas as pl
from jax.experimental.pallas import tpu as pltpu


_KMAX = 40                    # widest conv kernel (conv40)
_PAD_L = 32                   # >= 19 (left 'same' halo), multiple of 16 for bf16 packing
_PAD_R = 32                   # >= 20 (right 'same' halo)
_GROUP_K_TARGET = 128         # target MXU contraction depth for grouped taps
_VMEM_LIMIT = 32 * 1024 * 1024


# ----------------------------------------------------------------------------
# Kernel 1: fused Inception block for ONE batch element.
#   - optionally applies the *previous* layer's deferred BatchNorm+ReLU on load
#   - bottleneck1 -> padded bf16 scratch (zero halos)
#   - conv10/20/40 as one 40-tap conv, taps grouped to contraction depth ~128
#   - maxpool(3,1,1) + bottleneck2
#   - emits pre-BN output (bf16) + one-pass BN statistics (sum, sum of squares)
# ----------------------------------------------------------------------------
def inception_block_kernel(x_ref, pstats_ref, pgamma_ref, pbeta_ref,
                           wb1_ref, wall_ref, wb2_ref,
                           ypre_ref, stats_ref, x0pad_ref,
                           *, apply_input_affine, seq_len, pad_l, count, eps,
                           filters, group):
    f32, bf16 = jnp.float32, jnp.bfloat16
    l = seq_len
    f = filters
    left = (_KMAX - 1) // 2                     # 19 (PyTorch 'same' left pad, k=40)

    x_in = x_ref[...]                           # (L, Cin) bf16
    if apply_input_affine:
        # Deferred BatchNorm (training-mode batch stats) + ReLU of the producer.
        # TODO(synk): one-pass E[x^2]-mean^2 variance can cancel at very large
        # N*L; switch to a centered / Welford update if scaled up.
        tot = jnp.sum(pstats_ref[...], axis=0)              # (2, Cin)
        mean = tot[0:1, :] * (1.0 / count)
        var = tot[1:2, :] * (1.0 / count) - mean * mean
        scale = pgamma_ref[...] * lax.rsqrt(var + eps)
        shift = pbeta_ref[...] - mean * scale
        x32 = jnp.maximum(x_in.astype(f32) * scale + shift, 0.0)
        xact = x32.astype(bf16)
    else:
        xact = x_in
        x32 = x_in.astype(f32)

    # bottleneck1 (1x1 conv, no bias): store once as bf16 into padded scratch.
    lpad = x0pad_ref.shape[0]
    pad_r = lpad - pad_l - l
    x0pad_ref[pl.ds(0, pad_l), :] = jnp.zeros((pad_l, f), bf16)
    x0pad_ref[pl.ds(pad_l + l, pad_r), :] = jnp.zeros((pad_r, f), bf16)
    x0 = jnp.dot(xact, wb1_ref[...], preferred_element_type=f32)
    x0pad_ref[pl.ds(pad_l, l), :] = x0.astype(bf16)

    # conv10/20/40 fused into one 40-tap conv with a stacked (40*F, 3F) RHS.
    # Taps are grouped so each matmul has contraction depth ~group*F.
    acc = jnp.zeros((l, 3 * f), f32)
    base = pad_l - left
    for g0 in range(0, _KMAX, group):
        gl = min(group, _KMAX - g0)
        if gl == 1:
            lhs = x0pad_ref[pl.ds(base + g0, l), :]
        else:
            lhs = jnp.concatenate(
                [x0pad_ref[pl.ds(base + g0 + j, l), :] for j in range(gl)],
                axis=-1)                                     # (L, gl*F) bf16
        acc = acc + jnp.dot(lhs, wall_ref[pl.ds(g0 * f, gl * f), :],
                            preferred_element_type=f32)

    # MaxPool1d(kernel=3, stride=1, padding=1): shifted copies with -inf edges
    # (PyTorch max-pool padding is implicit -inf), then bottleneck2.
    neg = jnp.full((1, x32.shape[1]), -jnp.inf, f32)
    xl = jnp.concatenate([neg, x32[:-1, :]], axis=0)
    xr = jnp.concatenate([x32[1:, :], neg], axis=0)
    xm = jnp.maximum(x32, jnp.maximum(xl, xr))
    x4 = jnp.dot(xm.astype(bf16), wb2_ref[...], preferred_element_type=f32)

    # Pre-BN output written as two direct channel slices (no lane concat of the
    # big tensor); BN itself is deferred to the consumer.
    ypre_ref[:, 0:3 * f] = acc.astype(bf16)
    ypre_ref[:, 3 * f:4 * f] = x4.astype(bf16)

    # One-pass BatchNorm statistics for this batch element (reduced by consumer).
    s = jnp.concatenate([jnp.sum(acc, axis=0, keepdims=True),
                         jnp.sum(x4, axis=0, keepdims=True)], axis=-1)
    ss = jnp.concatenate([jnp.sum(acc * acc, axis=0, keepdims=True),
                          jnp.sum(x4 * x4, axis=0, keepdims=True)], axis=-1)
    stats_ref[0] = jnp.concatenate([s, ss], axis=0)
    # TODO(synk): BatchNorm1d running_mean/running_var buffer updates are a
    # training side effect and do not affect the forward output; not modeled.


# ----------------------------------------------------------------------------
# Kernels 2/3: residual branch.
#   res_stats : per-row-chunk BN stats of z = x @ W_res
#   res_apply : applies the block's deferred BN+ReLU to y_pre, adds BN(z), ReLU
# ----------------------------------------------------------------------------
def res_stats_kernel(x_ref, w_ref, stats_ref):
    z = jnp.dot(x_ref[...], w_ref[...], preferred_element_type=jnp.float32)
    stats_ref[0] = jnp.concatenate(
        [jnp.sum(z, axis=0, keepdims=True),
         jnp.sum(z * z, axis=0, keepdims=True)], axis=0)


def res_apply_kernel(x_ref, ypre_ref, w_ref, bstats_ref, bgamma_ref, bbeta_ref,
                     rstats_ref, rgamma_ref, rbeta_ref, o_ref, *, count, eps):
    inv = 1.0 / count
    # deferred BN+ReLU of the Inception block output
    bt = jnp.sum(bstats_ref[...], axis=0)
    bmean = bt[0:1, :] * inv
    bvar = bt[1:2, :] * inv - bmean * bmean
    bscale = bgamma_ref[...] * lax.rsqrt(bvar + eps)
    bshift = bbeta_ref[...] - bmean * bscale
    y_act = jnp.maximum(ypre_ref[...].astype(jnp.float32) * bscale + bshift, 0.0)
    # residual branch: BN(conv1x1(x))
    rt = jnp.sum(rstats_ref[...], axis=0)
    rmean = rt[0:1, :] * inv
    rvar = rt[1:2, :] * inv - rmean * rmean
    rscale = rgamma_ref[...] * lax.rsqrt(rvar + eps)
    rshift = rbeta_ref[...] - rmean * rscale
    z = jnp.dot(x_ref[...], w_ref[...], preferred_element_type=jnp.float32)
    o_ref[...] = jnp.maximum(y_act + z * rscale + rshift, 0.0).astype(o_ref.dtype)


# ----------------------------------------------------------------------------
# Kernel 4: head = (optional deferred BN+ReLU) -> mean over L -> linear -> softmax.
# ----------------------------------------------------------------------------
def head_kernel(y_ref, stats_ref, gamma_ref, beta_ref, w_ref, b_ref, o_ref,
                *, apply_affine, n_batch, seq_len, count, eps):
    y = y_ref[...].astype(jnp.float32)                       # (N*L, 4F)
    if apply_affine:
        tot = jnp.sum(stats_ref[...], axis=0)
        mean = tot[0:1, :] * (1.0 / count)
        var = tot[1:2, :] * (1.0 / count) - mean * mean
        scale = gamma_ref[...] * lax.rsqrt(var + eps)
        shift = beta_ref[...] - mean * scale
        y = jnp.maximum(y * scale + shift, 0.0)
    feat = jnp.sum(y.reshape(n_batch, seq_len, y.shape[-1]), axis=1) \
        * (1.0 / seq_len)                                    # (N, 4F)
    logits = jnp.dot(feat.astype(jnp.bfloat16), w_ref[...],
                     preferred_element_type=jnp.float32) + b_ref[...]
    logits = logits - jnp.max(logits, axis=-1, keepdims=True)
    e = jnp.exp(logits)
    o_ref[...] = e / jnp.sum(e, axis=-1, keepdims=True)


# ----------------------------------------------------------------------------
# Wrappers (layout plumbing, weight stacking, pallas_call setup).
# ----------------------------------------------------------------------------
def _stacked_tap_weights(ws, kmax):
    """Torch-layout (O, I, k) weights -> one (kmax, I, sum(O)) stack of taps,
    each placed at its 'same'-padding offset relative to the kmax-tap conv."""
    lmax = (kmax - 1) // 2
    parts = []
    for w in ws:
        k = w.shape[-1]
        start = lmax - (k - 1) // 2
        wk = jnp.transpose(w, (2, 1, 0))                     # (k, I, O)
        parts.append(jnp.pad(wk, ((start, kmax - k - start), (0, 0), (0, 0))))
    return jnp.concatenate(parts, axis=-1)


def _row_tile(nrows, cap=2048):
    """Largest row tile <= cap that divides nrows and is a multiple of 8;
    falls back to the full row count (a single full block is always legal)."""
    t = min(cap, nrows)
    t -= t % 8
    while t >= 8:
        if nrows % t == 0:
            return t
        t -= 8
    return nrows


def pallas_inception_layer(x_rows, prev, p, *, n_batch, seq_len, eps=1e-5):
    """One Inception block.

    x_rows: (N*L, Cin) bf16 rows.  If `prev` is None they are a real activation;
    otherwise they are the previous block's pre-BN output and
    prev = (stats (N,2,Cin), gamma (1,Cin), beta (1,Cin)) is applied in-kernel.
    Returns (y_pre (N*L, 4F) bf16, stats (N, 2, 4F) f32).
    """
    nl, c = x_rows.shape
    f = p['wb1'].shape[0]
    apply_affine = prev is not None
    if prev is None:
        pstats = jnp.zeros((1, 2, c), jnp.float32)
        pgamma = jnp.ones((1, c), jnp.float32)
        pbeta = jnp.zeros((1, c), jnp.float32)
    else:
        pstats, pgamma, pbeta = prev

    wb1 = jnp.transpose(p['wb1'][:, :, 0]).astype(jnp.bfloat16)        # (Cin, F)
    wb2 = jnp.transpose(p['wb2'][:, :, 0]).astype(jnp.bfloat16)        # (Cin, F)
    wall = _stacked_tap_weights([p['w10'], p['w20'], p['w40']], _KMAX)
    wall = wall.reshape(_KMAX * f, 3 * f).astype(jnp.bfloat16)         # (40F, 3F)

    group = max(1, min(_KMAX, _GROUP_K_TARGET // f))
    lpad = _PAD_L + seq_len + _PAD_R

    kernel = functools.partial(
        inception_block_kernel, apply_input_affine=apply_affine,
        seq_len=seq_len, pad_l=_PAD_L, count=float(nl), eps=eps,
        filters=f, group=group)

    ypre, stats = pl.pallas_call(
        kernel,
        out_shape=(jax.ShapeDtypeStruct((nl, 4 * f), jnp.bfloat16),
                   jax.ShapeDtypeStruct((n_batch, 2, 4 * f), jnp.float32)),
        grid=(n_batch,),
        in_specs=[
            pl.BlockSpec((seq_len, c), lambda b: (b, 0)),
            pl.BlockSpec(pstats.shape, lambda b: (0, 0, 0)),
            pl.BlockSpec((1, c), lambda b: (0, 0)),
            pl.BlockSpec((1, c), lambda b: (0, 0)),
            pl.BlockSpec((c, f), lambda b: (0, 0)),
            pl.BlockSpec((_KMAX * f, 3 * f), lambda b: (0, 0)),
            pl.BlockSpec((c, f), lambda b: (0, 0)),
        ],
        out_specs=(pl.BlockSpec((seq_len, 4 * f), lambda b: (b, 0)),
                   pl.BlockSpec((1, 2, 4 * f), lambda b: (b, 0, 0))),
        scratch_shapes=[pltpu.VMEM((lpad, f), jnp.bfloat16)],
        compiler_params=pltpu.CompilerParams(
            dimension_semantics=("parallel",),
            vmem_limit_bytes=_VMEM_LIMIT),
    )(x_rows, pstats, pgamma, pbeta, wb1, wall, wb2)
    return ypre, stats


def pallas_residual(x_rows, ypre_rows, bstats, bgamma, bbeta, p, *, count,
                    eps=1e-5):
    """Residual: out = relu( BN(ypre)+relu-deferred  +  BN(x @ W_res) )."""
    nrows, cx = x_rows.shape
    c4 = ypre_rows.shape[-1]
    w = jnp.transpose(p['w'][:, :, 0]).astype(jnp.bfloat16)            # (Cx, 4F)
    rgamma = p['gamma'].reshape(1, c4)
    rbeta = p['beta'].reshape(1, c4)
    tr = _row_tile(nrows)
    nchunks = nrows // tr

    rstats = pl.pallas_call(
        res_stats_kernel,
        out_shape=jax.ShapeDtypeStruct((nchunks, 2, c4), jnp.float32),
        grid=(nchunks,),
        in_specs=[pl.BlockSpec((tr, cx), lambda i: (i, 0)),
                  pl.BlockSpec((cx, c4), lambda i: (0, 0))],
        out_specs=pl.BlockSpec((1, 2, c4), lambda i: (i, 0, 0)),
        compiler_params=pltpu.CompilerParams(
            dimension_semantics=("parallel",),
            vmem_limit_bytes=_VMEM_LIMIT),
    )(x_rows, w)

    out = pl.pallas_call(
        functools.partial(res_apply_kernel, count=float(count), eps=eps),
        out_shape=jax.ShapeDtypeStruct((nrows, c4), jnp.bfloat16),
        grid=(nchunks,),
        in_specs=[pl.BlockSpec((tr, cx), lambda i: (i, 0)),
                  pl.BlockSpec((tr, c4), lambda i: (i, 0)),
                  pl.BlockSpec((cx, c4), lambda i: (0, 0)),
                  pl.BlockSpec(bstats.shape, lambda i: (0, 0, 0)),
                  pl.BlockSpec((1, c4), lambda i: (0, 0)),
                  pl.BlockSpec((1, c4), lambda i: (0, 0)),
                  pl.BlockSpec((nchunks, 2, c4), lambda i: (0, 0, 0)),
                  pl.BlockSpec((1, c4), lambda i: (0, 0)),
                  pl.BlockSpec((1, c4), lambda i: (0, 0))],
        out_specs=pl.BlockSpec((tr, c4), lambda i: (i, 0)),
        compiler_params=pltpu.CompilerParams(
            dimension_semantics=("parallel",),
            vmem_limit_bytes=_VMEM_LIMIT),
    )(x_rows, ypre_rows, w, bstats, bgamma, bbeta, rstats, rgamma, rbeta)
    return out


def pallas_head(y_rows, stats, gamma, beta, lin_w, lin_b, *, n_batch, seq_len,
                apply_affine, eps=1e-5):
    k = lin_w.shape[0]
    w = jnp.transpose(lin_w).astype(jnp.bfloat16)                      # (4F, K)
    b = lin_b.reshape(1, k).astype(jnp.float32)
    # TODO(synk): at production N*L, block the row axis of y_rows (per-chunk
    # partial sums) instead of keeping the whole activation in one VMEM block.
    return pl.pallas_call(
        functools.partial(head_kernel, apply_affine=apply_affine,
                          n_batch=n_batch, seq_len=seq_len,
                          count=float(n_batch * seq_len), eps=eps),
        out_shape=jax.ShapeDtypeStruct((n_batch, k), jnp.float32),
        in_specs=[pl.BlockSpec(memory_space=pltpu.MemorySpace.VMEM)] * 6,
        out_specs=pl.BlockSpec(memory_space=pltpu.MemorySpace.VMEM),
    )(y_rows, stats, gamma, beta, w, b)


def inception_model_forward(x_ncw, params):
    n, c_in, l = x_ncw.shape
    nl = n * l
    # single layout change for the whole model: NCW -> (N*L, C) channels-last rows.
    x_rows = jnp.transpose(x_ncw, (0, 2, 1)).reshape(nl, c_in).astype(jnp.bfloat16)

    act = x_rows          # current applied activation rows
    deferred = None       # (y_pre rows, stats, gamma, beta) awaiting BN+ReLU
    xres = x_rows         # residual skip input (torch `x`)

    for d, layer in enumerate(params['layers']):
        src = act if deferred is None else deferred[0]
        prev = None if deferred is None else deferred[1:]
        ypre, stats = pallas_inception_layer(src, prev, layer,
                                             n_batch=n, seq_len=l)
        gamma2d = layer['gamma'].reshape(1, -1)
        beta2d = layer['beta'].reshape(1, -1)
        deferred = (ypre, stats, gamma2d, beta2d)
        if d % 3 == 2:
            act = pallas_residual(xres, ypre, stats, gamma2d, beta2d,
                                  layer['res'], count=nl)
            xres = act
            deferred = None

    if deferred is None:
        c4 = act.shape[-1]
        dstats = jnp.zeros((1, 2, c4), jnp.float32)
        dgamma = jnp.ones((1, c4), jnp.float32)
        dbeta = jnp.zeros((1, c4), jnp.float32)
        return pallas_head(act, dstats, dgamma, dbeta, params['lin_w'],
                           params['lin_b'], n_batch=n, seq_len=l,
                           apply_affine=False)
    ypre, stats, gamma2d, beta2d = deferred
    return pallas_head(ypre, stats, gamma2d, beta2d, params['lin_w'],
                       params['lin_b'], n_batch=n, seq_len=l, apply_affine=True)


forward = jax.jit(inception_model_forward)


# ----------------------------------------------------------------------------
# Pure-JAX reference (torch semantics, full f32) for validation.
# ----------------------------------------------------------------------------
def _ref_conv_same(x, w):
    k = w.shape[-1]
    left = (k - 1) // 2
    xp = jnp.pad(x, ((0, 0), (0, 0), (left, k - 1 - left)))
    return lax.conv_general_dilated(
        xp, w, window_strides=(1,), padding='VALID',
        dimension_numbers=('NCH', 'OIH', 'NCH'),
        precision=lax.Precision.HIGHEST)


def _ref_bn(y, gamma, beta, eps=1e-5):
    mean = jnp.mean(y, axis=(0, 2), keepdims=True)
    var = jnp.mean(jnp.square(y - mean), axis=(0, 2), keepdims=True)
    return ((y - mean) / jnp.sqrt(var + eps)) * gamma.reshape(1, -1, 1) \
        + beta.reshape(1, -1, 1)


def ref_inception(x, p):
    x0 = _ref_conv_same(x, p['wb1'])
    x1 = _ref_conv_same(x0, p['w10'])
    x2 = _ref_conv_same(x0, p['w20'])
    x3 = _ref_conv_same(x0, p['w40'])
    xm = lax.reduce_window(x, -jnp.inf, lax.max, (1, 1, 3), (1, 1, 1),
                           [(0, 0), (0, 0), (1, 1)])
    x4 = _ref_conv_same(xm, p['wb2'])
    y = jnp.concatenate([x1, x2, x3, x4], axis=1)
    return jnp.maximum(_ref_bn(y, p['gamma'], p['beta']), 0.0)


def ref_residual(x, y, p):
    z = _ref_bn(_ref_conv_same(x, p['w']), p['gamma'], p['beta'])
    return jnp.maximum(y + z, 0.0)


def ref_model(x_ncw, params):
    x = x_ncw
    y = x_ncw
    for d, layer in enumerate(params['layers']):
        y = ref_inception(x if d == 0 else y, layer)
        if d % 3 == 2:
            y = ref_residual(x, y, layer['res'])
            x = y
    feat = jnp.mean(y, axis=-1)
    logits = feat @ params['lin_w'].T + params['lin_b']
    logits = logits - jnp.max(logits, axis=1, keepdims=True)
    e = jnp.exp(logits)
    return e / jnp.sum(e, axis=1, keepdims=True)


# ----------------------------------------------------------------------------
# Parameter construction (torch weight layouts).
# ----------------------------------------------------------------------------
def _conv_init(key, shape):
    fan_in = shape[1] * shape[2]
    return jax.random.normal(key, shape, jnp.float32) / jnp.sqrt(fan_in)


def make_params(key, input_size, filters, num_classes, depth):
    layers = []
    c = input_size
    for d in range(depth):
        key, k1, k2, k3, k4, k5, k6, k7 = jax.random.split(key, 8)
        layer_p = dict(
            wb1=_conv_init(k1, (filters, c, 1)),
            w10=_conv_init(k2, (filters, filters, 10)),
            w20=_conv_init(k3, (filters, filters, 20)),
            w40=_conv_init(k4, (filters, filters, 40)),
            wb2=_conv_init(k5, (filters, c, 1)),
            gamma=jax.random.uniform(k6, (4 * filters,), jnp.float32, 0.5, 1.5),
            beta=0.1 * jax.random.normal(k7, (4 * filters,), jnp.float32),
        )
        if d % 3 == 2:
            cres = input_size if d == 2 else 4 * filters
            key, kr1, kr2, kr3 = jax.random.split(key, 4)
            layer_p['res'] = dict(
                w=_conv_init(kr1, (4 * filters, cres, 1)),
                gamma=jax.random.uniform(kr2, (4 * filters,), jnp.float32,
                                         0.5, 1.5),
                beta=0.1 * jax.random.normal(kr3, (4 * filters,), jnp.float32),
            )
        layers.append(layer_p)
        c = 4 * filters
    key, kw, kb = jax.random.split(key, 3)
    return dict(
        layers=layers,
        lin_w=jax.random.normal(kw, (num_classes, 4 * filters), jnp.float32)
        / jnp.sqrt(4 * filters),
        lin_b=0.1 * jax.random.normal(kb, (num_classes,), jnp.float32),
    )


if __name__ == "__main__":
    N, C_IN, FILTERS, L = 2, 4, 8, 64
    NUM_CLASSES, DEPTH = 5, 3
    key = jax.random.PRNGKey(0)
    kx, kp = jax.random.split(key)
    x = jax.random.normal(kx, (N, C_IN, L), jnp.float32)
    params = make_params(kp, C_IN, FILTERS, NUM_CLASSES, DEPTH)

    out = jax.block_until_ready(forward(x, params))
    assert out.shape == (N, NUM_CLASSES), out.shape

    # Kernels use bf16 MXU inputs, bf16 activation storage and f32 accumulation;
    # the reference is full f32 (HIGHEST), so tolerances reflect bf16 rounding.
    ref = ref_model(x, params)
    row_sums = jnp.sum(out, axis=-1)
    if float(jnp.max(jnp.abs(row_sums - 1.0))) > 1e-3:
        raise AssertionError("softmax rows do not sum to 1")
    err_model = float(jnp.max(jnp.abs(out - ref)))
    if err_model > 3e-2:
        raise AssertionError(
            f"model output mismatch, max abs err = {err_model}")

    print("KERNEL_OK")
</pallas_src>

<mosaic_0001>
module attributes {stable_mosaic.version = 11 : i64} {
  func.func @inception_block_kernel(%arg0: i32, %arg1: memref<64x4xbf16, #tpu.memory_space<vmem>>, %arg2: memref<1x2x4xf32, #tpu.memory_space<vmem>>, %arg3: memref<1x4xf32, #tpu.memory_space<vmem>>, %arg4: memref<1x4xf32, #tpu.memory_space<vmem>>, %arg5: memref<4x8xbf16, #tpu.memory_space<vmem>>, %arg6: memref<320x24xbf16, #tpu.memory_space<vmem>>, %arg7: memref<4x8xbf16, #tpu.memory_space<vmem>>, %arg8: memref<64x32xbf16, #tpu.memory_space<vmem>>, %arg9: memref<1x2x32xf32, #tpu.memory_space<vmem>>, %arg10: memref<128x8xbf16, #tpu.memory_space<vmem>>) attributes {dimension_semantics = [#tpu.dimension_semantics<parallel>], iteration_bounds = array<i64: 2>, scalar_prefetch = 0 : i64, scratch_operands = 1 : i64, tpu.core_type = #tpu.core_type<tc>, window_params = [{transform_indices = @transform_0, window_bounds = array<i64: 64, 4>}, {pipeline_mode = #tpu.pipeline_mode<synchronous>, transform_indices = @transform_1, window_bounds = array<i64: 1, 2, 4>}, {pipeline_mode = #tpu.pipeline_mode<synchronous>, transform_indices = @transform_2, window_bounds = array<i64: 1, 4>}, {pipeline_mode = #tpu.pipeline_mode<synchronous>, transform_indices = @transform_3, window_bounds = array<i64: 1, 4>}, {pipeline_mode = #tpu.pipeline_mode<synchronous>, transform_indices = @transform_4, window_bounds = array<i64: 4, 8>}, {pipeline_mode = #tpu.pipeline_mode<synchronous>, transform_indices = @transform_5, window_bounds = array<i64: 320, 24>}, {pipeline_mode = #tpu.pipeline_mode<synchronous>, transform_indices = @transform_6, window_bounds = array<i64: 4, 8>}, {transform_indices = @transform_7, window_bounds = array<i64: 64, 32>}, {transform_indices = @transform_8, window_bounds = array<i64: 1, 2, 32>}]} {
    %c0 = arith.constant 0 : index
    %c0_0 = arith.constant 0 : index
    %0 = vector.load %arg1[%c0, %c0_0] : memref<64x4xbf16, #tpu.memory_space<vmem>>, vector<64x4xbf16>
    %1 = arith.extf %0 : vector<64x4xbf16> to vector<64x4xf32>
    %cst = arith.constant 0.000000e+00 : bf16
    %2 = vector.broadcast %cst : bf16 to vector<32x8xbf16>
    %c0_1 = arith.constant 0 : index
    %c0_2 = arith.constant 0 : index
    %3 = vector.load %arg10[%c0_1, %c0_2] : memref<128x8xbf16, #tpu.memory_space<vmem>>, vector<32x8xbf16>
    tpu.vector_store %arg10[%c0_1, %c0_2], %2 {strides = array<i32>} : memref<128x8xbf16, #tpu.memory_space<vmem>>, vector<32x8xbf16>,
    %cst_3 = arith.constant 0.000000e+00 : bf16
    %4 = vector.broadcast %cst_3 : bf16 to vector<32x8xbf16>
    %c96 = arith.constant 96 : index
    %c0_4 = arith.constant 0 : index
    %5 = vector.load %arg10[%c96, %c0_4] : memref<128x8xbf16, #tpu.memory_space<vmem>>, vector<32x8xbf16>
    tpu.vector_store %arg10[%c96, %c0_4], %4 {strides = array<i32>} : memref<128x8xbf16, #tpu.memory_space<vmem>>, vector<32x8xbf16>,
    %c0_5 = arith.constant 0 : index
    %c0_6 = arith.constant 0 : index
    %6 = vector.load %arg5[%c0_5, %c0_6] : memref<4x8xbf16, #tpu.memory_space<vmem>>, vector<4x8xbf16>
    %cst_7 = arith.constant dense<0.000000e+00> : vector<64x8xf32>
    %7 = tpu.matmul %0, %6, %cst_7 {dimension_numbers = #tpu.dot_dimension_numbers<[1], [0], [0], [1], [0, 0, 1, 1], [], []>} : vector<64x4xbf16>, vector<4x8xbf16>, vector<64x8xf32> -> vector<64x8xf32>
    %8 = arith.truncf %7 : vector<64x8xf32> to vector<64x8xbf16>
    %c32 = arith.constant 32 : index
    %c0_8 = arith.constant 0 : index
    %9 = vector.load %arg10[%c32, %c0_8] : memref<128x8xbf16, #tpu.memory_space<vmem>>, vector<64x8xbf16>
    tpu.vector_store %arg10[%c32, %c0_8], %8 {strides = array<i32>} : memref<128x8xbf16, #tpu.memory_space<vmem>>, vector<64x8xbf16>,
    %cst_9 = arith.constant 0.000000e+00 : f32
    %10 = vector.broadcast %cst_9 : f32 to vector<64x24xf32>
    %c13 = arith.constant 13 : index
    %c0_10 = arith.constant 0 : index
    %11 = vector.load %arg10[%c13, %c0_10] : memref<128x8xbf16, #tpu.memory_space<vmem>>, vector<64x8xbf16>
    %c14 = arith.constant 14 : index
    %c0_11 = arith.constant 0 : index
    %12 = vector.load %arg10[%c14, %c0_11] : memref<128x8xbf16, #tpu.memory_space<vmem>>, vector<64x8xbf16>
    %c15 = arith.constant 15 : index
    %c0_12 = arith.constant 0 : index
    %13 = vector.load %arg10[%c15, %c0_12] : memref<128x8xbf16, #tpu.memory_space<vmem>>, vector<64x8xbf16>
    %c16 = arith.constant 16 : index
    %c0_13 = arith.constant 0 : index
    %14 = vector.load %arg10[%c16, %c0_13] : memref<128x8xbf16, #tpu.memory_space<vmem>>, vector<64x8xbf16>
    %c17 = arith.constant 17 : index
    %c0_14 = arith.constant 0 : index
    %15 = vector.load %arg10[%c17, %c0_14] : memref<128x8xbf16, #tpu.memory_space<vmem>>, vector<64x8xbf16>
    %c18 = arith.constant 18 : index
    %c0_15 = arith.constant 0 : index
    %16 = vector.load %arg10[%c18, %c0_15] : memref<128x8xbf16, #tpu.memory_space<vmem>>, vector<64x8xbf16>
    %c19 = arith.constant 19 : index
    %c0_16 = arith.constant 0 : index
    %17 = vector.load %arg10[%c19, %c0_16] : memref<128x8xbf16, #tpu.memory_space<vmem>>, vector<64x8xbf16>
    %c20 = arith.constant 20 : index
    %c0_17 = arith.constant 0 : index
    %18 = vector.load %arg10[%c20, %c0_17] : memref<128x8xbf16, #tpu.memory_space<vmem>>, vector<64x8xbf16>
    %c21 = arith.constant 21 : index
    %c0_18 = arith.constant 0 : index
    %19 = vector.load %arg10[%c21, %c0_18] : memref<128x8xbf16, #tpu.memory_space<vmem>>, vector<64x8xbf16>
    %c22 = arith.constant 22 : index
    %c0_19 = arith.constant 0 : index
    %20 = vector.load %arg10[%c22, %c0_19] : memref<128x8xbf16, #tpu.memory_space<vmem>>, vector<64x8xbf16>
    %c23 = arith.constant 23 : index
    %c0_20 = arith.constant 0 : index
    %21 = vector.load %arg10[%c23, %c0_20] : memref<128x8xbf16, #tpu.memory_space<vmem>>, vector<64x8xbf16>
    %c24 = arith.constant 24 : index
    %c0_21 = arith.constant 0 : index
    %22 = vector.load %arg10[%c24, %c0_21] : memref<128x8xbf16, #tpu.memory_space<vmem>>, vector<64x8xbf16>
    %c25 = arith.constant 25 : index
    %c0_22 = arith.constant 0 : index
    %23 = vector.load %arg10[%c25, %c0_22] : memref<128x8xbf16, #tpu.memory_space<vmem>>, vector<64x8xbf16>
    %c26 = arith.constant 26 : index
    %c0_23 = arith.constant 0 : index
    %24 = vector.load %arg10[%c26, %c0_23] : memref<128x8xbf16, #tpu.memory_space<vmem>>, vector<64x8xbf16>
    %c27 = arith.constant 27 : index
    %c0_24 = arith.constant 0 : index
    %25 = vector.load %arg10[%c27, %c0_24] : memref<128x8xbf16, #tpu.memory_space<vmem>>, vector<64x8xbf16>
    %c28 = arith.constant 28 : index
    %c0_25 = arith.constant 0 : index
    %26 = vector.load %arg10[%c28, %c0_25] : memref<128x8xbf16, #tpu.memory_space<vmem>>, vector<64x8xbf16>
    %27 = tpu.concatenate %11, %12, %13, %14, %15, %16, %17, %18, %19, %20, %21, %22, %23, %24, %25, %26 in 1 : vector<64x8xbf16>, vector<64x8xbf16>, vector<64x8xbf16>, vector<64x8xbf16>, vector<64x8xbf16>, vector<64x8xbf16>, vector<64x8xbf16>, vector<64x8xbf16>, vector<64x8xbf16>, vector<64x8xbf16>, vector<64x8xbf16>, vector<64x8xbf16>, vector<64x8xbf16>, vector<64x8xbf16>, vector<64x8xbf16>, vector<64x8xbf16> -> vector<64x128xbf16>
    %c0_26 = arith.constant 0 : index
    %c0_27 = arith.constant 0 : index
    %28 = vector.load %arg6[%c0_26, %c0_27] : memref<320x24xbf16, #tpu.memory_space<vmem>>, vector<128x24xbf16>
    %cst_28 = arith.constant dense<0.000000e+00> : vector<64x24xf32>
    %29 = tpu.matmul %27, %28, %cst_28 {dimension_numbers = #tpu.dot_dimension_numbers<[1], [0], [0], [1], [0, 0, 1, 1], [], []>} : vector<64x128xbf16>, vector<128x24xbf16>, vector<64x24xf32> -> vector<64x24xf32>
    %30 = arith.addf %10, %29 : vector<64x24xf32>
    %c29 = arith.constant 29 : index
    %c0_29 = arith.constant 0 : index
    %31 = vector.load %arg10[%c29, %c0_29] : memref<128x8xbf16, #tpu.memory_space<vmem>>, vector<64x8xbf16>
    %c30 = arith.constant 30 : index
    %c0_30 = arith.constant 0 : index
    %32 = vector.load %arg10[%c30, %c0_30] : memref<128x8xbf16, #tpu.memory_space<vmem>>, vector<64x8xbf16>
    %c31 = arith.constant 31 : index
    %c0_31 = arith.constant 0 : index
    %33 = vector.load %arg10[%c31, %c0_31] : memref<128x8xbf16, #tpu.memory_space<vmem>>, vector<64x8xbf16>
    %c32_32 = arith.constant 32 : index
    %c0_33 = arith.constant 0 : index
    %34 = vector.load %arg10[%c32_32, %c0_33] : memref<128x8xbf16, #tpu.memory_space<vmem>>, vector<64x8xbf16>
    %c33 = arith.constant 33 : index
    %c0_34 = arith.constant 0 : index
    %35 = vector.load %arg10[%c33, %c0_34] : memref<128x8xbf16, #tpu.memory_space<vmem>>, vector<64x8xbf16>
    %c34 = arith.constant 34 : index
    %c0_35 = arith.constant 0 : index
    %36 = vector.load %arg10[%c34, %c0_35] : memref<128x8xbf16, #tpu.memory_space<vmem>>, vector<64x8xbf16>
    %c35 = arith.constant 35 : index
    %c0_36 = arith.constant 0 : index
    %37 = vector.load %arg10[%c35, %c0_36] : memref<128x8xbf16, #tpu.memory_space<vmem>>, vector<64x8xbf16>
    %c36 = arith.constant 36 : index
    %c0_37 = arith.constant 0 : index
    %38 = vector.load %arg10[%c36, %c0_37] : memref<128x8xbf16, #tpu.memory_space<vmem>>, vector<64x8xbf16>
    %c37 = arith.constant 37 : index
    %c0_38 = arith.constant 0 : index
    %39 = vector.load %arg10[%c37, %c0_38] : memref<128x8xbf16, #tpu.memory_space<vmem>>, vector<64x8xbf16>
    %c38 = arith.constant 38 : index
    %c0_39 = arith.constant 0 : index
    %40 = vector.load %arg10[%c38, %c0_39] : memref<128x8xbf16, #tpu.memory_space<vmem>>, vector<64x8xbf16>
    %c39 = arith.constant 39 : index
    %c0_40 = arith.constant 0 : index
    %41 = vector.load %arg10[%c39, %c0_40] : memref<128x8xbf16, #tpu.memory_space<vmem>>, vector<64x8xbf16>
    %c40 = arith.constant 40 : index
    %c0_41 = arith.constant 0 : index
    %42 = vector.load %arg10[%c40, %c0_41] : memref<128x8xbf16, #tpu.memory_space<vmem>>, vector<64x8xbf16>
    %c41 = arith.constant 41 : index
    %c0_42 = arith.constant 0 : index
    %43 = vector.load %arg10[%c41, %c0_42] : memref<128x8xbf16, #tpu.memory_space<vmem>>, vector<64x8xbf16>
    %c42 = arith.constant 42 : index
    %c0_43 = arith.constant 0 : index
    %44 = vector.load %arg10[%c42, %c0_43] : memref<128x8xbf16, #tpu.memory_space<vmem>>, vector<64x8xbf16>
    %c43 = arith.constant 43 : index
    %c0_44 = arith.constant 0 : index
    %45 = vector.load %arg10[%c43, %c0_44] : memref<128x8xbf16, #tpu.memory_space<vmem>>, vector<64x8xbf16>
    %c44 = arith.constant 44 : index
    %c0_45 = arith.constant 0 : index
    %46 = vector.load %arg10[%c44, %c0_45] : memref<128x8xbf16, #tpu.memory_space<vmem>>, vector<64x8xbf16>
    %47 = tpu.concatenate %31, %32, %33, %34, %35, %36, %37, %38, %39, %40, %41, %42, %43, %44, %45, %46 in 1 : vector<64x8xbf16>, vector<64x8xbf16>, vector<64x8xbf16>, vector<64x8xbf16>, vector<64x8xbf16>, vector<64x8xbf16>, vector<64x8xbf16>, vector<64x8xbf16>, vector<64x8xbf16>, vector<64x8xbf16>, vector<64x8xbf16>, vector<64x8xbf16>, vector<64x8xbf16>, vector<64x8xbf16>, vector<64x8xbf16>, vector<64x8xbf16> -> vector<64x128xbf16>
    %c128 = arith.constant 128 : index
    %c0_46 = arith.constant 0 : index
    %48 = vector.load %arg6[%c128, %c0_46] : memref<320x24xbf16, #tpu.memory_space<vmem>>, vector<128x24xbf16>
    %cst_47 = arith.constant dense<0.000000e+00> : vector<64x24xf32>
    %49 = tpu.matmul %47, %48, %cst_47 {dimension_numbers = #tpu.dot_dimension_numbers<[1], [0], [0], [1], [0, 0, 1, 1], [], []>} : vector<64x128xbf16>, vector<128x24xbf16>, vector<64x24xf32> -> vector<64x24xf32>
    %50 = arith.addf %30, %49 : vector<64x24xf32>
    %c45 = arith.constant 45 : index
    %c0_48 = arith.constant 0 : index
    %51 = vector.load %arg10[%c45, %c0_48] : memref<128x8xbf16, #tpu.memory_space<vmem>>, vector<64x8xbf16>
    %c46 = arith.constant 46 : index
    %c0_49 = arith.constant 0 : index
    %52 = vector.load %arg10[%c46, %c0_49] : memref<128x8xbf16, #tpu.memory_space<vmem>>, vector<64x8xbf16>
    %c47 = arith.constant 47 : index
    %c0_50 = arith.constant 0 : index
    %53 = vector.load %arg10[%c47, %c0_50] : memref<128x8xbf16, #tpu.memory_space<vmem>>, vector<64x8xbf16>
    %c48 = arith.constant 48 : index
    %c0_51 = arith.constant 0 : index
    %54 = vector.load %arg10[%c48, %c0_51] : memref<128x8xbf16, #tpu.memory_space<vmem>>, vector<64x8xbf16>
    %c49 = arith.constant 49 : index
    %c0_52 = arith.constant 0 : index
    %55 = vector.load %arg10[%c49, %c0_52] : memref<128x8xbf16, #tpu.memory_space<vmem>>, vector<64x8xbf16>
    %c50 = arith.constant 50 : index
    %c0_53 = arith.constant 0 : index
    %56 = vector.load %arg10[%c50, %c0_53] : memref<128x8xbf16, #tpu.memory_space<vmem>>, vector<64x8xbf16>
    %c51 = arith.constant 51 : index
    %c0_54 = arith.constant 0 : index
    %57 = vector.load %arg10[%c51, %c0_54] : memref<128x8xbf16, #tpu.memory_space<vmem>>, vector<64x8xbf16>
    %c52 = arith.constant 52 : index
    %c0_55 = arith.constant 0 : index
    %58 = vector.load %arg10[%c52, %c0_55] : memref<128x8xbf16, #tpu.memory_space<vmem>>, vector<64x8xbf16>
    %59 = tpu.concatenate %51, %52, %53, %54, %55, %56, %57, %58 in 1 : vector<64x8xbf16>, vector<64x8xbf16>, vector<64x8xbf16>, vector<64x8xbf16>, vector<64x8xbf16>, vector<64x8xbf16>, vector<64x8xbf16>, vector<64x8xbf16> -> vector<64x64xbf16>
    %c256 = arith.constant 256 : index
    %c0_56 = arith.constant 0 : index
    %60 = vector.load %arg6[%c256, %c0_56] : memref<320x24xbf16, #tpu.memory_space<vmem>>, vector<64x24xbf16>
    %cst_57 = arith.constant dense<0.000000e+00> : vector<64x24xf32>
    %61 = tpu.matmul %59, %60, %cst_57 {dimension_numbers = #tpu.dot_dimension_numbers<[1], [0], [0], [1], [0, 0, 1, 1], [], []>} : vector<64x64xbf16>, vector<64x24xbf16>, vector<64x24xf32> -> vector<64x24xf32>
    %62 = arith.addf %50, %61 : vector<64x24xf32>
    %cst_58 = arith.constant 0xFF800000 : f32
    %63 = vector.broadcast %cst_58 : f32 to vector<1x4xf32>
    %64 = vector.extract_strided_slice %1 {offsets = [0, 0], sizes = [63, 4], strides = [1, 1]} : vector<64x4xf32> to vector<63x4xf32>
    %65 = tpu.concatenate %63, %64 in 0 : vector<1x4xf32>, vector<63x4xf32> -> vector<64x4xf32>
    %66 = vector.extract_strided_slice %1 {offsets = [1, 0], sizes = [63, 4], strides = [1, 1]} : vector<64x4xf32> to vector<63x4xf32>
    %67 = tpu.concatenate %66, %63 in 0 : vector<63x4xf32>, vector<1x4xf32> -> vector<64x4xf32>
    %68 = arith.maximumf %65, %67 : vector<64x4xf32>
    %69 = arith.maximumf %1, %68 : vector<64x4xf32>
    %70 = arith.truncf %69 : vector<64x4xf32> to vector<64x4xbf16>
    %c0_59 = arith.constant 0 : index
    %c0_60 = arith.constant 0 : index
    %71 = vector.load %arg7[%c0_59, %c0_60] : memref<4x8xbf16, #tpu.memory_space<vmem>>, vector<4x8xbf16>
    %cst_61 = arith.constant dense<0.000000e+00> : vector<64x8xf32>
    %72 = tpu.matmul %70, %71, %cst_61 {dimension_numbers = #tpu.dot_dimension_numbers<[1], [0], [0], [1], [0, 0, 1, 1], [], []>} : vector<64x4xbf16>, vector<4x8xbf16>, vector<64x8xf32> -> vector<64x8xf32>
    %73 = arith.truncf %62 : vector<64x24xf32> to vector<64x24xbf16>
    %c0_62 = arith.constant 0 : index
    %c0_63 = arith.constant 0 : index
    %74 = vector.load %arg8[%c0_62, %c0_63] : memref<64x32xbf16, #tpu.memory_space<vmem>>, vector<64x24xbf16>
    tpu.vector_store %arg8[%c0_62, %c0_63], %73 {strides = array<i32>} : memref<64x32xbf16, #tpu.memory_space<vmem>>, vector<64x24xbf16>,
    %75 = arith.truncf %72 : vector<64x8xf32> to vector<64x8xbf16>
    %c0_64 = arith.constant 0 : index
    %c24_65 = arith.constant 24 : index
    %76 = vector.load %arg8[%c0_64, %c24_65] : memref<64x32xbf16, #tpu.memory_space<vmem>>, vector<64x8xbf16>
    tpu.vector_store %arg8[%c0_64, %c24_65], %75 {strides = array<i32>} : memref<64x32xbf16, #tpu.memory_space<vmem>>, vector<64x8xbf16>,
    %cst_66 = arith.constant dense<0.000000e+00> : vector<24xf32>
    %77 = vector.multi_reduction <add>, %62, %cst_66 [0] : vector<64x24xf32> to vector<24xf32>
    %78 = vector.shape_cast %77 : vector<24xf32> to vector<1x24xf32>
    %cst_67 = arith.constant dense<0.000000e+00> : vector<8xf32>
    %79 = vector.multi_reduction <add>, %72, %cst_67 [0] : vector<64x8xf32> to vector<8xf32>
    %80 = vector.shape_cast %79 : vector<8xf32> to vector<1x8xf32>
    %81 = tpu.concatenate %78, %80 in 1 : vector<1x24xf32>, vector<1x8xf32> -> vector<1x32xf32>
    %82 = arith.mulf %62, %62 : vector<64x24xf32>
    %cst_68 = arith.constant dense<0.000000e+00> : vector<24xf32>
    %83 = vector.multi_reduction <add>, %82, %cst_68 [0] : vector<64x24xf32> to vector<24xf32>
    %84 = vector.shape_cast %83 : vector<24xf32> to vector<1x24xf32>
    %85 = arith.mulf %72, %72 : vector<64x8xf32>
    %cst_69 = arith.constant dense<0.000000e+00> : vector<8xf32>
    %86 = vector.multi_reduction <add>, %85, %cst_69 [0] : vector<64x8xf32> to vector<8xf32>
    %87 = vector.shape_cast %86 : vector<8xf32> to vector<1x8xf32>
    %88 = tpu.concatenate %84, %87 in 1 : vector<1x24xf32>, vector<1x8xf32> -> vector<1x32xf32>
    %89 = tpu.concatenate %81, %88 in 0 : vector<1x32xf32>, vector<1x32xf32> -> vector<2x32xf32>
    %c0_70 = arith.constant 0 : index
    %c0_71 = arith.constant 0 : index
    %c0_72 = arith.constant 0 : index
    %90 = vector.load %arg9[%c0_70, %c0_71, %c0_72] : memref<1x2x32xf32, #tpu.memory_space<vmem>>, vector<1x2x32xf32>
    %91 = vector.shape_cast %90 : vector<1x2x32xf32> to vector<2x32xf32>
    %92 = vector.shape_cast %89 : vector<2x32xf32> to vector<1x2x32xf32>
    tpu.vector_store %arg9[%c0_70, %c0_71, %c0_72], %92 {strides = array<i32>} : memref<1x2x32xf32, #tpu.memory_space<vmem>>, vector<1x2x32xf32>,
    return
  }
  func.func @transform_0(%arg0: i32) -> (i32, i32) {
    %c0_i32 = arith.constant 0 : i32
    %c0_i32_0 = arith.constant 0 : i32
    return %arg0, %c0_i32 : i32, i32
  }
  func.func @transform_1(%arg0: i32) -> (i32, i32, i32) {
    %c0_i32 = arith.constant 0 : i32
    %c0_i32_0 = arith.constant 0 : i32
    %c0_i32_1 = arith.constant 0 : i32
    %c0_i32_2 = arith.constant 0 : i32
    return %c0_i32, %c0_i32_0, %c0_i32_1 : i32, i32, i32
  }
  func.func @transform_2(%arg0: i32) -> (i32, i32) {
    %c0_i32 = arith.constant 0 : i32
    %c0_i32_0 = arith.constant 0 : i32
    %c0_i32_1 = arith.constant 0 : i32
    return %c0_i32, %c0_i32_0 : i32, i32
  }
  func.func @transform_3(%arg0: i32) -> (i32, i32) {
    %c0_i32 = arith.constant 0 : i32
    %c0_i32_0 = arith.constant 0 : i32
    %c0_i32_1 = arith.constant 0 : i32
    return %c0_i32, %c0_i32_0 : i32, i32
  }
  func.func @transform_4(%arg0: i32) -> (i32, i32) {
    %c0_i32 = arith.constant 0 : i32
    %c0_i32_0 = arith.constant 0 : i32
    %c0_i32_1 = arith.constant 0 : i32
    return %c0_i32, %c0_i32_0 : i32, i32
  }
  func.func @transform_5(%arg0: i32) -> (i32, i32) {
    %c0_i32 = arith.constant 0 : i32
    %c0_i32_0 = arith.constant 0 : i32
    %c0_i32_1 = arith.constant 0 : i32
    return %c0_i32, %c0_i32_0 : i32, i32
  }
  func.func @transform_6(%arg0: i32) -> (i32, i32) {
    %c0_i32 = arith.constant 0 : i32
    %c0_i32_0 = arith.constant 0 : i32
    %c0_i32_1 = arith.constant 0 : i32
    return %c0_i32, %c0_i32_0 : i32, i32
  }
  func.func @transform_7(%arg0: i32) -> (i32, i32) {
    %c0_i32 = arith.constant 0 : i32
    %c0_i32_0 = arith.constant 0 : i32
    return %arg0, %c0_i32 : i32, i32
  }
  func.func @transform_8(%arg0: i32) -> (i32, i32, i32) {
    %c0_i32 = arith.constant 0 : i32
    %c0_i32_0 = arith.constant 0 : i32
    %c0_i32_1 = arith.constant 0 : i32
    return %arg0, %c0_i32, %c0_i32_0 : i32, i32, i32
  }
}

module attributes {stable_mosaic.version = 11 : i64} {
  func.func @inception_block_kernel(%arg0: i32, %arg1: memref<64x32xbf16, #tpu.memory_space<vmem>>, %arg2: memref<2x2x32xf32, #tpu.memory_space<vmem>>, %arg3: memref<1x32xf32, #tpu.memory_space<vmem>>, %arg4: memref<1x32xf32, #tpu.memory_space<vmem>>, %arg5: memref<32x8xbf16, #tpu.memory_space<vmem>>, %arg6: memref<320x24xbf16, #tpu.memory_space<vmem>>, %arg7: memref<32x8xbf16, #tpu.memory_space<vmem>>, %arg8: memref<64x32xbf16, #tpu.memory_space<vmem>>, %arg9: memref<1x2x32xf32, #tpu.memory_space<vmem>>, %arg10: memref<128x8xbf16, #tpu.memory_space<vmem>>) attributes {dimension_semantics = [#tpu.dimension_semantics<parallel>], iteration_bounds = array<i64: 2>, scalar_prefetch = 0 : i64, scratch_operands = 1 : i64, tpu.core_type = #tpu.core_type<tc>, window_params = [{transform_indices = @transform_0, window_bounds = array<i64: 64, 32>}, {pipeline_mode = #tpu.pipeline_mode<synchronous>, transform_indices = @transform_1, window_bounds = array<i64: 2, 2, 32>}, {pipeline_mode = #tpu.pipeline_mode<synchronous>, transform_indices = @transform_2, window_bounds = array<i64: 1, 32>}, {pipeline_mode = #tpu.pipeline_mode<synchronous>, transform_indices = @transform_3, window_bounds = array<i64: 1, 32>}, {pipeline_mode = #tpu.pipeline_mode<synchronous>, transform_indices = @transform_4, window_bounds = array<i64: 32, 8>}, {pipeline_mode = #tpu.pipeline_mode<synchronous>, transform_indices = @transform_5, window_bounds = array<i64: 320, 24>}, {pipeline_mode = #tpu.pipeline_mode<synchronous>, transform_indices = @transform_6, window_bounds = array<i64: 32, 8>}, {transform_indices = @transform_7, window_bounds = array<i64: 64, 32>}, {transform_indices = @transform_8, window_bounds = array<i64: 1, 2, 32>}]} {
    %c0 = arith.constant 0 : index
    %c0_0 = arith.constant 0 : index
    %0 = vector.load %arg1[%c0, %c0_0] : memref<64x32xbf16, #tpu.memory_space<vmem>>, vector<64x32xbf16>
    %c0_1 = arith.constant 0 : index
    %c0_2 = arith.constant 0 : index
    %c0_3 = arith.constant 0 : index
    %1 = vector.load %arg2[%c0_1, %c0_2, %c0_3] : memref<2x2x32xf32, #tpu.memory_space<vmem>>, vector<2x2x32xf32>
    %cst = arith.constant dense<0.000000e+00> : vector<2x32xf32>
    %2 = vector.multi_reduction <add>, %1, %cst [0] : vector<2x2x32xf32> to vector<2x32xf32>
    %3 = vector.extract_strided_slice %2 {offsets = [0, 0], sizes = [1, 32], strides = [1, 1]} : vector<2x32xf32> to vector<1x32xf32>
    %cst_4 = arith.constant 7.812500e-03 : f32
    %4 = vector.broadcast %cst_4 : f32 to vector<1x32xf32>
    %5 = arith.mulf %3, %4 : vector<1x32xf32>
    %6 = vector.extract_strided_slice %2 {offsets = [1, 0], sizes = [1, 32], strides = [1, 1]} : vector<2x32xf32> to vector<1x32xf32>
    %cst_5 = arith.constant 7.812500e-03 : f32
    %7 = vector.broadcast %cst_5 : f32 to vector<1x32xf32>
    %8 = arith.mulf %6, %7 : vector<1x32xf32>
    %9 = arith.mulf %5, %5 : vector<1x32xf32>
    %10 = arith.subf %8, %9 : vector<1x32xf32>
    %c0_6 = arith.constant 0 : index
    %c0_7 = arith.constant 0 : index
    %11 = vector.load %arg3[%c0_6, %c0_7] : memref<1x32xf32, #tpu.memory_space<vmem>>, vector<1x32xf32>
    %cst_8 = arith.constant 9.99999974E-6 : f32
    %12 = vector.broadcast %cst_8 : f32 to vector<1x32xf32>
    %13 = arith.addf %10, %12 : vector<1x32xf32>
    %14 = math.rsqrt %13 : vector<1x32xf32>
    %15 = arith.mulf %11, %14 : vector<1x32xf32>
    %c0_9 = arith.constant 0 : index
    %c0_10 = arith.constant 0 : index
    %16 = vector.load %arg4[%c0_9, %c0_10] : memref<1x32xf32, #tpu.memory_space<vmem>>, vector<1x32xf32>
    %17 = arith.mulf %5, %15 : vector<1x32xf32>
    %18 = arith.subf %16, %17 : vector<1x32xf32>
    %19 = arith.extf %0 : vector<64x32xbf16> to vector<64x32xf32>
    %20 = vector.broadcast %15 : vector<1x32xf32> to vector<64x32xf32>
    %21 = arith.mulf %19, %20 : vector<64x32xf32>
    %22 = vector.broadcast %18 : vector<1x32xf32> to vector<64x32xf32>
    %23 = arith.addf %21, %22 : vector<64x32xf32>
    %cst_11 = arith.constant 0.000000e+00 : f32
    %24 = vector.broadcast %cst_11 : f32 to vector<64x32xf32>
    %25 = arith.maximumf %23, %24 : vector<64x32xf32>
    %26 = arith.truncf %25 : vector<64x32xf32> to vector<64x32xbf16>
    %cst_12 = arith.constant 0.000000e+00 : bf16
    %27 = vector.broadcast %cst_12 : bf16 to vector<32x8xbf16>
    %c0_13 = arith.constant 0 : index
    %c0_14 = arith.constant 0 : index
    %28 = vector.load %arg10[%c0_13, %c0_14] : memref<128x8xbf16, #tpu.memory_space<vmem>>, vector<32x8xbf16>
    tpu.vector_store %arg10[%c0_13, %c0_14], %27 {strides = array<i32>} : memref<128x8xbf16, #tpu.memory_space<vmem>>, vector<32x8xbf16>,
    %cst_15 = arith.constant 0.000000e+00 : bf16
    %29 = vector.broadcast %cst_15 : bf16 to vector<32x8xbf16>
    %c96 = arith.constant 96 : index
    %c0_16 = arith.constant 0 : index
    %30 = vector.load %arg10[%c96, %c0_16] : memref<128x8xbf16, #tpu.memory_space<vmem>>, vector<32x8xbf16>
    tpu.vector_store %arg10[%c96, %c0_16], %29 {strides = array<i32>} : memref<128x8xbf16, #tpu.memory_space<vmem>>, vector<32x8xbf16>,
    %c0_17 = arith.constant 0 : index
    %c0_18 = arith.constant 0 : index
    %31 = vector.load %arg5[%c0_17, %c0_18] : memref<32x8xbf16, #tpu.memory_space<vmem>>, vector<32x8xbf16>
    %cst_19 = arith.constant dense<0.000000e+00> : vector<64x8xf32>
    %32 = tpu.matmul %26, %31, %cst_19 {dimension_numbers = #tpu.dot_dimension_numbers<[1], [0], [0], [1], [0, 0, 1, 1], [], []>} : vector<64x32xbf16>, vector<32x8xbf16>, vector<64x8xf32> -> vector<64x8xf32>
    %33 = arith.truncf %32 : vector<64x8xf32> to vector<64x8xbf16>
    %c32 = arith.constant 32 : index
    %c0_20 = arith.constant 0 : index
    %34 = vector.load %arg10[%c32, %c0_20] : memref<128x8xbf16, #tpu.memory_space<vmem>>, vector<64x8xbf16>
    tpu.vector_store %arg10[%c32, %c0_20], %33 {strides = array<i32>} : memref<128x8xbf16, #tpu.memory_space<vmem>>, vector<64x8xbf16>,
    %cst_21 = arith.constant 0.000000e+00 : f32
    %35 = vector.broadcast %cst_21 : f32 to vector<64x24xf32>
    %c13 = arith.constant 13 : index
    %c0_22 = arith.constant 0 : index
    %36 = vector.load %arg10[%c13, %c0_22] : memref<128x8xbf16, #tpu.memory_space<vmem>>, vector<64x8xbf16>
    %c14 = arith.constant 14 : index
    %c0_23 = arith.constant 0 : index
    %37 = vector.load %arg10[%c14, %c0_23] : memref<128x8xbf16, #tpu.memory_space<vmem>>, vector<64x8xbf16>
    %c15 = arith.constant 15 : index
    %c0_24 = arith.constant 0 : index
    %38 = vector.load %arg10[%c15, %c0_24] : memref<128x8xbf16, #tpu.memory_space<vmem>>, vector<64x8xbf16>
    %c16 = arith.constant 16 : index
    %c0_25 = arith.constant 0 : index
    %39 = vector.load %arg10[%c16, %c0_25] : memref<128x8xbf16, #tpu.memory_space<vmem>>, vector<64x8xbf16>
    %c17 = arith.constant 17 : index
    %c0_26 = arith.constant 0 : index
    %40 = vector.load %arg10[%c17, %c0_26] : memref<128x8xbf16, #tpu.memory_space<vmem>>, vector<64x8xbf16>
    %c18 = arith.constant 18 : index
    %c0_27 = arith.constant 0 : index
    %41 = vector.load %arg10[%c18, %c0_27] : memref<128x8xbf16, #tpu.memory_space<vmem>>, vector<64x8xbf16>
    %c19 = arith.constant 19 : index
    %c0_28 = arith.constant 0 : index
    %42 = vector.load %arg10[%c19, %c0_28] : memref<128x8xbf16, #tpu.memory_space<vmem>>, vector<64x8xbf16>
    %c20 = arith.constant 20 : index
    %c0_29 = arith.constant 0 : index
    %43 = vector.load %arg10[%c20, %c0_29] : memref<128x8xbf16, #tpu.memory_space<vmem>>, vector<64x8xbf16>
    %c21 = arith.constant 21 : index
    %c0_30 = arith.constant 0 : index
    %44 = vector.load %arg10[%c21, %c0_30] : memref<128x8xbf16, #tpu.memory_space<vmem>>, vector<64x8xbf16>
    %c22 = arith.constant 22 : index
    %c0_31 = arith.constant 0 : index
    %45 = vector.load %arg10[%c22, %c0_31] : memref<128x8xbf16, #tpu.memory_space<vmem>>, vector<64x8xbf16>
    %c23 = arith.constant 23 : index
    %c0_32 = arith.constant 0 : index
    %46 = vector.load %arg10[%c23, %c0_32] : memref<128x8xbf16, #tpu.memory_space<vmem>>, vector<64x8xbf16>
    %c24 = arith.constant 24 : index
    %c0_33 = arith.constant 0 : index
    %47 = vector.load %arg10[%c24, %c0_33] : memref<128x8xbf16, #tpu.memory_space<vmem>>, vector<64x8xbf16>
    %c25 = arith.constant 25 : index
    %c0_34 = arith.constant 0 : index
    %48 = vector.load %arg10[%c25, %c0_34] : memref<128x8xbf16, #tpu.memory_space<vmem>>, vector<64x8xbf16>
    %c26 = arith.constant 26 : index
    %c0_35 = arith.constant 0 : index
    %49 = vector.load %arg10[%c26, %c0_35] : memref<128x8xbf16, #tpu.memory_space<vmem>>, vector<64x8xbf16>
    %c27 = arith.constant 27 : index
    %c0_36 = arith.constant 0 : index
    %50 = vector.load %arg10[%c27, %c0_36] : memref<128x8xbf16, #tpu.memory_space<vmem>>, vector<64x8xbf16>
    %c28 = arith.constant 28 : index
    %c0_37 = arith.constant 0 : index
    %51 = vector.load %arg10[%c28, %c0_37] : memref<128x8xbf16, #tpu.memory_space<vmem>>, vector<64x8xbf16>
    %52 = tpu.concatenate %36, %37, %38, %39, %40, %41, %42, %43, %44, %45, %46, %47, %48, %49, %50, %51 in 1 : vector<64x8xbf16>, vector<64x8xbf16>, vector<64x8xbf16>, vector<64x8xbf16>, vector<64x8xbf16>, vector<64x8xbf16>, vector<64x8xbf16>, vector<64x8xbf16>, vector<64x8xbf16>, vector<64x8xbf16>, vector<64x8xbf16>, vector<64x8xbf16>, vector<64x8xbf16>, vector<64x8xbf16>, vector<64x8xbf16>, vector<64x8xbf16> -> vector<64x128xbf16>
    %c0_38 = arith.constant 0 : index
    %c0_39 = arith.constant 0 : index
    %53 = vector.load %arg6[%c0_38, %c0_39] : memref<320x24xbf16, #tpu.memory_space<vmem>>, vector<128x24xbf16>
    %cst_40 = arith.constant dense<0.000000e+00> : vector<64x24xf32>
    %54 = tpu.matmul %52, %53, %cst_40 {dimension_numbers = #tpu.dot_dimension_numbers<[1], [0], [0], [1], [0, 0, 1, 1], [], []>} : vector<64x128xbf16>, vector<128x24xbf16>, vector<64x24xf32> -> vector<64x24xf32>
    %55 = arith.addf %35, %54 : vector<64x24xf32>
    %c29 = arith.constant 29 : index
    %c0_41 = arith.constant 0 : index
    %56 = vector.load %arg10[%c29, %c0_41] : memref<128x8xbf16, #tpu.memory_space<vmem>>, vector<64x8xbf16>
    %c30 = arith.constant 30 : index
    %c0_42 = arith.constant 0 : index
    %57 = vector.load %arg10[%c30, %c0_42] : memref<128x8xbf16, #tpu.memory_space<vmem>>, vector<64x8xbf16>
    %c31 = arith.constant 31 : index
    %c0_43 = arith.constant 0 : index
    %58 = vector.load %arg10[%c31, %c0_43] : memref<128x8xbf16, #tpu.memory_space<vmem>>, vector<64x8xbf16>
    %c32_44 = arith.constant 32 : index
    %c0_45 = arith.constant 0 : index
    %59 = vector.load %arg10[%c32_44, %c0_45] : memref<128x8xbf16, #tpu.memory_space<vmem>>, vector<64x8xbf16>
    %c33 = arith.constant 33 : index
    %c0_46 = arith.constant 0 : index
    %60 = vector.load %arg10[%c33, %c0_46] : memref<128x8xbf16, #tpu.memory_space<vmem>>, vector<64x8xbf16>
    %c34 = arith.constant 34 : index
    %c0_47 = arith.constant 0 : index
    %61 = vector.load %arg10[%c34, %c0_47] : memref<128x8xbf16, #tpu.memory_space<vmem>>, vector<64x8xbf16>
    %c35 = arith.constant 35 : index
    %c0_48 = arith.constant 0 : index
    %62 = vector.load %arg10[%c35, %c0_48] : memref<128x8xbf16, #tpu.memory_space<vmem>>, vector<64x8xbf16>
    %c36 = arith.constant 36 : index
    %c0_49 = arith.constant 0 : index
    %63 = vector.load %arg10[%c36, %c0_49] : memref<128x8xbf16, #tpu.memory_space<vmem>>, vector<64x8xbf16>
    %c37 = arith.constant 37 : index
    %c0_50 = arith.constant 0 : index
    %64 = vector.load %arg10[%c37, %c0_50] : memref<128x8xbf16, #tpu.memory_space<vmem>>, vector<64x8xbf16>
    %c38 = arith.constant 38 : index
    %c0_51 = arith.constant 0 : index
    %65 = vector.load %arg10[%c38, %c0_51] : memref<128x8xbf16, #tpu.memory_space<vmem>>, vector<64x8xbf16>
    %c39 = arith.constant 39 : index
    %c0_52 = arith.constant 0 : index
    %66 = vector.load %arg10[%c39, %c0_52] : memref<128x8xbf16, #tpu.memory_space<vmem>>, vector<64x8xbf16>
    %c40 = arith.constant 40 : index
    %c0_53 = arith.constant 0 : index
    %67 = vector.load %arg10[%c40, %c0_53] : memref<128x8xbf16, #tpu.memory_space<vmem>>, vector<64x8xbf16>
    %c41 = arith.constant 41 : index
    %c0_54 = arith.constant 0 : index
    %68 = vector.load %arg10[%c41, %c0_54] : memref<128x8xbf16, #tpu.memory_space<vmem>>, vector<64x8xbf16>
    %c42 = arith.constant 42 : index
    %c0_55 = arith.constant 0 : index
    %69 = vector.load %arg10[%c42, %c0_55] : memref<128x8xbf16, #tpu.memory_space<vmem>>, vector<64x8xbf16>
    %c43 = arith.constant 43 : index
    %c0_56 = arith.constant 0 : index
    %70 = vector.load %arg10[%c43, %c0_56] : memref<128x8xbf16, #tpu.memory_space<vmem>>, vector<64x8xbf16>
    %c44 = arith.constant 44 : index
    %c0_57 = arith.constant 0 : index
    %71 = vector.load %arg10[%c44, %c0_57] : memref<128x8xbf16, #tpu.memory_space<vmem>>, vector<64x8xbf16>
    %72 = tpu.concatenate %56, %57, %58, %59, %60, %61, %62, %63, %64, %65, %66, %67, %68, %69, %70, %71 in 1 : vector<64x8xbf16>, vector<64x8xbf16>, vector<64x8xbf16>, vector<64x8xbf16>, vector<64x8xbf16>, vector<64x8xbf16>, vector<64x8xbf16>, vector<64x8xbf16>, vector<64x8xbf16>, vector<64x8xbf16>, vector<64x8xbf16>, vector<64x8xbf16>, vector<64x8xbf16>, vector<64x8xbf16>, vector<64x8xbf16>, vector<64x8xbf16> -> vector<64x128xbf16>
    %c128 = arith.constant 128 : index
    %c0_58 = arith.constant 0 : index
    %73 = vector.load %arg6[%c128, %c0_58] : memref<320x24xbf16, #tpu.memory_space<vmem>>, vector<128x24xbf16>
    %cst_59 = arith.constant dense<0.000000e+00> : vector<64x24xf32>
    %74 = tpu.matmul %72, %73, %cst_59 {dimension_numbers = #tpu.dot_dimension_numbers<[1], [0], [0], [1], [0, 0, 1, 1], [], []>} : vector<64x128xbf16>, vector<128x24xbf16>, vector<64x24xf32> -> vector<64x24xf32>
    %75 = arith.addf %55, %74 : vector<64x24xf32>
    %c45 = arith.constant 45 : index
    %c0_60 = arith.constant 0 : index
    %76 = vector.load %arg10[%c45, %c0_60] : memref<128x8xbf16, #tpu.memory_space<vmem>>, vector<64x8xbf16>
    %c46 = arith.constant 46 : index
    %c0_61 = arith.constant 0 : index
    %77 = vector.load %arg10[%c46, %c0_61] : memref<128x8xbf16, #tpu.memory_space<vmem>>, vector<64x8xbf16>
    %c47 = arith.constant 47 : index
    %c0_62 = arith.constant 0 : index
    %78 = vector.load %arg10[%c47, %c0_62] : memref<128x8xbf16, #tpu.memory_space<vmem>>, vector<64x8xbf16>
    %c48 = arith.constant 48 : index
    %c0_63 = arith.constant 0 : index
    %79 = vector.load %arg10[%c48, %c0_63] : memref<128x8xbf16, #tpu.memory_space<vmem>>, vector<64x8xbf16>
    %c49 = arith.constant 49 : index
    %c0_64 = arith.constant 0 : index
    %80 = vector.load %arg10[%c49, %c0_64] : memref<128x8xbf16, #tpu.memory_space<vmem>>, vector<64x8xbf16>
    %c50 = arith.constant 50 : index
    %c0_65 = arith.constant 0 : index
    %81 = vector.load %arg10[%c50, %c0_65] : memref<128x8xbf16, #tpu.memory_space<vmem>>, vector<64x8xbf16>
    %c51 = arith.constant 51 : index
    %c0_66 = arith.constant 0 : index
    %82 = vector.load %arg10[%c51, %c0_66] : memref<128x8xbf16, #tpu.memory_space<vmem>>, vector<64x8xbf16>
    %c52 = arith.constant 52 : index
    %c0_67 = arith.constant 0 : index
    %83 = vector.load %arg10[%c52, %c0_67] : memref<128x8xbf16, #tpu.memory_space<vmem>>, vector<64x8xbf16>
    %84 = tpu.concatenate %76, %77, %78, %79, %80, %81, %82, %83 in 1 : vector<64x8xbf16>, vector<64x8xbf16>, vector<64x8xbf16>, vector<64x8xbf16>, vector<64x8xbf16>, vector<64x8xbf16>, vector<64x8xbf16>, vector<64x8xbf16> -> vector<64x64xbf16>
    %c256 = arith.constant 256 : index
    %c0_68 = arith.constant 0 : index
    %85 = vector.load %arg6[%c256, %c0_68] : memref<320x24xbf16, #tpu.memory_space<vmem>>, vector<64x24xbf16>
    %cst_69 = arith.constant dense<0.000000e+00> : vector<64x24xf32>
    %86 = tpu.matmul %84, %85, %cst_69 {dimension_numbers = #tpu.dot_dimension_numbers<[1], [0], [0], [1], [0, 0, 1, 1], [], []>} : vector<64x64xbf16>, vector<64x24xbf16>, vector<64x24xf32> -> vector<64x24xf32>
    %87 = arith.addf %75, %86 : vector<64x24xf32>
    %cst_70 = arith.constant 0xFF800000 : f32
    %88 = vector.broadcast %cst_70 : f32 to vector<1x32xf32>
    %89 = vector.extract_strided_slice %25 {offsets = [0, 0], sizes = [63, 32], strides = [1, 1]} : vector<64x32xf32> to vector<63x32xf32>
    %90 = tpu.concatenate %88, %89 in 0 : vector<1x32xf32>, vector<63x32xf32> -> vector<64x32xf32>
    %91 = vector.extract_strided_slice %25 {offsets = [1, 0], sizes = [63, 32], strides = [1, 1]} : vector<64x32xf32> to vector<63x32xf32>
    %92 = tpu.concatenate %91, %88 in 0 : vector<63x32xf32>, vector<1x32xf32> -> vector<64x32xf32>
    %93 = arith.maximumf %90, %92 : vector<64x32xf32>
    %94 = arith.maximumf %25, %93 : vector<64x32xf32>
    %95 = arith.truncf %94 : vector<64x32xf32> to vector<64x32xbf16>
    %c0_71 = arith.constant 0 : index
    %c0_72 = arith.constant 0 : index
    %96 = vector.load %arg7[%c0_71, %c0_72] : memref<32x8xbf16, #tpu.memory_space<vmem>>, vector<32x8xbf16>
    %cst_73 = arith.constant dense<0.000000e+00> : vector<64x8xf32>
    %97 = tpu.matmul %95, %96, %cst_73 {dimension_numbers = #tpu.dot_dimension_numbers<[1], [0], [0], [1], [0, 0, 1, 1], [], []>} : vector<64x32xbf16>, vector<32x8xbf16>, vector<64x8xf32> -> vector<64x8xf32>
    %98 = arith.truncf %87 : vector<64x24xf32> to vector<64x24xbf16>
    %c0_74 = arith.constant 0 : index
    %c0_75 = arith.constant 0 : index
    %99 = vector.load %arg8[%c0_74, %c0_75] : memref<64x32xbf16, #tpu.memory_space<vmem>>, vector<64x24xbf16>
    tpu.vector_store %arg8[%c0_74, %c0_75], %98 {strides = array<i32>} : memref<64x32xbf16, #tpu.memory_space<vmem>>, vector<64x24xbf16>,
    %100 = arith.truncf %97 : vector<64x8xf32> to vector<64x8xbf16>
    %c0_76 = arith.constant 0 : index
    %c24_77 = arith.constant 24 : index
    %101 = vector.load %arg8[%c0_76, %c24_77] : memref<64x32xbf16, #tpu.memory_space<vmem>>, vector<64x8xbf16>
    tpu.vector_store %arg8[%c0_76, %c24_77], %100 {strides = array<i32>} : memref<64x32xbf16, #tpu.memory_space<vmem>>, vector<64x8xbf16>,
    %cst_78 = arith.constant dense<0.000000e+00> : vector<24xf32>
    %102 = vector.multi_reduction <add>, %87, %cst_78 [0] : vector<64x24xf32> to vector<24xf32>
    %103 = vector.shape_cast %102 : vector<24xf32> to vector<1x24xf32>
    %cst_79 = arith.constant dense<0.000000e+00> : vector<8xf32>
    %104 = vector.multi_reduction <add>, %97, %cst_79 [0] : vector<64x8xf32> to vector<8xf32>
    %105 = vector.shape_cast %104 : vector<8xf32> to vector<1x8xf32>
    %106 = tpu.concatenate %103, %105 in 1 : vector<1x24xf32>, vector<1x8xf32> -> vector<1x32xf32>
    %107 = arith.mulf %87, %87 : vector<64x24xf32>
    %cst_80 = arith.constant dense<0.000000e+00> : vector<24xf32>
    %108 = vector.multi_reduction <add>, %107, %cst_80 [0] : vector<64x24xf32> to vector<24xf32>
    %109 = vector.shape_cast %108 : vector<24xf32> to vector<1x24xf32>
    %110 = arith.mulf %97, %97 : vector<64x8xf32>
    %cst_81 = arith.constant dense<0.000000e+00> : vector<8xf32>
    %111 = vector.multi_reduction <add>, %110, %cst_81 [0] : vector<64x8xf32> to vector<8xf32>
    %112 = vector.shape_cast %111 : vector<8xf32> to vector<1x8xf32>
    %113 = tpu.concatenate %109, %112 in 1 : vector<1x24xf32>, vector<1x8xf32> -> vector<1x32xf32>
    %114 = tpu.concatenate %106, %113 in 0 : vector<1x32xf32>, vector<1x32xf32> -> vector<2x32xf32>
    %c0_82 = arith.constant 0 : index
    %c0_83 = arith.constant 0 : index
    %c0_84 = arith.constant 0 : index
    %115 = vector.load %arg9[%c0_82, %c0_83, %c0_84] : memref<1x2x32xf32, #tpu.memory_space<vmem>>, vector<1x2x32xf32>
    %116 = vector.shape_cast %115 : vector<1x2x32xf32> to vector<2x32xf32>
    %117 = vector.shape_cast %114 : vector<2x32xf32> to vector<1x2x32xf32>
    tpu.vector_store %arg9[%c0_82, %c0_83, %c0_84], %117 {strides = array<i32>} : memref<1x2x32xf32, #tpu.memory_space<vmem>>, vector<1x2x32xf32>,
    return
  }
  func.func @transform_0(%arg0: i32) -> (i32, i32) {
    %c0_i32 = arith.constant 0 : i32
    %c0_i32_0 = arith.constant 0 : i32
    return %arg0, %c0_i32 : i32, i32
  }
  func.func @transform_1(%arg0: i32) -> (i32, i32, i32) {
    %c0_i32 = arith.constant 0 : i32
    %c0_i32_0 = arith.constant 0 : i32
    %c0_i32_1 = arith.constant 0 : i32
    %c0_i32_2 = arith.constant 0 : i32
    return %c0_i32, %c0_i32_0, %c0_i32_1 : i32, i32, i32
  }
  func.func @transform_2(%arg0: i32) -> (i32, i32) {
    %c0_i32 = arith.constant 0 : i32
    %c0_i32_0 = arith.constant 0 : i32
    %c0_i32_1 = arith.constant 0 : i32
    return %c0_i32, %c0_i32_0 : i32, i32
  }
  func.func @transform_3(%arg0: i32) -> (i32, i32) {
    %c0_i32 = arith.constant 0 : i32
    %c0_i32_0 = arith.constant 0 : i32
    %c0_i32_1 = arith.constant 0 : i32
    return %c0_i32, %c0_i32_0 : i32, i32
  }
  func.func @transform_4(%arg0: i32) -> (i32, i32) {
    %c0_i32 = arith.constant 0 : i32
    %c0_i32_0 = arith.constant 0 : i32
    %c0_i32_1 = arith.constant 0 : i32
    return %c0_i32, %c0_i32_0 : i32, i32
  }
  func.func @transform_5(%arg0: i32) -> (i32, i32) {
    %c0_i32 = arith.constant 0 : i32
    %c0_i32_0 = arith.constant 0 : i32
    %c0_i32_1 = arith.constant 0 : i32
    return %c0_i32, %c0_i32_0 : i32, i32
  }
  func.func @transform_6(%arg0: i32) -> (i32, i32) {
    %c0_i32 = arith.constant 0 : i32
    %c0_i32_0 = arith.constant 0 : i32
    %c0_i32_1 = arith.constant 0 : i32
    return %c0_i32, %c0_i32_0 : i32, i32
  }
  func.func @transform_7(%arg0: i32) -> (i32, i32) {
    %c0_i32 = arith.constant 0 : i32
    %c0_i32_0 = arith.constant 0 : i32
    return %arg0, %c0_i32 : i32, i32
  }
  func.func @transform_8(%arg0: i32) -> (i32, i32, i32) {
    %c0_i32 = arith.constant 0 : i32
    %c0_i32_0 = arith.constant 0 : i32
    %c0_i32_1 = arith.constant 0 : i32
    return %arg0, %c0_i32, %c0_i32_0 : i32, i32, i32
  }
}

module attributes {stable_mosaic.version = 11 : i64} {
  func.func @res_stats_kernel(%arg0: i32, %arg1: memref<128x4xbf16, #tpu.memory_space<vmem>>, %arg2: memref<4x32xbf16, #tpu.memory_space<vmem>>, %arg3: memref<1x2x32xf32, #tpu.memory_space<vmem>>) attributes {dimension_semantics = [#tpu.dimension_semantics<parallel>], iteration_bounds = array<i64: 1>, scalar_prefetch = 0 : i64, scratch_operands = 0 : i64, tpu.core_type = #tpu.core_type<tc>, window_params = [{transform_indices = @transform_0, window_bounds = array<i64: 128, 4>}, {pipeline_mode = #tpu.pipeline_mode<synchronous>, transform_indices = @transform_1, window_bounds = array<i64: 4, 32>}, {transform_indices = @transform_2, window_bounds = array<i64: 1, 2, 32>}]} {
    %c0 = arith.constant 0 : index
    %c0_0 = arith.constant 0 : index
    %0 = vector.load %arg1[%c0, %c0_0] : memref<128x4xbf16, #tpu.memory_space<vmem>>, vector<128x4xbf16>
    %c0_1 = arith.constant 0 : index
    %c0_2 = arith.constant 0 : index
    %1 = vector.load %arg2[%c0_1, %c0_2] : memref<4x32xbf16, #tpu.memory_space<vmem>>, vector<4x32xbf16>
    %cst = arith.constant dense<0.000000e+00> : vector<128x32xf32>
    %2 = tpu.matmul %0, %1, %cst {dimension_numbers = #tpu.dot_dimension_numbers<[1], [0], [0], [1], [0, 0, 1, 1], [], []>} : vector<128x4xbf16>, vector<4x32xbf16>, vector<128x32xf32> -> vector<128x32xf32>
    %cst_3 = arith.constant dense<0.000000e+00> : vector<32xf32>
    %3 = vector.multi_reduction <add>, %2, %cst_3 [0] : vector<128x32xf32> to vector<32xf32>
    %4 = vector.shape_cast %3 : vector<32xf32> to vector<1x32xf32>
    %5 = arith.mulf %2, %2 : vector<128x32xf32>
    %cst_4 = arith.constant dense<0.000000e+00> : vector<32xf32>
    %6 = vector.multi_reduction <add>, %5, %cst_4 [0] : vector<128x32xf32> to vector<32xf32>
    %7 = vector.shape_cast %6 : vector<32xf32> to vector<1x32xf32>
    %8 = tpu.concatenate %4, %7 in 0 : vector<1x32xf32>, vector<1x32xf32> -> vector<2x32xf32>
    %c0_5 = arith.constant 0 : index
    %c0_6 = arith.constant 0 : index
    %c0_7 = arith.constant 0 : index
    %9 = vector.load %arg3[%c0_5, %c0_6, %c0_7] : memref<1x2x32xf32, #tpu.memory_space<vmem>>, vector<1x2x32xf32>
    %10 = vector.shape_cast %9 : vector<1x2x32xf32> to vector<2x32xf32>
    %11 = vector.shape_cast %8 : vector<2x32xf32> to vector<1x2x32xf32>
    tpu.vector_store %arg3[%c0_5, %c0_6, %c0_7], %11 {strides = array<i32>} : memref<1x2x32xf32, #tpu.memory_space<vmem>>, vector<1x2x32xf32>,
    return
  }
  func.func @transform_0(%arg0: i32) -> (i32, i32) {
    %c0_i32 = arith.constant 0 : i32
    %c0_i32_0 = arith.constant 0 : i32
    return %arg0, %c0_i32 : i32, i32
  }
  func.func @transform_1(%arg0: i32) -> (i32, i32) {
    %c0_i32 = arith.constant 0 : i32
    %c0_i32_0 = arith.constant 0 : i32
    %c0_i32_1 = arith.constant 0 : i32
    return %c0_i32, %c0_i32_0 : i32, i32
  }
  func.func @transform_2(%arg0: i32) -> (i32, i32, i32) {
    %c0_i32 = arith.constant 0 : i32
    %c0_i32_0 = arith.constant 0 : i32
    %c0_i32_1 = arith.constant 0 : i32
    return %arg0, %c0_i32, %c0_i32_0 : i32, i32, i32
  }
}

module attributes {stable_mosaic.version = 11 : i64} {
  func.func @res_apply_kernel(%arg0: i32, %arg1: memref<128x4xbf16, #tpu.memory_space<vmem>>, %arg2: memref<128x32xbf16, #tpu.memory_space<vmem>>, %arg3: memref<4x32xbf16, #tpu.memory_space<vmem>>, %arg4: memref<2x2x32xf32, #tpu.memory_space<vmem>>, %arg5: memref<1x32xf32, #tpu.memory_space<vmem>>, %arg6: memref<1x32xf32, #tpu.memory_space<vmem>>, %arg7: memref<1x2x32xf32, #tpu.memory_space<vmem>>, %arg8: memref<1x32xf32, #tpu.memory_space<vmem>>, %arg9: memref<1x32xf32, #tpu.memory_space<vmem>>, %arg10: memref<128x32xbf16, #tpu.memory_space<vmem>>) attributes {dimension_semantics = [#tpu.dimension_semantics<parallel>], iteration_bounds = array<i64: 1>, scalar_prefetch = 0 : i64, scratch_operands = 0 : i64, tpu.core_type = #tpu.core_type<tc>, window_params = [{transform_indices = @transform_0, window_bounds = array<i64: 128, 4>}, {transform_indices = @transform_1, window_bounds = array<i64: 128, 32>}, {pipeline_mode = #tpu.pipeline_mode<synchronous>, transform_indices = @transform_2, window_bounds = array<i64: 4, 32>}, {pipeline_mode = #tpu.pipeline_mode<synchronous>, transform_indices = @transform_3, window_bounds = array<i64: 2, 2, 32>}, {pipeline_mode = #tpu.pipeline_mode<synchronous>, transform_indices = @transform_4, window_bounds = array<i64: 1, 32>}, {pipeline_mode = #tpu.pipeline_mode<synchronous>, transform_indices = @transform_5, window_bounds = array<i64: 1, 32>}, {pipeline_mode = #tpu.pipeline_mode<synchronous>, transform_indices = @transform_6, window_bounds = array<i64: 1, 2, 32>}, {pipeline_mode = #tpu.pipeline_mode<synchronous>, transform_indices = @transform_7, window_bounds = array<i64: 1, 32>}, {pipeline_mode = #tpu.pipeline_mode<synchronous>, transform_indices = @transform_8, window_bounds = array<i64: 1, 32>}, {transform_indices = @transform_9, window_bounds = array<i64: 128, 32>}]} {
    %c0 = arith.constant 0 : index
    %c0_0 = arith.constant 0 : index
    %c0_1 = arith.constant 0 : index
    %0 = vector.load %arg4[%c0, %c0_0, %c0_1] : memref<2x2x32xf32, #tpu.memory_space<vmem>>, vector<2x2x32xf32>
    %cst = arith.constant dense<0.000000e+00> : vector<2x32xf32>
    %1 = vector.multi_reduction <add>, %0, %cst [0] : vector<2x2x32xf32> to vector<2x32xf32>
    %2 = vector.extract_strided_slice %1 {offsets = [0, 0], sizes = [1, 32], strides = [1, 1]} : vector<2x32xf32> to vector<1x32xf32>
    %cst_2 = arith.constant 7.812500e-03 : f32
    %3 = vector.broadcast %cst_2 : f32 to vector<1x32xf32>
    %4 = arith.mulf %2, %3 : vector<1x32xf32>
    %5 = vector.extract_strided_slice %1 {offsets = [1, 0], sizes = [1, 32], strides = [1, 1]} : vector<2x32xf32> to vector<1x32xf32>
    %cst_3 = arith.constant 7.812500e-03 : f32
    %6 = vector.broadcast %cst_3 : f32 to vector<1x32xf32>
    %7 = arith.mulf %5, %6 : vector<1x32xf32>
    %8 = arith.mulf %4, %4 : vector<1x32xf32>
    %9 = arith.subf %7, %8 : vector<1x32xf32>
    %c0_4 = arith.constant 0 : index
    %c0_5 = arith.constant 0 : index
    %10 = vector.load %arg5[%c0_4, %c0_5] : memref<1x32xf32, #tpu.memory_space<vmem>>, vector<1x32xf32>
    %cst_6 = arith.constant 9.99999974E-6 : f32
    %11 = vector.broadcast %cst_6 : f32 to vector<1x32xf32>
    %12 = arith.addf %9, %11 : vector<1x32xf32>
    %13 = math.rsqrt %12 : vector<1x32xf32>
    %14 = arith.mulf %10, %13 : vector<1x32xf32>
    %c0_7 = arith.constant 0 : index
    %c0_8 = arith.constant 0 : index
    %15 = vector.load %arg6[%c0_7, %c0_8] : memref<1x32xf32, #tpu.memory_space<vmem>>, vector<1x32xf32>
    %16 = arith.mulf %4, %14 : vector<1x32xf32>
    %17 = arith.subf %15, %16 : vector<1x32xf32>
    %c0_9 = arith.constant 0 : index
    %c0_10 = arith.constant 0 : index
    %18 = vector.load %arg2[%c0_9, %c0_10] : memref<128x32xbf16, #tpu.memory_space<vmem>>, vector<128x32xbf16>
    %19 = arith.extf %18 : vector<128x32xbf16> to vector<128x32xf32>
    %20 = vector.broadcast %14 : vector<1x32xf32> to vector<128x32xf32>
    %21 = arith.mulf %19, %20 : vector<128x32xf32>
    %22 = vector.broadcast %17 : vector<1x32xf32> to vector<128x32xf32>
    %23 = arith.addf %21, %22 : vector<128x32xf32>
    %cst_11 = arith.constant 0.000000e+00 : f32
    %24 = vector.broadcast %cst_11 : f32 to vector<128x32xf32>
    %25 = arith.maximumf %23, %24 : vector<128x32xf32>
    %c0_12 = arith.constant 0 : index
    %c0_13 = arith.constant 0 : index
    %c0_14 = arith.constant 0 : index
    %26 = vector.load %arg7[%c0_12, %c0_13, %c0_14] : memref<1x2x32xf32, #tpu.memory_space<vmem>>, vector<1x2x32xf32>
    %cst_15 = arith.constant dense<0.000000e+00> : vector<2x32xf32>
    %27 = vector.multi_reduction <add>, %26, %cst_15 [0] : vector<1x2x32xf32> to vector<2x32xf32>
    %28 = vector.extract_strided_slice %27 {offsets = [0, 0], sizes = [1, 32], strides = [1, 1]} : vector<2x32xf32> to vector<1x32xf32>
    %cst_16 = arith.constant 7.812500e-03 : f32
    %29 = vector.broadcast %cst_16 : f32 to vector<1x32xf32>
    %30 = arith.mulf %28, %29 : vector<1x32xf32>
    %31 = vector.extract_strided_slice %27 {offsets = [1, 0], sizes = [1, 32], strides = [1, 1]} : vector<2x32xf32> to vector<1x32xf32>
    %cst_17 = arith.constant 7.812500e-03 : f32
    %32 = vector.broadcast %cst_17 : f32 to vector<1x32xf32>
    %33 = arith.mulf %31, %32 : vector<1x32xf32>
    %34 = arith.mulf %30, %30 : vector<1x32xf32>
    %35 = arith.subf %33, %34 : vector<1x32xf32>
    %c0_18 = arith.constant 0 : index
    %c0_19 = arith.constant 0 : index
    %36 = vector.load %arg8[%c0_18, %c0_19] : memref<1x32xf32, #tpu.memory_space<vmem>>, vector<1x32xf32>
    %cst_20 = arith.constant 9.99999974E-6 : f32
    %37 = vector.broadcast %cst_20 : f32 to vector<1x32xf32>
    %38 = arith.addf %35, %37 : vector<1x32xf32>
    %39 = math.rsqrt %38 : vector<1x32xf32>
    %40 = arith.mulf %36, %39 : vector<1x32xf32>
    %c0_21 = arith.constant 0 : index
    %c0_22 = arith.constant 0 : index
    %41 = vector.load %arg9[%c0_21, %c0_22] : memref<1x32xf32, #tpu.memory_space<vmem>>, vector<1x32xf32>
    %42 = arith.mulf %30, %40 : vector<1x32xf32>
    %43 = arith.subf %41, %42 : vector<1x32xf32>
    %c0_23 = arith.constant 0 : index
    %c0_24 = arith.constant 0 : index
    %44 = vector.load %arg1[%c0_23, %c0_24] : memref<128x4xbf16, #tpu.memory_space<vmem>>, vector<128x4xbf16>
    %c0_25 = arith.constant 0 : index
    %c0_26 = arith.constant 0 : index
    %45 = vector.load %arg3[%c0_25, %c0_26] : memref<4x32xbf16, #tpu.memory_space<vmem>>, vector<4x32xbf16>
    %cst_27 = arith.constant dense<0.000000e+00> : vector<128x32xf32>
    %46 = tpu.matmul %44, %45, %cst_27 {dimension_numbers = #tpu.dot_dimension_numbers<[1], [0], [0], [1], [0, 0, 1, 1], [], []>} : vector<128x4xbf16>, vector<4x32xbf16>, vector<128x32xf32> -> vector<128x32xf32>
    %47 = vector.broadcast %40 : vector<1x32xf32> to vector<128x32xf32>
    %48 = arith.mulf %46, %47 : vector<128x32xf32>
    %49 = arith.addf %25, %48 : vector<128x32xf32>
    %50 = vector.broadcast %43 : vector<1x32xf32> to vector<128x32xf32>
    %51 = arith.addf %49, %50 : vector<128x32xf32>
    %cst_28 = arith.constant 0.000000e+00 : f32
    %52 = vector.broadcast %cst_28 : f32 to vector<128x32xf32>
    %53 = arith.maximumf %51, %52 : vector<128x32xf32>
    %54 = arith.truncf %53 : vector<128x32xf32> to vector<128x32xbf16>
    %c0_29 = arith.constant 0 : index
    %c0_30 = arith.constant 0 : index
    %55 = vector.load %arg10[%c0_29, %c0_30] : memref<128x32xbf16, #tpu.memory_space<vmem>>, vector<128x32xbf16>
    tpu.vector_store %arg10[%c0_29, %c0_30], %54 {strides = array<i32>} : memref<128x32xbf16, #tpu.memory_space<vmem>>, vector<128x32xbf16>,
    return
  }
  func.func @transform_0(%arg0: i32) -> (i32, i32) {
    %c0_i32 = arith.constant 0 : i32
    %c0_i32_0 = arith.constant 0 : i32
    return %arg0, %c0_i32 : i32, i32
  }
  func.func @transform_1(%arg0: i32) -> (i32, i32) {
    %c0_i32 = arith.constant 0 : i32
    %c0_i32_0 = arith.constant 0 : i32
    return %arg0, %c0_i32 : i32, i32
  }
  func.func @transform_2(%arg0: i32) -> (i32, i32) {
    %c0_i32 = arith.constant 0 : i32
    %c0_i32_0 = arith.constant 0 : i32
    %c0_i32_1 = arith.constant 0 : i32
    return %c0_i32, %c0_i32_0 : i32, i32
  }
  func.func @transform_3(%arg0: i32) -> (i32, i32, i32) {
    %c0_i32 = arith.constant 0 : i32
    %c0_i32_0 = arith.constant 0 : i32
    %c0_i32_1 = arith.constant 0 : i32
    %c0_i32_2 = arith.constant 0 : i32
    return %c0_i32, %c0_i32_0, %c0_i32_1 : i32, i32, i32
  }
  func.func @transform_4(%arg0: i32) -> (i32, i32) {
    %c0_i32 = arith.constant 0 : i32
    %c0_i32_0 = arith.constant 0 : i32
    %c0_i32_1 = arith.constant 0 : i32
    return %c0_i32, %c0_i32_0 : i32, i32
  }
  func.func @transform_5(%arg0: i32) -> (i32, i32) {
    %c0_i32 = arith.constant 0 : i32
    %c0_i32_0 = arith.constant 0 : i32
    %c0_i32_1 = arith.constant 0 : i32
    return %c0_i32, %c0_i32_0 : i32, i32
  }
  func.func @transform_6(%arg0: i32) -> (i32, i32, i32) {
    %c0_i32 = arith.constant 0 : i32
    %c0_i32_0 = arith.constant 0 : i32
    %c0_i32_1 = arith.constant 0 : i32
    %c0_i32_2 = arith.constant 0 : i32
    return %c0_i32, %c0_i32_0, %c0_i32_1 : i32, i32, i32
  }
  func.func @transform_7(%arg0: i32) -> (i32, i32) {
    %c0_i32 = arith.constant 0 : i32
    %c0_i32_0 = arith.constant 0 : i32
    %c0_i32_1 = arith.constant 0 : i32
    return %c0_i32, %c0_i32_0 : i32, i32
  }
  func.func @transform_8(%arg0: i32) -> (i32, i32) {
    %c0_i32 = arith.constant 0 : i32
    %c0_i32_0 = arith.constant 0 : i32
    %c0_i32_1 = arith.constant 0 : i32
    return %c0_i32, %c0_i32_0 : i32, i32
  }
  func.func @transform_9(%arg0: i32) -> (i32, i32) {
    %c0_i32 = arith.constant 0 : i32
    %c0_i32_0 = arith.constant 0 : i32
    return %arg0, %c0_i32 : i32, i32
  }
}

module attributes {stable_mosaic.version = 11 : i64} {
  func.func @head_kernel(%arg0: memref<128x32xbf16, #tpu.memory_space<vmem>>, %arg1: memref<1x2x32xf32, #tpu.memory_space<vmem>>, %arg2: memref<1x32xf32, #tpu.memory_space<vmem>>, %arg3: memref<1x32xf32, #tpu.memory_space<vmem>>, %arg4: memref<32x5xbf16, #tpu.memory_space<vmem>>, %arg5: memref<1x5xf32, #tpu.memory_space<vmem>>, %arg6: memref<2x5xf32, #tpu.memory_space<vmem>>) attributes {dimension_semantics = [], scalar_prefetch = 0 : i64, scratch_operands = 0 : i64, tpu.core_type = #tpu.core_type<tc>} {
    %c0 = arith.constant 0 : index
    %c0_0 = arith.constant 0 : index
    %0 = vector.load %arg0[%c0, %c0_0] : memref<128x32xbf16, #tpu.memory_space<vmem>>, vector<128x32xbf16>
    %1 = arith.extf %0 : vector<128x32xbf16> to vector<128x32xf32>
    %2 = vector.shape_cast %1 : vector<128x32xf32> to vector<2x64x32xf32>
    %cst = arith.constant dense<0.000000e+00> : vector<2x32xf32>
    %3 = vector.multi_reduction <add>, %2, %cst [1] : vector<2x64x32xf32> to vector<2x32xf32>
    %cst_1 = arith.constant 1.562500e-02 : f32
    %4 = vector.broadcast %cst_1 : f32 to vector<2x32xf32>
    %5 = arith.mulf %3, %4 : vector<2x32xf32>
    %6 = arith.truncf %5 : vector<2x32xf32> to vector<2x32xbf16>
    %c0_2 = arith.constant 0 : index
    %c0_3 = arith.constant 0 : index
    %7 = vector.load %arg4[%c0_2, %c0_3] : memref<32x5xbf16, #tpu.memory_space<vmem>>, vector<32x5xbf16>
    %cst_4 = arith.constant dense<0.000000e+00> : vector<2x5xf32>
    %8 = tpu.matmul %6, %7, %cst_4 {dimension_numbers = #tpu.dot_dimension_numbers<[1], [0], [0], [1], [0, 0, 1, 1], [], []>} : vector<2x32xbf16>, vector<32x5xbf16>, vector<2x5xf32> -> vector<2x5xf32>
    %c0_5 = arith.constant 0 : index
    %c0_6 = arith.constant 0 : index
    %9 = vector.load %arg5[%c0_5, %c0_6] : memref<1x5xf32, #tpu.memory_space<vmem>>, vector<1x5xf32>
    %10 = vector.broadcast %9 : vector<1x5xf32> to vector<2x5xf32>
    %11 = arith.addf %8, %10 : vector<2x5xf32>
    %cst_7 = arith.constant dense<0xFF800000> : vector<2xf32>
    %12 = vector.multi_reduction <maximumf>, %11, %cst_7 [1] : vector<2x5xf32> to vector<2xf32>
    %13 = vector.shape_cast %12 : vector<2xf32> to vector<2x1xf32>
    %14 = vector.broadcast %13 : vector<2x1xf32> to vector<2x5xf32>
    %15 = arith.subf %11, %14 : vector<2x5xf32>
    %16 = math.exp %15 : vector<2x5xf32>
    %cst_8 = arith.constant dense<0.000000e+00> : vector<2xf32>
    %17 = vector.multi_reduction <add>, %16, %cst_8 [1] : vector<2x5xf32> to vector<2xf32>
    %18 = vector.shape_cast %17 : vector<2xf32> to vector<2x1xf32>
    %19 = vector.broadcast %18 : vector<2x1xf32> to vector<2x5xf32>
    %20 = arith.divf %16, %19 : vector<2x5xf32>
    %c0_9 = arith.constant 0 : index
    %c0_10 = arith.constant 0 : index
    %21 = vector.load %arg6[%c0_9, %c0_10] : memref<2x5xf32, #tpu.memory_space<vmem>>, vector<2x5xf32>
    tpu.vector_store %arg6[%c0_9, %c0_10], %20 {strides = array<i32>} : memref<2x5xf32, #tpu.memory_space<vmem>>, vector<2x5xf32>,
    return
  }
}

</mosaic_0001>

<llo_original>
// kernel: inception_model_forward.9
$region0: #{inception_model_forward.9}
  #allocation0 [shape = 'u32[]', space=smem, size = 0x4, offset = 0x4, fixed_abs, tag = 'smem constant byte address 0x4 - core index']
  #allocation1 [shape = 'u32[72,128]{1,0:T(1,128)}', space=vmem, size = 0x9000, scoped, tag = 'internal scratch']
  %s0 = inlined_call_operand.vmem [shape: bf16[128,4], index: 0, kind: input, shape index: {}]
  %s1 = inlined_call_operand.vmem [shape: bf16[4,32], index: 1, kind: input, shape index: {}]
  %s2 = inlined_call_operand.vmem [shape: f32[1,2,32], index: 2, kind: output, shape index: {}]
  %s3 = sld [smem:[#allocation0]]
  $region18: #{inception_model_forward.9} parent=0
    _
  %s5 = ssub.s32 1, %s3
  %s6 = scalar_select 0, %s5, %s3
  // Predicated region
  $region2: #{inception_model_forward.9} parent=0 // pred_check
    _
  $region3: #{inception_model_forward.9} parent=0 // pred_check_branch
    %8 = sbr.rel (0) target = $region5
  $region4: #{inception_model_forward.9} parent=0 // pred_region
    _
  $region5: #{inception_model_forward.9} parent=0 // pred_fallthru
    _
  // Predicated region
  $region6: #{inception_model_forward.9} parent=0 // pred_check
    _
  $region7: #{inception_model_forward.9} parent=0 // pred_check_branch
    %10 = sbr.rel (0) target = $region9
  $region8: #{inception_model_forward.9} parent=0 // pred_region
    _
  $region9: #{inception_model_forward.9} parent=0 // pred_fallthru
    _
  %v12 = vld [vmem:[%s0] sm:$0xf]
  %v13 = vld [vmem:[%s0 + $0x4] sm:$0xf]
  %v14 = vld [vmem:[%s0 + $0x8] sm:$0xf]
  %v15 = vld [vmem:[%s0 + $0xc] sm:$0xf]
  %v16 = vld [vmem:[%s0 + $0x10] sm:$0xf]
  %v17 = vld [vmem:[%s0 + $0x14] sm:$0xf]
  %v18 = vld [vmem:[%s0 + $0x18] sm:$0xf]
  %v19 = vld [vmem:[%s0 + $0x1c] sm:$0xf]
  %v20 = vld [vmem:[%s0 + $0x20] sm:$0xf]
  %v21 = vld [vmem:[%s0 + $0x24] sm:$0xf]
  %v22 = vld [vmem:[%s0 + $0x28] sm:$0xf]
  %v23 = vld [vmem:[%s0 + $0x2c] sm:$0xf]
  %v24 = vld [vmem:[%s0 + $0x30] sm:$0xf]
  %v25 = vld [vmem:[%s0 + $0x34] sm:$0xf]
  %v26 = vld [vmem:[%s0 + $0x38] sm:$0xf]
  %v27 = vld [vmem:[%s0 + $0x3c] sm:$0xf]
  %v28 = vld [vmem:[%s1] sm:$0x3]
  %v45 = vunpack.c.l.b16 %v12
  %v46 = vunpack.c.l.b16 %v13
  %v47 = vunpack.c.l.b16 %v14
  %v48 = vunpack.c.l.b16 %v15
  %v49 = vunpack.c.l.b16 %v16
  %v50 = vunpack.c.l.b16 %v17
  %v51 = vunpack.c.l.b16 %v18
  %v52 = vunpack.c.l.b16 %v19
  %v53 = vunpack.c.l.b16 %v20
  %v54 = vunpack.c.l.b16 %v21
  %v55 = vunpack.c.l.b16 %v22
  %v56 = vunpack.c.l.b16 %v23
  %v57 = vunpack.c.l.b16 %v24
  %v58 = vunpack.c.l.b16 %v25
  %v59 = vunpack.c.l.b16 %v26
  %v60 = vunpack.c.l.b16 %v27
  %v61 = vpack.c.b16 %v46, %v45
  %v62 = vpack.c.b16 %v48, %v47
  %v63 = vpack.c.b16 %v50, %v49
  %v64 = vpack.c.b16 %v52, %v51
  %v65 = vpack.c.b16 %v54, %v53
  %v66 = vpack.c.b16 %v56, %v55
  %v67 = vpack.c.b16 %v58, %v57
  %v68 = vpack.c.b16 %v60, %v59
  %vm69 = vcmask 31744
  %v71 = vsel %vm69, %v61, 0
  %v74 = vsel %vm69, %v62, 0
  %v77 = vsel %vm69, %v63, 0
  %v80 = vsel %vm69, %v64, 0
  %v83 = vsel %vm69, %v65, 0
  %v86 = vsel %vm69, %v66, 0
  %v89 = vsel %vm69, %v67, 0
  %v92 = vsel %vm69, %v68, 0
  %vm94 = vcmask 1041408
  %v96 = vsel %vm94, %v28, 0
  %98 = vmatpush.bf16.msra.mxu0 0
  %99 = vmatpush.bf16.msra.mxu0 0
  %100 = vmatpush.bf16.msra.mxu0 0
  %101 = vmatpush.bf16.msra.mxu0 0
  %102 = vmatpush.bf16.msra.mxu0 0
  %103 = vmatpush.bf16.msra.mxu0 0
  %104 = vmatpush.bf16.msra.mxu0 0
  %105 = vmatpush.bf16.msra.mxu0 %v96
  %106 = vmatmul.bf16.gmra.mxu0 %v71
  %v107 = vpop.f32.mrf.mxu0
  %v108 = vadd.f32 0.0, %v107
  %v109 = vpop.f32.mrf.mxu0
  %v110 = vadd.f32 0.0, %v109
  %111 = vmatmul.bf16.gmra.mxu0 %v74
  %v112 = vpop.f32.mrf.mxu0
  %v113 = vadd.f32 0.0, %v112
  %v114 = vpop.f32.mrf.mxu0
  %v115 = vadd.f32 0.0, %v114
  %116 = vmatmul.bf16.gmra.mxu0 %v77
  %v117 = vpop.f32.mrf.mxu0
  %v118 = vadd.f32 0.0, %v117
  %v119 = vpop.f32.mrf.mxu0
  %v120 = vadd.f32 0.0, %v119
  %121 = vmatmul.bf16.gmra.mxu0 %v80
  %v122 = vpop.f32.mrf.mxu0
  %v123 = vadd.f32 0.0, %v122
  %v124 = vpop.f32.mrf.mxu0
  %v125 = vadd.f32 0.0, %v124
  %126 = vmatmul.bf16.gmra.mxu0 %v83
  %v127 = vpop.f32.mrf.mxu0
  %v128 = vadd.f32 0.0, %v127
  %v129 = vpop.f32.mrf.mxu0
  %v130 = vadd.f32 0.0, %v129
  %131 = vmatmul.bf16.gmra.mxu0 %v86
  %v132 = vpop.f32.mrf.mxu0
  %v133 = vadd.f32 0.0, %v132
  %v134 = vpop.f32.mrf.mxu0
  %v135 = vadd.f32 0.0, %v134
  %136 = vmatmul.bf16.gmra.mxu0 %v89
  %v137 = vpop.f32.mrf.mxu0
  %v138 = vadd.f32 0.0, %v137
  %v139 = vpop.f32.mrf.mxu0
  %v140 = vadd.f32 0.0, %v139
  %141 = vmatmul.bf16.gmra.mxu0 %v92
  %v142 = vpop.f32.mrf.mxu0
  %v143 = vadd.f32 0.0, %v142
  %v144 = vpop.f32.mrf.mxu0
  %v145 = vadd.f32 0.0, %v144
  %146 = vdwg.mxu0
  %vm147 = vcmask 261120
  %v148 = vsel %vm147, %v108, 0.0
  %v149 = vsel %vm147, %v110, 0.0
  %v150 = vadd.f32 %v148, %v149
  %v151 = vsel %vm147, %v113, 0.0
  %v152 = vadd.f32 %v150, %v151
  %v153 = vsel %vm147, %v115, 0.0
  %v154 = vadd.f32 %v152, %v153
  %v155 = vsel %vm147, %v118, 0.0
  %v156 = vadd.f32 %v154, %v155
  %v157 = vsel %vm147, %v120, 0.0
  %v158 = vadd.f32 %v156, %v157
  %v159 = vsel %vm147, %v123, 0.0
  %v160 = vadd.f32 %v158, %v159
  %v161 = vsel %vm147, %v125, 0.0
  %v162 = vadd.f32 %v160, %v161
  %v163 = vsel %vm147, %v128, 0.0
  %v164 = vadd.f32 %v162, %v163
  %v165 = vsel %vm147, %v130, 0.0
  %v166 = vadd.f32 %v164, %v165
  %v167 = vsel %vm147, %v133, 0.0
  %v168 = vadd.f32 %v166, %v167
  %v169 = vsel %vm147, %v135, 0.0
  %v170 = vadd.f32 %v168, %v169
  %v171 = vsel %vm147, %v138, 0.0
  %v172 = vadd.f32 %v170, %v171
  %v173 = vsel %vm147, %v140, 0.0
  %v174 = vadd.f32 %v172, %v173
  %v175 = vsel %vm147, %v143, 0.0
  %v176 = vadd.f32 %v174, %v175
  %v177 = vsel %vm147, %v145, 0.0
  %v178 = vadd.f32 %v176, %v177
  %v179 = vrot.slane %v178, 4
  %v180 = vadd.f32 %v178, %v179
  %v181 = vrot.slane %v180, 2
  %v182 = vadd.f32 %v180, %v181
  %v183 = vrot.slane %v182, 1
  %v184 = vadd.f32 %v182, %v183
  %v185 = vmul.f32 %v108, %v108
  %v186 = vmul.f32 %v110, %v110
  %v187 = vmul.f32 %v113, %v113
  %v188 = vmul.f32 %v115, %v115
  %v189 = vmul.f32 %v118, %v118
  %v190 = vmul.f32 %v120, %v120
  %v191 = vmul.f32 %v123, %v123
  %v192 = vmul.f32 %v125, %v125
  %v193 = vmul.f32 %v128, %v128
  %v194 = vmul.f32 %v130, %v130
  %v195 = vmul.f32 %v133, %v133
  %v196 = vmul.f32 %v135, %v135
  %v197 = vmul.f32 %v138, %v138
  %v198 = vmul.f32 %v140, %v140
  %v199 = vmul.f32 %v143, %v143
  %v200 = vmul.f32 %v145, %v145
  %v201 = vsel %vm147, %v185, 0.0
  %v202 = vsel %vm147, %v186, 0.0
  %v203 = vadd.f32 %v201, %v202
  %v204 = vsel %vm147, %v187, 0.0
  %v205 = vadd.f32 %v203, %v204
  %v206 = vsel %vm147, %v188, 0.0
  %v207 = vadd.f32 %v205, %v206
  %v208 = vsel %vm147, %v189, 0.0
  %v209 = vadd.f32 %v207, %v208
  %v210 = vsel %vm147, %v190, 0.0
  %v211 = vadd.f32 %v209, %v210
  %v212 = vsel %vm147, %v191, 0.0
  %v213 = vadd.f32 %v211, %v212
  %v214 = vsel %vm147, %v192, 0.0
  %v215 = vadd.f32 %v213, %v214
  %v216 = vsel %vm147, %v193, 0.0
  %v217 = vadd.f32 %v215, %v216
  %v218 = vsel %vm147, %v194, 0.0
  %v219 = vadd.f32 %v217, %v218
  %v220 = vsel %vm147, %v195, 0.0
  %v221 = vadd.f32 %v219, %v220
  %v222 = vsel %vm147, %v196, 0.0
  %v223 = vadd.f32 %v221, %v222
  %v224 = vsel %vm147, %v197, 0.0
  %v225 = vadd.f32 %v223, %v224
  %v226 = vsel %vm147, %v198, 0.0
  %v227 = vadd.f32 %v225, %v226
  %v228 = vsel %vm147, %v199, 0.0
  %v229 = vadd.f32 %v227, %v228
  %v230 = vsel %vm147, %v200, 0.0
  %v231 = vadd.f32 %v229, %v230
  %v232 = vrot.slane %v231, 4
  %v233 = vadd.f32 %v231, %v232
  %v234 = vrot.slane %v233, 2
  %v235 = vadd.f32 %v233, %v234
  %v236 = vrot.slane %v235, 1
  %v237 = vadd.f32 %v235, %v236
  %vm238 = vcmask 1040384
  %v239 = vsel %vm238, %v184, %v237
  %vm240 = vcmask 254976
  %241 = vst.msk [vmem:[%s2] sm:$0x3] %vm240, %v239
  // Predicated region
  $region10: #{inception_model_forward.9} parent=0 // pred_check
    _
  $region11: #{inception_model_forward.9} parent=0 // pred_check_branch
    %243 = sbr.rel (0) target = $region13
  $region12: #{inception_model_forward.9} parent=0 // pred_region
    _
  $region13: #{inception_model_forward.9} parent=0 // pred_fallthru
    _
  // Predicated region
  $region14: #{inception_model_forward.9} parent=0 // pred_check
    _
  $region15: #{inception_model_forward.9} parent=0 // pred_check_branch
    %245 = sbr.rel (0) target = $region17
  $region16: #{inception_model_forward.9} parent=0 // pred_region
    _
  $region17: #{inception_model_forward.9} parent=0 // pred_fallthru
    _

// kernel: inception_model_forward.10
$region0: #{inception_model_forward.10}
  #allocation0 [shape = 'u32[]', space=smem, size = 0x4, offset = 0x4, fixed_abs, tag = 'smem constant byte address 0x4 - core index']
  #allocation1 [shape = 'u32[72,128]{1,0:T(1,128)}', space=vmem, size = 0x9000, scoped, tag = 'internal scratch']
  %s0 = inlined_call_operand.vmem [shape: bf16[128,4], index: 0, kind: input, shape index: {}]
  %s1 = inlined_call_operand.vmem [shape: bf16[128,32], index: 1, kind: input, shape index: {}]
  %s2 = inlined_call_operand.vmem [shape: bf16[4,32], index: 2, kind: input, shape index: {}]
  %s3 = inlined_call_operand.vmem [shape: f32[2,2,32], index: 3, kind: input, shape index: {}]
  %s4 = inlined_call_operand.vmem [shape: f32[1,32], index: 4, kind: input, shape index: {}]
  %s5 = inlined_call_operand.vmem [shape: f32[1,32], index: 5, kind: input, shape index: {}]
  %s6 = inlined_call_operand.vmem [shape: f32[1,2,32], index: 6, kind: input, shape index: {}]
  %s7 = inlined_call_operand.vmem [shape: f32[1,32], index: 7, kind: input, shape index: {}]
  %s8 = inlined_call_operand.vmem [shape: f32[1,32], index: 8, kind: input, shape index: {}]
  %s9 = inlined_call_operand.vmem [shape: bf16[128,32], index: 9, kind: output, shape index: {}]
  %s10 = sld [smem:[#allocation0]]
  $region46: #{inception_model_forward.10} parent=0
    _
  %s12 = ssub.s32 1, %s10
  %s13 = scalar_select 0, %s12, %s10
  // Predicated region
  $region2: #{inception_model_forward.10} parent=0 // pred_check
    _
  $region3: #{inception_model_forward.10} parent=0 // pred_check_branch
    %15 = sbr.rel (0) target = $region5
  $region4: #{inception_model_forward.10} parent=0 // pred_region
    _
  $region5: #{inception_model_forward.10} parent=0 // pred_fallthru
    _
  // Predicated region
  $region6: #{inception_model_forward.10} parent=0 // pred_check
    _
  $region7: #{inception_model_forward.10} parent=0 // pred_check_branch
    %17 = sbr.rel (0) target = $region9
  $region8: #{inception_model_forward.10} parent=0 // pred_region
    _
  $region9: #{inception_model_forward.10} parent=0 // pred_fallthru
    _
  // Predicated region
  $region10: #{inception_model_forward.10} parent=0 // pred_check
    _
  $region11: #{inception_model_forward.10} parent=0 // pred_check_branch
    %19 = sbr.rel (0) target = $region13
  $region12: #{inception_model_forward.10} parent=0 // pred_region
    _
  $region13: #{inception_model_forward.10} parent=0 // pred_fallthru
    _
  // Predicated region
  $region14: #{inception_model_forward.10} parent=0 // pred_check
    _
  $region15: #{inception_model_forward.10} parent=0 // pred_check_branch
    %21 = sbr.rel (0) target = $region17
  $region16: #{inception_model_forward.10} parent=0 // pred_region
    _
  $region17: #{inception_model_forward.10} parent=0 // pred_fallthru
    _
  // Predicated region
  $region18: #{inception_model_forward.10} parent=0 // pred_check
    _
  $region19: #{inception_model_forward.10} parent=0 // pred_check_branch
    %23 = sbr.rel (0) target = $region21
  $region20: #{inception_model_forward.10} parent=0 // pred_region
    _
  $region21: #{inception_model_forward.10} parent=0 // pred_fallthru
    _
  // Predicated region
  $region22: #{inception_model_forward.10} parent=0 // pred_check
    _
  $region23: #{inception_model_forward.10} parent=0 // pred_check_branch
    %25 = sbr.rel (0) target = $region25
  $region24: #{inception_model_forward.10} parent=0 // pred_region
    _
  $region25: #{inception_model_forward.10} parent=0 // pred_fallthru
    _
  // Predicated region
  $region26: #{inception_model_forward.10} parent=0 // pred_check
    _
  $region27: #{inception_model_forward.10} parent=0 // pred_check_branch
    %27 = sbr.rel (0) target = $region29
  $region28: #{inception_model_forward.10} parent=0 // pred_region
    _
  $region29: #{inception_model_forward.10} parent=0 // pred_fallthru
    _
  // Predicated region
  $region30: #{inception_model_forward.10} parent=0 // pred_check
    _
  $region31: #{inception_model_forward.10} parent=0 // pred_check_branch
    %29 = sbr.rel (0) target = $region33
  $region32: #{inception_model_forward.10} parent=0 // pred_region
    _
  $region33: #{inception_model_forward.10} parent=0 // pred_fallthru
    _
  // Predicated region
  $region34: #{inception_model_forward.10} parent=0 // pred_check
    _
  $region35: #{inception_model_forward.10} parent=0 // pred_check_branch
    %31 = sbr.rel (0) target = $region37
  $region36: #{inception_model_forward.10} parent=0 // pred_region
    _
  $region37: #{inception_model_forward.10} parent=0 // pred_fallthru
    _
  %v33 = vld [vmem:[%s3] sm:$0x3]
  %v34 = vld [vmem:[%s3 + $0x2] sm:$0x3]
  %vm35 = vcmask 254976
  %v36 = vsel %vm35, %v33, 0.0
  %v37 = vsel %vm35, %v34, 0.0
  %v38 = vadd.f32 %v36, %v37
  %v39 = vmul.f32 %v38, 0.0078125
  %v40 = vmul.f32 %v39, %v39
  %v42 = vrot.slane %v40, 7
  %v44 = vsub.f32 %v39, %v42
  %v45 = vld [vmem:[%s4] sm:$0x1]
  %v46 = vadd.f32 %v44, 1e-05
  %v47 = vrsqrt.pop %v46
  %v48 = vmul.f32 %v47, %v46
  %v49 = vmul.f32 %v48, %v47
  %v50 = vmul.f32 0.5, %v49
  %v51 = vsub.f32 1.5, %v50
  %v52 = vmul.f32 %v47, %v51
  %vm53 = vweird.f32 %v46
  %vm54 = vweird.f32 %v47
  %vm55 = vmor %vm53, %vm54
  %v56 = vsel %vm55, %v47, %v52
  %58 = vst [vmem:[#allocation1] sm:$0xff] %v56
  %s59 = scalar_lea.vmem [#allocation1], 1
  %v60 = vld [vmem:[%s59] ss:$9 sm:$0xff]
  %v62 = vmul.f32 %v45, %v60
  %v63 = vld [vmem:[%s5] sm:$0x1]
  %v64 = vmul.f32 %v39, %v62
  %v65 = vsub.f32 %v63, %v64
  %v66 = vld [vmem:[%s1] sm:$0xf]
  %v67 = vld [vmem:[%s1 + $0x4] sm:$0xf]
  %v68 = vld [vmem:[%s1 + $0x8] sm:$0xf]
  %v69 = vld [vmem:[%s1 + $0xc] sm:$0xf]
  %v70 = vld [vmem:[%s1 + $0x10] sm:$0xf]
  %v71 = vld [vmem:[%s1 + $0x14] sm:$0xf]
  %v72 = vld [vmem:[%s1 + $0x18] sm:$0xf]
  %v73 = vld [vmem:[%s1 + $0x1c] sm:$0xf]
  %v74 = vld [vmem:[%s1 + $0x20] sm:$0xf]
  %v75 = vld [vmem:[%s1 + $0x24] sm:$0xf]
  %v76 = vld [vmem:[%s1 + $0x28] sm:$0xf]
  %v77 = vld [vmem:[%s1 + $0x2c] sm:$0xf]
  %v78 = vld [vmem:[%s1 + $0x30] sm:$0xf]
  %v79 = vld [vmem:[%s1 + $0x34] sm:$0xf]
  %v80 = vld [vmem:[%s1 + $0x38] sm:$0xf]
  %v81 = vld [vmem:[%s1 + $0x3c] sm:$0xf]
  %v82 = vunpack.c.l.bf16 %v66
  %v83 = vunpack.c.l.bf16 %v67
  %v84 = vunpack.c.l.bf16 %v68
  %v85 = vunpack.c.l.bf16 %v69
  %v86 = vunpack.c.l.bf16 %v70
  %v87 = vunpack.c.l.bf16 %v71
  %v88 = vunpack.c.l.bf16 %v72
  %v89 = vunpack.c.l.bf16 %v73
  %v90 = vunpack.c.l.bf16 %v74
  %v91 = vunpack.c.l.bf16 %v75
  %v92 = vunpack.c.l.bf16 %v76
  %v93 = vunpack.c.l.bf16 %v77
  %v94 = vunpack.c.l.bf16 %v78
  %v95 = vunpack.c.l.bf16 %v79
  %v96 = vunpack.c.l.bf16 %v80
  %v97 = vunpack.c.l.bf16 %v81
  %v99 = vperm.slane %v62, 0
  %v101 = vmul.f32 %v82, %v99
  %v102 = vmul.f32 %v83, %v99
  %v103 = vmul.f32 %v84, %v99
  %v104 = vmul.f32 %v85, %v99
  %v105 = vmul.f32 %v86, %v99
  %v106 = vmul.f32 %v87, %v99
  %v107 = vmul.f32 %v88, %v99
  %v108 = vmul.f32 %v89, %v99
  %v109 = vmul.f32 %v90, %v99
  %v110 = vmul.f32 %v91, %v99
  %v111 = vmul.f32 %v92, %v99
  %v112 = vmul.f32 %v93, %v99
  %v113 = vmul.f32 %v94, %v99
  %v114 = vmul.f32 %v95, %v99
  %v115 = vmul.f32 %v96, %v99
  %v116 = vmul.f32 %v97, %v99
  %v118 = vperm.slane %v65, 0
  %v120 = vadd.f32 %v101, %v118
  %v121 = vadd.f32 %v102, %v118
  %v122 = vadd.f32 %v103, %v118
  %v123 = vadd.f32 %v104, %v118
  %v124 = vadd.f32 %v105, %v118
  %v125 = vadd.f32 %v106, %v118
  %v126 = vadd.f32 %v107, %v118
  %v127 = vadd.f32 %v108, %v118
  %v128 = vadd.f32 %v109, %v118
  %v129 = vadd.f32 %v110, %v118
  %v130 = vadd.f32 %v111, %v118
  %v131 = vadd.f32 %v112, %v118
  %v132 = vadd.f32 %v113, %v118
  %v133 = vadd.f32 %v114, %v118
  %v134 = vadd.f32 %v115, %v118
  %v135 = vadd.f32 %v116, %v118
  %v136 = vmax.f32 %v120, 0.0
  %v137 = vmax.f32 %v121, 0.0
  %v138 = vmax.f32 %v122, 0.0
  %v139 = vmax.f32 %v123, 0.0
  %v140 = vmax.f32 %v124, 0.0
  %v141 = vmax.f32 %v125, 0.0
  %v142 = vmax.f32 %v126, 0.0
  %v143 = vmax.f32 %v127, 0.0
  %v144 = vmax.f32 %v128, 0.0
  %v145 = vmax.f32 %v129, 0.0
  %v146 = vmax.f32 %v130, 0.0
  %v147 = vmax.f32 %v131, 0.0
  %v148 = vmax.f32 %v132, 0.0
  %v149 = vmax.f32 %v133, 0.0
  %v150 = vmax.f32 %v134, 0.0
  %v151 = vmax.f32 %v135, 0.0
  %v152 = vld [vmem:[%s6] sm:$0x3]
  %v153 = vadd.f32 %v152, 0.0
  %v154 = vmul.f32 %v153, 0.0078125
  %v155 = vmul.f32 %v154, %v154
  %v157 = vrot.slane %v155, 7
  %v159 = vsub.f32 %v154, %v157
  %v160 = vld [vmem:[%s7] sm:$0x1]
  %v161 = vadd.f32 %v159, 1e-05
  %v162 = vrsqrt.pop %v161
  %v163 = vmul.f32 %v162, %v161
  %v164 = vmul.f32 %v163, %v162
  %v165 = vmul.f32 0.5, %v164
  %v166 = vsub.f32 1.5, %v165
  %v167 = vmul.f32 %v162, %v166
  %vm168 = vweird.f32 %v161
  %vm169 = vweird.f32 %v162
  %vm170 = vmor %vm168, %vm169
  %v171 = vsel %vm170, %v162, %v167
  %173 = vst [vmem:[#allocation1] sm:$0xff] %v171
  %s174 = scalar_lea.vmem [#allocation1], 1
  %v175 = vld [vmem:[%s174] ss:$9 sm:$0xff]
  %v177 = vmul.f32 %v160, %v175
  %v178 = vld [vmem:[%s8] sm:$0x1]
  %v179 = vmul.f32 %v154, %v177
  %v180 = vsub.f32 %v178, %v179
  %v181 = vld [vmem:[%s0] sm:$0xf]
  %v182 = vld [vmem:[%s0 + $0x4] sm:$0xf]
  %v183 = vld [vmem:[%s0 + $0x8] sm:$0xf]
  %v184 = vld [vmem:[%s0 + $0xc] sm:$0xf]
  %v185 = vld [vmem:[%s0 + $0x10] sm:$0xf]
  %v186 = vld [vmem:[%s0 + $0x14] sm:$0xf]
  %v187 = vld [vmem:[%s0 + $0x18] sm:$0xf]
  %v188 = vld [vmem:[%s0 + $0x1c] sm:$0xf]
  %v189 = vld [vmem:[%s0 + $0x20] sm:$0xf]
  %v190 = vld [vmem:[%s0 + $0x24] sm:$0xf]
  %v191 = vld [vmem:[%s0 + $0x28] sm:$0xf]
  %v192 = vld [vmem:[%s0 + $0x2c] sm:$0xf]
  %v193 = vld [vmem:[%s0 + $0x30] sm:$0xf]
  %v194 = vld [vmem:[%s0 + $0x34] sm:$0xf]
  %v195 = vld [vmem:[%s0 + $0x38] sm:$0xf]
  %v196 = vld [vmem:[%s0 + $0x3c] sm:$0xf]
  %v197 = vld [vmem:[%s2] sm:$0x3]
  %v214 = vunpack.c.l.b16 %v181
  %v215 = vunpack.c.l.b16 %v182
  %v216 = vunpack.c.l.b16 %v183
  %v217 = vunpack.c.l.b16 %v184
  %v218 = vunpack.c.l.b16 %v185
  %v219 = vunpack.c.l.b16 %v186
  %v220 = vunpack.c.l.b16 %v187
  %v221 = vunpack.c.l.b16 %v188
  %v222 = vunpack.c.l.b16 %v189
  %v223 = vunpack.c.l.b16 %v190
  %v224 = vunpack.c.l.b16 %v191
  %v225 = vunpack.c.l.b16 %v192
  %v226 = vunpack.c.l.b16 %v193
  %v227 = vunpack.c.l.b16 %v194
  %v228 = vunpack.c.l.b16 %v195
  %v229 = vunpack.c.l.b16 %v196
  %v230 = vpack.c.b16 %v215, %v214
  %v231 = vpack.c.b16 %v217, %v216
  %v232 = vpack.c.b16 %v219, %v218
  %v233 = vpack.c.b16 %v221, %v220
  %v234 = vpack.c.b16 %v223, %v222
  %v235 = vpack.c.b16 %v225, %v224
  %v236 = vpack.c.b16 %v227, %v226
  %v237 = vpack.c.b16 %v229, %v228
  %vm238 = vcmask 31744
  %v240 = vsel %vm238, %v230, 0
  %v243 = vsel %vm238, %v231, 0
  %v246 = vsel %vm238, %v232, 0
  %v249 = vsel %vm238, %v233, 0
  %v252 = vsel %vm238, %v234, 0
  %v255 = vsel %vm238, %v235, 0
  %v258 = vsel %vm238, %v236, 0
  %v261 = vsel %vm238, %v237, 0
  %vm263 = vcmask 1041408
  %v265 = vsel %vm263, %v197, 0
  %267 = vmatpush.bf16.msra.mxu0 0
  %268 = vmatpush.bf16.msra.mxu0 0
  %269 = vmatpush.bf16.msra.mxu0 0
  %270 = vmatpush.bf16.msra.mxu0 0
  %271 = vmatpush.bf16.msra.mxu0 0
  %272 = vmatpush.bf16.msra.mxu0 0
  %273 = vmatpush.bf16.msra.mxu0 0
  %274 = vmatpush.bf16.msra.mxu0 %v265
  %275 = vmatmul.bf16.gmra.mxu0 %v240
  %v276 = vpop.f32.mrf.mxu0
  %v277 = vadd.f32 0.0, %v276
  %v278 = vpop.f32.mrf.mxu0
  %v279 = vadd.f32 0.0, %v278
  %280 = vmatmul.bf16.gmra.mxu0 %v243
  %v281 = vpop.f32.mrf.mxu0
  %v282 = vadd.f32 0.0, %v281
  %v283 = vpop.f32.mrf.mxu0
  %v284 = vadd.f32 0.0, %v283
  %285 = vmatmul.bf16.gmra.mxu0 %v246
  %v286 = vpop.f32.mrf.mxu0
  %v287 = vadd.f32 0.0, %v286
  %v288 = vpop.f32.mrf.mxu0
  %v289 = vadd.f32 0.0, %v288
  %290 = vmatmul.bf16.gmra.mxu0 %v249
  %v291 = vpop.f32.mrf.mxu0
  %v292 = vadd.f32 0.0, %v291
  %v293 = vpop.f32.mrf.mxu0
  %v294 = vadd.f32 0.0, %v293
  %295 = vmatmul.bf16.gmra.mxu0 %v252
  %v296 = vpop.f32.mrf.mxu0
  %v297 = vadd.f32 0.0, %v296
  %v298 = vpop.f32.mrf.mxu0
  %v299 = vadd.f32 0.0, %v298
  %300 = vmatmul.bf16.gmra.mxu0 %v255
  %v301 = vpop.f32.mrf.mxu0
  %v302 = vadd.f32 0.0, %v301
  %v303 = vpop.f32.mrf.mxu0
  %v304 = vadd.f32 0.0, %v303
  %305 = vmatmul.bf16.gmra.mxu0 %v258
  %v306 = vpop.f32.mrf.mxu0
  %v307 = vadd.f32 0.0, %v306
  %v308 = vpop.f32.mrf.mxu0
  %v309 = vadd.f32 0.0, %v308
  %310 = vmatmul.bf16.gmra.mxu0 %v261
  %v311 = vpop.f32.mrf.mxu0
  %v312 = vadd.f32 0.0, %v311
  %v313 = vpop.f32.mrf.mxu0
  %v314 = vadd.f32 0.0, %v313
  %315 = vdwg.mxu0
  %v317 = vperm.slane %v177, 0
  %v319 = vmul.f32 %v277, %v317
  %v320 = vmul.f32 %v279, %v317
  %v321 = vmul.f32 %v282, %v317
  %v322 = vmul.f32 %v284, %v317
  %v323 = vmul.f32 %v287, %v317
  %v324 = vmul.f32 %v289, %v317
  %v325 = vmul.f32 %v292, %v317
  %v326 = vmul.f32 %v294, %v317
  %v327 = vmul.f32 %v297, %v317
  %v328 = vmul.f32 %v299, %v317
  %v329 = vmul.f32 %v302, %v317
  %v330 = vmul.f32 %v304, %v317
  %v331 = vmul.f32 %v307, %v317
  %v332 = vmul.f32 %v309, %v317
  %v333 = vmul.f32 %v312, %v317
  %v334 = vmul.f32 %v314, %v317
  %v335 = vadd.f32 %v136, %v319
  %v336 = vadd.f32 %v137, %v320
  %v337 = vadd.f32 %v138, %v321
  %v338 = vadd.f32 %v139, %v322
  %v339 = vadd.f32 %v140, %v323
  %v340 = vadd.f32 %v141, %v324
  %v341 = vadd.f32 %v142, %v325
  %v342 = vadd.f32 %v143, %v326
  %v343 = vadd.f32 %v144, %v327
  %v344 = vadd.f32 %v145, %v328
  %v345 = vadd.f32 %v146, %v329
  %v346 = vadd.f32 %v147, %v330
  %v347 = vadd.f32 %v148, %v331
  %v348 = vadd.f32 %v149, %v332
  %v349 = vadd.f32 %v150, %v333
  %v350 = vadd.f32 %v151, %v334
  %v352 = vperm.slane %v180, 0
  %v354 = vadd.f32 %v335, %v352
  %v355 = vadd.f32 %v336, %v352
  %v356 = vadd.f32 %v337, %v352
  %v357 = vadd.f32 %v338, %v352
  %v358 = vadd.f32 %v339, %v352
  %v359 = vadd.f32 %v340, %v352
  %v360 = vadd.f32 %v341, %v352
  %v361 = vadd.f32 %v342, %v352
  %v362 = vadd.f32 %v343, %v352
  %v363 = vadd.f32 %v344, %v352
  %v364 = vadd.f32 %v345, %v352
  %v365 = vadd.f32 %v346, %v352
  %v366 = vadd.f32 %v347, %v352
  %v367 = vadd.f32 %v348, %v352
  %v368 = vadd.f32 %v349, %v352
  %v369 = vadd.f32 %v350, %v352
  %v370 = vmax.f32 %v354, 0.0
  %v371 = vmax.f32 %v355, 0.0
  %v372 = vmax.f32 %v356, 0.0
  %v373 = vmax.f32 %v357, 0.0
  %v374 = vmax.f32 %v358, 0.0
  %v375 = vmax.f32 %v359, 0.0
  %v376 = vmax.f32 %v360, 0.0
  %v377 = vmax.f32 %v361, 0.0
  %v378 = vmax.f32 %v362, 0.0
  %v379 = vmax.f32 %v363, 0.0
  %v380 = vmax.f32 %v364, 0.0
  %v381 = vmax.f32 %v365, 0.0
  %v382 = vmax.f32 %v366, 0.0
  %v383 = vmax.f32 %v367, 0.0
  %v384 = vmax.f32 %v368, 0.0
  %v385 = vmax.f32 %v369, 0.0
  %v386 = vpack.c.bf16 %v370, %v370
  %v387 = vpack.c.bf16 %v371, %v371
  %v388 = vpack.c.bf16 %v372, %v372
  %v389 = vpack.c.bf16 %v373, %v373
  %v390 = vpack.c.bf16 %v374, %v374
  %v391 = vpack.c.bf16 %v375, %v375
  %v392 = vpack.c.bf16 %v376, %v376
  %v393 = vpack.c.bf16 %v377, %v377
  %v394 = vpack.c.bf16 %v378, %v378
  %v395 = vpack.c.bf16 %v379, %v379
  %v396 = vpack.c.bf16 %v380, %v380
  %v397 = vpack.c.bf16 %v381, %v381
  %v398 = vpack.c.bf16 %v382, %v382
  %v399 = vpack.c.bf16 %v383, %v383
  %v400 = vpack.c.bf16 %v384, %v384
  %v401 = vpack.c.bf16 %v385, %v385
  %vm402 = vcmask 257024
  %403 = vst.msk [vmem:[%s9] sm:$0xf] %vm402, %v386
  %404 = vst.msk [vmem:[%s9 + $0x4] sm:$0xf] %vm402, %v387
  %405 = vst.msk [vmem:[%s9 + $0x8] sm:$0xf] %vm402, %v388
  %406 = vst.msk [vmem:[%s9 + $0xc] sm:$0xf] %vm402, %v389
  %407 = vst.msk [vmem:[%s9 + $0x10] sm:$0xf] %vm402, %v390
  %408 = vst.msk [vmem:[%s9 + $0x14] sm:$0xf] %vm402, %v391
  %409 = vst.msk [vmem:[%s9 + $0x18] sm:$0xf] %vm402, %v392
  %410 = vst.msk [vmem:[%s9 + $0x1c] sm:$0xf] %vm402, %v393
  %411 = vst.msk [vmem:[%s9 + $0x20] sm:$0xf] %vm402, %v394
  %412 = vst.msk [vmem:[%s9 + $0x24] sm:$0xf] %vm402, %v395
  %413 = vst.msk [vmem:[%s9 + $0x28] sm:$0xf] %vm402, %v396
  %414 = vst.msk [vmem:[%s9 + $0x2c] sm:$0xf] %vm402, %v397
  %415 = vst.msk [vmem:[%s9 + $0x30] sm:$0xf] %vm402, %v398
  %416 = vst.msk [vmem:[%s9 + $0x34] sm:$0xf] %vm402, %v399
  %417 = vst.msk [vmem:[%s9 + $0x38] sm:$0xf] %vm402, %v400
  %418 = vst.msk [vmem:[%s9 + $0x3c] sm:$0xf] %vm402, %v401
  // Predicated region
  $region38: #{inception_model_forward.10} parent=0 // pred_check
    _
  $region39: #{inception_model_forward.10} parent=0 // pred_check_branch
    %420 = sbr.rel (0) target = $region41
  $region40: #{inception_model_forward.10} parent=0 // pred_region
    _
  $region41: #{inception_model_forward.10} parent=0 // pred_fallthru
    _
  // Predicated region
  $region42: #{inception_model_forward.10} parent=0 // pred_check
    _
  $region43: #{inception_model_forward.10} parent=0 // pred_check_branch
    %422 = sbr.rel (0) target = $region45
  $region44: #{inception_model_forward.10} parent=0 // pred_region
    _
  $region45: #{inception_model_forward.10} parent=0 // pred_fallthru
    _

// kernel: inception_model_forward.11
$region0: #{inception_model_forward.11}
  #allocation0 [shape = 'u32[]', space=smem, size = 0x4, offset = 0x4, fixed_abs, tag = 'smem constant byte address 0x4 - core index']
  #allocation1 [shape = 'u32[72,128]{1,0:T(1,128)}', space=vmem, size = 0x9000, scoped, tag = 'internal scratch']
  %s0 = inlined_call_operand.vmem [shape: bf16[128,32], index: 0, kind: input, shape index: {}]
  %s1 = inlined_call_operand.vmem [shape: f32[1,2,32], index: 1, kind: input, shape index: {}]
  %s2 = inlined_call_operand.vmem [shape: f32[1,32], index: 2, kind: input, shape index: {}]
  %s3 = inlined_call_operand.vmem [shape: f32[1,32], index: 3, kind: input, shape index: {}]
  %s4 = inlined_call_operand.vmem [shape: bf16[32,5], index: 4, kind: input, shape index: {}]
  %s5 = inlined_call_operand.vmem [shape: f32[1,5], index: 5, kind: input, shape index: {}]
  %s6 = inlined_call_operand.hbm [shape: f32[2,5], index: 6, kind: output, shape index: {}]
  %s7 = sld [smem:[#allocation0]]
  $region34: #{inception_model_forward.11} parent=0
    _
  %s9 = ssub.s32 1, %s7
  %s10 = scalar_select 0, %s9, %s7
  $region1: #{inception_model_forward.11} parent=0
    #allocation2 [shape = 'u8[1024]{0}', space=vmem, size = 0x400, scoped, tag = 'output window, operand 0, single buffered']
    #allocation3 [shape = 's32[1]{0}', space=sflag, size = 0x4, scoped, tag = 'scoped memory for inception_model_forward.11']
    %11 = vsyncpa [#allocation3], 0
    // Predicated region
    $region2: #{inception_model_forward.11} parent=1 // pred_check
      _
    $region3: #{inception_model_forward.11} parent=1 // pred_check_branch
      %13 = sbr.rel (0) target = $region5
    $region4: #{inception_model_forward.11} parent=1 // pred_region
      _
    $region5: #{inception_model_forward.11} parent=1 // pred_fallthru
      _
    // Predicated region
    $region6: #{inception_model_forward.11} parent=1 // pred_check
      _
    $region7: #{inception_model_forward.11} parent=1 // pred_check_branch
      %15 = sbr.rel (0) target = $region9
    $region8: #{inception_model_forward.11} parent=1 // pred_region
      _
    $region9: #{inception_model_forward.11} parent=1 // pred_fallthru
      _
    // Predicated region
    $region10: #{inception_model_forward.11} parent=1 // pred_check
      _
    $region11: #{inception_model_forward.11} parent=1 // pred_check_branch
      %17 = sbr.rel (0) target = $region13
    $region12: #{inception_model_forward.11} parent=1 // pred_region
      _
    $region13: #{inception_model_forward.11} parent=1 // pred_fallthru
      _
    // Predicated region
    $region14: #{inception_model_forward.11} parent=1 // pred_check
      _
    $region15: #{inception_model_forward.11} parent=1 // pred_check_branch
      %19 = sbr.rel (0) target = $region17
    $region16: #{inception_model_forward.11} parent=1 // pred_region
      _
    $region17: #{inception_model_forward.11} parent=1 // pred_fallthru
      _
    // Predicated region
    $region18: #{inception_model_forward.11} parent=1 // pred_check
      _
    $region19: #{inception_model_forward.11} parent=1 // pred_check_branch
      %21 = sbr.rel (0) target = $region21
    $region20: #{inception_model_forward.11} parent=1 // pred_region
      _
    $region21: #{inception_model_forward.11} parent=1 // pred_fallthru
      _
    // Predicated region
    $region22: #{inception_model_forward.11} parent=1 // pred_check
      _
    $region23: #{inception_model_forward.11} parent=1 // pred_check_branch
      %23 = sbr.rel (0) target = $region25
    $region24: #{inception_model_forward.11} parent=1 // pred_region
      _
    $region25: #{inception_model_forward.11} parent=1 // pred_fallthru
      _
    %v25 = vld [vmem:[%s0] sm:$0xf]
    %v26 = vld [vmem:[%s0 + $0x4] sm:$0xf]
    %v27 = vld [vmem:[%s0 + $0x8] sm:$0xf]
    %v28 = vld [vmem:[%s0 + $0xc] sm:$0xf]
    %v29 = vld [vmem:[%s0 + $0x10] sm:$0xf]
    %v30 = vld [vmem:[%s0 + $0x14] sm:$0xf]
    %v31 = vld [vmem:[%s0 + $0x18] sm:$0xf]
    %v32 = vld [vmem:[%s0 + $0x1c] sm:$0xf]
    %v33 = vld [vmem:[%s0 + $0x20] sm:$0xf]
    %v34 = vld [vmem:[%s0 + $0x24] sm:$0xf]
    %v35 = vld [vmem:[%s0 + $0x28] sm:$0xf]
    %v36 = vld [vmem:[%s0 + $0x2c] sm:$0xf]
    %v37 = vld [vmem:[%s0 + $0x30] sm:$0xf]
    %v38 = vld [vmem:[%s0 + $0x34] sm:$0xf]
    %v39 = vld [vmem:[%s0 + $0x38] sm:$0xf]
    %v40 = vld [vmem:[%s0 + $0x3c] sm:$0xf]
    %v41 = vunpack.c.l.bf16 %v25
    %v42 = vunpack.c.l.bf16 %v26
    %v43 = vunpack.c.l.bf16 %v27
    %v44 = vunpack.c.l.bf16 %v28
    %v45 = vunpack.c.l.bf16 %v29
    %v46 = vunpack.c.l.bf16 %v30
    %v47 = vunpack.c.l.bf16 %v31
    %v48 = vunpack.c.l.bf16 %v32
    %v49 = vunpack.c.l.bf16 %v33
    %v50 = vunpack.c.l.bf16 %v34
    %v51 = vunpack.c.l.bf16 %v35
    %v52 = vunpack.c.l.bf16 %v36
    %v53 = vunpack.c.l.bf16 %v37
    %v54 = vunpack.c.l.bf16 %v38
    %v55 = vunpack.c.l.bf16 %v39
    %v56 = vunpack.c.l.bf16 %v40
    %vm57 = vcmask 261120
    %v58 = vsel %vm57, %v41, 0.0
    %v59 = vsel %vm57, %v42, 0.0
    %v60 = vadd.f32 %v58, %v59
    %v61 = vsel %vm57, %v43, 0.0
    %v62 = vadd.f32 %v60, %v61
    %v63 = vsel %vm57, %v44, 0.0
    %v64 = vadd.f32 %v62, %v63
    %v65 = vsel %vm57, %v45, 0.0
    %v66 = vadd.f32 %v64, %v65
    %v67 = vsel %vm57, %v46, 0.0
    %v68 = vadd.f32 %v66, %v67
    %v69 = vsel %vm57, %v47, 0.0
    %v70 = vadd.f32 %v68, %v69
    %v71 = vsel %vm57, %v48, 0.0
    %v72 = vadd.f32 %v70, %v71
    %v73 = vrot.slane %v72, 4
    %v74 = vadd.f32 %v72, %v73
    %v75 = vrot.slane %v74, 2
    %v76 = vadd.f32 %v74, %v75
    %v77 = vrot.slane %v76, 1
    %v78 = vadd.f32 %v76, %v77
    %v79 = vsel %vm57, %v49, 0.0
    %v80 = vsel %vm57, %v50, 0.0
    %v81 = vadd.f32 %v79, %v80
    %v82 = vsel %vm57, %v51, 0.0
    %v83 = vadd.f32 %v81, %v82
    %v84 = vsel %vm57, %v52, 0.0
    %v85 = vadd.f32 %v83, %v84
    %v86 = vsel %vm57, %v53, 0.0
    %v87 = vadd.f32 %v85, %v86
    %v88 = vsel %vm57, %v54, 0.0
    %v89 = vadd.f32 %v87, %v88
    %v90 = vsel %vm57, %v55, 0.0
    %v91 = vadd.f32 %v89, %v90
    %v92 = vsel %vm57, %v56, 0.0
    %v93 = vadd.f32 %v91, %v92
    %v94 = vrot.slane %v93, 4
    %v95 = vadd.f32 %v93, %v94
    %v96 = vrot.slane %v95, 2
    %v97 = vadd.f32 %v95, %v96
    %v98 = vrot.slane %v97, 1
    %v99 = vadd.f32 %v97, %v98
    %v100 = vmul.f32 %v78, 0.015625
    %v101 = vmul.f32 %v99, 0.015625
    %v102 = vpack.c.bf16 %v100, %v100
    %v103 = vpack.c.bf16 %v101, %v101
    %v104 = vld [vmem:[%s4] sm:$0xf]
    %v105 = vld [vmem:[%s4 + $0x4] sm:$0xf]
    %v106 = vld [vmem:[%s4 + $0x8] sm:$0xf]
    %v107 = vld [vmem:[%s4 + $0xc] sm:$0xf]
    %v108 = vld [vmem:[%s5] sm:$0x1]
    %v110 = vperm.slane %v108, 0
    %v114 = vunpack.c.l.b16 %v102
    %v115 = vunpack.c.l.b16 %v103
    %vm116 = vcmask 1041409
    %v117 = vsel %vm116, %v115, %v114
    %v118 = vpack.c.b16 %v117, %v117
    %v123 = vunpack.c.l.b16 %v104
    %v124 = vunpack.c.l.b16 %v105
    %v125 = vunpack.c.l.b16 %v106
    %v126 = vunpack.c.l.b16 %v107
    %v127 = vpack.c.b16 %v124, %v123
    %v128 = vpack.c.b16 %v126, %v125
    %v132 = vsel %vm57, %v118, 0
    %134 = vmatpush.bf16.msra.mxu0 0
    %135 = vmatpush.bf16.msra.mxu0 0
    %136 = vmatpush.bf16.msra.mxu0 0
    %137 = vmatpush.bf16.msra.mxu0 0
    %138 = vmatpush.bf16.msra.mxu0 0
    %139 = vmatpush.bf16.msra.mxu0 0
    %140 = vmatpush.bf16.msra.mxu0 %v128
    %141 = vmatpush.bf16.msra.mxu0 %v127
    %142 = vmatmul.bf16.gmra.mxu0 %v132
    %v143 = vpop.f32.mrf.mxu0
    %v144 = vadd.f32 %v110, %v143
    %v145 = vpop.f32.mrf.mxu0
    %146 = vdwg.mxu0
    %vm147 = vcmask 33792
    %v148 = vsel %vm147, %v144, -inf
    %149 = vmax.xlane.f32.xlu0 %v148
    %v150 = vpop.xlane.xlu0 %149
    %v151 = vsub.f32 %v144, %v150
    %v152 = vmul.f32 %v151, 1.442695
    %v153 = vpow.pop %v152
    %v154 = vsel %vm147, %v153, 0.0
    %155 = vadd.xlane.f32.xlu0 %v154
    %v156 = vpop.xlane.xlu0 %155
    %v157 = vrcp.pop %v156
    %v158 = vmul.f32 %v156, %v157
    %v159 = vsub.f32 1.0, %v158
    %v160 = vmul.f32 %v157, %v159
    %v161 = vadd.f32 %v157, %v160
    %vm162 = vweird.f32 %v156
    %vm163 = vweird.f32 %v157
    %vm164 = vmor %vm162, %vm163
    %v165 = vsel %vm164, %v157, %v161
    %v166 = vand.u32 2147483647, %v156
    %vm167 = vcmp.eq.f32.partialorder %v166, 8.507059e+37
    %v168 = vand.u32 %v156, 2147483648
    %v169 = vor.u32 1.1754944e-38, %v168
    %v170 = vsel %vm167, %v169, %v165
    %v171 = vmul.f32 %v153, %v170
    %172 = vst.msk [vmem:[#allocation2] sm:$0x3] %vm147, %v171
    // Predicated region
    $region26: #{inception_model_forward.11} parent=1 // pred_check
      _
    $region27: #{inception_model_forward.11} parent=1 // pred_check_branch
      %174 = sbr.rel (0) target = $region29
    $region28: #{inception_model_forward.11} parent=1 // pred_region
      %176 = vsyncadd [#allocation3], 0
      %s178 = sshll.u32 [#allocation2], 4
      %s179 = int_to_ptr.vmem [resolvable:$true] %s178
      %s180 = sshll.u32 %s6, 4
      %s181 = int_to_ptr.hbm [resolvable:$true] %s180
      %183 = dma.vmem_to_hbm [thread:$0]  %s179, 32, %s181, [#allocation3]
    $region29: #{inception_model_forward.11} parent=1 // pred_fallthru
      _
    // Predicated region
    $region30: #{inception_model_forward.11} parent=1 // pred_check
      _
    $region31: #{inception_model_forward.11} parent=1 // pred_check_branch
      %185 = sbr.rel (0) target = $region33
    $region32: #{inception_model_forward.11} parent=1 // pred_region
      %187 = dma.done [#allocation3], 32
    $region33: #{inception_model_forward.11} parent=1 // pred_fallthru
      _
    %188 = vsyncpa [#allocation3], 1

// kernel: inception_model_forward.6
$region0: #{inception_model_forward.6}
  #allocation0 [shape = 'u32[]', space=smem, size = 0x4, offset = 0x4, fixed_abs, tag = 'smem constant byte address 0x4 - core index']
  #allocation1 [shape = 'u32[72,128]{1,0:T(1,128)}', space=vmem, size = 0x9000, scoped, tag = 'internal scratch']
  #allocation2 [shape = 'bf16[128,8]{1,0:T(8,128)(2,1)}', space=vmem, size = 0x8000, scoped, tag = 'scratch operand']
  %s0 = inlined_call_operand.vmem [shape: bf16[128,4], index: 0, kind: input, shape index: {}]
  %s1 = inlined_call_operand.vmem [shape: f32[1,2,4], index: 1, kind: input, shape index: {}]
  %s2 = inlined_call_operand.vmem [shape: f32[1,4], index: 2, kind: input, shape index: {}]
  %s3 = inlined_call_operand.vmem [shape: f32[1,4], index: 3, kind: input, shape index: {}]
  %s4 = inlined_call_operand.vmem [shape: bf16[4,8], index: 4, kind: input, shape index: {}]
  %s5 = inlined_call_operand.vmem [shape: bf16[320,24], index: 5, kind: input, shape index: {}]
  %s6 = inlined_call_operand.vmem [shape: bf16[4,8], index: 6, kind: input, shape index: {}]
  %s7 = inlined_call_operand.vmem [shape: bf16[128,32], index: 7, kind: output, shape index: {0}]
  %s8 = inlined_call_operand.vmem [shape: f32[2,2,32], index: 8, kind: output, shape index: {1}]
  %9 = xla_tuple %s7, %s8
  %s10 = sld [smem:[#allocation0]]
  $region69: #{inception_model_forward.6} parent=0
    _
  %s12 = ssub.s32 1, %s10
  %s13 = scalar_select 0, %s12, %s10
  loop: start=0, step=1, limit=4
  $region2: #{inception_model_forward.6} parent=0 // loop_pre_header
    _
  $region3: #{inception_model_forward.6} parent=0 // loop_header
    %s15 = sphi 0, %s19
    %p16 = scmp.ge.s32.totalorder %s15, 4
    %s25 = sphi 0, %s27
    %s28 = sphi 0, %s25
    %s29 = sphi 0, %s28
    %s45 = sphi 0, %s29
    %s49 = sphi 0, %s49
    %s51 = sphi 0, %s49
    %s52 = sphi 0, %s51
    %s66 = sphi 0, %s52
    %s70 = sphi 0, %s70
    %s72 = sphi 0, %s70
    %s73 = sphi 0, %s72
    %s87 = sphi 0, %s73
    %s91 = sphi 0, %s91
    %s93 = sphi 0, %s91
    %s94 = sphi 0, %s93
    %s108 = sphi 0, %s94
    %s112 = sphi 0, %s112
    %s114 = sphi 0, %s112
    %s115 = sphi 0, %s114
    %s129 = sphi 0, %s115
    %s133 = sphi 0, %s133
    %s135 = sphi 0, %s133
    %s136 = sphi 0, %s135
    %s150 = sphi 0, %s136
    %s154 = sphi 0, %s154
    %s156 = sphi 0, %s154
    %s157 = sphi 0, %s156
    %s171 = sphi 0, %s157
    %s177 = sphi 0, %s179
    %s180 = sphi 0, %s177
    %s181 = sphi 0, %s180
    %s197 = sphi 0, %s181
    %s203 = sphi 0, %s205
    %s206 = sphi 0, %s203
    %s207 = sphi 0, %s206
    %s223 = sphi 0, %s207
  $region4: #{inception_model_forward.6} parent=0 // loop_header_branch
    %18 = sbr.rel (%p16) target = $region8
  $region5: #{inception_model_forward.6} parent=0 // loop_body
    %s20 = ssub.s32 %s15, 1
    %s21 = ssub.s32 %s15, 2
    %s22 = sadd.s32 %s15, 1
    %s23 = ssub.s32 %s15, %s22
    %p24 = scmp.eq.s32.totalorder %s23, 0
    %s26 = sadd.s32 %s25, 1
    %s27 = scalar_select %p24, %s25, %s26
    %p30 = pneg %p24
    %p31 = scmp.eq.s32.totalorder %s15, 1
    %p32 = por %p30, %p31
    %p33 = scmp.ne.s32.totalorder %s25, %s28
    %p34 = scmp.eq.s32.totalorder %s15, 0
    %p35 = por %p33, %p34
    %p36 = scmp.ne.s32.totalorder %s25, %s28
    %p37 = scmp.eq.s32.totalorder %s20, 1
    %p38 = por %p36, %p37
    %p39 = scmp.ne.s32.totalorder %s28, %s29
    %p40 = scmp.eq.s32.totalorder %s20, 0
    %p41 = por %p39, %p40
    %p42 = scmp.ne.s32.totalorder %s28, %s29
    %p43 = scmp.eq.s32.totalorder %s21, 1
    %p44 = por %p42, %p43
    %p46 = scmp.ne.s32.totalorder %s29, %s45
    %p47 = scmp.eq.s32.totalorder %s21, 0
    %p48 = por %p46, %p47
    %s50 = sadd.s32 %s49, 1
    %p53 = scmp.eq.s32.totalorder %s15, 1
    %p54 = scmp.ne.s32.totalorder %s49, %s51
    %p55 = scmp.eq.s32.totalorder %s15, 0
    %p56 = por %p54, %p55
    %p57 = scmp.ne.s32.totalorder %s49, %s51
    %p58 = scmp.eq.s32.totalorder %s20, 1
    %p59 = por %p57, %p58
    %p60 = scmp.ne.s32.totalorder %s51, %s52
    %p61 = scmp.eq.s32.totalorder %s20, 0
    %p62 = por %p60, %p61
    %p63 = scmp.ne.s32.totalorder %s51, %s52
    %p64 = scmp.eq.s32.totalorder %s21, 1
    %p65 = por %p63, %p64
    %p67 = scmp.ne.s32.totalorder %s52, %s66
    %p68 = scmp.eq.s32.totalorder %s21, 0
    %p69 = por %p67, %p68
    %s71 = sadd.s32 %s70, 1
    %p74 = scmp.eq.s32.totalorder %s15, 1
    %p75 = scmp.ne.s32.totalorder %s70, %s72
    %p76 = scmp.eq.s32.totalorder %s15, 0
    %p77 = por %p75, %p76
    %p78 = scmp.ne.s32.totalorder %s70, %s72
    %p79 = scmp.eq.s32.totalorder %s20, 1
    %p80 = por %p78, %p79
    %p81 = scmp.ne.s32.totalorder %s72, %s73
    %p82 = scmp.eq.s32.totalorder %s20, 0
    %p83 = por %p81, %p82
    %p84 = scmp.ne.s32.totalorder %s72, %s73
    %p85 = scmp.eq.s32.totalorder %s21, 1
    %p86 = por %p84, %p85
    %p88 = scmp.ne.s32.totalorder %s73, %s87
    %p89 = scmp.eq.s32.totalorder %s21, 0
    %p90 = por %p88, %p89
    %s92 = sadd.s32 %s91, 1
    %p95 = scmp.eq.s32.totalorder %s15, 1
    %p96 = scmp.ne.s32.totalorder %s91, %s93
    %p97 = scmp.eq.s32.totalorder %s15, 0
    %p98 = por %p96, %p97
    %p99 = scmp.ne.s32.totalorder %s91, %s93
    %p100 = scmp.eq.s32.totalorder %s20, 1
    %p101 = por %p99, %p100
    %p102 = scmp.ne.s32.totalorder %s93, %s94
    %p103 = scmp.eq.s32.totalorder %s20, 0
    %p104 = por %p102, %p103
    %p105 = scmp.ne.s32.totalorder %s93, %s94
    %p106 = scmp.eq.s32.totalorder %s21, 1
    %p107 = por %p105, %p106
    %p109 = scmp.ne.s32.totalorder %s94, %s108
    %p110 = scmp.eq.s32.totalorder %s21, 0
    %p111 = por %p109, %p110
    %s113 = sadd.s32 %s112, 1
    %p116 = scmp.eq.s32.totalorder %s15, 1
    %p117 = scmp.ne.s32.totalorder %s112, %s114
    %p118 = scmp.eq.s32.totalorder %s15, 0
    %p119 = por %p117, %p118
    %p120 = scmp.ne.s32.totalorder %s112, %s114
    %p121 = scmp.eq.s32.totalorder %s20, 1
    %p122 = por %p120, %p121
    %p123 = scmp.ne.s32.totalorder %s114, %s115
    %p124 = scmp.eq.s32.totalorder %s20, 0
    %p125 = por %p123, %p124
    %p126 = scmp.ne.s32.totalorder %s114, %s115
    %p127 = scmp.eq.s32.totalorder %s21, 1
    %p128 = por %p126, %p127
    %p130 = scmp.ne.s32.totalorder %s115, %s129
    %p131 = scmp.eq.s32.totalorder %s21, 0
    %p132 = por %p130, %p131
    %s134 = sadd.s32 %s133, 1
    %p137 = scmp.eq.s32.totalorder %s15, 1
    %p138 = scmp.ne.s32.totalorder %s133, %s135
    %p139 = scmp.eq.s32.totalorder %s15, 0
    %p140 = por %p138, %p139
    %p141 = scmp.ne.s32.totalorder %s133, %s135
    %p142 = scmp.eq.s32.totalorder %s20, 1
    %p143 = por %p141, %p142
    %p144 = scmp.ne.s32.totalorder %s135, %s136
    %p145 = scmp.eq.s32.totalorder %s20, 0
    %p146 = por %p144, %p145
    %p147 = scmp.ne.s32.totalorder %s135, %s136
    %p148 = scmp.eq.s32.totalorder %s21, 1
    %p149 = por %p147, %p148
    %p151 = scmp.ne.s32.totalorder %s136, %s150
    %p152 = scmp.eq.s32.totalorder %s21, 0
    %p153 = por %p151, %p152
    %s155 = sadd.s32 %s154, 1
    %p158 = scmp.eq.s32.totalorder %s15, 1
    %p159 = scmp.ne.s32.totalorder %s154, %s156
    %p160 = scmp.eq.s32.totalorder %s15, 0
    %p161 = por %p159, %p160
    %p162 = scmp.ne.s32.totalorder %s154, %s156
    %p163 = scmp.eq.s32.totalorder %s20, 1
    %p164 = por %p162, %p163
    %p165 = scmp.ne.s32.totalorder %s156, %s157
    %p166 = scmp.eq.s32.totalorder %s20, 0
    %p167 = por %p165, %p166
    %p168 = scmp.ne.s32.totalorder %s156, %s157
    %p169 = scmp.eq.s32.totalorder %s21, 1
    %p170 = por %p168, %p169
    %p172 = scmp.ne.s32.totalorder %s157, %s171
    %p173 = scmp.eq.s32.totalorder %s21, 0
    %p174 = por %p172, %p173
    %s175 = ssub.s32 %s15, %s22
    %p176 = scmp.eq.s32.totalorder %s175, 0
    %s178 = sadd.s32 %s177, 1
    %s179 = scalar_select %p176, %s177, %s178
    %p182 = pneg %p176
    %p183 = scmp.eq.s32.totalorder %s15, 1
    %p184 = por %p182, %p183
    %p185 = scmp.ne.s32.totalorder %s177, %s180
    %p186 = scmp.eq.s32.totalorder %s15, 0
    %p187 = por %p185, %p186
    %p188 = scmp.ne.s32.totalorder %s177, %s180
    %p189 = scmp.eq.s32.totalorder %s20, 1
    %p190 = por %p188, %p189
    %p191 = scmp.ne.s32.totalorder %s180, %s181
    %p192 = scmp.eq.s32.totalorder %s20, 0
    %p193 = por %p191, %p192
    %p194 = scmp.ne.s32.totalorder %s180, %s181
    %p195 = scmp.eq.s32.totalorder %s21, 1
    %p196 = por %p194, %p195
    %p198 = scmp.ne.s32.totalorder %s181, %s197
    %p199 = scmp.eq.s32.totalorder %s21, 0
    %p200 = por %p198, %p199
    %s201 = ssub.s32 %s15, %s22
    %p202 = scmp.eq.s32.totalorder %s201, 0
    %s204 = sadd.s32 %s203, 1
    %s205 = scalar_select %p202, %s203, %s204
    %p208 = pneg %p202
    %p209 = scmp.eq.s32.totalorder %s15, 1
    %p210 = por %p208, %p209
    %p211 = scmp.ne.s32.totalorder %s203, %s206
    %p212 = scmp.eq.s32.totalorder %s15, 0
    %p213 = por %p211, %p212
    %p214 = scmp.ne.s32.totalorder %s203, %s206
    %p215 = scmp.eq.s32.totalorder %s20, 1
    %p216 = por %p214, %p215
    %p217 = scmp.ne.s32.totalorder %s206, %s207
    %p218 = scmp.eq.s32.totalorder %s20, 0
    %p219 = por %p217, %p218
    %p220 = scmp.ne.s32.totalorder %s206, %s207
    %p221 = scmp.eq.s32.totalorder %s21, 1
    %p222 = por %p220, %p221
    %p224 = scmp.ne.s32.totalorder %s207, %s223
    %p225 = scmp.eq.s32.totalorder %s21, 0
    %p226 = por %p224, %p225
    %p227 = scmp.le.s32.totalorder 1, %s15
    %p228 = scmp.lt.s32.totalorder %s15, 3
    %p229 = pnand %p227, %p228
    %p230 = pneg %p229
    // Predicated region
    $region9: #{inception_model_forward.6} parent=5 // pred_check
      _
    $region10: #{inception_model_forward.6} parent=5 // pred_check_branch
      %232 = sbr.rel (%p229) target = $region12
    $region11: #{inception_model_forward.6} parent=5 // pred_region
      %s233 = ssub.s32 %s15, 1
      // Predicated region
      $region13: #{inception_model_forward.6} parent=11 // pred_check
        %p234 = pneg %p62
      $region14: #{inception_model_forward.6} parent=11 // pred_check_branch
        %236 = sbr.rel (%p234) target = $region16
      $region15: #{inception_model_forward.6} parent=11 // pred_region
        _
      $region16: #{inception_model_forward.6} parent=11 // pred_fallthru
        _
      // Predicated region
      $region17: #{inception_model_forward.6} parent=11 // pred_check
        %p237 = pneg %p83
      $region18: #{inception_model_forward.6} parent=11 // pred_check_branch
        %239 = sbr.rel (%p237) target = $region20
      $region19: #{inception_model_forward.6} parent=11 // pred_region
        _
      $region20: #{inception_model_forward.6} parent=11 // pred_fallthru
        _
      // Predicated region
      $region21: #{inception_model_forward.6} parent=11 // pred_check
        %p240 = pneg %p104
      $region22: #{inception_model_forward.6} parent=11 // pred_check_branch
        %242 = sbr.rel (%p240) target = $region24
      $region23: #{inception_model_forward.6} parent=11 // pred_region
        _
      $region24: #{inception_model_forward.6} parent=11 // pred_fallthru
        _
      // Predicated region
      $region25: #{inception_model_forward.6} parent=11 // pred_check
        %p243 = pneg %p125
      $region26: #{inception_model_forward.6} parent=11 // pred_check_branch
        %245 = sbr.rel (%p243) target = $region28
      $region27: #{inception_model_forward.6} parent=11 // pred_region
        _
      $region28: #{inception_model_forward.6} parent=11 // pred_fallthru
        _
      // Predicated region
      $region29: #{inception_model_forward.6} parent=11 // pred_check
        %p246 = pneg %p146
      $region30: #{inception_model_forward.6} parent=11 // pred_check_branch
        %248 = sbr.rel (%p246) target = $region32
      $region31: #{inception_model_forward.6} parent=11 // pred_region
        _
      $region32: #{inception_model_forward.6} parent=11 // pred_fallthru
        _
      // Predicated region
      $region33: #{inception_model_forward.6} parent=11 // pred_check
        %p249 = pneg %p167
      $region34: #{inception_model_forward.6} parent=11 // pred_check_branch
        %251 = sbr.rel (%p249) target = $region36
      $region35: #{inception_model_forward.6} parent=11 // pred_region
        _
      $region36: #{inception_model_forward.6} parent=11 // pred_fallthru
        _
    $region12: #{inception_model_forward.6} parent=5 // pred_fallthru
      _
    %p252 = scmp.lt.s32.totalorder %s15, 2
    // Predicated region
    $region37: #{inception_model_forward.6} parent=5 // pred_check
      %p253 = pneg %p252
    $region38: #{inception_model_forward.6} parent=5 // pred_check_branch
      %255 = sbr.rel (%p253) target = $region40
    $region39: #{inception_model_forward.6} parent=5 // pred_region
      // Predicated region
      $region41: #{inception_model_forward.6} parent=39 // pred_check
        %p256 = pneg %p35
      $region42: #{inception_model_forward.6} parent=39 // pred_check_branch
        %258 = sbr.rel (%p256) target = $region44
      $region43: #{inception_model_forward.6} parent=39 // pred_region
        %s259 = smul.u32 8, %s15
        %p260 = scmp.lt.s32.totalorder %s259, 15
        %s261 = scalar_select %p260, %s259, 15
        %s262 = smul.addr %s261, 4
        %s263 = scalar_lea.vmem %s0, %s262
        %s264 = smul.u32 8, %s15
      $region44: #{inception_model_forward.6} parent=39 // pred_fallthru
        _
    $region40: #{inception_model_forward.6} parent=5 // pred_fallthru
      _
    %p265 = scmp.le.s32.totalorder 1, %s15
    %p266 = scmp.lt.s32.totalorder %s15, 3
    %p267 = pnand %p265, %p266
    %p268 = pneg %p267
    // Predicated region
    $region45: #{inception_model_forward.6} parent=5 // pred_check
      _
    $region46: #{inception_model_forward.6} parent=5 // pred_check_branch
      %270 = sbr.rel (%p267) target = $region48
    $region47: #{inception_model_forward.6} parent=5 // pred_region
      %s271 = ssub.s32 %s15, 1
      %s272 = smul.u32 8, %s20
      %p273 = scmp.lt.s32.totalorder %s272, 15
      %s274 = scalar_select %p273, %s272, 15
      %s275 = smul.addr %s274, 4
      %s276 = scalar_lea.vmem %s0, %s275
      %p277 = pneg %p41
      %p278 = pneg %p38
      %p279 = pneg %p62
      %p280 = pneg %p59
      %p281 = pneg %p83
      %p282 = pneg %p80
      %p283 = pneg %p104
      %p284 = pneg %p101
      %p285 = pneg %p125
      %p286 = pneg %p122
      %p287 = pneg %p146
      %p288 = pneg %p143
      %p289 = pneg %p167
      %p290 = pneg %p164
      %p291 = pneg %p193
      %p292 = pneg %p190
      %s293 = smul.u32 8, %s20
      %p294 = scmp.lt.s32.totalorder %s293, 15
      %s295 = scalar_select %p294, %s293, 15
      %s296 = smul.addr %s295, 4
      %s297 = scalar_lea.vmem %s7, %s296
      %p298 = pneg %p219
      %p299 = pneg %p216
      %p300 = scmp.lt.s32.totalorder %s20, 1
      %s301 = scalar_select %p300, %s20, 1
      %s302 = smul.addr %s301, 2
      %s303 = scalar_lea.vmem %s8, %s302
      %s304 = smul.u32 8, %s20
      %p305 = scmp.lt.s32.totalorder %s304, 15
      %s306 = scalar_select %p305, %s304, 15
      %s307 = smul.addr %s306, 4
      %s308 = scalar_lea.vmem %s0, %s307
      %s309 = smul.u32 8, %s20
      %s310 = smul.u32 8, %s20
      %p311 = scmp.lt.s32.totalorder %s310, 15
      %s312 = scalar_select %p311, %s310, 15
      %s313 = smul.addr %s312, 4
      %s314 = scalar_lea.vmem %s7, %s313
      %s315 = smul.u32 8, %s20
      %p316 = scmp.lt.s32.totalorder %s20, 1
      %s317 = scalar_select %p316, %s20, 1
      %s318 = smul.addr %s317, 2
      %s319 = scalar_lea.vmem %s8, %s318
      %v321 = vld [vmem:[%s308] sm:$0xf]
      %v322 = vld [vmem:[%s308 + $0x4] sm:$0xf]
      %v323 = vld [vmem:[%s308 + $0x8] sm:$0xf]
      %v324 = vld [vmem:[%s308 + $0xc] sm:$0xf]
      %v325 = vld [vmem:[%s308 + $0x10] sm:$0xf]
      %v326 = vld [vmem:[%s308 + $0x14] sm:$0xf]
      %v327 = vld [vmem:[%s308 + $0x18] sm:$0xf]
      %v328 = vld [vmem:[%s308 + $0x1c] sm:$0xf]
      %v329 = vunpack.c.l.bf16 %v321
      %v330 = vunpack.c.l.bf16 %v322
      %v331 = vunpack.c.l.bf16 %v323
      %v332 = vunpack.c.l.bf16 %v324
      %v333 = vunpack.c.l.bf16 %v325
      %v334 = vunpack.c.l.bf16 %v326
      %v335 = vunpack.c.l.bf16 %v327
      %v336 = vunpack.c.l.bf16 %v328
      %vm337 = vcmask 60416
      %338 = vst.msk [vmem:[#allocation2] sm:$0xf] %vm337, 0
      %339 = vst.msk [vmem:[#allocation2 + $0x4] sm:$0xf] %vm337, 0
      %340 = vst.msk [vmem:[#allocation2 + $0x8] sm:$0xf] %vm337, 0
      %341 = vst.msk [vmem:[#allocation2 + $0xc] sm:$0xf] %vm337, 0
      %342 = vst.msk [vmem:[#allocation2 + $0x30] sm:$0xf] %vm337, 0
      %343 = vst.msk [vmem:[#allocation2 + $0x34] sm:$0xf] %vm337, 0
      %344 = vst.msk [vmem:[#allocation2 + $0x38] sm:$0xf] %vm337, 0
      %345 = vst.msk [vmem:[#allocation2 + $0x3c] sm:$0xf] %vm337, 0
      %v346 = vld [vmem:[%s4] sm:$0x3]
      %v355 = vunpack.c.l.b16 %v321
      %v356 = vunpack.c.l.b16 %v322
      %v357 = vunpack.c.l.b16 %v323
      %v358 = vunpack.c.l.b16 %v324
      %v359 = vunpack.c.l.b16 %v325
      %v360 = vunpack.c.l.b16 %v326
      %v361 = vunpack.c.l.b16 %v327
      %v362 = vunpack.c.l.b16 %v328
      %v363 = vpack.c.b16 %v356, %v355
      %v364 = vpack.c.b16 %v358, %v357
      %v365 = vpack.c.b16 %v360, %v359
      %v366 = vpack.c.b16 %v362, %v361
      %vm367 = vcmask 31744
      %v369 = vsel %vm367, %v363, 0
      %v372 = vsel %vm367, %v364, 0
      %v375 = vsel %vm367, %v365, 0
      %v378 = vsel %vm367, %v366, 0
      %vm380 = vcmask 1041408
      %v382 = vsel %vm380, %v346, 0
      %384 = vmatpush.bf16.msra.mxu0 0
      %385 = vmatpush.bf16.msra.mxu0 0
      %386 = vmatpush.bf16.msra.mxu0 0
      %387 = vmatpush.bf16.msra.mxu0 0
      %388 = vmatpush.bf16.msra.mxu0 0
      %389 = vmatpush.bf16.msra.mxu0 0
      %390 = vmatpush.bf16.msra.mxu0 0
      %391 = vmatpush.bf16.msra.mxu0 %v382
      %392 = vmatmul.bf16.gmra.mxu0 %v369
      %v393 = vpop.f32.mrf.mxu0
      %v394 = vadd.f32 0.0, %v393
      %v395 = vpop.f32.mrf.mxu0
      %v396 = vadd.f32 0.0, %v395
      %397 = vmatmul.bf16.gmra.mxu0 %v372
      %v398 = vpop.f32.mrf.mxu0
      %v399 = vadd.f32 0.0, %v398
      %v400 = vpop.f32.mrf.mxu0
      %v401 = vadd.f32 0.0, %v400
      %402 = vmatmul.bf16.gmra.mxu0 %v375
      %v403 = vpop.f32.mrf.mxu0
      %v404 = vadd.f32 0.0, %v403
      %v405 = vpop.f32.mrf.mxu0
      %v406 = vadd.f32 0.0, %v405
      %407 = vmatmul.bf16.gmra.mxu0 %v378
      %v408 = vpop.f32.mrf.mxu0
      %v409 = vadd.f32 0.0, %v408
      %v410 = vpop.f32.mrf.mxu0
      %v411 = vadd.f32 0.0, %v410
      %412 = vdwg.mxu0
      %v413 = vpack.c.bf16 %v394, %v394
      %v414 = vpack.c.bf16 %v396, %v396
      %v415 = vpack.c.bf16 %v399, %v399
      %v416 = vpack.c.bf16 %v401, %v401
      %v417 = vpack.c.bf16 %v404, %v404
      %v418 = vpack.c.bf16 %v406, %v406
      %v419 = vpack.c.bf16 %v409, %v409
      %v420 = vpack.c.bf16 %v411, %v411
      %421 = vst.msk [vmem:[#allocation2 + $0x10] sm:$0xf] %vm337, %v413
      %422 = vst.msk [vmem:[#allocation2 + $0x14] sm:$0xf] %vm337, %v414
      %423 = vst.msk [vmem:[#allocation2 + $0x18] sm:$0xf] %vm337, %v415
      %424 = vst.msk [vmem:[#allocation2 + $0x1c] sm:$0xf] %vm337, %v416
      %425 = vst.msk [vmem:[#allocation2 + $0x20] sm:$0xf] %vm337, %v417
      %426 = vst.msk [vmem:[#allocation2 + $0x24] sm:$0xf] %vm337, %v418
      %427 = vst.msk [vmem:[#allocation2 + $0x28] sm:$0xf] %vm337, %v419
      %428 = vst.msk [vmem:[#allocation2 + $0x2c] sm:$0xf] %vm337, %v420
      %v429 = vld [vmem:[#allocation2 + $0x4] sm:$0xc]
      %v430 = vld [vmem:[#allocation2 + $0x8] sm:$0xf]
      %v431 = vld [vmem:[#allocation2 + $0xc] sm:$0xf]
      %v432 = vld [vmem:[#allocation2 + $0x10] sm:$0xf]
      %v433 = vld [vmem:[#allocation2 + $0x14] sm:$0xf]
      %v434 = vld [vmem:[#allocation2 + $0x18] sm:$0xf]
      %v435 = vld [vmem:[#allocation2 + $0x1c] sm:$0xf]
      %v436 = vld [vmem:[#allocation2 + $0x20] sm:$0xf]
      %v437 = vld [vmem:[#allocation2 + $0x24] sm:$0x7]
      %v438 = vld [vmem:[#allocation2 + $0x4] sm:$0x8]
      %v439 = vld [vmem:[#allocation2 + $0x24] sm:$0xf]
      %v440 = vld [vmem:[#allocation2 + $0x28] sm:$0x1]
      %v441 = vld [vmem:[#allocation2 + $0x8] sm:$0xe]
      %v442 = vld [vmem:[#allocation2 + $0x28] sm:$0x3]
      %v443 = vld [vmem:[#allocation2 + $0x8] sm:$0xc]
      %v444 = vld [vmem:[#allocation2 + $0x28] sm:$0x7]
      %v445 = vld [vmem:[#allocation2 + $0x8] sm:$0x8]
      %v446 = vld [vmem:[#allocation2 + $0x28] sm:$0xf]
      %v447 = vld [vmem:[#allocation2 + $0x2c] sm:$0x1]
      %v448 = vld [vmem:[#allocation2 + $0xc] sm:$0xe]
      %v449 = vld [vmem:[#allocation2 + $0x2c] sm:$0x3]
      %v450 = vld [vmem:[#allocation2 + $0xc] sm:$0xc]
      %v460 = vunpack.c.l.b16 %v429
      %v461 = vunpack.c.l.b16 %v430
      %v462 = vunpack.c.l.b16 %v431
      %v463 = vunpack.c.l.b16 %v432
      %v464 = vunpack.c.l.b16 %v433
      %v465 = vunpack.c.l.b16 %v434
      %v466 = vunpack.c.l.b16 %v435
      %v467 = vunpack.c.l.b16 %v436
      %v468 = vunpack.c.l.b16 %v437
      %v469 = vpack.c.b16 %v461, %v460
      %v470 = vpack.c.b16 %v463, %v462
      %v471 = vpack.c.b16 %v465, %v464
      %v472 = vpack.c.b16 %v467, %v466
      %v473 = vpack.c.b16 %v468, %v468
      %v475 = vunpack.c.l.b16 %v438
      %v476 = vpack.c.b16 %v461, %v475
      %vm477 = vsmask.f32 7424
      %v479 = vshrl.u32 %v476, 16
      %v481 = vshll.u32 %v476, 16
      %v483 = vrot.slane %v481, 1
      %v484 = vor.u32 %v479, %v483
      %v486 = vshll.u32 %v470, 16
      %v488 = vrot.slane %v486, 1
      %v489 = vsel %vm477, %v484, %v488
      %v490 = vshrl.u32 %v470, 16
      %v492 = vor.u32 %v490, %v488
      %v494 = vshll.u32 %v471, 16
      %v496 = vrot.slane %v494, 1
      %v497 = vsel %vm477, %v492, %v496
      %v498 = vshrl.u32 %v471, 16
      %v500 = vor.u32 %v498, %v496
      %v502 = vshll.u32 %v472, 16
      %v504 = vrot.slane %v502, 1
      %v505 = vsel %vm477, %v500, %v504
      %v506 = vshrl.u32 %v472, 16
      %v508 = vor.u32 %v506, %v504
      %v510 = vshll.u32 %v473, 16
      %v512 = vrot.slane %v510, 1
      %v513 = vsel %vm477, %v508, %v512
      %v514 = vshrl.u32 %v473, 16
      %v516 = vor.u32 %v514, %v512
      %517 = vrot.lane.b32.xlu0 %v489, 8
      %v518 = vpop.permute.xlu0 %517
      %519 = vrot.lane.b32.xlu0 %v497, 8
      %v520 = vpop.permute.xlu0 %519
      %521 = vrot.lane.b32.xlu0 %v505, 8
      %v522 = vpop.permute.xlu0 %521
      %523 = vrot.lane.b32.xlu0 %v513, 8
      %v524 = vpop.permute.xlu0 %523
      %525 = vrot.lane.b32.xlu0 %v516, 8
      %v526 = vpop.permute.xlu0 %525
      %v528 = vunpack.c.l.b16 %v439
      %v529 = vpack.c.b16 %v528, %v528
      %vm530 = vcmask 1046528
      %v531 = vrot.slane %v476, 1
      %v532 = vrot.slane %v470, 1
      %v533 = vsel %vm530, %v531, %v532
      %v534 = vrot.slane %v471, 1
      %v535 = vsel %vm530, %v532, %v534
      %v536 = vrot.slane %v472, 1
      %v537 = vsel %vm530, %v534, %v536
      %v538 = vrot.slane %v529, 1
      %v539 = vsel %vm530, %v536, %v538
      %540 = vrot.lane.b32.xlu0 %v533, 16
      %v541 = vpop.permute.xlu0 %540
      %542 = vrot.lane.b32.xlu0 %v535, 16
      %v543 = vpop.permute.xlu0 %542
      %544 = vrot.lane.b32.xlu0 %v537, 16
      %v545 = vpop.permute.xlu0 %544
      %546 = vrot.lane.b32.xlu0 %v539, 16
      %v547 = vpop.permute.xlu0 %546
      %548 = vrot.lane.b32.xlu0 %v538, 16
      %v549 = vpop.permute.xlu0 %548
      %v550 = vpack.c.b16 %v462, %v461
      %v551 = vpack.c.b16 %v464, %v463
      %v552 = vpack.c.b16 %v466, %v465
      %v553 = vpack.c.b16 %v528, %v467
      %vm554 = vsmask.f32 2304
      %v556 = vshrl.u32 %v550, 16
      %v558 = vrot.slane %v556, 5
      %v559 = vshll.u32 %v550, 16
      %v561 = vrot.slane %v559, 6
      %v562 = vor.u32 %v558, %v561
      %v564 = vshrl.u32 %v551, 16
      %v566 = vrot.slane %v564, 5
      %v567 = vshll.u32 %v551, 16
      %v569 = vrot.slane %v567, 6
      %v570 = vor.u32 %v566, %v569
      %v571 = vsel %vm554, %v562, %v570
      %v573 = vshrl.u32 %v552, 16
      %v575 = vrot.slane %v573, 5
      %v576 = vshll.u32 %v552, 16
      %v578 = vrot.slane %v576, 6
      %v579 = vor.u32 %v575, %v578
      %v580 = vsel %vm554, %v570, %v579
      %v582 = vshrl.u32 %v553, 16
      %v584 = vrot.slane %v582, 5
      %v585 = vshll.u32 %v553, 16
      %v587 = vrot.slane %v585, 6
      %v588 = vor.u32 %v584, %v587
      %v589 = vsel %vm554, %v579, %v588
      %590 = vrot.lane.b32.xlu0 %v562, 24
      %v591 = vpop.permute.xlu0 %590
      %592 = vrot.lane.b32.xlu0 %v571, 24
      %v593 = vpop.permute.xlu0 %592
      %594 = vrot.lane.b32.xlu0 %v580, 24
      %v595 = vpop.permute.xlu0 %594
      %596 = vrot.lane.b32.xlu0 %v589, 24
      %v597 = vpop.permute.xlu0 %596
      %598 = vrot.lane.b32.xlu0 %v588, 24
      %v599 = vpop.permute.xlu0 %598
      %v601 = vunpack.c.l.b16 %v440
      %v602 = vpack.c.b16 %v601, %v601
      %vm603 = vcmask 1041408
      %v604 = vrot.slane %v550, 6
      %v605 = vrot.slane %v551, 6
      %v606 = vsel %vm603, %v604, %v605
      %v607 = vrot.slane %v552, 6
      %v608 = vsel %vm603, %v605, %v607
      %v609 = vrot.slane %v553, 6
      %v610 = vsel %vm603, %v607, %v609
      %v611 = vrot.slane %v602, 6
      %v612 = vsel %vm603, %v609, %v611
      %613 = vrot.lane.b32.xlu0 %v604, 32
      %v614 = vpop.permute.xlu0 %613
      %615 = vrot.lane.b32.xlu0 %v606, 32
      %v616 = vpop.permute.xlu0 %615
      %617 = vrot.lane.b32.xlu0 %v608, 32
      %v618 = vpop.permute.xlu0 %617
      %619 = vrot.lane.b32.xlu0 %v610, 32
      %v620 = vpop.permute.xlu0 %619
      %621 = vrot.lane.b32.xlu0 %v612, 32
      %v622 = vpop.permute.xlu0 %621
      %v624 = vunpack.c.l.b16 %v441
      %v625 = vpack.c.b16 %v462, %v624
      %vm626 = vsmask.f32 1280
      %v628 = vshrl.u32 %v625, 16
      %v630 = vrot.slane %v628, 6
      %v631 = vshll.u32 %v625, 16
      %v633 = vrot.slane %v631, 7
      %v634 = vor.u32 %v630, %v633
      %v635 = vrot.slane %v564, 6
      %v636 = vrot.slane %v567, 7
      %v637 = vor.u32 %v635, %v636
      %v638 = vsel %vm626, %v634, %v637
      %v639 = vrot.slane %v573, 6
      %v640 = vrot.slane %v576, 7
      %v641 = vor.u32 %v639, %v640
      %v642 = vsel %vm626, %v637, %v641
      %v643 = vrot.slane %v582, 6
      %v644 = vrot.slane %v585, 7
      %v645 = vor.u32 %v643, %v644
      %v646 = vsel %vm626, %v641, %v645
      %v648 = vshrl.u32 %v602, 16
      %v650 = vrot.slane %v648, 6
      %v651 = vshll.u32 %v602, 16
      %v653 = vrot.slane %v651, 7
      %v654 = vor.u32 %v650, %v653
      %v655 = vsel %vm626, %v645, %v654
      %656 = vrot.lane.b32.xlu0 %v634, 40
      %v657 = vpop.permute.xlu0 %656
      %658 = vrot.lane.b32.xlu0 %v638, 40
      %v659 = vpop.permute.xlu0 %658
      %660 = vrot.lane.b32.xlu0 %v642, 40
      %v661 = vpop.permute.xlu0 %660
      %662 = vrot.lane.b32.xlu0 %v646, 40
      %v663 = vpop.permute.xlu0 %662
      %664 = vrot.lane.b32.xlu0 %v655, 40
      %v665 = vpop.permute.xlu0 %664
      %v667 = vunpack.c.l.b16 %v442
      %v668 = vpack.c.b16 %v667, %v667
      %vm669 = vcmask 1040384
      %v670 = vrot.slane %v625, 7
      %v671 = vrot.slane %v551, 7
      %v672 = vsel %vm669, %v670, %v671
      %v673 = vrot.slane %v552, 7
      %v674 = vsel %vm669, %v671, %v673
      %v675 = vrot.slane %v553, 7
      %v676 = vsel %vm669, %v673, %v675
      %v677 = vrot.slane %v668, 7
      %v678 = vsel %vm669, %v675, %v677
      %679 = vrot.lane.b32.xlu0 %v670, 48
      %v680 = vpop.permute.xlu0 %679
      %681 = vrot.lane.b32.xlu0 %v672, 48
      %v682 = vpop.permute.xlu0 %681
      %683 = vrot.lane.b32.xlu0 %v674, 48
      %v684 = vpop.permute.xlu0 %683
      %685 = vrot.lane.b32.xlu0 %v676, 48
      %v686 = vpop.permute.xlu0 %685
      %687 = vrot.lane.b32.xlu0 %v678, 48
      %v688 = vpop.permute.xlu0 %687
      %v690 = vunpack.c.l.b16 %v443
      %v691 = vpack.c.b16 %v462, %v690
      %vm692 = vsmask.f32 256
      %v694 = vshrl.u32 %v691, 16
      %v696 = vrot.slane %v694, 7
      %v697 = vshll.u32 %v691, 16
      %v699 = vor.u32 %v696, %v697
      %v700 = vrot.slane %v564, 7
      %v701 = vor.u32 %v700, %v567
      %v702 = vsel %vm692, %v696, %v701
      %v703 = vrot.slane %v573, 7
      %v704 = vor.u32 %v703, %v576
      %v705 = vsel %vm692, %v700, %v704
      %v706 = vrot.slane %v582, 7
      %v707 = vor.u32 %v706, %v585
      %v708 = vsel %vm692, %v703, %v707
      %v710 = vshrl.u32 %v668, 16
      %v712 = vrot.slane %v710, 7
      %v713 = vshll.u32 %v668, 16
      %v715 = vor.u32 %v712, %v713
      %v716 = vsel %vm692, %v706, %v715
      %717 = vrot.lane.b32.xlu0 %v699, 56
      %v718 = vpop.permute.xlu0 %717
      %719 = vrot.lane.b32.xlu0 %v702, 56
      %v720 = vpop.permute.xlu0 %719
      %721 = vrot.lane.b32.xlu0 %v705, 56
      %v722 = vpop.permute.xlu0 %721
      %723 = vrot.lane.b32.xlu0 %v708, 56
      %v724 = vpop.permute.xlu0 %723
      %725 = vrot.lane.b32.xlu0 %v716, 56
      %v726 = vpop.permute.xlu0 %725
      %v728 = vunpack.c.l.b16 %v444
      %v729 = vpack.c.b16 %v728, %v728
      %730 = vrot.lane.b32.xlu0 %v691, 64
      %v731 = vpop.permute.xlu0 %730
      %732 = vrot.lane.b32.xlu0 %v551, 64
      %v733 = vpop.permute.xlu0 %732
      %734 = vrot.lane.b32.xlu0 %v552, 64
      %v735 = vpop.permute.xlu0 %734
      %736 = vrot.lane.b32.xlu0 %v553, 64
      %v737 = vpop.permute.xlu0 %736
      %738 = vrot.lane.b32.xlu0 %v729, 64
      %v739 = vpop.permute.xlu0 %738
      %v741 = vunpack.c.l.b16 %v445
      %v742 = vpack.c.b16 %v462, %v741
      %v744 = vshrl.u32 %v742, 16
      %v746 = vshll.u32 %v742, 16
      %v748 = vrot.slane %v746, 1
      %v749 = vor.u32 %v744, %v748
      %v750 = vrot.slane %v567, 1
      %v751 = vsel %vm477, %v749, %v750
      %v752 = vor.u32 %v564, %v750
      %v753 = vrot.slane %v576, 1
      %v754 = vsel %vm477, %v752, %v753
      %v755 = vor.u32 %v573, %v753
      %v756 = vrot.slane %v585, 1
      %v757 = vsel %vm477, %v755, %v756
      %v758 = vor.u32 %v582, %v756
      %v760 = vshll.u32 %v729, 16
      %v762 = vrot.slane %v760, 1
      %v763 = vsel %vm477, %v758, %v762
      %v764 = vshrl.u32 %v729, 16
      %v766 = vor.u32 %v764, %v762
      %767 = vrot.lane.b32.xlu0 %v751, 72
      %v768 = vpop.permute.xlu0 %767
      %769 = vrot.lane.b32.xlu0 %v754, 72
      %v770 = vpop.permute.xlu0 %769
      %771 = vrot.lane.b32.xlu0 %v757, 72
      %v772 = vpop.permute.xlu0 %771
      %773 = vrot.lane.b32.xlu0 %v763, 72
      %v774 = vpop.permute.xlu0 %773
      %775 = vrot.lane.b32.xlu0 %v766, 72
      %v776 = vpop.permute.xlu0 %775
      %v778 = vunpack.c.l.b16 %v446
      %v779 = vpack.c.b16 %v778, %v778
      %v780 = vrot.slane %v742, 1
      %v781 = vrot.slane %v551, 1
      %v782 = vsel %vm530, %v780, %v781
      %v783 = vrot.slane %v552, 1
      %v784 = vsel %vm530, %v781, %v783
      %v785 = vrot.slane %v553, 1
      %v786 = vsel %vm530, %v783, %v785
      %v787 = vrot.slane %v779, 1
      %v788 = vsel %vm530, %v785, %v787
      %789 = vrot.lane.b32.xlu0 %v782, 80
      %v790 = vpop.permute.xlu0 %789
      %791 = vrot.lane.b32.xlu0 %v784, 80
      %v792 = vpop.permute.xlu0 %791
      %793 = vrot.lane.b32.xlu0 %v786, 80
      %v794 = vpop.permute.xlu0 %793
      %795 = vrot.lane.b32.xlu0 %v788, 80
      %v796 = vpop.permute.xlu0 %795
      %797 = vrot.lane.b32.xlu0 %v787, 80
      %v798 = vpop.permute.xlu0 %797
      %v799 = vpack.c.b16 %v778, %v528
      %v800 = vrot.slane %v490, 5
      %v801 = vrot.slane %v486, 6
      %v802 = vor.u32 %v800, %v801
      %v803 = vrot.slane %v498, 5
      %v804 = vrot.slane %v494, 6
      %v805 = vor.u32 %v803, %v804
      %v806 = vsel %vm554, %v802, %v805
      %v807 = vrot.slane %v506, 5
      %v808 = vrot.slane %v502, 6
      %v809 = vor.u32 %v807, %v808
      %v810 = vsel %vm554, %v805, %v809
      %v812 = vshrl.u32 %v799, 16
      %v814 = vrot.slane %v812, 5
      %v815 = vshll.u32 %v799, 16
      %v817 = vrot.slane %v815, 6
      %v818 = vor.u32 %v814, %v817
      %v819 = vsel %vm554, %v809, %v818
      %820 = vrot.lane.b32.xlu0 %v802, 88
      %v821 = vpop.permute.xlu0 %820
      %822 = vrot.lane.b32.xlu0 %v806, 88
      %v823 = vpop.permute.xlu0 %822
      %824 = vrot.lane.b32.xlu0 %v810, 88
      %v825 = vpop.permute.xlu0 %824
      %826 = vrot.lane.b32.xlu0 %v819, 88
      %v827 = vpop.permute.xlu0 %826
      %828 = vrot.lane.b32.xlu0 %v818, 88
      %v829 = vpop.permute.xlu0 %828
      %v831 = vunpack.c.l.b16 %v447
      %v832 = vpack.c.b16 %v831, %v831
      %v833 = vrot.slane %v470, 6
      %v834 = vrot.slane %v471, 6
      %v835 = vsel %vm603, %v833, %v834
      %v836 = vrot.slane %v472, 6
      %v837 = vsel %vm603, %v834, %v836
      %v838 = vrot.slane %v799, 6
      %v839 = vsel %vm603, %v836, %v838
      %v840 = vrot.slane %v832, 6
      %v841 = vsel %vm603, %v838, %v840
      %842 = vrot.lane.b32.xlu0 %v833, 96
      %v843 = vpop.permute.xlu0 %842
      %844 = vrot.lane.b32.xlu0 %v835, 96
      %v845 = vpop.permute.xlu0 %844
      %846 = vrot.lane.b32.xlu0 %v837, 96
      %v847 = vpop.permute.xlu0 %846
      %848 = vrot.lane.b32.xlu0 %v839, 96
      %v849 = vpop.permute.xlu0 %848
      %850 = vrot.lane.b32.xlu0 %v841, 96
      %v851 = vpop.permute.xlu0 %850
      %v853 = vunpack.c.l.b16 %v448
      %v854 = vpack.c.b16 %v463, %v853
      %v856 = vshrl.u32 %v854, 16
      %v858 = vrot.slane %v856, 6
      %v859 = vshll.u32 %v854, 16
      %v861 = vrot.slane %v859, 7
      %v862 = vor.u32 %v858, %v861
      %v863 = vrot.slane %v498, 6
      %v864 = vrot.slane %v494, 7
      %v865 = vor.u32 %v863, %v864
      %v866 = vsel %vm626, %v862, %v865
      %v867 = vrot.slane %v506, 6
      %v868 = vrot.slane %v502, 7
      %v869 = vor.u32 %v867, %v868
      %v870 = vsel %vm626, %v865, %v869
      %v871 = vrot.slane %v812, 6
      %v872 = vrot.slane %v815, 7
      %v873 = vor.u32 %v871, %v872
      %v874 = vsel %vm626, %v869, %v873
      %v876 = vshrl.u32 %v832, 16
      %v878 = vrot.slane %v876, 6
      %v879 = vshll.u32 %v832, 16
      %v881 = vrot.slane %v879, 7
      %v882 = vor.u32 %v878, %v881
      %v883 = vsel %vm626, %v873, %v882
      %884 = vrot.lane.b32.xlu0 %v862, 104
      %v885 = vpop.permute.xlu0 %884
      %886 = vrot.lane.b32.xlu0 %v866, 104
      %v887 = vpop.permute.xlu0 %886
      %888 = vrot.lane.b32.xlu0 %v870, 104
      %v889 = vpop.permute.xlu0 %888
      %890 = vrot.lane.b32.xlu0 %v874, 104
      %v891 = vpop.permute.xlu0 %890
      %892 = vrot.lane.b32.xlu0 %v883, 104
      %v893 = vpop.permute.xlu0 %892
      %v895 = vunpack.c.l.b16 %v449
      %v896 = vpack.c.b16 %v895, %v895
      %v897 = vrot.slane %v854, 7
      %v898 = vrot.slane %v471, 7
      %v899 = vsel %vm669, %v897, %v898
      %v900 = vrot.slane %v472, 7
      %v901 = vsel %vm669, %v898, %v900
      %v902 = vrot.slane %v799, 7
      %v903 = vsel %vm669, %v900, %v902
      %v904 = vrot.slane %v896, 7
      %v905 = vsel %vm669, %v902, %v904
      %906 = vrot.lane.b32.xlu0 %v897, 112
      %v907 = vpop.permute.xlu0 %906
      %908 = vrot.lane.b32.xlu0 %v899, 112
      %v909 = vpop.permute.xlu0 %908
      %910 = vrot.lane.b32.xlu0 %v901, 112
      %v911 = vpop.permute.xlu0 %910
      %912 = vrot.lane.b32.xlu0 %v903, 112
      %v913 = vpop.permute.xlu0 %912
      %914 = vrot.lane.b32.xlu0 %v905, 112
      %v915 = vpop.permute.xlu0 %914
      %v917 = vunpack.c.l.b16 %v450
      %v918 = vpack.c.b16 %v463, %v917
      %v920 = vshrl.u32 %v918, 16
      %v922 = vrot.slane %v920, 7
      %v923 = vshll.u32 %v918, 16
      %v925 = vor.u32 %v922, %v923
      %v926 = vrot.slane %v498, 7
      %v927 = vor.u32 %v926, %v494
      %v928 = vsel %vm692, %v922, %v927
      %v929 = vrot.slane %v506, 7
      %v930 = vor.u32 %v929, %v502
      %v931 = vsel %vm692, %v926, %v930
      %v932 = vrot.slane %v812, 7
      %v933 = vor.u32 %v932, %v815
      %v934 = vsel %vm692, %v929, %v933
      %v936 = vshrl.u32 %v896, 16
      %v938 = vrot.slane %v936, 7
      %v939 = vshll.u32 %v896, 16
      %v941 = vor.u32 %v938, %v939
      %v942 = vsel %vm692, %v932, %v941
      %943 = vrot.lane.b32.xlu0 %v925, 120
      %v944 = vpop.permute.xlu0 %943
      %945 = vrot.lane.b32.xlu0 %v928, 120
      %v946 = vpop.permute.xlu0 %945
      %947 = vrot.lane.b32.xlu0 %v931, 120
      %v948 = vpop.permute.xlu0 %947
      %949 = vrot.lane.b32.xlu0 %v934, 120
      %v950 = vpop.permute.xlu0 %949
      %951 = vrot.lane.b32.xlu0 %v942, 120
      %v952 = vpop.permute.xlu0 %951
      %vm953 = vcmask 64512
      %v956 = vsel %vm953, %v469, %v518
      %v958 = vsel %vm953, %v470, %v520
      %v960 = vsel %vm953, %v471, %v522
      %v962 = vsel %vm953, %v472, %v524
      %v964 = vsel %vm953, %v473, %v526
      %vm965 = vcmask 130048
      %v967 = vsel %vm965, %v956, %v541
      %v969 = vsel %vm965, %v958, %v543
      %v971 = vsel %vm965, %v960, %v545
      %v973 = vsel %vm965, %v962, %v547
      %v975 = vsel %vm965, %v964, %v549
      %vm976 = vcmask 195584
      %v978 = vsel %vm976, %v967, %v591
      %v980 = vsel %vm976, %v969, %v593
      %v982 = vsel %vm976, %v971, %v595
      %v984 = vsel %vm976, %v973, %v597
      %v986 = vsel %vm976, %v975, %v599
      %vm987 = vcmask 261120
      %v989 = vsel %vm987, %v978, %v614
      %v991 = vsel %vm987, %v980, %v616
      %v993 = vsel %vm987, %v982, %v618
      %v995 = vsel %vm987, %v984, %v620
      %v997 = vsel %vm987, %v986, %v622
      %vm998 = vcmask 326656
      %v1000 = vsel %vm998, %v989, %v657
      %v1002 = vsel %vm998, %v991, %v659
      %v1004 = vsel %vm998, %v993, %v661
      %v1006 = vsel %vm998, %v995, %v663
      %v1008 = vsel %vm998, %v997, %v665
      %vm1009 = vcmask 392192
      %v1011 = vsel %vm1009, %v1000, %v680
      %v1013 = vsel %vm1009, %v1002, %v682
      %v1015 = vsel %vm1009, %v1004, %v684
      %v1017 = vsel %vm1009, %v1006, %v686
      %v1019 = vsel %vm1009, %v1008, %v688
      %vm1020 = vcmask 457728
      %v1022 = vsel %vm1020, %v1011, %v718
      %v1024 = vsel %vm1020, %v1013, %v720
      %v1026 = vsel %vm1020, %v1015, %v722
      %v1028 = vsel %vm1020, %v1017, %v724
      %v1030 = vsel %vm1020, %v1019, %v726
      %vm1031 = vcmask 523264
      %v1033 = vsel %vm1031, %v1022, %v731
      %v1035 = vsel %vm1031, %v1024, %v733
      %v1037 = vsel %vm1031, %v1026, %v735
      %v1039 = vsel %vm1031, %v1028, %v737
      %v1041 = vsel %vm1031, %v1030, %v739
      %vm1042 = vcmask 588800
      %v1044 = vsel %vm1042, %v1033, %v768
      %v1046 = vsel %vm1042, %v1035, %v770
      %v1048 = vsel %vm1042, %v1037, %v772
      %v1050 = vsel %vm1042, %v1039, %v774
      %v1052 = vsel %vm1042, %v1041, %v776
      %vm1053 = vcmask 654336
      %v1055 = vsel %vm1053, %v1044, %v790
      %v1057 = vsel %vm1053, %v1046, %v792
      %v1059 = vsel %vm1053, %v1048, %v794
      %v1061 = vsel %vm1053, %v1050, %v796
      %v1063 = vsel %vm1053, %v1052, %v798
      %vm1064 = vcmask 719872
      %v1066 = vsel %vm1064, %v1055, %v821
      %v1068 = vsel %vm1064, %v1057, %v823
      %v1070 = vsel %vm1064, %v1059, %v825
      %v1072 = vsel %vm1064, %v1061, %v827
      %v1074 = vsel %vm1064, %v1063, %v829
      %vm1075 = vcmask 785408
      %v1077 = vsel %vm1075, %v1066, %v843
      %v1079 = vsel %vm1075, %v1068, %v845
      %v1081 = vsel %vm1075, %v1070, %v847
      %v1083 = vsel %vm1075, %v1072, %v849
      %v1085 = vsel %vm1075, %v1074, %v851
      %vm1086 = vcmask 850944
      %v1088 = vsel %vm1086, %v1077, %v885
      %v1090 = vsel %vm1086, %v1079, %v887
      %v1092 = vsel %vm1086, %v1081, %v889
      %v1094 = vsel %vm1086, %v1083, %v891
      %v1096 = vsel %vm1086, %v1085, %v893
      %vm1097 = vcmask 916480
      %v1099 = vsel %vm1097, %v1088, %v907
      %v1101 = vsel %vm1097, %v1090, %v909
      %v1103 = vsel %vm1097, %v1092, %v911
      %v1105 = vsel %vm1097, %v1094, %v913
      %v1107 = vsel %vm1097, %v1096, %v915
      %vm1108 = vcmask 982016
      %v1110 = vsel %vm1108, %v1099, %v944
      %v1112 = vsel %vm1108, %v1101, %v946
      %v1114 = vsel %vm1108, %v1103, %v948
      %v1116 = vsel %vm1108, %v1105, %v950
      %v1118 = vsel %vm1108, %v1107, %v952
      %v1119 = vld [vmem:[%s5] sm:$0xf]
      %v1120 = vld [vmem:[%s5 + $0x4] sm:$0xf]
      %v1121 = vld [vmem:[%s5 + $0x8] sm:$0xf]
      %v1122 = vld [vmem:[%s5 + $0xc] sm:$0xf]
      %v1123 = vld [vmem:[%s5 + $0x10] sm:$0xf]
      %v1124 = vld [vmem:[%s5 + $0x14] sm:$0xf]
      %v1125 = vld [vmem:[%s5 + $0x18] sm:$0xf]
      %v1126 = vld [vmem:[%s5 + $0x1c] sm:$0xf]
      %v1127 = vld [vmem:[%s5 + $0x20] sm:$0xf]
      %v1128 = vld [vmem:[%s5 + $0x24] sm:$0xf]
      %v1129 = vld [vmem:[%s5 + $0x28] sm:$0xf]
      %v1130 = vld [vmem:[%s5 + $0x2c] sm:$0xf]
      %v1131 = vld [vmem:[%s5 + $0x30] sm:$0xf]
      %v1132 = vld [vmem:[%s5 + $0x34] sm:$0xf]
      %v1133 = vld [vmem:[%s5 + $0x38] sm:$0xf]
      %v1134 = vld [vmem:[%s5 + $0x3c] sm:$0xf]
      %v1135 = vld [vmem:[#allocation2 + $0x2c] sm:$0x7]
      %v1136 = vld [vmem:[#allocation2 + $0xc] sm:$0x8]
      %v1137 = vld [vmem:[#allocation2 + $0x2c] sm:$0xf]
      %v1138 = vld [vmem:[#allocation2 + $0x30] sm:$0x1]
      %v1139 = vld [vmem:[#allocation2 + $0x10] sm:$0xe]
      %v1140 = vld [vmem:[#allocation2 + $0x30] sm:$0x3]
      %v1141 = vld [vmem:[#allocation2 + $0x10] sm:$0xc]
      %v1142 = vld [vmem:[#allocation2 + $0x30] sm:$0x7]
      %v1143 = vld [vmem:[#allocation2 + $0x10] sm:$0x8]
      %v1144 = vld [vmem:[#allocation2 + $0x30] sm:$0xf]
      %v1145 = vld [vmem:[#allocation2 + $0x34] sm:$0x1]
      %v1146 = vld [vmem:[#allocation2 + $0x14] sm:$0xe]
      %v1147 = vld [vmem:[#allocation2 + $0x34] sm:$0x3]
      %v1148 = vld [vmem:[#allocation2 + $0x14] sm:$0xc]
      %v1150 = vunpack.c.l.b16 %v1135
      %v1151 = vpack.c.b16 %v1150, %v1150
      %v1153 = vunpack.c.l.b16 %v1136
      %v1154 = vpack.c.b16 %v463, %v1153
      %v1156 = vshrl.u32 %v1154, 16
      %v1158 = vshll.u32 %v1154, 16
      %v1160 = vrot.slane %v1158, 1
      %v1161 = vor.u32 %v1156, %v1160
      %v1162 = vsel %vm477, %v1161, %v496
      %v1163 = vrot.slane %v815, 1
      %v1164 = vsel %vm477, %v508, %v1163
      %v1165 = vor.u32 %v812, %v1163
      %v1167 = vshll.u32 %v1151, 16
      %v1169 = vrot.slane %v1167, 1
      %v1170 = vsel %vm477, %v1165, %v1169
      %v1171 = vshrl.u32 %v1151, 16
      %v1173 = vor.u32 %v1171, %v1169
      %1174 = vrot.lane.b32.xlu0 %v1162, 8
      %v1175 = vpop.permute.xlu0 %1174
      %1176 = vrot.lane.b32.xlu0 %v1164, 8
      %v1177 = vpop.permute.xlu0 %1176
      %1178 = vrot.lane.b32.xlu0 %v1170, 8
      %v1179 = vpop.permute.xlu0 %1178
      %1180 = vrot.lane.b32.xlu0 %v1173, 8
      %v1181 = vpop.permute.xlu0 %1180
      %v1183 = vunpack.c.l.b16 %v1137
      %v1184 = vpack.c.b16 %v1183, %v1183
      %v1185 = vrot.slane %v1154, 1
      %v1186 = vsel %vm530, %v1185, %v534
      %v1187 = vrot.slane %v799, 1
      %v1188 = vsel %vm530, %v536, %v1187
      %v1189 = vrot.slane %v1184, 1
      %v1190 = vsel %vm530, %v1187, %v1189
      %1191 = vrot.lane.b32.xlu0 %v1186, 16
      %v1192 = vpop.permute.xlu0 %1191
      %1193 = vrot.lane.b32.xlu0 %v1188, 16
      %v1194 = vpop.permute.xlu0 %1193
      %1195 = vrot.lane.b32.xlu0 %v1190, 16
      %v1196 = vpop.permute.xlu0 %1195
      %1197 = vrot.lane.b32.xlu0 %v1189, 16
      %v1198 = vpop.permute.xlu0 %1197
      %v1199 = vpack.c.b16 %v1183, %v778
      %v1201 = vshrl.u32 %v1199, 16
      %v1203 = vrot.slane %v1201, 5
      %v1204 = vshll.u32 %v1199, 16
      %v1206 = vrot.slane %v1204, 6
      %v1207 = vor.u32 %v1203, %v1206
      %v1208 = vsel %vm554, %v588, %v1207
      %1209 = vrot.lane.b32.xlu0 %v570, 24
      %v1210 = vpop.permute.xlu0 %1209
      %1211 = vrot.lane.b32.xlu0 %v1208, 24
      %v1212 = vpop.permute.xlu0 %1211
      %1213 = vrot.lane.b32.xlu0 %v1207, 24
      %v1214 = vpop.permute.xlu0 %1213
      %v1216 = vunpack.c.l.b16 %v1138
      %v1217 = vpack.c.b16 %v1216, %v1216
      %v1218 = vrot.slane %v1199, 6
      %v1219 = vsel %vm603, %v609, %v1218
      %v1220 = vrot.slane %v1217, 6
      %v1221 = vsel %vm603, %v1218, %v1220
      %1222 = vrot.lane.b32.xlu0 %v605, 32
      %v1223 = vpop.permute.xlu0 %1222
      %1224 = vrot.lane.b32.xlu0 %v1219, 32
      %v1225 = vpop.permute.xlu0 %1224
      %1226 = vrot.lane.b32.xlu0 %v1221, 32
      %v1227 = vpop.permute.xlu0 %1226
      %v1229 = vunpack.c.l.b16 %v1139
      %v1230 = vpack.c.b16 %v464, %v1229
      %v1232 = vshrl.u32 %v1230, 16
      %v1234 = vrot.slane %v1232, 6
      %v1235 = vshll.u32 %v1230, 16
      %v1237 = vrot.slane %v1235, 7
      %v1238 = vor.u32 %v1234, %v1237
      %v1239 = vsel %vm626, %v1238, %v641
      %v1240 = vrot.slane %v1201, 6
      %v1241 = vrot.slane %v1204, 7
      %v1242 = vor.u32 %v1240, %v1241
      %v1243 = vsel %vm626, %v645, %v1242
      %v1245 = vshrl.u32 %v1217, 16
      %v1247 = vrot.slane %v1245, 6
      %v1248 = vshll.u32 %v1217, 16
      %v1250 = vrot.slane %v1248, 7
      %v1251 = vor.u32 %v1247, %v1250
      %v1252 = vsel %vm626, %v1242, %v1251
      %1253 = vrot.lane.b32.xlu0 %v1238, 40
      %v1254 = vpop.permute.xlu0 %1253
      %1255 = vrot.lane.b32.xlu0 %v1239, 40
      %v1256 = vpop.permute.xlu0 %1255
      %1257 = vrot.lane.b32.xlu0 %v1243, 40
      %v1258 = vpop.permute.xlu0 %1257
      %1259 = vrot.lane.b32.xlu0 %v1252, 40
      %v1260 = vpop.permute.xlu0 %1259
      %v1262 = vunpack.c.l.b16 %v1140
      %v1263 = vpack.c.b16 %v1262, %v1262
      %v1264 = vrot.slane %v1230, 7
      %v1265 = vsel %vm669, %v1264, %v673
      %v1266 = vrot.slane %v1199, 7
      %v1267 = vsel %vm669, %v675, %v1266
      %v1268 = vrot.slane %v1263, 7
      %v1269 = vsel %vm669, %v1266, %v1268
      %1270 = vrot.lane.b32.xlu0 %v1264, 48
      %v1271 = vpop.permute.xlu0 %1270
      %1272 = vrot.lane.b32.xlu0 %v1265, 48
      %v1273 = vpop.permute.xlu0 %1272
      %1274 = vrot.lane.b32.xlu0 %v1267, 48
      %v1275 = vpop.permute.xlu0 %1274
      %1276 = vrot.lane.b32.xlu0 %v1269, 48
      %v1277 = vpop.permute.xlu0 %1276
      %v1279 = vunpack.c.l.b16 %v1141
      %v1280 = vpack.c.b16 %v464, %v1279
      %v1282 = vshrl.u32 %v1280, 16
      %v1284 = vrot.slane %v1282, 7
      %v1285 = vshll.u32 %v1280, 16
      %v1287 = vor.u32 %v1284, %v1285
      %v1288 = vsel %vm692, %v1284, %v704
      %v1289 = vrot.slane %v1201, 7
      %v1290 = vor.u32 %v1289, %v1204
      %v1291 = vsel %vm692, %v706, %v1290
      %v1293 = vshrl.u32 %v1263, 16
      %v1295 = vrot.slane %v1293, 7
      %v1296 = vshll.u32 %v1263, 16
      %v1298 = vor.u32 %v1295, %v1296
      %v1299 = vsel %vm692, %v1289, %v1298
      %1300 = vrot.lane.b32.xlu0 %v1287, 56
      %v1301 = vpop.permute.xlu0 %1300
      %1302 = vrot.lane.b32.xlu0 %v1288, 56
      %v1303 = vpop.permute.xlu0 %1302
      %1304 = vrot.lane.b32.xlu0 %v1291, 56
      %v1305 = vpop.permute.xlu0 %1304
      %1306 = vrot.lane.b32.xlu0 %v1299, 56
      %v1307 = vpop.permute.xlu0 %1306
      %v1309 = vunpack.c.l.b16 %v1142
      %v1310 = vpack.c.b16 %v1309, %v1309
      %1311 = vrot.lane.b32.xlu0 %v1280, 64
      %v1312 = vpop.permute.xlu0 %1311
      %1313 = vrot.lane.b32.xlu0 %v1199, 64
      %v1314 = vpop.permute.xlu0 %1313
      %1315 = vrot.lane.b32.xlu0 %v1310, 64
      %v1316 = vpop.permute.xlu0 %1315
      %v1318 = vunpack.c.l.b16 %v1143
      %v1319 = vpack.c.b16 %v464, %v1318
      %v1321 = vshrl.u32 %v1319, 16
      %v1323 = vshll.u32 %v1319, 16
      %v1325 = vrot.slane %v1323, 1
      %v1326 = vor.u32 %v1321, %v1325
      %v1327 = vsel %vm477, %v1326, %v753
      %v1328 = vrot.slane %v1204, 1
      %v1329 = vsel %vm477, %v758, %v1328
      %v1330 = vor.u32 %v1201, %v1328
      %v1332 = vshll.u32 %v1310, 16
      %v1334 = vrot.slane %v1332, 1
      %v1335 = vsel %vm477, %v1330, %v1334
      %v1336 = vshrl.u32 %v1310, 16
      %v1338 = vor.u32 %v1336, %v1334
      %1339 = vrot.lane.b32.xlu0 %v1327, 72
      %v1340 = vpop.permute.xlu0 %1339
      %1341 = vrot.lane.b32.xlu0 %v1329, 72
      %v1342 = vpop.permute.xlu0 %1341
      %1343 = vrot.lane.b32.xlu0 %v1335, 72
      %v1344 = vpop.permute.xlu0 %1343
      %1345 = vrot.lane.b32.xlu0 %v1338, 72
      %v1346 = vpop.permute.xlu0 %1345
      %v1348 = vunpack.c.l.b16 %v1144
      %v1349 = vpack.c.b16 %v1348, %v1348
      %v1350 = vrot.slane %v1319, 1
      %v1351 = vsel %vm530, %v1350, %v783
      %v1352 = vrot.slane %v1199, 1
      %v1353 = vsel %vm530, %v785, %v1352
      %v1354 = vrot.slane %v1349, 1
      %v1355 = vsel %vm530, %v1352, %v1354
      %1356 = vrot.lane.b32.xlu0 %v1351, 80
      %v1357 = vpop.permute.xlu0 %1356
      %1358 = vrot.lane.b32.xlu0 %v1353, 80
      %v1359 = vpop.permute.xlu0 %1358
      %1360 = vrot.lane.b32.xlu0 %v1355, 80
      %v1361 = vpop.permute.xlu0 %1360
      %1362 = vrot.lane.b32.xlu0 %v1354, 80
      %v1363 = vpop.permute.xlu0 %1362
      %v1364 = vpack.c.b16 %v1348, %v1183
      %v1366 = vshrl.u32 %v1364, 16
      %v1368 = vrot.slane %v1366, 5
      %v1369 = vshll.u32 %v1364, 16
      %v1371 = vrot.slane %v1369, 6
      %v1372 = vor.u32 %v1368, %v1371
      %v1373 = vsel %vm554, %v818, %v1372
      %1374 = vrot.lane.b32.xlu0 %v805, 88
      %v1375 = vpop.permute.xlu0 %1374
      %1376 = vrot.lane.b32.xlu0 %v1373, 88
      %v1377 = vpop.permute.xlu0 %1376
      %1378 = vrot.lane.b32.xlu0 %v1372, 88
      %v1379 = vpop.permute.xlu0 %1378
      %v1381 = vunpack.c.l.b16 %v1145
      %v1382 = vpack.c.b16 %v1381, %v1381
      %v1383 = vrot.slane %v1364, 6
      %v1384 = vsel %vm603, %v838, %v1383
      %v1385 = vrot.slane %v1382, 6
      %v1386 = vsel %vm603, %v1383, %v1385
      %1387 = vrot.lane.b32.xlu0 %v834, 96
      %v1388 = vpop.permute.xlu0 %1387
      %1389 = vrot.lane.b32.xlu0 %v1384, 96
      %v1390 = vpop.permute.xlu0 %1389
      %1391 = vrot.lane.b32.xlu0 %v1386, 96
      %v1392 = vpop.permute.xlu0 %1391
      %v1394 = vunpack.c.l.b16 %v1146
      %v1395 = vpack.c.b16 %v465, %v1394
      %v1397 = vshrl.u32 %v1395, 16
      %v1399 = vrot.slane %v1397, 6
      %v1400 = vshll.u32 %v1395, 16
      %v1402 = vrot.slane %v1400, 7
      %v1403 = vor.u32 %v1399, %v1402
      %v1404 = vsel %vm626, %v1403, %v869
      %v1405 = vrot.slane %v1366, 6
      %v1406 = vrot.slane %v1369, 7
      %v1407 = vor.u32 %v1405, %v1406
      %v1408 = vsel %vm626, %v873, %v1407
      %v1410 = vshrl.u32 %v1382, 16
      %v1412 = vrot.slane %v1410, 6
      %v1413 = vshll.u32 %v1382, 16
      %v1415 = vrot.slane %v1413, 7
      %v1416 = vor.u32 %v1412, %v1415
      %v1417 = vsel %vm626, %v1407, %v1416
      %1418 = vrot.lane.b32.xlu0 %v1403, 104
      %v1419 = vpop.permute.xlu0 %1418
      %1420 = vrot.lane.b32.xlu0 %v1404, 104
      %v1421 = vpop.permute.xlu0 %1420
      %1422 = vrot.lane.b32.xlu0 %v1408, 104
      %v1423 = vpop.permute.xlu0 %1422
      %1424 = vrot.lane.b32.xlu0 %v1417, 104
      %v1425 = vpop.permute.xlu0 %1424
      %v1427 = vunpack.c.l.b16 %v1147
      %v1428 = vpack.c.b16 %v1427, %v1427
      %v1429 = vrot.slane %v1395, 7
      %v1430 = vsel %vm669, %v1429, %v900
      %v1431 = vrot.slane %v1364, 7
      %v1432 = vsel %vm669, %v902, %v1431
      %v1433 = vrot.slane %v1428, 7
      %v1434 = vsel %vm669, %v1431, %v1433
      %1435 = vrot.lane.b32.xlu0 %v1429, 112
      %v1436 = vpop.permute.xlu0 %1435
      %1437 = vrot.lane.b32.xlu0 %v1430, 112
      %v1438 = vpop.permute.xlu0 %1437
      %1439 = vrot.lane.b32.xlu0 %v1432, 112
      %v1440 = vpop.permute.xlu0 %1439
      %1441 = vrot.lane.b32.xlu0 %v1434, 112
      %v1442 = vpop.permute.xlu0 %1441
      %v1444 = vunpack.c.l.b16 %v1148
      %v1445 = vpack.c.b16 %v465, %v1444
      %v1447 = vshrl.u32 %v1445, 16
      %v1449 = vrot.slane %v1447, 7
      %v1450 = vshll.u32 %v1445, 16
      %v1452 = vor.u32 %v1449, %v1450
      %v1453 = vsel %vm692, %v1449, %v930
      %v1454 = vrot.slane %v1366, 7
      %v1455 = vor.u32 %v1454, %v1369
      %v1456 = vsel %vm692, %v932, %v1455
      %v1458 = vshrl.u32 %v1428, 16
      %v1460 = vrot.slane %v1458, 7
      %v1461 = vshll.u32 %v1428, 16
      %v1463 = vor.u32 %v1460, %v1461
      %v1464 = vsel %vm692, %v1454, %v1463
      %1465 = vrot.lane.b32.xlu0 %v1452, 120
      %v1466 = vpop.permute.xlu0 %1465
      %1467 = vrot.lane.b32.xlu0 %v1453, 120
      %v1468 = vpop.permute.xlu0 %1467
      %1469 = vrot.lane.b32.xlu0 %v1456, 120
      %v1470 = vpop.permute.xlu0 %1469
      %1471 = vrot.lane.b32.xlu0 %v1464, 120
      %v1472 = vpop.permute.xlu0 %1471
      %v1474 = vsel %vm953, %v918, %v1175
      %v1476 = vsel %vm953, %v472, %v1177
      %v1478 = vsel %vm953, %v799, %v1179
      %v1480 = vsel %vm953, %v1151, %v1181
      %v1482 = vsel %vm965, %v1474, %v1192
      %v1484 = vsel %vm965, %v1476, %v1194
      %v1486 = vsel %vm965, %v1478, %v1196
      %v1488 = vsel %vm965, %v1480, %v1198
      %v1490 = vsel %vm976, %v1482, %v1210
      %v1491 = vsel %vm976, %v1484, %v597
      %v1493 = vsel %vm976, %v1486, %v1212
      %v1495 = vsel %vm976, %v1488, %v1214
      %v1497 = vsel %vm987, %v1490, %v1223
      %v1498 = vsel %vm987, %v1491, %v620
      %v1500 = vsel %vm987, %v1493, %v1225
      %v1502 = vsel %vm987, %v1495, %v1227
      %v1504 = vsel %vm998, %v1497, %v1254
      %v1506 = vsel %vm998, %v993, %v1256
      %v1507 = vsel %vm998, %v1498, %v663
      %v1509 = vsel %vm998, %v1500, %v1258
      %v1511 = vsel %vm998, %v1502, %v1260
      %v1513 = vsel %vm1009, %v1504, %v1271
      %v1515 = vsel %vm1009, %v1506, %v1273
      %v1516 = vsel %vm1009, %v1507, %v686
      %v1518 = vsel %vm1009, %v1509, %v1275
      %v1520 = vsel %vm1009, %v1511, %v1277
      %v1522 = vsel %vm1020, %v1513, %v1301
      %v1524 = vsel %vm1020, %v1515, %v1303
      %v1525 = vsel %vm1020, %v1516, %v724
      %v1527 = vsel %vm1020, %v1518, %v1305
      %v1529 = vsel %vm1020, %v1520, %v1307
      %v1531 = vsel %vm1031, %v1522, %v1312
      %v1532 = vsel %vm1031, %v1524, %v735
      %v1533 = vsel %vm1031, %v1525, %v737
      %v1535 = vsel %vm1031, %v1527, %v1314
      %v1537 = vsel %vm1031, %v1529, %v1316
      %v1539 = vsel %vm1042, %v1531, %v1340
      %v1540 = vsel %vm1042, %v1532, %v772
      %v1542 = vsel %vm1042, %v1533, %v1342
      %v1544 = vsel %vm1042, %v1535, %v1344
      %v1546 = vsel %vm1042, %v1537, %v1346
      %v1548 = vsel %vm1053, %v1539, %v1357
      %v1549 = vsel %vm1053, %v1540, %v794
      %v1551 = vsel %vm1053, %v1542, %v1359
      %v1553 = vsel %vm1053, %v1544, %v1361
      %v1555 = vsel %vm1053, %v1546, %v1363
      %v1557 = vsel %vm1064, %v1548, %v1375
      %v1558 = vsel %vm1064, %v1549, %v825
      %v1559 = vsel %vm1064, %v1551, %v827
      %v1561 = vsel %vm1064, %v1553, %v1377
      %v1563 = vsel %vm1064, %v1555, %v1379
      %v1565 = vsel %vm1075, %v1557, %v1388
      %v1566 = vsel %vm1075, %v1558, %v847
      %v1567 = vsel %vm1075, %v1559, %v849
      %v1569 = vsel %vm1075, %v1561, %v1390
      %v1571 = vsel %vm1075, %v1563, %v1392
      %v1573 = vsel %vm1086, %v1565, %v1419
      %v1575 = vsel %vm1086, %v1566, %v1421
      %v1576 = vsel %vm1086, %v1567, %v891
      %v1578 = vsel %vm1086, %v1569, %v1423
      %v1580 = vsel %vm1086, %v1571, %v1425
      %v1582 = vsel %vm1097, %v1573, %v1436
      %v1584 = vsel %vm1097, %v1575, %v1438
      %v1585 = vsel %vm1097, %v1576, %v913
      %v1587 = vsel %vm1097, %v1578, %v1440
      %v1589 = vsel %vm1097, %v1580, %v1442
      %v1591 = vsel %vm1108, %v1582, %v1466
      %v1593 = vsel %vm1108, %v1584, %v1468
      %v1594 = vsel %vm1108, %v1585, %v950
      %v1596 = vsel %vm1108, %v1587, %v1470
      %v1598 = vsel %vm1108, %v1589, %v1472
      %v1599 = vld [vmem:[%s5 + $0x40] sm:$0xf]
      %v1600 = vld [vmem:[%s5 + $0x44] sm:$0xf]
      %v1601 = vld [vmem:[%s5 + $0x48] sm:$0xf]
      %v1602 = vld [vmem:[%s5 + $0x4c] sm:$0xf]
      %v1603 = vld [vmem:[%s5 + $0x50] sm:$0xf]
      %v1604 = vld [vmem:[%s5 + $0x54] sm:$0xf]
      %v1605 = vld [vmem:[%s5 + $0x58] sm:$0xf]
      %v1606 = vld [vmem:[%s5 + $0x5c] sm:$0xf]
      %v1607 = vld [vmem:[%s5 + $0x60] sm:$0xf]
      %v1608 = vld [vmem:[%s5 + $0x64] sm:$0xf]
      %v1609 = vld [vmem:[%s5 + $0x68] sm:$0xf]
      %v1610 = vld [vmem:[%s5 + $0x6c] sm:$0xf]
      %v1611 = vld [vmem:[%s5 + $0x70] sm:$0xf]
      %v1612 = vld [vmem:[%s5 + $0x74] sm:$0xf]
      %v1613 = vld [vmem:[%s5 + $0x78] sm:$0xf]
      %v1614 = vld [vmem:[%s5 + $0x7c] sm:$0xf]
      %vm1615 = vsmask.f32 5376
      %v1616 = vshrl.u32 %v1591, 16
      %v1618 = vrot.slane %v1616, 2
      %v1619 = vshll.u32 %v1591, 16
      %v1621 = vrot.slane %v1619, 3
      %v1622 = vor.u32 %v1618, %v1621
      %v1623 = vshrl.u32 %v1593, 16
      %v1625 = vrot.slane %v1623, 2
      %v1626 = vshll.u32 %v1593, 16
      %v1628 = vrot.slane %v1626, 3
      %v1629 = vor.u32 %v1625, %v1628
      %v1630 = vsel %vm1615, %v1622, %v1629
      %v1631 = vshrl.u32 %v1594, 16
      %v1633 = vrot.slane %v1631, 2
      %v1634 = vshll.u32 %v1594, 16
      %v1636 = vrot.slane %v1634, 3
      %v1637 = vor.u32 %v1633, %v1636
      %v1638 = vsel %vm1615, %v1629, %v1637
      %v1639 = vshrl.u32 %v1596, 16
      %v1641 = vrot.slane %v1639, 2
      %v1642 = vshll.u32 %v1596, 16
      %v1644 = vrot.slane %v1642, 3
      %v1645 = vor.u32 %v1641, %v1644
      %v1646 = vsel %vm1615, %v1637, %v1645
      %v1647 = vshrl.u32 %v1598, 16
      %v1649 = vrot.slane %v1647, 2
      %v1650 = vshll.u32 %v1598, 16
      %v1652 = vrot.slane %v1650, 3
      %v1653 = vor.u32 %v1649, %v1652
      %v1654 = vsel %vm1615, %v1645, %v1653
      %v1675 = vunpack.c.l.b16 %v1599
      %v1676 = vunpack.c.l.b16 %v1600
      %v1677 = vunpack.c.l.b16 %v1601
      %v1678 = vunpack.c.l.b16 %v1602
      %v1679 = vunpack.c.l.b16 %v1603
      %v1680 = vunpack.c.l.b16 %v1604
      %v1681 = vunpack.c.l.b16 %v1605
      %v1682 = vunpack.c.l.b16 %v1606
      %v1683 = vunpack.c.l.b16 %v1607
      %v1684 = vunpack.c.l.b16 %v1608
      %v1685 = vunpack.c.l.b16 %v1609
      %v1686 = vunpack.c.l.b16 %v1610
      %v1687 = vunpack.c.l.b16 %v1611
      %v1688 = vunpack.c.l.b16 %v1612
      %v1689 = vunpack.c.l.b16 %v1613
      %v1690 = vunpack.c.l.b16 %v1614
      %v1691 = vpack.c.b16 %v1676, %v1675
      %v1692 = vpack.c.b16 %v1678, %v1677
      %v1693 = vpack.c.b16 %v1680, %v1679
      %v1694 = vpack.c.b16 %v1682, %v1681
      %v1695 = vpack.c.b16 %v1684, %v1683
      %v1696 = vpack.c.b16 %v1686, %v1685
      %v1697 = vpack.c.b16 %v1688, %v1687
      %v1698 = vpack.c.b16 %v1690, %v1689
      %1707 = vmatpush.bf16.msra.mxu0 %v1698
      %1708 = vmatpush.bf16.msra.mxu0 %v1697
      %1709 = vmatpush.bf16.msra.mxu0 %v1696
      %1710 = vmatpush.bf16.msra.mxu0 %v1695
      %1711 = vmatpush.bf16.msra.mxu0 %v1694
      %1712 = vmatpush.bf16.msra.mxu0 %v1693
      %1713 = vmatpush.bf16.msra.mxu0 %v1692
      %1714 = vmatpush.bf16.msra.mxu0 %v1691
      %1715 = vmatmul.bf16.gmra.mxu0 %v1630
      %v1716 = vpop.f32.mrf.mxu0
      %v1717 = vadd.f32 0.0, %v1716
      %v1718 = vpop.f32.mrf.mxu0
      %v1719 = vadd.f32 0.0, %v1718
      %1720 = vmatmul.bf16.gmra.mxu0 %v1638
      %v1721 = vpop.f32.mrf.mxu0
      %v1722 = vadd.f32 0.0, %v1721
      %v1723 = vpop.f32.mrf.mxu0
      %v1724 = vadd.f32 0.0, %v1723
      %1725 = vmatmul.bf16.gmra.mxu0 %v1646
      %v1726 = vpop.f32.mrf.mxu0
      %v1727 = vadd.f32 0.0, %v1726
      %v1728 = vpop.f32.mrf.mxu0
      %v1729 = vadd.f32 0.0, %v1728
      %1730 = vmatmul.bf16.gmra.mxu0 %v1654
      %v1731 = vpop.f32.mrf.mxu0
      %v1732 = vadd.f32 0.0, %v1731
      %v1733 = vpop.f32.mrf.mxu0
      %v1734 = vadd.f32 0.0, %v1733
      %1735 = vdwg.mxu0
      %v1736 = vshrl.u32 %v1110, 16
      %v1738 = vrot.slane %v1736, 2
      %v1739 = vshll.u32 %v1110, 16
      %v1741 = vrot.slane %v1739, 3
      %v1742 = vor.u32 %v1738, %v1741
      %v1743 = vshrl.u32 %v1112, 16
      %v1745 = vrot.slane %v1743, 2
      %v1746 = vshll.u32 %v1112, 16
      %v1748 = vrot.slane %v1746, 3
      %v1749 = vor.u32 %v1745, %v1748
      %v1750 = vsel %vm1615, %v1742, %v1749
      %v1751 = vshrl.u32 %v1114, 16
      %v1753 = vrot.slane %v1751, 2
      %v1754 = vshll.u32 %v1114, 16
      %v1756 = vrot.slane %v1754, 3
      %v1757 = vor.u32 %v1753, %v1756
      %v1758 = vsel %vm1615, %v1749, %v1757
      %v1759 = vshrl.u32 %v1116, 16
      %v1761 = vrot.slane %v1759, 2
      %v1762 = vshll.u32 %v1116, 16
      %v1764 = vrot.slane %v1762, 3
      %v1765 = vor.u32 %v1761, %v1764
      %v1766 = vsel %vm1615, %v1757, %v1765
      %v1767 = vshrl.u32 %v1118, 16
      %v1769 = vrot.slane %v1767, 2
      %v1770 = vshll.u32 %v1118, 16
      %v1772 = vrot.slane %v1770, 3
      %v1773 = vor.u32 %v1769, %v1772
      %v1774 = vsel %vm1615, %v1765, %v1773
      %v1795 = vunpack.c.l.b16 %v1119
      %v1796 = vunpack.c.l.b16 %v1120
      %v1797 = vunpack.c.l.b16 %v1121
      %v1798 = vunpack.c.l.b16 %v1122
      %v1799 = vunpack.c.l.b16 %v1123
      %v1800 = vunpack.c.l.b16 %v1124
      %v1801 = vunpack.c.l.b16 %v1125
      %v1802 = vunpack.c.l.b16 %v1126
      %v1803 = vunpack.c.l.b16 %v1127
      %v1804 = vunpack.c.l.b16 %v1128
      %v1805 = vunpack.c.l.b16 %v1129
      %v1806 = vunpack.c.l.b16 %v1130
      %v1807 = vunpack.c.l.b16 %v1131
      %v1808 = vunpack.c.l.b16 %v1132
      %v1809 = vunpack.c.l.b16 %v1133
      %v1810 = vunpack.c.l.b16 %v1134
      %v1811 = vpack.c.b16 %v1796, %v1795
      %v1812 = vpack.c.b16 %v1798, %v1797
      %v1813 = vpack.c.b16 %v1800, %v1799
      %v1814 = vpack.c.b16 %v1802, %v1801
      %v1815 = vpack.c.b16 %v1804, %v1803
      %v1816 = vpack.c.b16 %v1806, %v1805
      %v1817 = vpack.c.b16 %v1808, %v1807
      %v1818 = vpack.c.b16 %v1810, %v1809
      %1827 = vmatpush.bf16.msra.mxu0 %v1818
      %1828 = vmatpush.bf16.msra.mxu0 %v1817
      %1829 = vmatpush.bf16.msra.mxu0 %v1816
      %1830 = vmatpush.bf16.msra.mxu0 %v1815
      %1831 = vmatpush.bf16.msra.mxu0 %v1814
      %1832 = vmatpush.bf16.msra.mxu0 %v1813
      %1833 = vmatpush.bf16.msra.mxu0 %v1812
      %1834 = vmatpush.bf16.msra.mxu0 %v1811
      %1835 = vmatmul.bf16.gmra.mxu0 %v1750
      %v1836 = vpop.f32.mrf.mxu0
      %v1837 = vadd.f32 %v1717, %v1836
      %v1838 = vpop.f32.mrf.mxu0
      %v1839 = vadd.f32 %v1719, %v1838
      %1840 = vmatmul.bf16.gmra.mxu0 %v1758
      %v1841 = vpop.f32.mrf.mxu0
      %v1842 = vadd.f32 %v1722, %v1841
      %v1843 = vpop.f32.mrf.mxu0
      %v1844 = vadd.f32 %v1724, %v1843
      %1845 = vmatmul.bf16.gmra.mxu0 %v1766
      %v1846 = vpop.f32.mrf.mxu0
      %v1847 = vadd.f32 %v1727, %v1846
      %v1848 = vpop.f32.mrf.mxu0
      %v1849 = vadd.f32 %v1729, %v1848
      %1850 = vmatmul.bf16.gmra.mxu0 %v1774
      %v1851 = vpop.f32.mrf.mxu0
      %v1852 = vadd.f32 %v1732, %v1851
      %v1853 = vpop.f32.mrf.mxu0
      %v1854 = vadd.f32 %v1734, %v1853
      %1855 = vdwg.mxu0
      %v1856 = vld [vmem:[#allocation2 + $0x34] sm:$0x7]
      %v1857 = vld [vmem:[#allocation2 + $0x14] sm:$0x8]
      %v1858 = vld [vmem:[#allocation2 + $0x34] sm:$0xf]
      %v1859 = vld [vmem:[#allocation2 + $0x18] sm:$0xf]
      %v1860 = vld [vmem:[#allocation2 + $0x1c] sm:$0xf]
      %v1861 = vld [vmem:[#allocation2 + $0x20] sm:$0xf]
      %v1862 = vld [vmem:[#allocation2 + $0x24] sm:$0xf]
      %v1863 = vld [vmem:[#allocation2 + $0x28] sm:$0xf]
      %v1864 = vld [vmem:[#allocation2 + $0x2c] sm:$0xf]
      %v1865 = vld [vmem:[#allocation2 + $0x30] sm:$0xf]
      %v1866 = vld [vmem:[#allocation2 + $0x38] sm:$0x1]
      %v1867 = vld [vmem:[#allocation2 + $0x18] sm:$0xe]
      %v1868 = vld [vmem:[#allocation2 + $0x38] sm:$0x3]
      %v1869 = vld [vmem:[#allocation2 + $0x18] sm:$0xc]
      %v1871 = vunpack.c.l.b16 %v1856
      %v1872 = vpack.c.b16 %v1871, %v1871
      %v1874 = vunpack.c.l.b16 %v1857
      %v1875 = vpack.c.b16 %v465, %v1874
      %v1877 = vshrl.u32 %v1875, 16
      %v1879 = vshll.u32 %v1875, 16
      %v1881 = vrot.slane %v1879, 1
      %v1882 = vor.u32 %v1877, %v1881
      %v1883 = vsel %vm477, %v1882, %v504
      %v1884 = vrot.slane %v1369, 1
      %v1885 = vsel %vm477, %v1165, %v1884
      %v1886 = vor.u32 %v1366, %v1884
      %v1888 = vshll.u32 %v1872, 16
      %v1890 = vrot.slane %v1888, 1
      %v1891 = vsel %vm477, %v1886, %v1890
      %v1892 = vshrl.u32 %v1872, 16
      %v1894 = vor.u32 %v1892, %v1890
      %1895 = vrot.lane.b32.xlu0 %v1883, 8
      %v1896 = vpop.permute.xlu0 %1895
      %1897 = vrot.lane.b32.xlu0 %v1885, 8
      %v1898 = vpop.permute.xlu0 %1897
      %1899 = vrot.lane.b32.xlu0 %v1891, 8
      %v1900 = vpop.permute.xlu0 %1899
      %1901 = vrot.lane.b32.xlu0 %v1894, 8
      %v1902 = vpop.permute.xlu0 %1901
      %v1904 = vunpack.c.l.b16 %v1858
      %v1905 = vpack.c.b16 %v1904, %v1904
      %v1906 = vrot.slane %v1875, 1
      %v1907 = vsel %vm530, %v1906, %v536
      %v1908 = vrot.slane %v1364, 1
      %v1909 = vsel %vm530, %v1187, %v1908
      %v1910 = vrot.slane %v1905, 1
      %v1911 = vsel %vm530, %v1908, %v1910
      %1912 = vrot.lane.b32.xlu0 %v1907, 16
      %v1913 = vpop.permute.xlu0 %1912
      %1914 = vrot.lane.b32.xlu0 %v1909, 16
      %v1915 = vpop.permute.xlu0 %1914
      %1916 = vrot.lane.b32.xlu0 %v1911, 16
      %v1917 = vpop.permute.xlu0 %1916
      %1918 = vrot.lane.b32.xlu0 %v1910, 16
      %v1919 = vpop.permute.xlu0 %1918
      %v1920 = vpack.c.b16 %v1904, %v1348
      %v1922 = vshrl.u32 %v1920, 16
      %v1924 = vrot.slane %v1922, 5
      %v1925 = vshll.u32 %v1920, 16
      %v1927 = vrot.slane %v1925, 6
      %v1928 = vor.u32 %v1924, %v1927
      %v1929 = vsel %vm554, %v1207, %v1928
      %1930 = vrot.lane.b32.xlu0 %v579, 24
      %v1931 = vpop.permute.xlu0 %1930
      %1932 = vrot.lane.b32.xlu0 %v1929, 24
      %v1933 = vpop.permute.xlu0 %1932
      %1934 = vrot.lane.b32.xlu0 %v1928, 24
      %v1935 = vpop.permute.xlu0 %1934
      %v1944 = vunpack.c.l.b16 %v1859
      %v1945 = vunpack.c.l.b16 %v1860
      %v1946 = vunpack.c.l.b16 %v1861
      %v1947 = vunpack.c.l.b16 %v1862
      %v1948 = vunpack.c.l.b16 %v1863
      %v1949 = vunpack.c.l.b16 %v1864
      %v1950 = vunpack.c.l.b16 %v1865
      %v1951 = vunpack.c.l.b16 %v1866
      %v1952 = vpack.c.b16 %v1945, %v1944
      %v1953 = vpack.c.b16 %v1947, %v1946
      %v1954 = vpack.c.b16 %v1949, %v1948
      %v1955 = vpack.c.b16 %v1904, %v1950
      %v1956 = vpack.c.b16 %v1951, %v1951
      %v1957 = vrot.slane %v1952, 6
      %v1958 = vrot.slane %v1953, 6
      %v1959 = vsel %vm603, %v1957, %v1958
      %v1960 = vrot.slane %v1954, 6
      %v1961 = vsel %vm603, %v1958, %v1960
      %v1962 = vrot.slane %v1955, 6
      %v1963 = vsel %vm603, %v1960, %v1962
      %v1964 = vrot.slane %v1956, 6
      %v1965 = vsel %vm603, %v1962, %v1964
      %1966 = vrot.lane.b32.xlu0 %v1957, 32
      %v1967 = vpop.permute.xlu0 %1966
      %1968 = vrot.lane.b32.xlu0 %v1959, 32
      %v1969 = vpop.permute.xlu0 %1968
      %1970 = vrot.lane.b32.xlu0 %v1961, 32
      %v1971 = vpop.permute.xlu0 %1970
      %1972 = vrot.lane.b32.xlu0 %v1963, 32
      %v1973 = vpop.permute.xlu0 %1972
      %1974 = vrot.lane.b32.xlu0 %v1965, 32
      %v1975 = vpop.permute.xlu0 %1974
      %v1977 = vunpack.c.l.b16 %v1867
      %v1978 = vpack.c.b16 %v1945, %v1977
      %v1980 = vshrl.u32 %v1978, 16
      %v1982 = vrot.slane %v1980, 6
      %v1983 = vshll.u32 %v1978, 16
      %v1985 = vrot.slane %v1983, 7
      %v1986 = vor.u32 %v1982, %v1985
      %v1988 = vshrl.u32 %v1953, 16
      %v1990 = vrot.slane %v1988, 6
      %v1991 = vshll.u32 %v1953, 16
      %v1993 = vrot.slane %v1991, 7
      %v1994 = vor.u32 %v1990, %v1993
      %v1995 = vsel %vm626, %v1986, %v1994
      %v1997 = vshrl.u32 %v1954, 16
      %v1999 = vrot.slane %v1997, 6
      %v2000 = vshll.u32 %v1954, 16
      %v2002 = vrot.slane %v2000, 7
      %v2003 = vor.u32 %v1999, %v2002
      %v2004 = vsel %vm626, %v1994, %v2003
      %v2006 = vshrl.u32 %v1955, 16
      %v2008 = vrot.slane %v2006, 6
      %v2009 = vshll.u32 %v1955, 16
      %v2011 = vrot.slane %v2009, 7
      %v2012 = vor.u32 %v2008, %v2011
      %v2013 = vsel %vm626, %v2003, %v2012
      %v2015 = vshrl.u32 %v1956, 16
      %v2017 = vrot.slane %v2015, 6
      %v2018 = vshll.u32 %v1956, 16
      %v2020 = vrot.slane %v2018, 7
      %v2021 = vor.u32 %v2017, %v2020
      %v2022 = vsel %vm626, %v2012, %v2021
      %2023 = vrot.lane.b32.xlu0 %v1986, 40
      %v2024 = vpop.permute.xlu0 %2023
      %2025 = vrot.lane.b32.xlu0 %v1995, 40
      %v2026 = vpop.permute.xlu0 %2025
      %2027 = vrot.lane.b32.xlu0 %v2004, 40
      %v2028 = vpop.permute.xlu0 %2027
      %2029 = vrot.lane.b32.xlu0 %v2013, 40
      %v2030 = vpop.permute.xlu0 %2029
      %2031 = vrot.lane.b32.xlu0 %v2022, 40
      %v2032 = vpop.permute.xlu0 %2031
      %v2034 = vunpack.c.l.b16 %v1868
      %v2035 = vpack.c.b16 %v2034, %v2034
      %v2036 = vrot.slane %v1978, 7
      %v2037 = vrot.slane %v1953, 7
      %v2038 = vsel %vm669, %v2036, %v2037
      %v2039 = vrot.slane %v1954, 7
      %v2040 = vsel %vm669, %v2037, %v2039
      %v2041 = vrot.slane %v1955, 7
      %v2042 = vsel %vm669, %v2039, %v2041
      %v2043 = vrot.slane %v2035, 7
      %v2044 = vsel %vm669, %v2041, %v2043
      %2045 = vrot.lane.b32.xlu0 %v2036, 48
      %v2046 = vpop.permute.xlu0 %2045
      %2047 = vrot.lane.b32.xlu0 %v2038, 48
      %v2048 = vpop.permute.xlu0 %2047
      %2049 = vrot.lane.b32.xlu0 %v2040, 48
      %v2050 = vpop.permute.xlu0 %2049
      %2051 = vrot.lane.b32.xlu0 %v2042, 48
      %v2052 = vpop.permute.xlu0 %2051
      %2053 = vrot.lane.b32.xlu0 %v2044, 48
      %v2054 = vpop.permute.xlu0 %2053
      %v2056 = vunpack.c.l.b16 %v1869
      %v2057 = vpack.c.b16 %v1945, %v2056
      %v2059 = vshrl.u32 %v2057, 16
      %v2061 = vrot.slane %v2059, 7
      %v2062 = vshll.u32 %v2057, 16
      %v2064 = vor.u32 %v2061, %v2062
      %v2065 = vrot.slane %v1988, 7
      %v2066 = vor.u32 %v2065, %v1991
      %v2067 = vsel %vm692, %v2061, %v2066
      %v2068 = vrot.slane %v1997, 7
      %v2069 = vor.u32 %v2068, %v2000
      %v2070 = vsel %vm692, %v2065, %v2069
      %v2071 = vrot.slane %v2006, 7
      %v2072 = vor.u32 %v2071, %v2009
      %v2073 = vsel %vm692, %v2068, %v2072
      %v2075 = vshrl.u32 %v2035, 16
      %v2077 = vrot.slane %v2075, 7
      %v2078 = vshll.u32 %v2035, 16
      %v2080 = vor.u32 %v2077, %v2078
      %v2081 = vsel %vm692, %v2071, %v2080
      %2082 = vrot.lane.b32.xlu0 %v2064, 56
      %v2083 = vpop.permute.xlu0 %2082
      %2084 = vrot.lane.b32.xlu0 %v2067, 56
      %v2085 = vpop.permute.xlu0 %2084
      %2086 = vrot.lane.b32.xlu0 %v2070, 56
      %v2087 = vpop.permute.xlu0 %2086
      %2088 = vrot.lane.b32.xlu0 %v2073, 56
      %v2089 = vpop.permute.xlu0 %2088
      %2090 = vrot.lane.b32.xlu0 %v2081, 56
      %v2091 = vpop.permute.xlu0 %2090
      %v2093 = vsel %vm953, %v1445, %v1896
      %v2095 = vsel %vm953, %v799, %v1898
      %v2097 = vsel %vm953, %v1364, %v1900
      %v2099 = vsel %vm953, %v1872, %v1902
      %v2101 = vsel %vm965, %v2093, %v1913
      %v2103 = vsel %vm965, %v2095, %v1915
      %v2105 = vsel %vm965, %v2097, %v1917
      %v2107 = vsel %vm965, %v2099, %v1919
      %v2109 = vsel %vm976, %v2101, %v1931
      %v2110 = vsel %vm976, %v2103, %v1212
      %v2112 = vsel %vm976, %v2105, %v1933
      %v2114 = vsel %vm976, %v2107, %v1935
      %v2116 = vsel %vm987, %v2109, %v1967
      %v2118 = vsel %vm987, %v1491, %v1969
      %v2120 = vsel %vm987, %v2110, %v1971
      %v2122 = vsel %vm987, %v2112, %v1973
      %v2124 = vsel %vm987, %v2114, %v1975
      %v2126 = vsel %vm998, %v2116, %v2024
      %v2128 = vsel %vm998, %v2118, %v2026
      %v2130 = vsel %vm998, %v2120, %v2028
      %v2132 = vsel %vm998, %v2122, %v2030
      %v2134 = vsel %vm998, %v2124, %v2032
      %v2136 = vsel %vm1009, %v2126, %v2046
      %v2138 = vsel %vm1009, %v2128, %v2048
      %v2140 = vsel %vm1009, %v2130, %v2050
      %v2142 = vsel %vm1009, %v2132, %v2052
      %v2144 = vsel %vm1009, %v2134, %v2054
      %v2146 = vsel %vm1020, %v2136, %v2083
      %v2148 = vsel %vm1020, %v2138, %v2085
      %v2150 = vsel %vm1020, %v2140, %v2087
      %v2152 = vsel %vm1020, %v2142, %v2089
      %v2154 = vsel %vm1020, %v2144, %v2091
      %v2155 = vld [vmem:[%s5 + $0x80] sm:$0xf]
      %v2156 = vld [vmem:[%s5 + $0x84] sm:$0xf]
      %v2157 = vld [vmem:[%s5 + $0x88] sm:$0xf]
      %v2158 = vld [vmem:[%s5 + $0x8c] sm:$0xf]
      %v2159 = vld [vmem:[%s5 + $0x90] sm:$0xf]
      %v2160 = vld [vmem:[%s5 + $0x94] sm:$0xf]
      %v2161 = vld [vmem:[%s5 + $0x98] sm:$0xf]
      %v2162 = vld [vmem:[%s5 + $0x9c] sm:$0xf]
      %v2163 = vshrl.u32 %v2146, 16
      %v2165 = vrot.slane %v2163, 2
      %v2166 = vshll.u32 %v2146, 16
      %v2168 = vrot.slane %v2166, 3
      %v2169 = vor.u32 %v2165, %v2168
      %v2170 = vshrl.u32 %v2148, 16
      %v2172 = vrot.slane %v2170, 2
      %v2173 = vshll.u32 %v2148, 16
      %v2175 = vrot.slane %v2173, 3
      %v2176 = vor.u32 %v2172, %v2175
      %v2177 = vsel %vm1615, %v2169, %v2176
      %v2178 = vshrl.u32 %v2150, 16
      %v2180 = vrot.slane %v2178, 2
      %v2181 = vshll.u32 %v2150, 16
      %v2183 = vrot.slane %v2181, 3
      %v2184 = vor.u32 %v2180, %v2183
      %v2185 = vsel %vm1615, %v2176, %v2184
      %v2186 = vshrl.u32 %v2152, 16
      %v2188 = vrot.slane %v2186, 2
      %v2189 = vshll.u32 %v2152, 16
      %v2191 = vrot.slane %v2189, 3
      %v2192 = vor.u32 %v2188, %v2191
      %v2193 = vsel %vm1615, %v2184, %v2192
      %v2194 = vshrl.u32 %v2154, 16
      %v2196 = vrot.slane %v2194, 2
      %v2197 = vshll.u32 %v2154, 16
      %v2199 = vrot.slane %v2197, 3
      %v2200 = vor.u32 %v2196, %v2199
      %v2201 = vsel %vm1615, %v2192, %v2200
      %v2210 = vunpack.c.l.b16 %v2155
      %v2211 = vunpack.c.l.b16 %v2156
      %v2212 = vunpack.c.l.b16 %v2157
      %v2213 = vunpack.c.l.b16 %v2158
      %v2214 = vunpack.c.l.b16 %v2159
      %v2215 = vunpack.c.l.b16 %v2160
      %v2216 = vunpack.c.l.b16 %v2161
      %v2217 = vunpack.c.l.b16 %v2162
      %v2218 = vpack.c.b16 %v2211, %v2210
      %v2219 = vpack.c.b16 %v2213, %v2212
      %v2220 = vpack.c.b16 %v2215, %v2214
      %v2221 = vpack.c.b16 %v2217, %v2216
      %v2227 = vsel %vm1031, %v2177, 0
      %v2230 = vsel %vm1031, %v2185, 0
      %v2233 = vsel %vm1031, %v2193, 0
      %v2236 = vsel %vm1031, %v2201, 0
      %2238 = vmatpush.bf16.msra.mxu0 0
      %2239 = vmatpush.bf16.msra.mxu0 0
      %2240 = vmatpush.bf16.msra.mxu0 0
      %2241 = vmatpush.bf16.msra.mxu0 0
      %2242 = vmatpush.bf16.msra.mxu0 %v2221
      %2243 = vmatpush.bf16.msra.mxu0 %v2220
      %2244 = vmatpush.bf16.msra.mxu0 %v2219
      %2245 = vmatpush.bf16.msra.mxu0 %v2218
      %2246 = vmatmul.bf16.gmra.mxu0 %v2227
      %v2247 = vpop.f32.mrf.mxu0
      %v2248 = vadd.f32 0.0, %v2247
      %v2249 = vpop.f32.mrf.mxu0
      %v2250 = vadd.f32 0.0, %v2249
      %2251 = vmatmul.bf16.gmra.mxu0 %v2230
      %v2252 = vpop.f32.mrf.mxu0
      %v2253 = vadd.f32 0.0, %v2252
      %v2254 = vpop.f32.mrf.mxu0
      %v2255 = vadd.f32 0.0, %v2254
      %2256 = vmatmul.bf16.gmra.mxu0 %v2233
      %v2257 = vpop.f32.mrf.mxu0
      %v2258 = vadd.f32 0.0, %v2257
      %v2259 = vpop.f32.mrf.mxu0
      %v2260 = vadd.f32 0.0, %v2259
      %2261 = vmatmul.bf16.gmra.mxu0 %v2236
      %v2262 = vpop.f32.mrf.mxu0
      %v2263 = vadd.f32 0.0, %v2262
      %v2264 = vpop.f32.mrf.mxu0
      %v2265 = vadd.f32 0.0, %v2264
      %2266 = vdwg.mxu0
      %v2267 = vadd.f32 %v1837, %v2248
      %v2268 = vadd.f32 %v1839, %v2250
      %v2269 = vadd.f32 %v1842, %v2253
      %v2270 = vadd.f32 %v1844, %v2255
      %v2271 = vadd.f32 %v1847, %v2258
      %v2272 = vadd.f32 %v1849, %v2260
      %v2273 = vadd.f32 %v1852, %v2263
      %v2274 = vadd.f32 %v1854, %v2265
      %vm2283 = vcmask 1040384
      %v2284 = vrot.slane %v329, 7
      %v2285 = vrot.slane %v330, 7
      %v2286 = vsel %vm2283, %v2284, %v2285
      %v2287 = vrot.slane %v331, 7
      %v2288 = vsel %vm2283, %v2285, %v2287
      %v2289 = vrot.slane %v332, 7
      %v2290 = vsel %vm2283, %v2287, %v2289
      %v2291 = vrot.slane %v333, 7
      %v2292 = vsel %vm2283, %v2289, %v2291
      %v2293 = vrot.slane %v334, 7
      %v2294 = vsel %vm2283, %v2291, %v2293
      %v2295 = vrot.slane %v335, 7
      %v2296 = vsel %vm2283, %v2293, %v2295
      %v2297 = vrot.slane %v336, 7
      %v2298 = vsel %vm2283, %v2295, %v2297
      %v2307 = vsel %vm2283, -inf, %v2284
      %vm2308 = vcmask 1046528
      %v2309 = vrot.slane %v329, 1
      %v2310 = vrot.slane %v330, 1
      %v2311 = vsel %vm2308, %v2309, %v2310
      %v2312 = vrot.slane %v331, 1
      %v2313 = vsel %vm2308, %v2310, %v2312
      %v2314 = vrot.slane %v332, 1
      %v2315 = vsel %vm2308, %v2312, %v2314
      %v2316 = vrot.slane %v333, 1
      %v2317 = vsel %vm2308, %v2314, %v2316
      %v2318 = vrot.slane %v334, 1
      %v2319 = vsel %vm2308, %v2316, %v2318
      %v2320 = vrot.slane %v335, 1
      %v2321 = vsel %vm2308, %v2318, %v2320
      %v2322 = vrot.slane %v336, 1
      %v2323 = vsel %vm2308, %v2320, %v2322
      %v2332 = vsel %vm2308, %v2322, -inf
      %v2333 = vmax.f32 %v2307, %v2311
      %v2334 = vmax.f32 %v2286, %v2313
      %v2335 = vmax.f32 %v2288, %v2315
      %v2336 = vmax.f32 %v2290, %v2317
      %v2337 = vmax.f32 %v2292, %v2319
      %v2338 = vmax.f32 %v2294, %v2321
      %v2339 = vmax.f32 %v2296, %v2323
      %v2340 = vmax.f32 %v2298, %v2332
      %v2341 = vmax.f32 %v329, %v2333
      %v2342 = vmax.f32 %v330, %v2334
      %v2343 = vmax.f32 %v331, %v2335
      %v2344 = vmax.f32 %v332, %v2336
      %v2345 = vmax.f32 %v333, %v2337
      %v2346 = vmax.f32 %v334, %v2338
      %v2347 = vmax.f32 %v335, %v2339
      %v2348 = vmax.f32 %v336, %v2340
      %v2349 = vpack.c.bf16 %v2342, %v2341
      %v2350 = vpack.c.bf16 %v2344, %v2343
      %v2351 = vpack.c.bf16 %v2346, %v2345
      %v2352 = vpack.c.bf16 %v2348, %v2347
      %v2353 = vld [vmem:[%s6] sm:$0x3]
      %v2355 = vsel %vm367, %v2349, 0
      %v2358 = vsel %vm367, %v2350, 0
      %v2361 = vsel %vm367, %v2351, 0
      %v2364 = vsel %vm367, %v2352, 0
      %v2367 = vsel %vm380, %v2353, 0
      %2369 = vmatpush.bf16.msra.mxu0 0
      %2370 = vmatpush.bf16.msra.mxu0 0
      %2371 = vmatpush.bf16.msra.mxu0 0
      %2372 = vmatpush.bf16.msra.mxu0 0
      %2373 = vmatpush.bf16.msra.mxu0 0
      %2374 = vmatpush.bf16.msra.mxu0 0
      %2375 = vmatpush.bf16.msra.mxu0 0
      %2376 = vmatpush.bf16.msra.mxu0 %v2367
      %2377 = vmatmul.bf16.gmra.mxu0 %v2355
      %v2378 = vpop.f32.mrf.mxu0
      %v2379 = vadd.f32 0.0, %v2378
      %v2380 = vpop.f32.mrf.mxu0
      %v2381 = vadd.f32 0.0, %v2380
      %2382 = vmatmul.bf16.gmra.mxu0 %v2358
      %v2383 = vpop.f32.mrf.mxu0
      %v2384 = vadd.f32 0.0, %v2383
      %v2385 = vpop.f32.mrf.mxu0
      %v2386 = vadd.f32 0.0, %v2385
      %2387 = vmatmul.bf16.gmra.mxu0 %v2361
      %v2388 = vpop.f32.mrf.mxu0
      %v2389 = vadd.f32 0.0, %v2388
      %v2390 = vpop.f32.mrf.mxu0
      %v2391 = vadd.f32 0.0, %v2390
      %2392 = vmatmul.bf16.gmra.mxu0 %v2364
      %v2393 = vpop.f32.mrf.mxu0
      %v2394 = vadd.f32 0.0, %v2393
      %v2395 = vpop.f32.mrf.mxu0
      %v2396 = vadd.f32 0.0, %v2395
      %2397 = vdwg.mxu0
      %v2398 = vpack.c.bf16 %v2267, %v2267
      %v2399 = vpack.c.bf16 %v2268, %v2268
      %v2400 = vpack.c.bf16 %v2269, %v2269
      %v2401 = vpack.c.bf16 %v2270, %v2270
      %v2402 = vpack.c.bf16 %v2271, %v2271
      %v2403 = vpack.c.bf16 %v2272, %v2272
      %v2404 = vpack.c.bf16 %v2273, %v2273
      %v2405 = vpack.c.bf16 %v2274, %v2274
      %vm2406 = vcmask 191488
      %2407 = vst.msk [vmem:[%s314] sm:$0xf] %vm2406, %v2398
      %2408 = vst.msk [vmem:[%s314 + $0x4] sm:$0xf] %vm2406, %v2399
      %2409 = vst.msk [vmem:[%s314 + $0x8] sm:$0xf] %vm2406, %v2400
      %2410 = vst.msk [vmem:[%s314 + $0xc] sm:$0xf] %vm2406, %v2401
      %2411 = vst.msk [vmem:[%s314 + $0x10] sm:$0xf] %vm2406, %v2402
      %2412 = vst.msk [vmem:[%s314 + $0x14] sm:$0xf] %vm2406, %v2403
      %2413 = vst.msk [vmem:[%s314 + $0x18] sm:$0xf] %vm2406, %v2404
      %2414 = vst.msk [vmem:[%s314 + $0x1c] sm:$0xf] %vm2406, %v2405
      %v2415 = vpack.c.bf16 %v2379, %v2379
      %v2416 = vpack.c.bf16 %v2381, %v2381
      %v2417 = vpack.c.bf16 %v2384, %v2384
      %v2418 = vpack.c.bf16 %v2386, %v2386
      %v2419 = vpack.c.bf16 %v2389, %v2389
      %v2420 = vpack.c.bf16 %v2391, %v2391
      %v2421 = vpack.c.bf16 %v2394, %v2394
      %v2422 = vpack.c.bf16 %v2396, %v2396
      %2431 = vrot.lane.b32.xlu0 %v2415, 24
      %v2432 = vpop.permute.xlu0 %2431
      %2433 = vrot.lane.b32.xlu0 %v2416, 24
      %v2434 = vpop.permute.xlu0 %2433
      %2435 = vrot.lane.b32.xlu0 %v2417, 24
      %v2436 = vpop.permute.xlu0 %2435
      %2437 = vrot.lane.b32.xlu0 %v2418, 24
      %v2438 = vpop.permute.xlu0 %2437
      %2439 = vrot.lane.b32.xlu0 %v2419, 24
      %v2440 = vpop.permute.xlu0 %2439
      %2441 = vrot.lane.b32.xlu0 %v2420, 24
      %v2442 = vpop.permute.xlu0 %2441
      %2443 = vrot.lane.b32.xlu0 %v2421, 24
      %v2444 = vpop.permute.xlu0 %2443
      %2445 = vrot.lane.b32.xlu0 %v2422, 24
      %v2446 = vpop.permute.xlu0 %2445
      %vm2455 = vcmask 257216
      %2456 = vst.msk [vmem:[%s314] sm:$0xf] %vm2455, %v2432
      %2457 = vst.msk [vmem:[%s314 + $0x4] sm:$0xf] %vm2455, %v2434
      %2458 = vst.msk [vmem:[%s314 + $0x8] sm:$0xf] %vm2455, %v2436
      %2459 = vst.msk [vmem:[%s314 + $0xc] sm:$0xf] %vm2455, %v2438
      %2460 = vst.msk [vmem:[%s314 + $0x10] sm:$0xf] %vm2455, %v2440
      %2461 = vst.msk [vmem:[%s314 + $0x14] sm:$0xf] %vm2455, %v2442
      %2462 = vst.msk [vmem:[%s314 + $0x18] sm:$0xf] %vm2455, %v2444
      %2463 = vst.msk [vmem:[%s314 + $0x1c] sm:$0xf] %vm2455, %v2446
      %v2464 = vsel %vm976, %v2267, 0.0
      %v2465 = vsel %vm976, %v2268, 0.0
      %v2466 = vadd.f32 %v2464, %v2465
      %v2467 = vsel %vm976, %v2269, 0.0
      %v2468 = vadd.f32 %v2466, %v2467
      %v2469 = vsel %vm976, %v2270, 0.0
      %v2470 = vadd.f32 %v2468, %v2469
      %v2471 = vsel %vm976, %v2271, 0.0
      %v2472 = vadd.f32 %v2470, %v2471
      %v2473 = vsel %vm976, %v2272, 0.0
      %v2474 = vadd.f32 %v2472, %v2473
      %v2475 = vsel %vm976, %v2273, 0.0
      %v2476 = vadd.f32 %v2474, %v2475
      %v2477 = vsel %vm976, %v2274, 0.0
      %v2478 = vadd.f32 %v2476, %v2477
      %v2479 = vrot.slane %v2478, 4
      %v2480 = vadd.f32 %v2478, %v2479
      %v2481 = vrot.slane %v2480, 2
      %v2482 = vadd.f32 %v2480, %v2481
      %v2483 = vrot.slane %v2482, 1
      %v2484 = vadd.f32 %v2482, %v2483
      %v2485 = vsel %vm953, %v2379, 0.0
      %v2486 = vsel %vm953, %v2381, 0.0
      %v2487 = vadd.f32 %v2485, %v2486
      %v2488 = vsel %vm953, %v2384, 0.0
      %v2489 = vadd.f32 %v2487, %v2488
      %v2490 = vsel %vm953, %v2386, 0.0
      %v2491 = vadd.f32 %v2489, %v2490
      %v2492 = vsel %vm953, %v2389, 0.0
      %v2493 = vadd.f32 %v2491, %v2492
      %v2494 = vsel %vm953, %v2391, 0.0
      %v2495 = vadd.f32 %v2493, %v2494
      %v2496 = vsel %vm953, %v2394, 0.0
      %v2497 = vadd.f32 %v2495, %v2496
      %v2498 = vsel %vm953, %v2396, 0.0
      %v2499 = vadd.f32 %v2497, %v2498
      %v2500 = vrot.slane %v2499, 4
      %v2501 = vadd.f32 %v2499, %v2500
      %v2502 = vrot.slane %v2501, 2
      %v2503 = vadd.f32 %v2501, %v2502
      %v2504 = vrot.slane %v2503, 1
      %v2505 = vadd.f32 %v2503, %v2504
      %2507 = vrot.lane.b32.xlu0 %v2505, 24
      %v2508 = vpop.permute.xlu0 %2507
      %v2510 = vsel %vm976, %v2484, %v2508
      %v2511 = vmul.f32 %v2267, %v2267
      %v2512 = vmul.f32 %v2268, %v2268
      %v2513 = vmul.f32 %v2269, %v2269
      %v2514 = vmul.f32 %v2270, %v2270
      %v2515 = vmul.f32 %v2271, %v2271
      %v2516 = vmul.f32 %v2272, %v2272
      %v2517 = vmul.f32 %v2273, %v2273
      %v2518 = vmul.f32 %v2274, %v2274
      %v2519 = vsel %vm976, %v2511, 0.0
      %v2520 = vsel %vm976, %v2512, 0.0
      %v2521 = vadd.f32 %v2519, %v2520
      %v2522 = vsel %vm976, %v2513, 0.0
      %v2523 = vadd.f32 %v2521, %v2522
      %v2524 = vsel %vm976, %v2514, 0.0
      %v2525 = vadd.f32 %v2523, %v2524
      %v2526 = vsel %vm976, %v2515, 0.0
      %v2527 = vadd.f32 %v2525, %v2526
      %v2528 = vsel %vm976, %v2516, 0.0
      %v2529 = vadd.f32 %v2527, %v2528
      %v2530 = vsel %vm976, %v2517, 0.0
      %v2531 = vadd.f32 %v2529, %v2530
      %v2532 = vsel %vm976, %v2518, 0.0
      %v2533 = vadd.f32 %v2531, %v2532
      %v2534 = vrot.slane %v2533, 4
      %v2535 = vadd.f32 %v2533, %v2534
      %v2536 = vrot.slane %v2535, 2
      %v2537 = vadd.f32 %v2535, %v2536
      %v2538 = vrot.slane %v2537, 1
      %v2539 = vadd.f32 %v2537, %v2538
      %v2540 = vmul.f32 %v2379, %v2379
      %v2541 = vmul.f32 %v2381, %v2381
      %v2542 = vmul.f32 %v2384, %v2384
      %v2543 = vmul.f32 %v2386, %v2386
      %v2544 = vmul.f32 %v2389, %v2389
      %v2545 = vmul.f32 %v2391, %v2391
      %v2546 = vmul.f32 %v2394, %v2394
      %v2547 = vmul.f32 %v2396, %v2396
      %v2548 = vsel %vm953, %v2540, 0.0
      %v2549 = vsel %vm953, %v2541, 0.0
      %v2550 = vadd.f32 %v2548, %v2549
      %v2551 = vsel %vm953, %v2542, 0.0
      %v2552 = vadd.f32 %v2550, %v2551
      %v2553 = vsel %vm953, %v2543, 0.0
      %v2554 = vadd.f32 %v2552, %v2553
      %v2555 = vsel %vm953, %v2544, 0.0
      %v2556 = vadd.f32 %v2554, %v2555
      %v2557 = vsel %vm953, %v2545, 0.0
      %v2558 = vadd.f32 %v2556, %v2557
      %v2559 = vsel %vm953, %v2546, 0.0
      %v2560 = vadd.f32 %v2558, %v2559
      %v2561 = vsel %vm953, %v2547, 0.0
      %v2562 = vadd.f32 %v2560, %v2561
      %v2563 = vrot.slane %v2562, 4
      %v2564 = vadd.f32 %v2562, %v2563
      %v2565 = vrot.slane %v2564, 2
      %v2566 = vadd.f32 %v2564, %v2565
      %v2567 = vrot.slane %v2566, 1
      %v2568 = vadd.f32 %v2566, %v2567
      %2570 = vrot.lane.b32.xlu0 %v2568, 24
      %v2571 = vpop.permute.xlu0 %2570
      %v2573 = vsel %vm976, %v2539, %v2571
      %v2575 = vrot.slane %v2573, 7
      %v2577 = vsel %vm2283, %v2510, %v2575
      %vm2578 = vcmask 254976
      %2579 = vst.msk [vmem:[%s319] sm:$0x3] %vm2578, %v2577
      %s2580 = smul.u32 8, %s20
      %p2581 = scmp.lt.s32.totalorder %s2580, 15
      %s2582 = scalar_select %p2581, %s2580, 15
      %s2583 = smul.addr %s2582, 4
      %s2584 = scalar_lea.vmem %s7, %s2583
      %p2585 = scmp.lt.s32.totalorder %s20, 1
      %s2586 = scalar_select %p2585, %s20, 1
      %s2587 = smul.addr %s2586, 2
      %s2588 = scalar_lea.vmem %s8, %s2587
      // Predicated region
      $region49: #{inception_model_forward.6} parent=47 // pred_check
        %p2589 = pneg %p190
      $region50: #{inception_model_forward.6} parent=47 // pred_check_branch
        %2591 = sbr.rel (%p2589) target = $region52
      $region51: #{inception_model_forward.6} parent=47 // pred_region
        %s2592 = smul.u32 8, %s20
      $region52: #{inception_model_forward.6} parent=47 // pred_fallthru
        _
      // Predicated region
      $region53: #{inception_model_forward.6} parent=47 // pred_check
        %p2593 = pneg %p216
      $region54: #{inception_model_forward.6} parent=47 // pred_check_branch
        %2595 = sbr.rel (%p2593) target = $region56
      $region55: #{inception_model_forward.6} parent=47 // pred_region
        _
      $region56: #{inception_model_forward.6} parent=47 // pred_fallthru
        _
    $region48: #{inception_model_forward.6} parent=5 // pred_fallthru
      _
    %p2596 = scmp.le.s32.totalorder 2, %s15
    // Predicated region
    $region57: #{inception_model_forward.6} parent=5 // pred_check
      %p2597 = pneg %p2596
    $region58: #{inception_model_forward.6} parent=5 // pred_check_branch
      %2599 = sbr.rel (%p2597) target = $region60
    $region59: #{inception_model_forward.6} parent=5 // pred_region
      %s2600 = ssub.s32 %s15, 2
      // Predicated region
      $region61: #{inception_model_forward.6} parent=59 // pred_check
        %p2601 = pneg %p196
      $region62: #{inception_model_forward.6} parent=59 // pred_check_branch
        %2603 = sbr.rel (%p2601) target = $region64
      $region63: #{inception_model_forward.6} parent=59 // pred_region
        %s2604 = smul.u32 8, %s21
        %p2605 = scmp.lt.s32.totalorder %s2604, 15
        %s2606 = scalar_select %p2605, %s2604, 15
        %s2607 = smul.addr %s2606, 4
        %s2608 = scalar_lea.vmem %s7, %s2607
      $region64: #{inception_model_forward.6} parent=59 // pred_fallthru
        _
      // Predicated region
      $region65: #{inception_model_forward.6} parent=59 // pred_check
        %p2609 = pneg %p222
      $region66: #{inception_model_forward.6} parent=59 // pred_check_branch
        %2611 = sbr.rel (%p2609) target = $region68
      $region67: #{inception_model_forward.6} parent=59 // pred_region
        %p2612 = scmp.lt.s32.totalorder %s21, 1
        %s2613 = scalar_select %p2612, %s21, 1
        %s2614 = smul.addr %s2613, 2
        %s2615 = scalar_lea.vmem %s8, %s2614
      $region68: #{inception_model_forward.6} parent=59 // pred_fallthru
        _
    $region60: #{inception_model_forward.6} parent=5 // pred_fallthru
      _
  $region6: #{inception_model_forward.6} parent=0 // loop_footer
    %s19 = sadd.s32 1, %s15
  $region7: #{inception_model_forward.6} parent=0 // loop_footer_branch
    %14 = sbr.rel target = $region3
  $region8: #{inception_model_forward.6} parent=0 // loop_exit
    _

// kernel: inception_model_forward.7
$region0: #{inception_model_forward.7}
  #allocation0 [shape = 'u32[]', space=smem, size = 0x4, offset = 0x4, fixed_abs, tag = 'smem constant byte address 0x4 - core index']
  #allocation1 [shape = 'u32[72,128]{1,0:T(1,128)}', space=vmem, size = 0x9000, scoped, tag = 'internal scratch']
  #allocation2 [shape = 'bf16[128,8]{1,0:T(8,128)(2,1)}', space=vmem, size = 0x8000, scoped, tag = 'scratch operand']
  %s0 = inlined_call_operand.vmem [shape: bf16[128,32], index: 0, kind: input, shape index: {}]
  %s1 = inlined_call_operand.vmem [shape: f32[2,2,32], index: 1, kind: input, shape index: {}]
  %s2 = inlined_call_operand.vmem [shape: f32[1,32], index: 2, kind: input, shape index: {}]
  %s3 = inlined_call_operand.vmem [shape: f32[1,32], index: 3, kind: input, shape index: {}]
  %s4 = inlined_call_operand.vmem [shape: bf16[32,8], index: 4, kind: input, shape index: {}]
  %s5 = inlined_call_operand.vmem [shape: bf16[320,24], index: 5, kind: input, shape index: {}]
  %s6 = inlined_call_operand.vmem [shape: bf16[32,8], index: 6, kind: input, shape index: {}]
  %s7 = inlined_call_operand.vmem [shape: bf16[128,32], index: 7, kind: output, shape index: {0}]
  %s8 = inlined_call_operand.vmem [shape: f32[2,2,32], index: 8, kind: output, shape index: {1}]
  %9 = xla_tuple %s7, %s8
  %s10 = sld [smem:[#allocation0]]
  $region69: #{inception_model_forward.7} parent=0
    _
  %s12 = ssub.s32 1, %s10
  %s13 = scalar_select 0, %s12, %s10
  loop: start=0, step=1, limit=4
  $region2: #{inception_model_forward.7} parent=0 // loop_pre_header
    _
  $region3: #{inception_model_forward.7} parent=0 // loop_header
    %s15 = sphi 0, %s19
    %p16 = scmp.ge.s32.totalorder %s15, 4
    %s25 = sphi 0, %s27
    %s28 = sphi 0, %s25
    %s29 = sphi 0, %s28
    %s45 = sphi 0, %s29
    %s49 = sphi 0, %s49
    %s51 = sphi 0, %s49
    %s52 = sphi 0, %s51
    %s66 = sphi 0, %s52
    %s70 = sphi 0, %s70
    %s72 = sphi 0, %s70
    %s73 = sphi 0, %s72
    %s87 = sphi 0, %s73
    %s91 = sphi 0, %s91
    %s93 = sphi 0, %s91
    %s94 = sphi 0, %s93
    %s108 = sphi 0, %s94
    %s112 = sphi 0, %s112
    %s114 = sphi 0, %s112
    %s115 = sphi 0, %s114
    %s129 = sphi 0, %s115
    %s133 = sphi 0, %s133
    %s135 = sphi 0, %s133
    %s136 = sphi 0, %s135
    %s150 = sphi 0, %s136
    %s154 = sphi 0, %s154
    %s156 = sphi 0, %s154
    %s157 = sphi 0, %s156
    %s171 = sphi 0, %s157
    %s177 = sphi 0, %s179
    %s180 = sphi 0, %s177
    %s181 = sphi 0, %s180
    %s197 = sphi 0, %s181
    %s203 = sphi 0, %s205
    %s206 = sphi 0, %s203
    %s207 = sphi 0, %s206
    %s223 = sphi 0, %s207
  $region4: #{inception_model_forward.7} parent=0 // loop_header_branch
    %18 = sbr.rel (%p16) target = $region8
  $region5: #{inception_model_forward.7} parent=0 // loop_body
    %s20 = ssub.s32 %s15, 1
    %s21 = ssub.s32 %s15, 2
    %s22 = sadd.s32 %s15, 1
    %s23 = ssub.s32 %s15, %s22
    %p24 = scmp.eq.s32.totalorder %s23, 0
    %s26 = sadd.s32 %s25, 1
    %s27 = scalar_select %p24, %s25, %s26
    %p30 = pneg %p24
    %p31 = scmp.eq.s32.totalorder %s15, 1
    %p32 = por %p30, %p31
    %p33 = scmp.ne.s32.totalorder %s25, %s28
    %p34 = scmp.eq.s32.totalorder %s15, 0
    %p35 = por %p33, %p34
    %p36 = scmp.ne.s32.totalorder %s25, %s28
    %p37 = scmp.eq.s32.totalorder %s20, 1
    %p38 = por %p36, %p37
    %p39 = scmp.ne.s32.totalorder %s28, %s29
    %p40 = scmp.eq.s32.totalorder %s20, 0
    %p41 = por %p39, %p40
    %p42 = scmp.ne.s32.totalorder %s28, %s29
    %p43 = scmp.eq.s32.totalorder %s21, 1
    %p44 = por %p42, %p43
    %p46 = scmp.ne.s32.totalorder %s29, %s45
    %p47 = scmp.eq.s32.totalorder %s21, 0
    %p48 = por %p46, %p47
    %s50 = sadd.s32 %s49, 1
    %p53 = scmp.eq.s32.totalorder %s15, 1
    %p54 = scmp.ne.s32.totalorder %s49, %s51
    %p55 = scmp.eq.s32.totalorder %s15, 0
    %p56 = por %p54, %p55
    %p57 = scmp.ne.s32.totalorder %s49, %s51
    %p58 = scmp.eq.s32.totalorder %s20, 1
    %p59 = por %p57, %p58
    %p60 = scmp.ne.s32.totalorder %s51, %s52
    %p61 = scmp.eq.s32.totalorder %s20, 0
    %p62 = por %p60, %p61
    %p63 = scmp.ne.s32.totalorder %s51, %s52
    %p64 = scmp.eq.s32.totalorder %s21, 1
    %p65 = por %p63, %p64
    %p67 = scmp.ne.s32.totalorder %s52, %s66
    %p68 = scmp.eq.s32.totalorder %s21, 0
    %p69 = por %p67, %p68
    %s71 = sadd.s32 %s70, 1
    %p74 = scmp.eq.s32.totalorder %s15, 1
    %p75 = scmp.ne.s32.totalorder %s70, %s72
    %p76 = scmp.eq.s32.totalorder %s15, 0
    %p77 = por %p75, %p76
    %p78 = scmp.ne.s32.totalorder %s70, %s72
    %p79 = scmp.eq.s32.totalorder %s20, 1
    %p80 = por %p78, %p79
    %p81 = scmp.ne.s32.totalorder %s72, %s73
    %p82 = scmp.eq.s32.totalorder %s20, 0
    %p83 = por %p81, %p82
    %p84 = scmp.ne.s32.totalorder %s72, %s73
    %p85 = scmp.eq.s32.totalorder %s21, 1
    %p86 = por %p84, %p85
    %p88 = scmp.ne.s32.totalorder %s73, %s87
    %p89 = scmp.eq.s32.totalorder %s21, 0
    %p90 = por %p88, %p89
    %s92 = sadd.s32 %s91, 1
    %p95 = scmp.eq.s32.totalorder %s15, 1
    %p96 = scmp.ne.s32.totalorder %s91, %s93
    %p97 = scmp.eq.s32.totalorder %s15, 0
    %p98 = por %p96, %p97
    %p99 = scmp.ne.s32.totalorder %s91, %s93
    %p100 = scmp.eq.s32.totalorder %s20, 1
    %p101 = por %p99, %p100
    %p102 = scmp.ne.s32.totalorder %s93, %s94
    %p103 = scmp.eq.s32.totalorder %s20, 0
    %p104 = por %p102, %p103
    %p105 = scmp.ne.s32.totalorder %s93, %s94
    %p106 = scmp.eq.s32.totalorder %s21, 1
    %p107 = por %p105, %p106
    %p109 = scmp.ne.s32.totalorder %s94, %s108
    %p110 = scmp.eq.s32.totalorder %s21, 0
    %p111 = por %p109, %p110
    %s113 = sadd.s32 %s112, 1
    %p116 = scmp.eq.s32.totalorder %s15, 1
    %p117 = scmp.ne.s32.totalorder %s112, %s114
    %p118 = scmp.eq.s32.totalorder %s15, 0
    %p119 = por %p117, %p118
    %p120 = scmp.ne.s32.totalorder %s112, %s114
    %p121 = scmp.eq.s32.totalorder %s20, 1
    %p122 = por %p120, %p121
    %p123 = scmp.ne.s32.totalorder %s114, %s115
    %p124 = scmp.eq.s32.totalorder %s20, 0
    %p125 = por %p123, %p124
    %p126 = scmp.ne.s32.totalorder %s114, %s115
    %p127 = scmp.eq.s32.totalorder %s21, 1
    %p128 = por %p126, %p127
    %p130 = scmp.ne.s32.totalorder %s115, %s129
    %p131 = scmp.eq.s32.totalorder %s21, 0
    %p132 = por %p130, %p131
    %s134 = sadd.s32 %s133, 1
    %p137 = scmp.eq.s32.totalorder %s15, 1
    %p138 = scmp.ne.s32.totalorder %s133, %s135
    %p139 = scmp.eq.s32.totalorder %s15, 0
    %p140 = por %p138, %p139
    %p141 = scmp.ne.s32.totalorder %s133, %s135
    %p142 = scmp.eq.s32.totalorder %s20, 1
    %p143 = por %p141, %p142
    %p144 = scmp.ne.s32.totalorder %s135, %s136
    %p145 = scmp.eq.s32.totalorder %s20, 0
    %p146 = por %p144, %p145
    %p147 = scmp.ne.s32.totalorder %s135, %s136
    %p148 = scmp.eq.s32.totalorder %s21, 1
    %p149 = por %p147, %p148
    %p151 = scmp.ne.s32.totalorder %s136, %s150
    %p152 = scmp.eq.s32.totalorder %s21, 0
    %p153 = por %p151, %p152
    %s155 = sadd.s32 %s154, 1
    %p158 = scmp.eq.s32.totalorder %s15, 1
    %p159 = scmp.ne.s32.totalorder %s154, %s156
    %p160 = scmp.eq.s32.totalorder %s15, 0
    %p161 = por %p159, %p160
    %p162 = scmp.ne.s32.totalorder %s154, %s156
    %p163 = scmp.eq.s32.totalorder %s20, 1
    %p164 = por %p162, %p163
    %p165 = scmp.ne.s32.totalorder %s156, %s157
    %p166 = scmp.eq.s32.totalorder %s20, 0
    %p167 = por %p165, %p166
    %p168 = scmp.ne.s32.totalorder %s156, %s157
    %p169 = scmp.eq.s32.totalorder %s21, 1
    %p170 = por %p168, %p169
    %p172 = scmp.ne.s32.totalorder %s157, %s171
    %p173 = scmp.eq.s32.totalorder %s21, 0
    %p174 = por %p172, %p173
    %s175 = ssub.s32 %s15, %s22
    %p176 = scmp.eq.s32.totalorder %s175, 0
    %s178 = sadd.s32 %s177, 1
    %s179 = scalar_select %p176, %s177, %s178
    %p182 = pneg %p176
    %p183 = scmp.eq.s32.totalorder %s15, 1
    %p184 = por %p182, %p183
    %p185 = scmp.ne.s32.totalorder %s177, %s180
    %p186 = scmp.eq.s32.totalorder %s15, 0
    %p187 = por %p185, %p186
    %p188 = scmp.ne.s32.totalorder %s177, %s180
    %p189 = scmp.eq.s32.totalorder %s20, 1
    %p190 = por %p188, %p189
    %p191 = scmp.ne.s32.totalorder %s180, %s181
    %p192 = scmp.eq.s32.totalorder %s20, 0
    %p193 = por %p191, %p192
    %p194 = scmp.ne.s32.totalorder %s180, %s181
    %p195 = scmp.eq.s32.totalorder %s21, 1
    %p196 = por %p194, %p195
    %p198 = scmp.ne.s32.totalorder %s181, %s197
    %p199 = scmp.eq.s32.totalorder %s21, 0
    %p200 = por %p198, %p199
    %s201 = ssub.s32 %s15, %s22
    %p202 = scmp.eq.s32.totalorder %s201, 0
    %s204 = sadd.s32 %s203, 1
    %s205 = scalar_select %p202, %s203, %s204
    %p208 = pneg %p202
    %p209 = scmp.eq.s32.totalorder %s15, 1
    %p210 = por %p208, %p209
    %p211 = scmp.ne.s32.totalorder %s203, %s206
    %p212 = scmp.eq.s32.totalorder %s15, 0
    %p213 = por %p211, %p212
    %p214 = scmp.ne.s32.totalorder %s203, %s206
    %p215 = scmp.eq.s32.totalorder %s20, 1
    %p216 = por %p214, %p215
    %p217 = scmp.ne.s32.totalorder %s206, %s207
    %p218 = scmp.eq.s32.totalorder %s20, 0
    %p219 = por %p217, %p218
    %p220 = scmp.ne.s32.totalorder %s206, %s207
    %p221 = scmp.eq.s32.totalorder %s21, 1
    %p222 = por %p220, %p221
    %p224 = scmp.ne.s32.totalorder %s207, %s223
    %p225 = scmp.eq.s32.totalorder %s21, 0
    %p226 = por %p224, %p225
    %p227 = scmp.le.s32.totalorder 1, %s15
    %p228 = scmp.lt.s32.totalorder %s15, 3
    %p229 = pnand %p227, %p228
    %p230 = pneg %p229
    // Predicated region
    $region9: #{inception_model_forward.7} parent=5 // pred_check
      _
    $region10: #{inception_model_forward.7} parent=5 // pred_check_branch
      %232 = sbr.rel (%p229) target = $region12
    $region11: #{inception_model_forward.7} parent=5 // pred_region
      %s233 = ssub.s32 %s15, 1
      // Predicated region
      $region13: #{inception_model_forward.7} parent=11 // pred_check
        %p234 = pneg %p62
      $region14: #{inception_model_forward.7} parent=11 // pred_check_branch
        %236 = sbr.rel (%p234) target = $region16
      $region15: #{inception_model_forward.7} parent=11 // pred_region
        _
      $region16: #{inception_model_forward.7} parent=11 // pred_fallthru
        _
      // Predicated region
      $region17: #{inception_model_forward.7} parent=11 // pred_check
        %p237 = pneg %p83
      $region18: #{inception_model_forward.7} parent=11 // pred_check_branch
        %239 = sbr.rel (%p237) target = $region20
      $region19: #{inception_model_forward.7} parent=11 // pred_region
        _
      $region20: #{inception_model_forward.7} parent=11 // pred_fallthru
        _
      // Predicated region
      $region21: #{inception_model_forward.7} parent=11 // pred_check
        %p240 = pneg %p104
      $region22: #{inception_model_forward.7} parent=11 // pred_check_branch
        %242 = sbr.rel (%p240) target = $region24
      $region23: #{inception_model_forward.7} parent=11 // pred_region
        _
      $region24: #{inception_model_forward.7} parent=11 // pred_fallthru
        _
      // Predicated region
      $region25: #{inception_model_forward.7} parent=11 // pred_check
        %p243 = pneg %p125
      $region26: #{inception_model_forward.7} parent=11 // pred_check_branch
        %245 = sbr.rel (%p243) target = $region28
      $region27: #{inception_model_forward.7} parent=11 // pred_region
        _
      $region28: #{inception_model_forward.7} parent=11 // pred_fallthru
        _
      // Predicated region
      $region29: #{inception_model_forward.7} parent=11 // pred_check
        %p246 = pneg %p146
      $region30: #{inception_model_forward.7} parent=11 // pred_check_branch
        %248 = sbr.rel (%p246) target = $region32
      $region31: #{inception_model_forward.7} parent=11 // pred_region
        _
      $region32: #{inception_model_forward.7} parent=11 // pred_fallthru
        _
      // Predicated region
      $region33: #{inception_model_forward.7} parent=11 // pred_check
        %p249 = pneg %p167
      $region34: #{inception_model_forward.7} parent=11 // pred_check_branch
        %251 = sbr.rel (%p249) target = $region36
      $region35: #{inception_model_forward.7} parent=11 // pred_region
        _
      $region36: #{inception_model_forward.7} parent=11 // pred_fallthru
        _
    $region12: #{inception_model_forward.7} parent=5 // pred_fallthru
      _
    %p252 = scmp.lt.s32.totalorder %s15, 2
    // Predicated region
    $region37: #{inception_model_forward.7} parent=5 // pred_check
      %p253 = pneg %p252
    $region38: #{inception_model_forward.7} parent=5 // pred_check_branch
      %255 = sbr.rel (%p253) target = $region40
    $region39: #{inception_model_forward.7} parent=5 // pred_region
      // Predicated region
      $region41: #{inception_model_forward.7} parent=39 // pred_check
        %p256 = pneg %p35
      $region42: #{inception_model_forward.7} parent=39 // pred_check_branch
        %258 = sbr.rel (%p256) target = $region44
      $region43: #{inception_model_forward.7} parent=39 // pred_region
        %s259 = smul.u32 8, %s15
        %p260 = scmp.lt.s32.totalorder %s259, 15
        %s261 = scalar_select %p260, %s259, 15
        %s262 = smul.addr %s261, 4
        %s263 = scalar_lea.vmem %s0, %s262
        %s264 = smul.u32 8, %s15
      $region44: #{inception_model_forward.7} parent=39 // pred_fallthru
        _
    $region40: #{inception_model_forward.7} parent=5 // pred_fallthru
      _
    %p265 = scmp.le.s32.totalorder 1, %s15
    %p266 = scmp.lt.s32.totalorder %s15, 3
    %p267 = pnand %p265, %p266
    %p268 = pneg %p267
    // Predicated region
    $region45: #{inception_model_forward.7} parent=5 // pred_check
      _
    $region46: #{inception_model_forward.7} parent=5 // pred_check_branch
      %270 = sbr.rel (%p267) target = $region48
    $region47: #{inception_model_forward.7} parent=5 // pred_region
      %s271 = ssub.s32 %s15, 1
      %s272 = smul.u32 8, %s20
      %p273 = scmp.lt.s32.totalorder %s272, 15
      %s274 = scalar_select %p273, %s272, 15
      %s275 = smul.addr %s274, 4
      %s276 = scalar_lea.vmem %s0, %s275
      %p277 = pneg %p41
      %p278 = pneg %p38
      %p279 = pneg %p62
      %p280 = pneg %p59
      %p281 = pneg %p83
      %p282 = pneg %p80
      %p283 = pneg %p104
      %p284 = pneg %p101
      %p285 = pneg %p125
      %p286 = pneg %p122
      %p287 = pneg %p146
      %p288 = pneg %p143
      %p289 = pneg %p167
      %p290 = pneg %p164
      %p291 = pneg %p193
      %p292 = pneg %p190
      %s293 = smul.u32 8, %s20
      %p294 = scmp.lt.s32.totalorder %s293, 15
      %s295 = scalar_select %p294, %s293, 15
      %s296 = smul.addr %s295, 4
      %s297 = scalar_lea.vmem %s7, %s296
      %p298 = pneg %p219
      %p299 = pneg %p216
      %p300 = scmp.lt.s32.totalorder %s20, 1
      %s301 = scalar_select %p300, %s20, 1
      %s302 = smul.addr %s301, 2
      %s303 = scalar_lea.vmem %s8, %s302
      %s304 = smul.u32 8, %s20
      %p305 = scmp.lt.s32.totalorder %s304, 15
      %s306 = scalar_select %p305, %s304, 15
      %s307 = smul.addr %s306, 4
      %s308 = scalar_lea.vmem %s0, %s307
      %s309 = smul.u32 8, %s20
      %s310 = smul.u32 8, %s20
      %p311 = scmp.lt.s32.totalorder %s310, 15
      %s312 = scalar_select %p311, %s310, 15
      %s313 = smul.addr %s312, 4
      %s314 = scalar_lea.vmem %s7, %s313
      %s315 = smul.u32 8, %s20
      %p316 = scmp.lt.s32.totalorder %s20, 1
      %s317 = scalar_select %p316, %s20, 1
      %s318 = smul.addr %s317, 2
      %s319 = scalar_lea.vmem %s8, %s318
      %v321 = vld [vmem:[%s308] sm:$0xf]
      %v322 = vld [vmem:[%s308 + $0x4] sm:$0xf]
      %v323 = vld [vmem:[%s308 + $0x8] sm:$0xf]
      %v324 = vld [vmem:[%s308 + $0xc] sm:$0xf]
      %v325 = vld [vmem:[%s308 + $0x10] sm:$0xf]
      %v326 = vld [vmem:[%s308 + $0x14] sm:$0xf]
      %v327 = vld [vmem:[%s308 + $0x18] sm:$0xf]
      %v328 = vld [vmem:[%s308 + $0x1c] sm:$0xf]
      %v329 = vld [vmem:[%s1] sm:$0x3]
      %v330 = vld [vmem:[%s1 + $0x2] sm:$0x3]
      %vm331 = vcmask 254976
      %v332 = vsel %vm331, %v329, 0.0
      %v333 = vsel %vm331, %v330, 0.0
      %v334 = vadd.f32 %v332, %v333
      %v335 = vmul.f32 %v334, 0.0078125
      %v336 = vmul.f32 %v335, %v335
      %v338 = vrot.slane %v336, 7
      %v340 = vsub.f32 %v335, %v338
      %v341 = vld [vmem:[%s2] sm:$0x1]
      %v342 = vadd.f32 %v340, 1e-05
      %v343 = vrsqrt.pop %v342
      %v344 = vmul.f32 %v343, %v342
      %v345 = vmul.f32 %v344, %v343
      %v346 = vmul.f32 0.5, %v345
      %v347 = vsub.f32 1.5, %v346
      %v348 = vmul.f32 %v343, %v347
      %vm349 = vweird.f32 %v342
      %vm350 = vweird.f32 %v343
      %vm351 = vmor %vm349, %vm350
      %v352 = vsel %vm351, %v343, %v348
      %354 = vst [vmem:[#allocation1] sm:$0xff] %v352
      %s355 = scalar_lea.vmem [#allocation1], 1
      %v356 = vld [vmem:[%s355] ss:$9 sm:$0xff]
      %v358 = vmul.f32 %v341, %v356
      %v359 = vld [vmem:[%s3] sm:$0x1]
      %v360 = vmul.f32 %v335, %v358
      %v361 = vsub.f32 %v359, %v360
      %v362 = vunpack.c.l.bf16 %v321
      %v363 = vunpack.c.l.bf16 %v322
      %v364 = vunpack.c.l.bf16 %v323
      %v365 = vunpack.c.l.bf16 %v324
      %v366 = vunpack.c.l.bf16 %v325
      %v367 = vunpack.c.l.bf16 %v326
      %v368 = vunpack.c.l.bf16 %v327
      %v369 = vunpack.c.l.bf16 %v328
      %v371 = vperm.slane %v358, 0
      %v373 = vmul.f32 %v362, %v371
      %v374 = vmul.f32 %v363, %v371
      %v375 = vmul.f32 %v364, %v371
      %v376 = vmul.f32 %v365, %v371
      %v377 = vmul.f32 %v366, %v371
      %v378 = vmul.f32 %v367, %v371
      %v379 = vmul.f32 %v368, %v371
      %v380 = vmul.f32 %v369, %v371
      %v382 = vperm.slane %v361, 0
      %v384 = vadd.f32 %v373, %v382
      %v385 = vadd.f32 %v374, %v382
      %v386 = vadd.f32 %v375, %v382
      %v387 = vadd.f32 %v376, %v382
      %v388 = vadd.f32 %v377, %v382
      %v389 = vadd.f32 %v378, %v382
      %v390 = vadd.f32 %v379, %v382
      %v391 = vadd.f32 %v380, %v382
      %v392 = vmax.f32 %v384, 0.0
      %v393 = vmax.f32 %v385, 0.0
      %v394 = vmax.f32 %v386, 0.0
      %v395 = vmax.f32 %v387, 0.0
      %v396 = vmax.f32 %v388, 0.0
      %v397 = vmax.f32 %v389, 0.0
      %v398 = vmax.f32 %v390, 0.0
      %v399 = vmax.f32 %v391, 0.0
      %v400 = vpack.c.bf16 %v393, %v392
      %v401 = vpack.c.bf16 %v395, %v394
      %v402 = vpack.c.bf16 %v397, %v396
      %v403 = vpack.c.bf16 %v399, %v398
      %vm404 = vcmask 60416
      %405 = vst.msk [vmem:[#allocation2] sm:$0xf] %vm404, 0
      %406 = vst.msk [vmem:[#allocation2 + $0x4] sm:$0xf] %vm404, 0
      %407 = vst.msk [vmem:[#allocation2 + $0x8] sm:$0xf] %vm404, 0
      %408 = vst.msk [vmem:[#allocation2 + $0xc] sm:$0xf] %vm404, 0
      %409 = vst.msk [vmem:[#allocation2 + $0x30] sm:$0xf] %vm404, 0
      %410 = vst.msk [vmem:[#allocation2 + $0x34] sm:$0xf] %vm404, 0
      %411 = vst.msk [vmem:[#allocation2 + $0x38] sm:$0xf] %vm404, 0
      %412 = vst.msk [vmem:[#allocation2 + $0x3c] sm:$0xf] %vm404, 0
      %v413 = vld [vmem:[%s4] sm:$0xf]
      %v414 = vld [vmem:[%s4 + $0x4] sm:$0xf]
      %v415 = vld [vmem:[%s4 + $0x8] sm:$0xf]
      %v416 = vld [vmem:[%s4 + $0xc] sm:$0xf]
      %v421 = vunpack.c.l.b16 %v413
      %v422 = vunpack.c.l.b16 %v414
      %v423 = vunpack.c.l.b16 %v415
      %v424 = vunpack.c.l.b16 %v416
      %v425 = vpack.c.b16 %v422, %v421
      %v426 = vpack.c.b16 %v424, %v423
      %vm429 = vcmask 261120
      %v431 = vsel %vm429, %v400, 0
      %v434 = vsel %vm429, %v401, 0
      %v437 = vsel %vm429, %v402, 0
      %v440 = vsel %vm429, %v403, 0
      %442 = vmatpush.bf16.msra.mxu0 0
      %443 = vmatpush.bf16.msra.mxu0 0
      %444 = vmatpush.bf16.msra.mxu0 0
      %445 = vmatpush.bf16.msra.mxu0 0
      %446 = vmatpush.bf16.msra.mxu0 0
      %447 = vmatpush.bf16.msra.mxu0 0
      %448 = vmatpush.bf16.msra.mxu0 %v426
      %449 = vmatpush.bf16.msra.mxu0 %v425
      %450 = vmatmul.bf16.gmra.mxu0 %v431
      %v451 = vpop.f32.mrf.mxu0
      %v452 = vadd.f32 0.0, %v451
      %v453 = vpop.f32.mrf.mxu0
      %v454 = vadd.f32 0.0, %v453
      %455 = vmatmul.bf16.gmra.mxu0 %v434
      %v456 = vpop.f32.mrf.mxu0
      %v457 = vadd.f32 0.0, %v456
      %v458 = vpop.f32.mrf.mxu0
      %v459 = vadd.f32 0.0, %v458
      %460 = vmatmul.bf16.gmra.mxu0 %v437
      %v461 = vpop.f32.mrf.mxu0
      %v462 = vadd.f32 0.0, %v461
      %v463 = vpop.f32.mrf.mxu0
      %v464 = vadd.f32 0.0, %v463
      %465 = vmatmul.bf16.gmra.mxu0 %v440
      %v466 = vpop.f32.mrf.mxu0
      %v467 = vadd.f32 0.0, %v466
      %v468 = vpop.f32.mrf.mxu0
      %v469 = vadd.f32 0.0, %v468
      %470 = vdwg.mxu0
      %v471 = vpack.c.bf16 %v452, %v452
      %v472 = vpack.c.bf16 %v454, %v454
      %v473 = vpack.c.bf16 %v457, %v457
      %v474 = vpack.c.bf16 %v459, %v459
      %v475 = vpack.c.bf16 %v462, %v462
      %v476 = vpack.c.bf16 %v464, %v464
      %v477 = vpack.c.bf16 %v467, %v467
      %v478 = vpack.c.bf16 %v469, %v469
      %479 = vst.msk [vmem:[#allocation2 + $0x10] sm:$0xf] %vm404, %v471
      %480 = vst.msk [vmem:[#allocation2 + $0x14] sm:$0xf] %vm404, %v472
      %481 = vst.msk [vmem:[#allocation2 + $0x18] sm:$0xf] %vm404, %v473
      %482 = vst.msk [vmem:[#allocation2 + $0x1c] sm:$0xf] %vm404, %v474
      %483 = vst.msk [vmem:[#allocation2 + $0x20] sm:$0xf] %vm404, %v475
      %484 = vst.msk [vmem:[#allocation2 + $0x24] sm:$0xf] %vm404, %v476
      %485 = vst.msk [vmem:[#allocation2 + $0x28] sm:$0xf] %vm404, %v477
      %486 = vst.msk [vmem:[#allocation2 + $0x2c] sm:$0xf] %vm404, %v478
      %v487 = vld [vmem:[#allocation2 + $0x4] sm:$0xc]
      %v488 = vld [vmem:[#allocation2 + $0x8] sm:$0xf]
      %v489 = vld [vmem:[#allocation2 + $0xc] sm:$0xf]
      %v490 = vld [vmem:[#allocation2 + $0x10] sm:$0xf]
      %v491 = vld [vmem:[#allocation2 + $0x14] sm:$0xf]
      %v492 = vld [vmem:[#allocation2 + $0x18] sm:$0xf]
      %v493 = vld [vmem:[#allocation2 + $0x1c] sm:$0xf]
      %v494 = vld [vmem:[#allocation2 + $0x20] sm:$0xf]
      %v495 = vld [vmem:[#allocation2 + $0x24] sm:$0x7]
      %v496 = vld [vmem:[#allocation2 + $0x4] sm:$0x8]
      %v497 = vld [vmem:[#allocation2 + $0x24] sm:$0xf]
      %v498 = vld [vmem:[#allocation2 + $0x28] sm:$0x1]
      %v499 = vld [vmem:[#allocation2 + $0x8] sm:$0xe]
      %v500 = vld [vmem:[#allocation2 + $0x28] sm:$0x3]
      %v501 = vld [vmem:[#allocation2 + $0x8] sm:$0xc]
      %v502 = vld [vmem:[#allocation2 + $0x28] sm:$0x7]
      %v503 = vld [vmem:[#allocation2 + $0x8] sm:$0x8]
      %v504 = vld [vmem:[#allocation2 + $0x28] sm:$0xf]
      %v505 = vld [vmem:[#allocation2 + $0x2c] sm:$0x1]
      %v506 = vld [vmem:[#allocation2 + $0xc] sm:$0xe]
      %v507 = vld [vmem:[#allocation2 + $0x2c] sm:$0x3]
      %v508 = vld [vmem:[#allocation2 + $0xc] sm:$0xc]
      %v518 = vunpack.c.l.b16 %v487
      %v519 = vunpack.c.l.b16 %v488
      %v520 = vunpack.c.l.b16 %v489
      %v521 = vunpack.c.l.b16 %v490
      %v522 = vunpack.c.l.b16 %v491
      %v523 = vunpack.c.l.b16 %v492
      %v524 = vunpack.c.l.b16 %v493
      %v525 = vunpack.c.l.b16 %v494
      %v526 = vunpack.c.l.b16 %v495
      %v527 = vpack.c.b16 %v519, %v518
      %v528 = vpack.c.b16 %v521, %v520
      %v529 = vpack.c.b16 %v523, %v522
      %v530 = vpack.c.b16 %v525, %v524
      %v531 = vpack.c.b16 %v526, %v526
      %v533 = vunpack.c.l.b16 %v496
      %v534 = vpack.c.b16 %v519, %v533
      %vm535 = vsmask.f32 7424
      %v537 = vshrl.u32 %v534, 16
      %v539 = vshll.u32 %v534, 16
      %v541 = vrot.slane %v539, 1
      %v542 = vor.u32 %v537, %v541
      %v544 = vshll.u32 %v528, 16
      %v546 = vrot.slane %v544, 1
      %v547 = vsel %vm535, %v542, %v546
      %v548 = vshrl.u32 %v528, 16
      %v550 = vor.u32 %v548, %v546
      %v552 = vshll.u32 %v529, 16
      %v554 = vrot.slane %v552, 1
      %v555 = vsel %vm535, %v550, %v554
      %v556 = vshrl.u32 %v529, 16
      %v558 = vor.u32 %v556, %v554
      %v560 = vshll.u32 %v530, 16
      %v562 = vrot.slane %v560, 1
      %v563 = vsel %vm535, %v558, %v562
      %v564 = vshrl.u32 %v530, 16
      %v566 = vor.u32 %v564, %v562
      %v568 = vshll.u32 %v531, 16
      %v570 = vrot.slane %v568, 1
      %v571 = vsel %vm535, %v566, %v570
      %v572 = vshrl.u32 %v531, 16
      %v574 = vor.u32 %v572, %v570
      %575 = vrot.lane.b32.xlu0 %v547, 8
      %v576 = vpop.permute.xlu0 %575
      %577 = vrot.lane.b32.xlu0 %v555, 8
      %v578 = vpop.permute.xlu0 %577
      %579 = vrot.lane.b32.xlu0 %v563, 8
      %v580 = vpop.permute.xlu0 %579
      %581 = vrot.lane.b32.xlu0 %v571, 8
      %v582 = vpop.permute.xlu0 %581
      %583 = vrot.lane.b32.xlu0 %v574, 8
      %v584 = vpop.permute.xlu0 %583
      %v586 = vunpack.c.l.b16 %v497
      %v587 = vpack.c.b16 %v586, %v586
      %vm588 = vcmask 1046528
      %v589 = vrot.slane %v534, 1
      %v590 = vrot.slane %v528, 1
      %v591 = vsel %vm588, %v589, %v590
      %v592 = vrot.slane %v529, 1
      %v593 = vsel %vm588, %v590, %v592
      %v594 = vrot.slane %v530, 1
      %v595 = vsel %vm588, %v592, %v594
      %v596 = vrot.slane %v587, 1
      %v597 = vsel %vm588, %v594, %v596
      %598 = vrot.lane.b32.xlu0 %v591, 16
      %v599 = vpop.permute.xlu0 %598
      %600 = vrot.lane.b32.xlu0 %v593, 16
      %v601 = vpop.permute.xlu0 %600
      %602 = vrot.lane.b32.xlu0 %v595, 16
      %v603 = vpop.permute.xlu0 %602
      %604 = vrot.lane.b32.xlu0 %v597, 16
      %v605 = vpop.permute.xlu0 %604
      %606 = vrot.lane.b32.xlu0 %v596, 16
      %v607 = vpop.permute.xlu0 %606
      %v608 = vpack.c.b16 %v520, %v519
      %v609 = vpack.c.b16 %v522, %v521
      %v610 = vpack.c.b16 %v524, %v523
      %v611 = vpack.c.b16 %v586, %v525
      %vm612 = vsmask.f32 2304
      %v614 = vshrl.u32 %v608, 16
      %v616 = vrot.slane %v614, 5
      %v617 = vshll.u32 %v608, 16
      %v619 = vrot.slane %v617, 6
      %v620 = vor.u32 %v616, %v619
      %v622 = vshrl.u32 %v609, 16
      %v624 = vrot.slane %v622, 5
      %v625 = vshll.u32 %v609, 16
      %v627 = vrot.slane %v625, 6
      %v628 = vor.u32 %v624, %v627
      %v629 = vsel %vm612, %v620, %v628
      %v631 = vshrl.u32 %v610, 16
      %v633 = vrot.slane %v631, 5
      %v634 = vshll.u32 %v610, 16
      %v636 = vrot.slane %v634, 6
      %v637 = vor.u32 %v633, %v636
      %v638 = vsel %vm612, %v628, %v637
      %v640 = vshrl.u32 %v611, 16
      %v642 = vrot.slane %v640, 5
      %v643 = vshll.u32 %v611, 16
      %v645 = vrot.slane %v643, 6
      %v646 = vor.u32 %v642, %v645
      %v647 = vsel %vm612, %v637, %v646
      %648 = vrot.lane.b32.xlu0 %v620, 24
      %v649 = vpop.permute.xlu0 %648
      %650 = vrot.lane.b32.xlu0 %v629, 24
      %v651 = vpop.permute.xlu0 %650
      %652 = vrot.lane.b32.xlu0 %v638, 24
      %v653 = vpop.permute.xlu0 %652
      %654 = vrot.lane.b32.xlu0 %v647, 24
      %v655 = vpop.permute.xlu0 %654
      %656 = vrot.lane.b32.xlu0 %v646, 24
      %v657 = vpop.permute.xlu0 %656
      %v659 = vunpack.c.l.b16 %v498
      %v660 = vpack.c.b16 %v659, %v659
      %vm661 = vcmask 1041408
      %v662 = vrot.slane %v608, 6
      %v663 = vrot.slane %v609, 6
      %v664 = vsel %vm661, %v662, %v663
      %v665 = vrot.slane %v610, 6
      %v666 = vsel %vm661, %v663, %v665
      %v667 = vrot.slane %v611, 6
      %v668 = vsel %vm661, %v665, %v667
      %v669 = vrot.slane %v660, 6
      %v670 = vsel %vm661, %v667, %v669
      %671 = vrot.lane.b32.xlu0 %v662, 32
      %v672 = vpop.permute.xlu0 %671
      %673 = vrot.lane.b32.xlu0 %v664, 32
      %v674 = vpop.permute.xlu0 %673
      %675 = vrot.lane.b32.xlu0 %v666, 32
      %v676 = vpop.permute.xlu0 %675
      %677 = vrot.lane.b32.xlu0 %v668, 32
      %v678 = vpop.permute.xlu0 %677
      %679 = vrot.lane.b32.xlu0 %v670, 32
      %v680 = vpop.permute.xlu0 %679
      %v682 = vunpack.c.l.b16 %v499
      %v683 = vpack.c.b16 %v520, %v682
      %vm684 = vsmask.f32 1280
      %v686 = vshrl.u32 %v683, 16
      %v688 = vrot.slane %v686, 6
      %v689 = vshll.u32 %v683, 16
      %v691 = vrot.slane %v689, 7
      %v692 = vor.u32 %v688, %v691
      %v693 = vrot.slane %v622, 6
      %v694 = vrot.slane %v625, 7
      %v695 = vor.u32 %v693, %v694
      %v696 = vsel %vm684, %v692, %v695
      %v697 = vrot.slane %v631, 6
      %v698 = vrot.slane %v634, 7
      %v699 = vor.u32 %v697, %v698
      %v700 = vsel %vm684, %v695, %v699
      %v701 = vrot.slane %v640, 6
      %v702 = vrot.slane %v643, 7
      %v703 = vor.u32 %v701, %v702
      %v704 = vsel %vm684, %v699, %v703
      %v706 = vshrl.u32 %v660, 16
      %v708 = vrot.slane %v706, 6
      %v709 = vshll.u32 %v660, 16
      %v711 = vrot.slane %v709, 7
      %v712 = vor.u32 %v708, %v711
      %v713 = vsel %vm684, %v703, %v712
      %714 = vrot.lane.b32.xlu0 %v692, 40
      %v715 = vpop.permute.xlu0 %714
      %716 = vrot.lane.b32.xlu0 %v696, 40
      %v717 = vpop.permute.xlu0 %716
      %718 = vrot.lane.b32.xlu0 %v700, 40
      %v719 = vpop.permute.xlu0 %718
      %720 = vrot.lane.b32.xlu0 %v704, 40
      %v721 = vpop.permute.xlu0 %720
      %722 = vrot.lane.b32.xlu0 %v713, 40
      %v723 = vpop.permute.xlu0 %722
      %v725 = vunpack.c.l.b16 %v500
      %v726 = vpack.c.b16 %v725, %v725
      %vm727 = vcmask 1040384
      %v728 = vrot.slane %v683, 7
      %v729 = vrot.slane %v609, 7
      %v730 = vsel %vm727, %v728, %v729
      %v731 = vrot.slane %v610, 7
      %v732 = vsel %vm727, %v729, %v731
      %v733 = vrot.slane %v611, 7
      %v734 = vsel %vm727, %v731, %v733
      %v735 = vrot.slane %v726, 7
      %v736 = vsel %vm727, %v733, %v735
      %737 = vrot.lane.b32.xlu0 %v728, 48
      %v738 = vpop.permute.xlu0 %737
      %739 = vrot.lane.b32.xlu0 %v730, 48
      %v740 = vpop.permute.xlu0 %739
      %741 = vrot.lane.b32.xlu0 %v732, 48
      %v742 = vpop.permute.xlu0 %741
      %743 = vrot.lane.b32.xlu0 %v734, 48
      %v744 = vpop.permute.xlu0 %743
      %745 = vrot.lane.b32.xlu0 %v736, 48
      %v746 = vpop.permute.xlu0 %745
      %v748 = vunpack.c.l.b16 %v501
      %v749 = vpack.c.b16 %v520, %v748
      %vm750 = vsmask.f32 256
      %v752 = vshrl.u32 %v749, 16
      %v754 = vrot.slane %v752, 7
      %v755 = vshll.u32 %v749, 16
      %v757 = vor.u32 %v754, %v755
      %v758 = vrot.slane %v622, 7
      %v759 = vor.u32 %v758, %v625
      %v760 = vsel %vm750, %v754, %v759
      %v761 = vrot.slane %v631, 7
      %v762 = vor.u32 %v761, %v634
      %v763 = vsel %vm750, %v758, %v762
      %v764 = vrot.slane %v640, 7
      %v765 = vor.u32 %v764, %v643
      %v766 = vsel %vm750, %v761, %v765
      %v768 = vshrl.u32 %v726, 16
      %v770 = vrot.slane %v768, 7
      %v771 = vshll.u32 %v726, 16
      %v773 = vor.u32 %v770, %v771
      %v774 = vsel %vm750, %v764, %v773
      %775 = vrot.lane.b32.xlu0 %v757, 56
      %v776 = vpop.permute.xlu0 %775
      %777 = vrot.lane.b32.xlu0 %v760, 56
      %v778 = vpop.permute.xlu0 %777
      %779 = vrot.lane.b32.xlu0 %v763, 56
      %v780 = vpop.permute.xlu0 %779
      %781 = vrot.lane.b32.xlu0 %v766, 56
      %v782 = vpop.permute.xlu0 %781
      %783 = vrot.lane.b32.xlu0 %v774, 56
      %v784 = vpop.permute.xlu0 %783
      %v786 = vunpack.c.l.b16 %v502
      %v787 = vpack.c.b16 %v786, %v786
      %788 = vrot.lane.b32.xlu0 %v749, 64
      %v789 = vpop.permute.xlu0 %788
      %790 = vrot.lane.b32.xlu0 %v609, 64
      %v791 = vpop.permute.xlu0 %790
      %792 = vrot.lane.b32.xlu0 %v610, 64
      %v793 = vpop.permute.xlu0 %792
      %794 = vrot.lane.b32.xlu0 %v611, 64
      %v795 = vpop.permute.xlu0 %794
      %796 = vrot.lane.b32.xlu0 %v787, 64
      %v797 = vpop.permute.xlu0 %796
      %v799 = vunpack.c.l.b16 %v503
      %v800 = vpack.c.b16 %v520, %v799
      %v802 = vshrl.u32 %v800, 16
      %v804 = vshll.u32 %v800, 16
      %v806 = vrot.slane %v804, 1
      %v807 = vor.u32 %v802, %v806
      %v808 = vrot.slane %v625, 1
      %v809 = vsel %vm535, %v807, %v808
      %v810 = vor.u32 %v622, %v808
      %v811 = vrot.slane %v634, 1
      %v812 = vsel %vm535, %v810, %v811
      %v813 = vor.u32 %v631, %v811
      %v814 = vrot.slane %v643, 1
      %v815 = vsel %vm535, %v813, %v814
      %v816 = vor.u32 %v640, %v814
      %v818 = vshll.u32 %v787, 16
      %v820 = vrot.slane %v818, 1
      %v821 = vsel %vm535, %v816, %v820
      %v822 = vshrl.u32 %v787, 16
      %v824 = vor.u32 %v822, %v820
      %825 = vrot.lane.b32.xlu0 %v809, 72
      %v826 = vpop.permute.xlu0 %825
      %827 = vrot.lane.b32.xlu0 %v812, 72
      %v828 = vpop.permute.xlu0 %827
      %829 = vrot.lane.b32.xlu0 %v815, 72
      %v830 = vpop.permute.xlu0 %829
      %831 = vrot.lane.b32.xlu0 %v821, 72
      %v832 = vpop.permute.xlu0 %831
      %833 = vrot.lane.b32.xlu0 %v824, 72
      %v834 = vpop.permute.xlu0 %833
      %v836 = vunpack.c.l.b16 %v504
      %v837 = vpack.c.b16 %v836, %v836
      %v838 = vrot.slane %v800, 1
      %v839 = vrot.slane %v609, 1
      %v840 = vsel %vm588, %v838, %v839
      %v841 = vrot.slane %v610, 1
      %v842 = vsel %vm588, %v839, %v841
      %v843 = vrot.slane %v611, 1
      %v844 = vsel %vm588, %v841, %v843
      %v845 = vrot.slane %v837, 1
      %v846 = vsel %vm588, %v843, %v845
      %847 = vrot.lane.b32.xlu0 %v840, 80
      %v848 = vpop.permute.xlu0 %847
      %849 = vrot.lane.b32.xlu0 %v842, 80
      %v850 = vpop.permute.xlu0 %849
      %851 = vrot.lane.b32.xlu0 %v844, 80
      %v852 = vpop.permute.xlu0 %851
      %853 = vrot.lane.b32.xlu0 %v846, 80
      %v854 = vpop.permute.xlu0 %853
      %855 = vrot.lane.b32.xlu0 %v845, 80
      %v856 = vpop.permute.xlu0 %855
      %v857 = vpack.c.b16 %v836, %v586
      %v858 = vrot.slane %v548, 5
      %v859 = vrot.slane %v544, 6
      %v860 = vor.u32 %v858, %v859
      %v861 = vrot.slane %v556, 5
      %v862 = vrot.slane %v552, 6
      %v863 = vor.u32 %v861, %v862
      %v864 = vsel %vm612, %v860, %v863
      %v865 = vrot.slane %v564, 5
      %v866 = vrot.slane %v560, 6
      %v867 = vor.u32 %v865, %v866
      %v868 = vsel %vm612, %v863, %v867
      %v870 = vshrl.u32 %v857, 16
      %v872 = vrot.slane %v870, 5
      %v873 = vshll.u32 %v857, 16
      %v875 = vrot.slane %v873, 6
      %v876 = vor.u32 %v872, %v875
      %v877 = vsel %vm612, %v867, %v876
      %878 = vrot.lane.b32.xlu0 %v860, 88
      %v879 = vpop.permute.xlu0 %878
      %880 = vrot.lane.b32.xlu0 %v864, 88
      %v881 = vpop.permute.xlu0 %880
      %882 = vrot.lane.b32.xlu0 %v868, 88
      %v883 = vpop.permute.xlu0 %882
      %884 = vrot.lane.b32.xlu0 %v877, 88
      %v885 = vpop.permute.xlu0 %884
      %886 = vrot.lane.b32.xlu0 %v876, 88
      %v887 = vpop.permute.xlu0 %886
      %v889 = vunpack.c.l.b16 %v505
      %v890 = vpack.c.b16 %v889, %v889
      %v891 = vrot.slane %v528, 6
      %v892 = vrot.slane %v529, 6
      %v893 = vsel %vm661, %v891, %v892
      %v894 = vrot.slane %v530, 6
      %v895 = vsel %vm661, %v892, %v894
      %v896 = vrot.slane %v857, 6
      %v897 = vsel %vm661, %v894, %v896
      %v898 = vrot.slane %v890, 6
      %v899 = vsel %vm661, %v896, %v898
      %900 = vrot.lane.b32.xlu0 %v891, 96
      %v901 = vpop.permute.xlu0 %900
      %902 = vrot.lane.b32.xlu0 %v893, 96
      %v903 = vpop.permute.xlu0 %902
      %904 = vrot.lane.b32.xlu0 %v895, 96
      %v905 = vpop.permute.xlu0 %904
      %906 = vrot.lane.b32.xlu0 %v897, 96
      %v907 = vpop.permute.xlu0 %906
      %908 = vrot.lane.b32.xlu0 %v899, 96
      %v909 = vpop.permute.xlu0 %908
      %v911 = vunpack.c.l.b16 %v506
      %v912 = vpack.c.b16 %v521, %v911
      %v914 = vshrl.u32 %v912, 16
      %v916 = vrot.slane %v914, 6
      %v917 = vshll.u32 %v912, 16
      %v919 = vrot.slane %v917, 7
      %v920 = vor.u32 %v916, %v919
      %v921 = vrot.slane %v556, 6
      %v922 = vrot.slane %v552, 7
      %v923 = vor.u32 %v921, %v922
      %v924 = vsel %vm684, %v920, %v923
      %v925 = vrot.slane %v564, 6
      %v926 = vrot.slane %v560, 7
      %v927 = vor.u32 %v925, %v926
      %v928 = vsel %vm684, %v923, %v927
      %v929 = vrot.slane %v870, 6
      %v930 = vrot.slane %v873, 7
      %v931 = vor.u32 %v929, %v930
      %v932 = vsel %vm684, %v927, %v931
      %v934 = vshrl.u32 %v890, 16
      %v936 = vrot.slane %v934, 6
      %v937 = vshll.u32 %v890, 16
      %v939 = vrot.slane %v937, 7
      %v940 = vor.u32 %v936, %v939
      %v941 = vsel %vm684, %v931, %v940
      %942 = vrot.lane.b32.xlu0 %v920, 104
      %v943 = vpop.permute.xlu0 %942
      %944 = vrot.lane.b32.xlu0 %v924, 104
      %v945 = vpop.permute.xlu0 %944
      %946 = vrot.lane.b32.xlu0 %v928, 104
      %v947 = vpop.permute.xlu0 %946
      %948 = vrot.lane.b32.xlu0 %v932, 104
      %v949 = vpop.permute.xlu0 %948
      %950 = vrot.lane.b32.xlu0 %v941, 104
      %v951 = vpop.permute.xlu0 %950
      %v953 = vunpack.c.l.b16 %v507
      %v954 = vpack.c.b16 %v953, %v953
      %v955 = vrot.slane %v912, 7
      %v956 = vrot.slane %v529, 7
      %v957 = vsel %vm727, %v955, %v956
      %v958 = vrot.slane %v530, 7
      %v959 = vsel %vm727, %v956, %v958
      %v960 = vrot.slane %v857, 7
      %v961 = vsel %vm727, %v958, %v960
      %v962 = vrot.slane %v954, 7
      %v963 = vsel %vm727, %v960, %v962
      %964 = vrot.lane.b32.xlu0 %v955, 112
      %v965 = vpop.permute.xlu0 %964
      %966 = vrot.lane.b32.xlu0 %v957, 112
      %v967 = vpop.permute.xlu0 %966
      %968 = vrot.lane.b32.xlu0 %v959, 112
      %v969 = vpop.permute.xlu0 %968
      %970 = vrot.lane.b32.xlu0 %v961, 112
      %v971 = vpop.permute.xlu0 %970
      %972 = vrot.lane.b32.xlu0 %v963, 112
      %v973 = vpop.permute.xlu0 %972
      %v975 = vunpack.c.l.b16 %v508
      %v976 = vpack.c.b16 %v521, %v975
      %v978 = vshrl.u32 %v976, 16
      %v980 = vrot.slane %v978, 7
      %v981 = vshll.u32 %v976, 16
      %v983 = vor.u32 %v980, %v981
      %v984 = vrot.slane %v556, 7
      %v985 = vor.u32 %v984, %v552
      %v986 = vsel %vm750, %v980, %v985
      %v987 = vrot.slane %v564, 7
      %v988 = vor.u32 %v987, %v560
      %v989 = vsel %vm750, %v984, %v988
      %v990 = vrot.slane %v870, 7
      %v991 = vor.u32 %v990, %v873
      %v992 = vsel %vm750, %v987, %v991
      %v994 = vshrl.u32 %v954, 16
      %v996 = vrot.slane %v994, 7
      %v997 = vshll.u32 %v954, 16
      %v999 = vor.u32 %v996, %v997
      %v1000 = vsel %vm750, %v990, %v999
      %1001 = vrot.lane.b32.xlu0 %v983, 120
      %v1002 = vpop.permute.xlu0 %1001
      %1003 = vrot.lane.b32.xlu0 %v986, 120
      %v1004 = vpop.permute.xlu0 %1003
      %1005 = vrot.lane.b32.xlu0 %v989, 120
      %v1006 = vpop.permute.xlu0 %1005
      %1007 = vrot.lane.b32.xlu0 %v992, 120
      %v1008 = vpop.permute.xlu0 %1007
      %1009 = vrot.lane.b32.xlu0 %v1000, 120
      %v1010 = vpop.permute.xlu0 %1009
      %vm1011 = vcmask 64512
      %v1014 = vsel %vm1011, %v527, %v576
      %v1016 = vsel %vm1011, %v528, %v578
      %v1018 = vsel %vm1011, %v529, %v580
      %v1020 = vsel %vm1011, %v530, %v582
      %v1022 = vsel %vm1011, %v531, %v584
      %vm1023 = vcmask 130048
      %v1025 = vsel %vm1023, %v1014, %v599
      %v1027 = vsel %vm1023, %v1016, %v601
      %v1029 = vsel %vm1023, %v1018, %v603
      %v1031 = vsel %vm1023, %v1020, %v605
      %v1033 = vsel %vm1023, %v1022, %v607
      %vm1034 = vcmask 195584
      %v1036 = vsel %vm1034, %v1025, %v649
      %v1038 = vsel %vm1034, %v1027, %v651
      %v1040 = vsel %vm1034, %v1029, %v653
      %v1042 = vsel %vm1034, %v1031, %v655
      %v1044 = vsel %vm1034, %v1033, %v657
      %v1046 = vsel %vm429, %v1036, %v672
      %v1048 = vsel %vm429, %v1038, %v674
      %v1050 = vsel %vm429, %v1040, %v676
      %v1052 = vsel %vm429, %v1042, %v678
      %v1054 = vsel %vm429, %v1044, %v680
      %vm1055 = vcmask 326656
      %v1057 = vsel %vm1055, %v1046, %v715
      %v1059 = vsel %vm1055, %v1048, %v717
      %v1061 = vsel %vm1055, %v1050, %v719
      %v1063 = vsel %vm1055, %v1052, %v721
      %v1065 = vsel %vm1055, %v1054, %v723
      %vm1066 = vcmask 392192
      %v1068 = vsel %vm1066, %v1057, %v738
      %v1070 = vsel %vm1066, %v1059, %v740
      %v1072 = vsel %vm1066, %v1061, %v742
      %v1074 = vsel %vm1066, %v1063, %v744
      %v1076 = vsel %vm1066, %v1065, %v746
      %vm1077 = vcmask 457728
      %v1079 = vsel %vm1077, %v1068, %v776
      %v1081 = vsel %vm1077, %v1070, %v778
      %v1083 = vsel %vm1077, %v1072, %v780
      %v1085 = vsel %vm1077, %v1074, %v782
      %v1087 = vsel %vm1077, %v1076, %v784
      %vm1088 = vcmask 523264
      %v1090 = vsel %vm1088, %v1079, %v789
      %v1092 = vsel %vm1088, %v1081, %v791
      %v1094 = vsel %vm1088, %v1083, %v793
      %v1096 = vsel %vm1088, %v1085, %v795
      %v1098 = vsel %vm1088, %v1087, %v797
      %vm1099 = vcmask 588800
      %v1101 = vsel %vm1099, %v1090, %v826
      %v1103 = vsel %vm1099, %v1092, %v828
      %v1105 = vsel %vm1099, %v1094, %v830
      %v1107 = vsel %vm1099, %v1096, %v832
      %v1109 = vsel %vm1099, %v1098, %v834
      %vm1110 = vcmask 654336
      %v1112 = vsel %vm1110, %v1101, %v848
      %v1114 = vsel %vm1110, %v1103, %v850
      %v1116 = vsel %vm1110, %v1105, %v852
      %v1118 = vsel %vm1110, %v1107, %v854
      %v1120 = vsel %vm1110, %v1109, %v856
      %vm1121 = vcmask 719872
      %v1123 = vsel %vm1121, %v1112, %v879
      %v1125 = vsel %vm1121, %v1114, %v881
      %v1127 = vsel %vm1121, %v1116, %v883
      %v1129 = vsel %vm1121, %v1118, %v885
      %v1131 = vsel %vm1121, %v1120, %v887
      %vm1132 = vcmask 785408
      %v1134 = vsel %vm1132, %v1123, %v901
      %v1136 = vsel %vm1132, %v1125, %v903
      %v1138 = vsel %vm1132, %v1127, %v905
      %v1140 = vsel %vm1132, %v1129, %v907
      %v1142 = vsel %vm1132, %v1131, %v909
      %vm1143 = vcmask 850944
      %v1145 = vsel %vm1143, %v1134, %v943
      %v1147 = vsel %vm1143, %v1136, %v945
      %v1149 = vsel %vm1143, %v1138, %v947
      %v1151 = vsel %vm1143, %v1140, %v949
      %v1153 = vsel %vm1143, %v1142, %v951
      %vm1154 = vcmask 916480
      %v1156 = vsel %vm1154, %v1145, %v965
      %v1158 = vsel %vm1154, %v1147, %v967
      %v1160 = vsel %vm1154, %v1149, %v969
      %v1162 = vsel %vm1154, %v1151, %v971
      %v1164 = vsel %vm1154, %v1153, %v973
      %vm1165 = vcmask 982016
      %v1167 = vsel %vm1165, %v1156, %v1002
      %v1169 = vsel %vm1165, %v1158, %v1004
      %v1171 = vsel %vm1165, %v1160, %v1006
      %v1173 = vsel %vm1165, %v1162, %v1008
      %v1175 = vsel %vm1165, %v1164, %v1010
      %v1176 = vld [vmem:[%s5] sm:$0xf]
      %v1177 = vld [vmem:[%s5 + $0x4] sm:$0xf]
      %v1178 = vld [vmem:[%s5 + $0x8] sm:$0xf]
      %v1179 = vld [vmem:[%s5 + $0xc] sm:$0xf]
      %v1180 = vld [vmem:[%s5 + $0x10] sm:$0xf]
      %v1181 = vld [vmem:[%s5 + $0x14] sm:$0xf]
      %v1182 = vld [vmem:[%s5 + $0x18] sm:$0xf]
      %v1183 = vld [vmem:[%s5 + $0x1c] sm:$0xf]
      %v1184 = vld [vmem:[%s5 + $0x20] sm:$0xf]
      %v1185 = vld [vmem:[%s5 + $0x24] sm:$0xf]
      %v1186 = vld [vmem:[%s5 + $0x28] sm:$0xf]
      %v1187 = vld [vmem:[%s5 + $0x2c] sm:$0xf]
      %v1188 = vld [vmem:[%s5 + $0x30] sm:$0xf]
      %v1189 = vld [vmem:[%s5 + $0x34] sm:$0xf]
      %v1190 = vld [vmem:[%s5 + $0x38] sm:$0xf]
      %v1191 = vld [vmem:[%s5 + $0x3c] sm:$0xf]
      %v1192 = vld [vmem:[#allocation2 + $0x2c] sm:$0x7]
      %v1193 = vld [vmem:[#allocation2 + $0xc] sm:$0x8]
      %v1194 = vld [vmem:[#allocation2 + $0x2c] sm:$0xf]
      %v1195 = vld [vmem:[#allocation2 + $0x30] sm:$0x1]
      %v1196 = vld [vmem:[#allocation2 + $0x10] sm:$0xe]
      %v1197 = vld [vmem:[#allocation2 + $0x30] sm:$0x3]
      %v1198 = vld [vmem:[#allocation2 + $0x10] sm:$0xc]
      %v1199 = vld [vmem:[#allocation2 + $0x30] sm:$0x7]
      %v1200 = vld [vmem:[#allocation2 + $0x10] sm:$0x8]
      %v1201 = vld [vmem:[#allocation2 + $0x30] sm:$0xf]
      %v1202 = vld [vmem:[#allocation2 + $0x34] sm:$0x1]
      %v1203 = vld [vmem:[#allocation2 + $0x14] sm:$0xe]
      %v1204 = vld [vmem:[#allocation2 + $0x34] sm:$0x3]
      %v1205 = vld [vmem:[#allocation2 + $0x14] sm:$0xc]
      %v1207 = vunpack.c.l.b16 %v1192
      %v1208 = vpack.c.b16 %v1207, %v1207
      %v1210 = vunpack.c.l.b16 %v1193
      %v1211 = vpack.c.b16 %v521, %v1210
      %v1213 = vshrl.u32 %v1211, 16
      %v1215 = vshll.u32 %v1211, 16
      %v1217 = vrot.slane %v1215, 1
      %v1218 = vor.u32 %v1213, %v1217
      %v1219 = vsel %vm535, %v1218, %v554
      %v1220 = vrot.slane %v873, 1
      %v1221 = vsel %vm535, %v566, %v1220
      %v1222 = vor.u32 %v870, %v1220
      %v1224 = vshll.u32 %v1208, 16
      %v1226 = vrot.slane %v1224, 1
      %v1227 = vsel %vm535, %v1222, %v1226
      %v1228 = vshrl.u32 %v1208, 16
      %v1230 = vor.u32 %v1228, %v1226
      %1231 = vrot.lane.b32.xlu0 %v1219, 8
      %v1232 = vpop.permute.xlu0 %1231
      %1233 = vrot.lane.b32.xlu0 %v1221, 8
      %v1234 = vpop.permute.xlu0 %1233
      %1235 = vrot.lane.b32.xlu0 %v1227, 8
      %v1236 = vpop.permute.xlu0 %1235
      %1237 = vrot.lane.b32.xlu0 %v1230, 8
      %v1238 = vpop.permute.xlu0 %1237
      %v1240 = vunpack.c.l.b16 %v1194
      %v1241 = vpack.c.b16 %v1240, %v1240
      %v1242 = vrot.slane %v1211, 1
      %v1243 = vsel %vm588, %v1242, %v592
      %v1244 = vrot.slane %v857, 1
      %v1245 = vsel %vm588, %v594, %v1244
      %v1246 = vrot.slane %v1241, 1
      %v1247 = vsel %vm588, %v1244, %v1246
      %1248 = vrot.lane.b32.xlu0 %v1243, 16
      %v1249 = vpop.permute.xlu0 %1248
      %1250 = vrot.lane.b32.xlu0 %v1245, 16
      %v1251 = vpop.permute.xlu0 %1250
      %1252 = vrot.lane.b32.xlu0 %v1247, 16
      %v1253 = vpop.permute.xlu0 %1252
      %1254 = vrot.lane.b32.xlu0 %v1246, 16
      %v1255 = vpop.permute.xlu0 %1254
      %v1256 = vpack.c.b16 %v1240, %v836
      %v1258 = vshrl.u32 %v1256, 16
      %v1260 = vrot.slane %v1258, 5
      %v1261 = vshll.u32 %v1256, 16
      %v1263 = vrot.slane %v1261, 6
      %v1264 = vor.u32 %v1260, %v1263
      %v1265 = vsel %vm612, %v646, %v1264
      %1266 = vrot.lane.b32.xlu0 %v628, 24
      %v1267 = vpop.permute.xlu0 %1266
      %1268 = vrot.lane.b32.xlu0 %v1265, 24
      %v1269 = vpop.permute.xlu0 %1268
      %1270 = vrot.lane.b32.xlu0 %v1264, 24
      %v1271 = vpop.permute.xlu0 %1270
      %v1273 = vunpack.c.l.b16 %v1195
      %v1274 = vpack.c.b16 %v1273, %v1273
      %v1275 = vrot.slane %v1256, 6
      %v1276 = vsel %vm661, %v667, %v1275
      %v1277 = vrot.slane %v1274, 6
      %v1278 = vsel %vm661, %v1275, %v1277
      %1279 = vrot.lane.b32.xlu0 %v663, 32
      %v1280 = vpop.permute.xlu0 %1279
      %1281 = vrot.lane.b32.xlu0 %v1276, 32
      %v1282 = vpop.permute.xlu0 %1281
      %1283 = vrot.lane.b32.xlu0 %v1278, 32
      %v1284 = vpop.permute.xlu0 %1283
      %v1286 = vunpack.c.l.b16 %v1196
      %v1287 = vpack.c.b16 %v522, %v1286
      %v1289 = vshrl.u32 %v1287, 16
      %v1291 = vrot.slane %v1289, 6
      %v1292 = vshll.u32 %v1287, 16
      %v1294 = vrot.slane %v1292, 7
      %v1295 = vor.u32 %v1291, %v1294
      %v1296 = vsel %vm684, %v1295, %v699
      %v1297 = vrot.slane %v1258, 6
      %v1298 = vrot.slane %v1261, 7
      %v1299 = vor.u32 %v1297, %v1298
      %v1300 = vsel %vm684, %v703, %v1299
      %v1302 = vshrl.u32 %v1274, 16
      %v1304 = vrot.slane %v1302, 6
      %v1305 = vshll.u32 %v1274, 16
      %v1307 = vrot.slane %v1305, 7
      %v1308 = vor.u32 %v1304, %v1307
      %v1309 = vsel %vm684, %v1299, %v1308
      %1310 = vrot.lane.b32.xlu0 %v1295, 40
      %v1311 = vpop.permute.xlu0 %1310
      %1312 = vrot.lane.b32.xlu0 %v1296, 40
      %v1313 = vpop.permute.xlu0 %1312
      %1314 = vrot.lane.b32.xlu0 %v1300, 40
      %v1315 = vpop.permute.xlu0 %1314
      %1316 = vrot.lane.b32.xlu0 %v1309, 40
      %v1317 = vpop.permute.xlu0 %1316
      %v1319 = vunpack.c.l.b16 %v1197
      %v1320 = vpack.c.b16 %v1319, %v1319
      %v1321 = vrot.slane %v1287, 7
      %v1322 = vsel %vm727, %v1321, %v731
      %v1323 = vrot.slane %v1256, 7
      %v1324 = vsel %vm727, %v733, %v1323
      %v1325 = vrot.slane %v1320, 7
      %v1326 = vsel %vm727, %v1323, %v1325
      %1327 = vrot.lane.b32.xlu0 %v1321, 48
      %v1328 = vpop.permute.xlu0 %1327
      %1329 = vrot.lane.b32.xlu0 %v1322, 48
      %v1330 = vpop.permute.xlu0 %1329
      %1331 = vrot.lane.b32.xlu0 %v1324, 48
      %v1332 = vpop.permute.xlu0 %1331
      %1333 = vrot.lane.b32.xlu0 %v1326, 48
      %v1334 = vpop.permute.xlu0 %1333
      %v1336 = vunpack.c.l.b16 %v1198
      %v1337 = vpack.c.b16 %v522, %v1336
      %v1339 = vshrl.u32 %v1337, 16
      %v1341 = vrot.slane %v1339, 7
      %v1342 = vshll.u32 %v1337, 16
      %v1344 = vor.u32 %v1341, %v1342
      %v1345 = vsel %vm750, %v1341, %v762
      %v1346 = vrot.slane %v1258, 7
      %v1347 = vor.u32 %v1346, %v1261
      %v1348 = vsel %vm750, %v764, %v1347
      %v1350 = vshrl.u32 %v1320, 16
      %v1352 = vrot.slane %v1350, 7
      %v1353 = vshll.u32 %v1320, 16
      %v1355 = vor.u32 %v1352, %v1353
      %v1356 = vsel %vm750, %v1346, %v1355
      %1357 = vrot.lane.b32.xlu0 %v1344, 56
      %v1358 = vpop.permute.xlu0 %1357
      %1359 = vrot.lane.b32.xlu0 %v1345, 56
      %v1360 = vpop.permute.xlu0 %1359
      %1361 = vrot.lane.b32.xlu0 %v1348, 56
      %v1362 = vpop.permute.xlu0 %1361
      %1363 = vrot.lane.b32.xlu0 %v1356, 56
      %v1364 = vpop.permute.xlu0 %1363
      %v1366 = vunpack.c.l.b16 %v1199
      %v1367 = vpack.c.b16 %v1366, %v1366
      %1368 = vrot.lane.b32.xlu0 %v1337, 64
      %v1369 = vpop.permute.xlu0 %1368
      %1370 = vrot.lane.b32.xlu0 %v1256, 64
      %v1371 = vpop.permute.xlu0 %1370
      %1372 = vrot.lane.b32.xlu0 %v1367, 64
      %v1373 = vpop.permute.xlu0 %1372
      %v1375 = vunpack.c.l.b16 %v1200
      %v1376 = vpack.c.b16 %v522, %v1375
      %v1378 = vshrl.u32 %v1376, 16
      %v1380 = vshll.u32 %v1376, 16
      %v1382 = vrot.slane %v1380, 1
      %v1383 = vor.u32 %v1378, %v1382
      %v1384 = vsel %vm535, %v1383, %v811
      %v1385 = vrot.slane %v1261, 1
      %v1386 = vsel %vm535, %v816, %v1385
      %v1387 = vor.u32 %v1258, %v1385
      %v1389 = vshll.u32 %v1367, 16
      %v1391 = vrot.slane %v1389, 1
      %v1392 = vsel %vm535, %v1387, %v1391
      %v1393 = vshrl.u32 %v1367, 16
      %v1395 = vor.u32 %v1393, %v1391
      %1396 = vrot.lane.b32.xlu0 %v1384, 72
      %v1397 = vpop.permute.xlu0 %1396
      %1398 = vrot.lane.b32.xlu0 %v1386, 72
      %v1399 = vpop.permute.xlu0 %1398
      %1400 = vrot.lane.b32.xlu0 %v1392, 72
      %v1401 = vpop.permute.xlu0 %1400
      %1402 = vrot.lane.b32.xlu0 %v1395, 72
      %v1403 = vpop.permute.xlu0 %1402
      %v1405 = vunpack.c.l.b16 %v1201
      %v1406 = vpack.c.b16 %v1405, %v1405
      %v1407 = vrot.slane %v1376, 1
      %v1408 = vsel %vm588, %v1407, %v841
      %v1409 = vrot.slane %v1256, 1
      %v1410 = vsel %vm588, %v843, %v1409
      %v1411 = vrot.slane %v1406, 1
      %v1412 = vsel %vm588, %v1409, %v1411
      %1413 = vrot.lane.b32.xlu0 %v1408, 80
      %v1414 = vpop.permute.xlu0 %1413
      %1415 = vrot.lane.b32.xlu0 %v1410, 80
      %v1416 = vpop.permute.xlu0 %1415
      %1417 = vrot.lane.b32.xlu0 %v1412, 80
      %v1418 = vpop.permute.xlu0 %1417
      %1419 = vrot.lane.b32.xlu0 %v1411, 80
      %v1420 = vpop.permute.xlu0 %1419
      %v1421 = vpack.c.b16 %v1405, %v1240
      %v1423 = vshrl.u32 %v1421, 16
      %v1425 = vrot.slane %v1423, 5
      %v1426 = vshll.u32 %v1421, 16
      %v1428 = vrot.slane %v1426, 6
      %v1429 = vor.u32 %v1425, %v1428
      %v1430 = vsel %vm612, %v876, %v1429
      %1431 = vrot.lane.b32.xlu0 %v863, 88
      %v1432 = vpop.permute.xlu0 %1431
      %1433 = vrot.lane.b32.xlu0 %v1430, 88
      %v1434 = vpop.permute.xlu0 %1433
      %1435 = vrot.lane.b32.xlu0 %v1429, 88
      %v1436 = vpop.permute.xlu0 %1435
      %v1438 = vunpack.c.l.b16 %v1202
      %v1439 = vpack.c.b16 %v1438, %v1438
      %v1440 = vrot.slane %v1421, 6
      %v1441 = vsel %vm661, %v896, %v1440
      %v1442 = vrot.slane %v1439, 6
      %v1443 = vsel %vm661, %v1440, %v1442
      %1444 = vrot.lane.b32.xlu0 %v892, 96
      %v1445 = vpop.permute.xlu0 %1444
      %1446 = vrot.lane.b32.xlu0 %v1441, 96
      %v1447 = vpop.permute.xlu0 %1446
      %1448 = vrot.lane.b32.xlu0 %v1443, 96
      %v1449 = vpop.permute.xlu0 %1448
      %v1451 = vunpack.c.l.b16 %v1203
      %v1452 = vpack.c.b16 %v523, %v1451
      %v1454 = vshrl.u32 %v1452, 16
      %v1456 = vrot.slane %v1454, 6
      %v1457 = vshll.u32 %v1452, 16
      %v1459 = vrot.slane %v1457, 7
      %v1460 = vor.u32 %v1456, %v1459
      %v1461 = vsel %vm684, %v1460, %v927
      %v1462 = vrot.slane %v1423, 6
      %v1463 = vrot.slane %v1426, 7
      %v1464 = vor.u32 %v1462, %v1463
      %v1465 = vsel %vm684, %v931, %v1464
      %v1467 = vshrl.u32 %v1439, 16
      %v1469 = vrot.slane %v1467, 6
      %v1470 = vshll.u32 %v1439, 16
      %v1472 = vrot.slane %v1470, 7
      %v1473 = vor.u32 %v1469, %v1472
      %v1474 = vsel %vm684, %v1464, %v1473
      %1475 = vrot.lane.b32.xlu0 %v1460, 104
      %v1476 = vpop.permute.xlu0 %1475
      %1477 = vrot.lane.b32.xlu0 %v1461, 104
      %v1478 = vpop.permute.xlu0 %1477
      %1479 = vrot.lane.b32.xlu0 %v1465, 104
      %v1480 = vpop.permute.xlu0 %1479
      %1481 = vrot.lane.b32.xlu0 %v1474, 104
      %v1482 = vpop.permute.xlu0 %1481
      %v1484 = vunpack.c.l.b16 %v1204
      %v1485 = vpack.c.b16 %v1484, %v1484
      %v1486 = vrot.slane %v1452, 7
      %v1487 = vsel %vm727, %v1486, %v958
      %v1488 = vrot.slane %v1421, 7
      %v1489 = vsel %vm727, %v960, %v1488
      %v1490 = vrot.slane %v1485, 7
      %v1491 = vsel %vm727, %v1488, %v1490
      %1492 = vrot.lane.b32.xlu0 %v1486, 112
      %v1493 = vpop.permute.xlu0 %1492
      %1494 = vrot.lane.b32.xlu0 %v1487, 112
      %v1495 = vpop.permute.xlu0 %1494
      %1496 = vrot.lane.b32.xlu0 %v1489, 112
      %v1497 = vpop.permute.xlu0 %1496
      %1498 = vrot.lane.b32.xlu0 %v1491, 112
      %v1499 = vpop.permute.xlu0 %1498
      %v1501 = vunpack.c.l.b16 %v1205
      %v1502 = vpack.c.b16 %v523, %v1501
      %v1504 = vshrl.u32 %v1502, 16
      %v1506 = vrot.slane %v1504, 7
      %v1507 = vshll.u32 %v1502, 16
      %v1509 = vor.u32 %v1506, %v1507
      %v1510 = vsel %vm750, %v1506, %v988
      %v1511 = vrot.slane %v1423, 7
      %v1512 = vor.u32 %v1511, %v1426
      %v1513 = vsel %vm750, %v990, %v1512
      %v1515 = vshrl.u32 %v1485, 16
      %v1517 = vrot.slane %v1515, 7
      %v1518 = vshll.u32 %v1485, 16
      %v1520 = vor.u32 %v1517, %v1518
      %v1521 = vsel %vm750, %v1511, %v1520
      %1522 = vrot.lane.b32.xlu0 %v1509, 120
      %v1523 = vpop.permute.xlu0 %1522
      %1524 = vrot.lane.b32.xlu0 %v1510, 120
      %v1525 = vpop.permute.xlu0 %1524
      %1526 = vrot.lane.b32.xlu0 %v1513, 120
      %v1527 = vpop.permute.xlu0 %1526
      %1528 = vrot.lane.b32.xlu0 %v1521, 120
      %v1529 = vpop.permute.xlu0 %1528
      %v1531 = vsel %vm1011, %v976, %v1232
      %v1533 = vsel %vm1011, %v530, %v1234
      %v1535 = vsel %vm1011, %v857, %v1236
      %v1537 = vsel %vm1011, %v1208, %v1238
      %v1539 = vsel %vm1023, %v1531, %v1249
      %v1541 = vsel %vm1023, %v1533, %v1251
      %v1543 = vsel %vm1023, %v1535, %v1253
      %v1545 = vsel %vm1023, %v1537, %v1255
      %v1547 = vsel %vm1034, %v1539, %v1267
      %v1548 = vsel %vm1034, %v1541, %v655
      %v1550 = vsel %vm1034, %v1543, %v1269
      %v1552 = vsel %vm1034, %v1545, %v1271
      %v1554 = vsel %vm429, %v1547, %v1280
      %v1555 = vsel %vm429, %v1548, %v678
      %v1557 = vsel %vm429, %v1550, %v1282
      %v1559 = vsel %vm429, %v1552, %v1284
      %v1561 = vsel %vm1055, %v1554, %v1311
      %v1563 = vsel %vm1055, %v1050, %v1313
      %v1564 = vsel %vm1055, %v1555, %v721
      %v1566 = vsel %vm1055, %v1557, %v1315
      %v1568 = vsel %vm1055, %v1559, %v1317
      %v1570 = vsel %vm1066, %v1561, %v1328
      %v1572 = vsel %vm1066, %v1563, %v1330
      %v1573 = vsel %vm1066, %v1564, %v744
      %v1575 = vsel %vm1066, %v1566, %v1332
      %v1577 = vsel %vm1066, %v1568, %v1334
      %v1579 = vsel %vm1077, %v1570, %v1358
      %v1581 = vsel %vm1077, %v1572, %v1360
      %v1582 = vsel %vm1077, %v1573, %v782
      %v1584 = vsel %vm1077, %v1575, %v1362
      %v1586 = vsel %vm1077, %v1577, %v1364
      %v1588 = vsel %vm1088, %v1579, %v1369
      %v1589 = vsel %vm1088, %v1581, %v793
      %v1590 = vsel %vm1088, %v1582, %v795
      %v1592 = vsel %vm1088, %v1584, %v1371
      %v1594 = vsel %vm1088, %v1586, %v1373
      %v1596 = vsel %vm1099, %v1588, %v1397
      %v1597 = vsel %vm1099, %v1589, %v830
      %v1599 = vsel %vm1099, %v1590, %v1399
      %v1601 = vsel %vm1099, %v1592, %v1401
      %v1603 = vsel %vm1099, %v1594, %v1403
      %v1605 = vsel %vm1110, %v1596, %v1414
      %v1606 = vsel %vm1110, %v1597, %v852
      %v1608 = vsel %vm1110, %v1599, %v1416
      %v1610 = vsel %vm1110, %v1601, %v1418
      %v1612 = vsel %vm1110, %v1603, %v1420
      %v1614 = vsel %vm1121, %v1605, %v1432
      %v1615 = vsel %vm1121, %v1606, %v883
      %v1616 = vsel %vm1121, %v1608, %v885
      %v1618 = vsel %vm1121, %v1610, %v1434
      %v1620 = vsel %vm1121, %v1612, %v1436
      %v1622 = vsel %vm1132, %v1614, %v1445
      %v1623 = vsel %vm1132, %v1615, %v905
      %v1624 = vsel %vm1132, %v1616, %v907
      %v1626 = vsel %vm1132, %v1618, %v1447
      %v1628 = vsel %vm1132, %v1620, %v1449
      %v1630 = vsel %vm1143, %v1622, %v1476
      %v1632 = vsel %vm1143, %v1623, %v1478
      %v1633 = vsel %vm1143, %v1624, %v949
      %v1635 = vsel %vm1143, %v1626, %v1480
      %v1637 = vsel %vm1143, %v1628, %v1482
      %v1639 = vsel %vm1154, %v1630, %v1493
      %v1641 = vsel %vm1154, %v1632, %v1495
      %v1642 = vsel %vm1154, %v1633, %v971
      %v1644 = vsel %vm1154, %v1635, %v1497
      %v1646 = vsel %vm1154, %v1637, %v1499
      %v1648 = vsel %vm1165, %v1639, %v1523
      %v1650 = vsel %vm1165, %v1641, %v1525
      %v1651 = vsel %vm1165, %v1642, %v1008
      %v1653 = vsel %vm1165, %v1644, %v1527
      %v1655 = vsel %vm1165, %v1646, %v1529
      %v1656 = vld [vmem:[%s5 + $0x40] sm:$0xf]
      %v1657 = vld [vmem:[%s5 + $0x44] sm:$0xf]
      %v1658 = vld [vmem:[%s5 + $0x48] sm:$0xf]
      %v1659 = vld [vmem:[%s5 + $0x4c] sm:$0xf]
      %v1660 = vld [vmem:[%s5 + $0x50] sm:$0xf]
      %v1661 = vld [vmem:[%s5 + $0x54] sm:$0xf]
      %v1662 = vld [vmem:[%s5 + $0x58] sm:$0xf]
      %v1663 = vld [vmem:[%s5 + $0x5c] sm:$0xf]
      %v1664 = vld [vmem:[%s5 + $0x60] sm:$0xf]
      %v1665 = vld [vmem:[%s5 + $0x64] sm:$0xf]
      %v1666 = vld [vmem:[%s5 + $0x68] sm:$0xf]
      %v1667 = vld [vmem:[%s5 + $0x6c] sm:$0xf]
      %v1668 = vld [vmem:[%s5 + $0x70] sm:$0xf]
      %v1669 = vld [vmem:[%s5 + $0x74] sm:$0xf]
      %v1670 = vld [vmem:[%s5 + $0x78] sm:$0xf]
      %v1671 = vld [vmem:[%s5 + $0x7c] sm:$0xf]
      %vm1672 = vsmask.f32 5376
      %v1673 = vshrl.u32 %v1648, 16
      %v1675 = vrot.slane %v1673, 2
      %v1676 = vshll.u32 %v1648, 16
      %v1678 = vrot.slane %v1676, 3
      %v1679 = vor.u32 %v1675, %v1678
      %v1680 = vshrl.u32 %v1650, 16
      %v1682 = vrot.slane %v1680, 2
      %v1683 = vshll.u32 %v1650, 16
      %v1685 = vrot.slane %v1683, 3
      %v1686 = vor.u32 %v1682, %v1685
      %v1687 = vsel %vm1672, %v1679, %v1686
      %v1688 = vshrl.u32 %v1651, 16
      %v1690 = vrot.slane %v1688, 2
      %v1691 = vshll.u32 %v1651, 16
      %v1693 = vrot.slane %v1691, 3
      %v1694 = vor.u32 %v1690, %v1693
      %v1695 = vsel %vm1672, %v1686, %v1694
      %v1696 = vshrl.u32 %v1653, 16
      %v1698 = vrot.slane %v1696, 2
      %v1699 = vshll.u32 %v1653, 16
      %v1701 = vrot.slane %v1699, 3
      %v1702 = vor.u32 %v1698, %v1701
      %v1703 = vsel %vm1672, %v1694, %v1702
      %v1704 = vshrl.u32 %v1655, 16
      %v1706 = vrot.slane %v1704, 2
      %v1707 = vshll.u32 %v1655, 16
      %v1709 = vrot.slane %v1707, 3
      %v1710 = vor.u32 %v1706, %v1709
      %v1711 = vsel %vm1672, %v1702, %v1710
      %v1732 = vunpack.c.l.b16 %v1656
      %v1733 = vunpack.c.l.b16 %v1657
      %v1734 = vunpack.c.l.b16 %v1658
      %v1735 = vunpack.c.l.b16 %v1659
      %v1736 = vunpack.c.l.b16 %v1660
      %v1737 = vunpack.c.l.b16 %v1661
      %v1738 = vunpack.c.l.b16 %v1662
      %v1739 = vunpack.c.l.b16 %v1663
      %v1740 = vunpack.c.l.b16 %v1664
      %v1741 = vunpack.c.l.b16 %v1665
      %v1742 = vunpack.c.l.b16 %v1666
      %v1743 = vunpack.c.l.b16 %v1667
      %v1744 = vunpack.c.l.b16 %v1668
      %v1745 = vunpack.c.l.b16 %v1669
      %v1746 = vunpack.c.l.b16 %v1670
      %v1747 = vunpack.c.l.b16 %v1671
      %v1748 = vpack.c.b16 %v1733, %v1732
      %v1749 = vpack.c.b16 %v1735, %v1734
      %v1750 = vpack.c.b16 %v1737, %v1736
      %v1751 = vpack.c.b16 %v1739, %v1738
      %v1752 = vpack.c.b16 %v1741, %v1740
      %v1753 = vpack.c.b16 %v1743, %v1742
      %v1754 = vpack.c.b16 %v1745, %v1744
      %v1755 = vpack.c.b16 %v1747, %v1746
      %1764 = vmatpush.bf16.msra.mxu0 %v1755
      %1765 = vmatpush.bf16.msra.mxu0 %v1754
      %1766 = vmatpush.bf16.msra.mxu0 %v1753
      %1767 = vmatpush.bf16.msra.mxu0 %v1752
      %1768 = vmatpush.bf16.msra.mxu0 %v1751
      %1769 = vmatpush.bf16.msra.mxu0 %v1750
      %1770 = vmatpush.bf16.msra.mxu0 %v1749
      %1771 = vmatpush.bf16.msra.mxu0 %v1748
      %1772 = vmatmul.bf16.gmra.mxu0 %v1687
      %v1773 = vpop.f32.mrf.mxu0
      %v1774 = vadd.f32 0.0, %v1773
      %v1775 = vpop.f32.mrf.mxu0
      %v1776 = vadd.f32 0.0, %v1775
      %1777 = vmatmul.bf16.gmra.mxu0 %v1695
      %v1778 = vpop.f32.mrf.mxu0
      %v1779 = vadd.f32 0.0, %v1778
      %v1780 = vpop.f32.mrf.mxu0
      %v1781 = vadd.f32 0.0, %v1780
      %1782 = vmatmul.bf16.gmra.mxu0 %v1703
      %v1783 = vpop.f32.mrf.mxu0
      %v1784 = vadd.f32 0.0, %v1783
      %v1785 = vpop.f32.mrf.mxu0
      %v1786 = vadd.f32 0.0, %v1785
      %1787 = vmatmul.bf16.gmra.mxu0 %v1711
      %v1788 = vpop.f32.mrf.mxu0
      %v1789 = vadd.f32 0.0, %v1788
      %v1790 = vpop.f32.mrf.mxu0
      %v1791 = vadd.f32 0.0, %v1790
      %1792 = vdwg.mxu0
      %v1793 = vshrl.u32 %v1167, 16
      %v1795 = vrot.slane %v1793, 2
      %v1796 = vshll.u32 %v1167, 16
      %v1798 = vrot.slane %v1796, 3
      %v1799 = vor.u32 %v1795, %v1798
      %v1800 = vshrl.u32 %v1169, 16
      %v1802 = vrot.slane %v1800, 2
      %v1803 = vshll.u32 %v1169, 16
      %v1805 = vrot.slane %v1803, 3
      %v1806 = vor.u32 %v1802, %v1805
      %v1807 = vsel %vm1672, %v1799, %v1806
      %v1808 = vshrl.u32 %v1171, 16
      %v1810 = vrot.slane %v1808, 2
      %v1811 = vshll.u32 %v1171, 16
      %v1813 = vrot.slane %v1811, 3
      %v1814 = vor.u32 %v1810, %v1813
      %v1815 = vsel %vm1672, %v1806, %v1814
      %v1816 = vshrl.u32 %v1173, 16
      %v1818 = vrot.slane %v1816, 2
      %v1819 = vshll.u32 %v1173, 16
      %v1821 = vrot.slane %v1819, 3
      %v1822 = vor.u32 %v1818, %v1821
      %v1823 = vsel %vm1672, %v1814, %v1822
      %v1824 = vshrl.u32 %v1175, 16
      %v1826 = vrot.slane %v1824, 2
      %v1827 = vshll.u32 %v1175, 16
      %v1829 = vrot.slane %v1827, 3
      %v1830 = vor.u32 %v1826, %v1829
      %v1831 = vsel %vm1672, %v1822, %v1830
      %v1852 = vunpack.c.l.b16 %v1176
      %v1853 = vunpack.c.l.b16 %v1177
      %v1854 = vunpack.c.l.b16 %v1178
      %v1855 = vunpack.c.l.b16 %v1179
      %v1856 = vunpack.c.l.b16 %v1180
      %v1857 = vunpack.c.l.b16 %v1181
      %v1858 = vunpack.c.l.b16 %v1182
      %v1859 = vunpack.c.l.b16 %v1183
      %v1860 = vunpack.c.l.b16 %v1184
      %v1861 = vunpack.c.l.b16 %v1185
      %v1862 = vunpack.c.l.b16 %v1186
      %v1863 = vunpack.c.l.b16 %v1187
      %v1864 = vunpack.c.l.b16 %v1188
      %v1865 = vunpack.c.l.b16 %v1189
      %v1866 = vunpack.c.l.b16 %v1190
      %v1867 = vunpack.c.l.b16 %v1191
      %v1868 = vpack.c.b16 %v1853, %v1852
      %v1869 = vpack.c.b16 %v1855, %v1854
      %v1870 = vpack.c.b16 %v1857, %v1856
      %v1871 = vpack.c.b16 %v1859, %v1858
      %v1872 = vpack.c.b16 %v1861, %v1860
      %v1873 = vpack.c.b16 %v1863, %v1862
      %v1874 = vpack.c.b16 %v1865, %v1864
      %v1875 = vpack.c.b16 %v1867, %v1866
      %1884 = vmatpush.bf16.msra.mxu0 %v1875
      %1885 = vmatpush.bf16.msra.mxu0 %v1874
      %1886 = vmatpush.bf16.msra.mxu0 %v1873
      %1887 = vmatpush.bf16.msra.mxu0 %v1872
      %1888 = vmatpush.bf16.msra.mxu0 %v1871
      %1889 = vmatpush.bf16.msra.mxu0 %v1870
      %1890 = vmatpush.bf16.msra.mxu0 %v1869
      %1891 = vmatpush.bf16.msra.mxu0 %v1868
      %1892 = vmatmul.bf16.gmra.mxu0 %v1807
      %v1893 = vpop.f32.mrf.mxu0
      %v1894 = vadd.f32 %v1774, %v1893
      %v1895 = vpop.f32.mrf.mxu0
      %v1896 = vadd.f32 %v1776, %v1895
      %1897 = vmatmul.bf16.gmra.mxu0 %v1815
      %v1898 = vpop.f32.mrf.mxu0
      %v1899 = vadd.f32 %v1779, %v1898
      %v1900 = vpop.f32.mrf.mxu0
      %v1901 = vadd.f32 %v1781, %v1900
      %1902 = vmatmul.bf16.gmra.mxu0 %v1823
      %v1903 = vpop.f32.mrf.mxu0
      %v1904 = vadd.f32 %v1784, %v1903
      %v1905 = vpop.f32.mrf.mxu0
      %v1906 = vadd.f32 %v1786, %v1905
      %1907 = vmatmul.bf16.gmra.mxu0 %v1831
      %v1908 = vpop.f32.mrf.mxu0
      %v1909 = vadd.f32 %v1789, %v1908
      %v1910 = vpop.f32.mrf.mxu0
      %v1911 = vadd.f32 %v1791, %v1910
      %1912 = vdwg.mxu0
      %v1913 = vld [vmem:[#allocation2 + $0x34] sm:$0x7]
      %v1914 = vld [vmem:[#allocation2 + $0x14] sm:$0x8]
      %v1915 = vld [vmem:[#allocation2 + $0x34] sm:$0xf]
      %v1916 = vld [vmem:[#allocation2 + $0x18] sm:$0xf]
      %v1917 = vld [vmem:[#allocation2 + $0x1c] sm:$0xf]
      %v1918 = vld [vmem:[#allocation2 + $0x20] sm:$0xf]
      %v1919 = vld [vmem:[#allocation2 + $0x24] sm:$0xf]
      %v1920 = vld [vmem:[#allocation2 + $0x28] sm:$0xf]
      %v1921 = vld [vmem:[#allocation2 + $0x2c] sm:$0xf]
      %v1922 = vld [vmem:[#allocation2 + $0x30] sm:$0xf]
      %v1923 = vld [vmem:[#allocation2 + $0x38] sm:$0x1]
      %v1924 = vld [vmem:[#allocation2 + $0x18] sm:$0xe]
      %v1925 = vld [vmem:[#allocation2 + $0x38] sm:$0x3]
      %v1926 = vld [vmem:[#allocation2 + $0x18] sm:$0xc]
      %v1928 = vunpack.c.l.b16 %v1913
      %v1929 = vpack.c.b16 %v1928, %v1928
      %v1931 = vunpack.c.l.b16 %v1914
      %v1932 = vpack.c.b16 %v523, %v1931
      %v1934 = vshrl.u32 %v1932, 16
      %v1936 = vshll.u32 %v1932, 16
      %v1938 = vrot.slane %v1936, 1
      %v1939 = vor.u32 %v1934, %v1938
      %v1940 = vsel %vm535, %v1939, %v562
      %v1941 = vrot.slane %v1426, 1
      %v1942 = vsel %vm535, %v1222, %v1941
      %v1943 = vor.u32 %v1423, %v1941
      %v1945 = vshll.u32 %v1929, 16
      %v1947 = vrot.slane %v1945, 1
      %v1948 = vsel %vm535, %v1943, %v1947
      %v1949 = vshrl.u32 %v1929, 16
      %v1951 = vor.u32 %v1949, %v1947
      %1952 = vrot.lane.b32.xlu0 %v1940, 8
      %v1953 = vpop.permute.xlu0 %1952
      %1954 = vrot.lane.b32.xlu0 %v1942, 8
      %v1955 = vpop.permute.xlu0 %1954
      %1956 = vrot.lane.b32.xlu0 %v1948, 8
      %v1957 = vpop.permute.xlu0 %1956
      %1958 = vrot.lane.b32.xlu0 %v1951, 8
      %v1959 = vpop.permute.xlu0 %1958
      %v1961 = vunpack.c.l.b16 %v1915
      %v1962 = vpack.c.b16 %v1961, %v1961
      %v1963 = vrot.slane %v1932, 1
      %v1964 = vsel %vm588, %v1963, %v594
      %v1965 = vrot.slane %v1421, 1
      %v1966 = vsel %vm588, %v1244, %v1965
      %v1967 = vrot.slane %v1962, 1
      %v1968 = vsel %vm588, %v1965, %v1967
      %1969 = vrot.lane.b32.xlu0 %v1964, 16
      %v1970 = vpop.permute.xlu0 %1969
      %1971 = vrot.lane.b32.xlu0 %v1966, 16
      %v1972 = vpop.permute.xlu0 %1971
      %1973 = vrot.lane.b32.xlu0 %v1968, 16
      %v1974 = vpop.permute.xlu0 %1973
      %1975 = vrot.lane.b32.xlu0 %v1967, 16
      %v1976 = vpop.permute.xlu0 %1975
      %v1977 = vpack.c.b16 %v1961, %v1405
      %v1979 = vshrl.u32 %v1977, 16
      %v1981 = vrot.slane %v1979, 5
      %v1982 = vshll.u32 %v1977, 16
      %v1984 = vrot.slane %v1982, 6
      %v1985 = vor.u32 %v1981, %v1984
      %v1986 = vsel %vm612, %v1264, %v1985
      %1987 = vrot.lane.b32.xlu0 %v637, 24
      %v1988 = vpop.permute.xlu0 %1987
      %1989 = vrot.lane.b32.xlu0 %v1986, 24
      %v1990 = vpop.permute.xlu0 %1989
      %1991 = vrot.lane.b32.xlu0 %v1985, 24
      %v1992 = vpop.permute.xlu0 %1991
      %v2001 = vunpack.c.l.b16 %v1916
      %v2002 = vunpack.c.l.b16 %v1917
      %v2003 = vunpack.c.l.b16 %v1918
      %v2004 = vunpack.c.l.b16 %v1919
      %v2005 = vunpack.c.l.b16 %v1920
      %v2006 = vunpack.c.l.b16 %v1921
      %v2007 = vunpack.c.l.b16 %v1922
      %v2008 = vunpack.c.l.b16 %v1923
      %v2009 = vpack.c.b16 %v2002, %v2001
      %v2010 = vpack.c.b16 %v2004, %v2003
      %v2011 = vpack.c.b16 %v2006, %v2005
      %v2012 = vpack.c.b16 %v1961, %v2007
      %v2013 = vpack.c.b16 %v2008, %v2008
      %v2014 = vrot.slane %v2009, 6
      %v2015 = vrot.slane %v2010, 6
      %v2016 = vsel %vm661, %v2014, %v2015
      %v2017 = vrot.slane %v2011, 6
      %v2018 = vsel %vm661, %v2015, %v2017
      %v2019 = vrot.slane %v2012, 6
      %v2020 = vsel %vm661, %v2017, %v2019
      %v2021 = vrot.slane %v2013, 6
      %v2022 = vsel %vm661, %v2019, %v2021
      %2023 = vrot.lane.b32.xlu0 %v2014, 32
      %v2024 = vpop.permute.xlu0 %2023
      %2025 = vrot.lane.b32.xlu0 %v2016, 32
      %v2026 = vpop.permute.xlu0 %2025
      %2027 = vrot.lane.b32.xlu0 %v2018, 32
      %v2028 = vpop.permute.xlu0 %2027
      %2029 = vrot.lane.b32.xlu0 %v2020, 32
      %v2030 = vpop.permute.xlu0 %2029
      %2031 = vrot.lane.b32.xlu0 %v2022, 32
      %v2032 = vpop.permute.xlu0 %2031
      %v2034 = vunpack.c.l.b16 %v1924
      %v2035 = vpack.c.b16 %v2002, %v2034
      %v2037 = vshrl.u32 %v2035, 16
      %v2039 = vrot.slane %v2037, 6
      %v2040 = vshll.u32 %v2035, 16
      %v2042 = vrot.slane %v2040, 7
      %v2043 = vor.u32 %v2039, %v2042
      %v2045 = vshrl.u32 %v2010, 16
      %v2047 = vrot.slane %v2045, 6
      %v2048 = vshll.u32 %v2010, 16
      %v2050 = vrot.slane %v2048, 7
      %v2051 = vor.u32 %v2047, %v2050
      %v2052 = vsel %vm684, %v2043, %v2051
      %v2054 = vshrl.u32 %v2011, 16
      %v2056 = vrot.slane %v2054, 6
      %v2057 = vshll.u32 %v2011, 16
      %v2059 = vrot.slane %v2057, 7
      %v2060 = vor.u32 %v2056, %v2059
      %v2061 = vsel %vm684, %v2051, %v2060
      %v2063 = vshrl.u32 %v2012, 16
      %v2065 = vrot.slane %v2063, 6
      %v2066 = vshll.u32 %v2012, 16
      %v2068 = vrot.slane %v2066, 7
      %v2069 = vor.u32 %v2065, %v2068
      %v2070 = vsel %vm684, %v2060, %v2069
      %v2072 = vshrl.u32 %v2013, 16
      %v2074 = vrot.slane %v2072, 6
      %v2075 = vshll.u32 %v2013, 16
      %v2077 = vrot.slane %v2075, 7
      %v2078 = vor.u32 %v2074, %v2077
      %v2079 = vsel %vm684, %v2069, %v2078
      %2080 = vrot.lane.b32.xlu0 %v2043, 40
      %v2081 = vpop.permute.xlu0 %2080
      %2082 = vrot.lane.b32.xlu0 %v2052, 40
      %v2083 = vpop.permute.xlu0 %2082
      %2084 = vrot.lane.b32.xlu0 %v2061, 40
      %v2085 = vpop.permute.xlu0 %2084
      %2086 = vrot.lane.b32.xlu0 %v2070, 40
      %v2087 = vpop.permute.xlu0 %2086
      %2088 = vrot.lane.b32.xlu0 %v2079, 40
      %v2089 = vpop.permute.xlu0 %2088
      %v2091 = vunpack.c.l.b16 %v1925
      %v2092 = vpack.c.b16 %v2091, %v2091
      %v2093 = vrot.slane %v2035, 7
      %v2094 = vrot.slane %v2010, 7
      %v2095 = vsel %vm727, %v2093, %v2094
      %v2096 = vrot.slane %v2011, 7
      %v2097 = vsel %vm727, %v2094, %v2096
      %v2098 = vrot.slane %v2012, 7
      %v2099 = vsel %vm727, %v2096, %v2098
      %v2100 = vrot.slane %v2092, 7
      %v2101 = vsel %vm727, %v2098, %v2100
      %2102 = vrot.lane.b32.xlu0 %v2093, 48
      %v2103 = vpop.permute.xlu0 %2102
      %2104 = vrot.lane.b32.xlu0 %v2095, 48
      %v2105 = vpop.permute.xlu0 %2104
      %2106 = vrot.lane.b32.xlu0 %v2097, 48
      %v2107 = vpop.permute.xlu0 %2106
      %2108 = vrot.lane.b32.xlu0 %v2099, 48
      %v2109 = vpop.permute.xlu0 %2108
      %2110 = vrot.lane.b32.xlu0 %v2101, 48
      %v2111 = vpop.permute.xlu0 %2110
      %v2113 = vunpack.c.l.b16 %v1926
      %v2114 = vpack.c.b16 %v2002, %v2113
      %v2116 = vshrl.u32 %v2114, 16
      %v2118 = vrot.slane %v2116, 7
      %v2119 = vshll.u32 %v2114, 16
      %v2121 = vor.u32 %v2118, %v2119
      %v2122 = vrot.slane %v2045, 7
      %v2123 = vor.u32 %v2122, %v2048
      %v2124 = vsel %vm750, %v2118, %v2123
      %v2125 = vrot.slane %v2054, 7
      %v2126 = vor.u32 %v2125, %v2057
      %v2127 = vsel %vm750, %v2122, %v2126
      %v2128 = vrot.slane %v2063, 7
      %v2129 = vor.u32 %v2128, %v2066
      %v2130 = vsel %vm750, %v2125, %v2129
      %v2132 = vshrl.u32 %v2092, 16
      %v2134 = vrot.slane %v2132, 7
      %v2135 = vshll.u32 %v2092, 16
      %v2137 = vor.u32 %v2134, %v2135
      %v2138 = vsel %vm750, %v2128, %v2137
      %2139 = vrot.lane.b32.xlu0 %v2121, 56
      %v2140 = vpop.permute.xlu0 %2139
      %2141 = vrot.lane.b32.xlu0 %v2124, 56
      %v2142 = vpop.permute.xlu0 %2141
      %2143 = vrot.lane.b32.xlu0 %v2127, 56
      %v2144 = vpop.permute.xlu0 %2143
      %2145 = vrot.lane.b32.xlu0 %v2130, 56
      %v2146 = vpop.permute.xlu0 %2145
      %2147 = vrot.lane.b32.xlu0 %v2138, 56
      %v2148 = vpop.permute.xlu0 %2147
      %v2150 = vsel %vm1011, %v1502, %v1953
      %v2152 = vsel %vm1011, %v857, %v1955
      %v2154 = vsel %vm1011, %v1421, %v1957
      %v2156 = vsel %vm1011, %v1929, %v1959
      %v2158 = vsel %vm1023, %v2150, %v1970
      %v2160 = vsel %vm1023, %v2152, %v1972
      %v2162 = vsel %vm1023, %v2154, %v1974
      %v2164 = vsel %vm1023, %v2156, %v1976
      %v2166 = vsel %vm1034, %v2158, %v1988
      %v2167 = vsel %vm1034, %v2160, %v1269
      %v2169 = vsel %vm1034, %v2162, %v1990
      %v2171 = vsel %vm1034, %v2164, %v1992
      %v2173 = vsel %vm429, %v2166, %v2024
      %v2175 = vsel %vm429, %v1548, %v2026
      %v2177 = vsel %vm429, %v2167, %v2028
      %v2179 = vsel %vm429, %v2169, %v2030
      %v2181 = vsel %vm429, %v2171, %v2032
      %v2183 = vsel %vm1055, %v2173, %v2081
      %v2185 = vsel %vm1055, %v2175, %v2083
      %v2187 = vsel %vm1055, %v2177, %v2085
      %v2189 = vsel %vm1055, %v2179, %v2087
      %v2191 = vsel %vm1055, %v2181, %v2089
      %v2193 = vsel %vm1066, %v2183, %v2103
      %v2195 = vsel %vm1066, %v2185, %v2105
      %v2197 = vsel %vm1066, %v2187, %v2107
      %v2199 = vsel %vm1066, %v2189, %v2109
      %v2201 = vsel %vm1066, %v2191, %v2111
      %v2203 = vsel %vm1077, %v2193, %v2140
      %v2205 = vsel %vm1077, %v2195, %v2142
      %v2207 = vsel %vm1077, %v2197, %v2144
      %v2209 = vsel %vm1077, %v2199, %v2146
      %v2211 = vsel %vm1077, %v2201, %v2148
      %v2212 = vld [vmem:[%s5 + $0x80] sm:$0xf]
      %v2213 = vld [vmem:[%s5 + $0x84] sm:$0xf]
      %v2214 = vld [vmem:[%s5 + $0x88] sm:$0xf]
      %v2215 = vld [vmem:[%s5 + $0x8c] sm:$0xf]
      %v2216 = vld [vmem:[%s5 + $0x90] sm:$0xf]
      %v2217 = vld [vmem:[%s5 + $0x94] sm:$0xf]
      %v2218 = vld [vmem:[%s5 + $0x98] sm:$0xf]
      %v2219 = vld [vmem:[%s5 + $0x9c] sm:$0xf]
      %v2220 = vshrl.u32 %v2203, 16
      %v2222 = vrot.slane %v2220, 2
      %v2223 = vshll.u32 %v2203, 16
      %v2225 = vrot.slane %v2223, 3
      %v2226 = vor.u32 %v2222, %v2225
      %v2227 = vshrl.u32 %v2205, 16
      %v2229 = vrot.slane %v2227, 2
      %v2230 = vshll.u32 %v2205, 16
      %v2232 = vrot.slane %v2230, 3
      %v2233 = vor.u32 %v2229, %v2232
      %v2234 = vsel %vm1672, %v2226, %v2233
      %v2235 = vshrl.u32 %v2207, 16
      %v2237 = vrot.slane %v2235, 2
      %v2238 = vshll.u32 %v2207, 16
      %v2240 = vrot.slane %v2238, 3
      %v2241 = vor.u32 %v2237, %v2240
      %v2242 = vsel %vm1672, %v2233, %v2241
      %v2243 = vshrl.u32 %v2209, 16
      %v2245 = vrot.slane %v2243, 2
      %v2246 = vshll.u32 %v2209, 16
      %v2248 = vrot.slane %v2246, 3
      %v2249 = vor.u32 %v2245, %v2248
      %v2250 = vsel %vm1672, %v2241, %v2249
      %v2251 = vshrl.u32 %v2211, 16
      %v2253 = vrot.slane %v2251, 2
      %v2254 = vshll.u32 %v2211, 16
      %v2256 = vrot.slane %v2254, 3
      %v2257 = vor.u32 %v2253, %v2256
      %v2258 = vsel %vm1672, %v2249, %v2257
      %v2267 = vunpack.c.l.b16 %v2212
      %v2268 = vunpack.c.l.b16 %v2213
      %v2269 = vunpack.c.l.b16 %v2214
      %v2270 = vunpack.c.l.b16 %v2215
      %v2271 = vunpack.c.l.b16 %v2216
      %v2272 = vunpack.c.l.b16 %v2217
      %v2273 = vunpack.c.l.b16 %v2218
      %v2274 = vunpack.c.l.b16 %v2219
      %v2275 = vpack.c.b16 %v2268, %v2267
      %v2276 = vpack.c.b16 %v2270, %v2269
      %v2277 = vpack.c.b16 %v2272, %v2271
      %v2278 = vpack.c.b16 %v2274, %v2273
      %v2284 = vsel %vm1088, %v2234, 0
      %v2287 = vsel %vm1088, %v2242, 0
      %v2290 = vsel %vm1088, %v2250, 0
      %v2293 = vsel %vm1088, %v2258, 0
      %2295 = vmatpush.bf16.msra.mxu0 0
      %2296 = vmatpush.bf16.msra.mxu0 0
      %2297 = vmatpush.bf16.msra.mxu0 0
      %2298 = vmatpush.bf16.msra.mxu0 0
      %2299 = vmatpush.bf16.msra.mxu0 %v2278
      %2300 = vmatpush.bf16.msra.mxu0 %v2277
      %2301 = vmatpush.bf16.msra.mxu0 %v2276
      %2302 = vmatpush.bf16.msra.mxu0 %v2275
      %2303 = vmatmul.bf16.gmra.mxu0 %v2284
      %v2304 = vpop.f32.mrf.mxu0
      %v2305 = vadd.f32 0.0, %v2304
      %v2306 = vpop.f32.mrf.mxu0
      %v2307 = vadd.f32 0.0, %v2306
      %2308 = vmatmul.bf16.gmra.mxu0 %v2287
      %v2309 = vpop.f32.mrf.mxu0
      %v2310 = vadd.f32 0.0, %v2309
      %v2311 = vpop.f32.mrf.mxu0
      %v2312 = vadd.f32 0.0, %v2311
      %2313 = vmatmul.bf16.gmra.mxu0 %v2290
      %v2314 = vpop.f32.mrf.mxu0
      %v2315 = vadd.f32 0.0, %v2314
      %v2316 = vpop.f32.mrf.mxu0
      %v2317 = vadd.f32 0.0, %v2316
      %2318 = vmatmul.bf16.gmra.mxu0 %v2293
      %v2319 = vpop.f32.mrf.mxu0
      %v2320 = vadd.f32 0.0, %v2319
      %v2321 = vpop.f32.mrf.mxu0
      %v2322 = vadd.f32 0.0, %v2321
      %2323 = vdwg.mxu0
      %v2324 = vadd.f32 %v1894, %v2305
      %v2325 = vadd.f32 %v1896, %v2307
      %v2326 = vadd.f32 %v1899, %v2310
      %v2327 = vadd.f32 %v1901, %v2312
      %v2328 = vadd.f32 %v1904, %v2315
      %v2329 = vadd.f32 %v1906, %v2317
      %v2330 = vadd.f32 %v1909, %v2320
      %v2331 = vadd.f32 %v1911, %v2322
      %vm2340 = vcmask 1040384
      %v2341 = vrot.slane %v392, 7
      %v2342 = vrot.slane %v393, 7
      %v2343 = vsel %vm2340, %v2341, %v2342
      %v2344 = vrot.slane %v394, 7
      %v2345 = vsel %vm2340, %v2342, %v2344
      %v2346 = vrot.slane %v395, 7
      %v2347 = vsel %vm2340, %v2344, %v2346
      %v2348 = vrot.slane %v396, 7
      %v2349 = vsel %vm2340, %v2346, %v2348
      %v2350 = vrot.slane %v397, 7
      %v2351 = vsel %vm2340, %v2348, %v2350
      %v2352 = vrot.slane %v398, 7
      %v2353 = vsel %vm2340, %v2350, %v2352
      %v2354 = vrot.slane %v399, 7
      %v2355 = vsel %vm2340, %v2352, %v2354
      %v2364 = vsel %vm2340, -inf, %v2341
      %vm2365 = vcmask 1046528
      %v2366 = vrot.slane %v392, 1
      %v2367 = vrot.slane %v393, 1
      %v2368 = vsel %vm2365, %v2366, %v2367
      %v2369 = vrot.slane %v394, 1
      %v2370 = vsel %vm2365, %v2367, %v2369
      %v2371 = vrot.slane %v395, 1
      %v2372 = vsel %vm2365, %v2369, %v2371
      %v2373 = vrot.slane %v396, 1
      %v2374 = vsel %vm2365, %v2371, %v2373
      %v2375 = vrot.slane %v397, 1
      %v2376 = vsel %vm2365, %v2373, %v2375
      %v2377 = vrot.slane %v398, 1
      %v2378 = vsel %vm2365, %v2375, %v2377
      %v2379 = vrot.slane %v399, 1
      %v2380 = vsel %vm2365, %v2377, %v2379
      %v2389 = vsel %vm2365, %v2379, -inf
      %v2390 = vmax.f32 %v2364, %v2368
      %v2391 = vmax.f32 %v2343, %v2370
      %v2392 = vmax.f32 %v2345, %v2372
      %v2393 = vmax.f32 %v2347, %v2374
      %v2394 = vmax.f32 %v2349, %v2376
      %v2395 = vmax.f32 %v2351, %v2378
      %v2396 = vmax.f32 %v2353, %v2380
      %v2397 = vmax.f32 %v2355, %v2389
      %v2398 = vmax.f32 %v392, %v2390
      %v2399 = vmax.f32 %v393, %v2391
      %v2400 = vmax.f32 %v394, %v2392
      %v2401 = vmax.f32 %v395, %v2393
      %v2402 = vmax.f32 %v396, %v2394
      %v2403 = vmax.f32 %v397, %v2395
      %v2404 = vmax.f32 %v398, %v2396
      %v2405 = vmax.f32 %v399, %v2397
      %v2406 = vpack.c.bf16 %v2399, %v2398
      %v2407 = vpack.c.bf16 %v2401, %v2400
      %v2408 = vpack.c.bf16 %v2403, %v2402
      %v2409 = vpack.c.bf16 %v2405, %v2404
      %v2410 = vld [vmem:[%s6] sm:$0xf]
      %v2411 = vld [vmem:[%s6 + $0x4] sm:$0xf]
      %v2412 = vld [vmem:[%s6 + $0x8] sm:$0xf]
      %v2413 = vld [vmem:[%s6 + $0xc] sm:$0xf]
      %v2418 = vunpack.c.l.b16 %v2410
      %v2419 = vunpack.c.l.b16 %v2411
      %v2420 = vunpack.c.l.b16 %v2412
      %v2421 = vunpack.c.l.b16 %v2413
      %v2422 = vpack.c.b16 %v2419, %v2418
      %v2423 = vpack.c.b16 %v2421, %v2420
      %v2427 = vsel %vm429, %v2406, 0
      %v2430 = vsel %vm429, %v2407, 0
      %v2433 = vsel %vm429, %v2408, 0
      %v2436 = vsel %vm429, %v2409, 0
      %2438 = vmatpush.bf16.msra.mxu0 0
      %2439 = vmatpush.bf16.msra.mxu0 0
      %2440 = vmatpush.bf16.msra.mxu0 0
      %2441 = vmatpush.bf16.msra.mxu0 0
      %2442 = vmatpush.bf16.msra.mxu0 0
      %2443 = vmatpush.bf16.msra.mxu0 0
      %2444 = vmatpush.bf16.msra.mxu0 %v2423
      %2445 = vmatpush.bf16.msra.mxu0 %v2422
      %2446 = vmatmul.bf16.gmra.mxu0 %v2427
      %v2447 = vpop.f32.mrf.mxu0
      %v2448 = vadd.f32 0.0, %v2447
      %v2449 = vpop.f32.mrf.mxu0
      %v2450 = vadd.f32 0.0, %v2449
      %2451 = vmatmul.bf16.gmra.mxu0 %v2430
      %v2452 = vpop.f32.mrf.mxu0
      %v2453 = vadd.f32 0.0, %v2452
      %v2454 = vpop.f32.mrf.mxu0
      %v2455 = vadd.f32 0.0, %v2454
      %2456 = vmatmul.bf16.gmra.mxu0 %v2433
      %v2457 = vpop.f32.mrf.mxu0
      %v2458 = vadd.f32 0.0, %v2457
      %v2459 = vpop.f32.mrf.mxu0
      %v2460 = vadd.f32 0.0, %v2459
      %2461 = vmatmul.bf16.gmra.mxu0 %v2436
      %v2462 = vpop.f32.mrf.mxu0
      %v2463 = vadd.f32 0.0, %v2462
      %v2464 = vpop.f32.mrf.mxu0
      %v2465 = vadd.f32 0.0, %v2464
      %2466 = vdwg.mxu0
      %v2467 = vpack.c.bf16 %v2324, %v2324
      %v2468 = vpack.c.bf16 %v2325, %v2325
      %v2469 = vpack.c.bf16 %v2326, %v2326
      %v2470 = vpack.c.bf16 %v2327, %v2327
      %v2471 = vpack.c.bf16 %v2328, %v2328
      %v2472 = vpack.c.bf16 %v2329, %v2329
      %v2473 = vpack.c.bf16 %v2330, %v2330
      %v2474 = vpack.c.bf16 %v2331, %v2331
      %vm2475 = vcmask 191488
      %2476 = vst.msk [vmem:[%s314] sm:$0xf] %vm2475, %v2467
      %2477 = vst.msk [vmem:[%s314 + $0x4] sm:$0xf] %vm2475, %v2468
      %2478 = vst.msk [vmem:[%s314 + $0x8] sm:$0xf] %vm2475, %v2469
      %2479 = vst.msk [vmem:[%s314 + $0xc] sm:$0xf] %vm2475, %v2470
      %2480 = vst.msk [vmem:[%s314 + $0x10] sm:$0xf] %vm2475, %v2471
      %2481 = vst.msk [vmem:[%s314 + $0x14] sm:$0xf] %vm2475, %v2472
      %2482 = vst.msk [vmem:[%s314 + $0x18] sm:$0xf] %vm2475, %v2473
      %2483 = vst.msk [vmem:[%s314 + $0x1c] sm:$0xf] %vm2475, %v2474
      %v2484 = vpack.c.bf16 %v2448, %v2448
      %v2485 = vpack.c.bf16 %v2450, %v2450
      %v2486 = vpack.c.bf16 %v2453, %v2453
      %v2487 = vpack.c.bf16 %v2455, %v2455
      %v2488 = vpack.c.bf16 %v2458, %v2458
      %v2489 = vpack.c.bf16 %v2460, %v2460
      %v2490 = vpack.c.bf16 %v2463, %v2463
      %v2491 = vpack.c.bf16 %v2465, %v2465
      %2500 = vrot.lane.b32.xlu0 %v2484, 24
      %v2501 = vpop.permute.xlu0 %2500
      %2502 = vrot.lane.b32.xlu0 %v2485, 24
      %v2503 = vpop.permute.xlu0 %2502
      %2504 = vrot.lane.b32.xlu0 %v2486, 24
      %v2505 = vpop.permute.xlu0 %2504
      %2506 = vrot.lane.b32.xlu0 %v2487, 24
      %v2507 = vpop.permute.xlu0 %2506
      %2508 = vrot.lane.b32.xlu0 %v2488, 24
      %v2509 = vpop.permute.xlu0 %2508
      %2510 = vrot.lane.b32.xlu0 %v2489, 24
      %v2511 = vpop.permute.xlu0 %2510
      %2512 = vrot.lane.b32.xlu0 %v2490, 24
      %v2513 = vpop.permute.xlu0 %2512
      %2514 = vrot.lane.b32.xlu0 %v2491, 24
      %v2515 = vpop.permute.xlu0 %2514
      %vm2524 = vcmask 257216
      %2525 = vst.msk [vmem:[%s314] sm:$0xf] %vm2524, %v2501
      %2526 = vst.msk [vmem:[%s314 + $0x4] sm:$0xf] %vm2524, %v2503
      %2527 = vst.msk [vmem:[%s314 + $0x8] sm:$0xf] %vm2524, %v2505
      %2528 = vst.msk [vmem:[%s314 + $0xc] sm:$0xf] %vm2524, %v2507
      %2529 = vst.msk [vmem:[%s314 + $0x10] sm:$0xf] %vm2524, %v2509
      %2530 = vst.msk [vmem:[%s314 + $0x14] sm:$0xf] %vm2524, %v2511
      %2531 = vst.msk [vmem:[%s314 + $0x18] sm:$0xf] %vm2524, %v2513
      %2532 = vst.msk [vmem:[%s314 + $0x1c] sm:$0xf] %vm2524, %v2515
      %v2533 = vsel %vm1034, %v2324, 0.0
      %v2534 = vsel %vm1034, %v2325, 0.0
      %v2535 = vadd.f32 %v2533, %v2534
      %v2536 = vsel %vm1034, %v2326, 0.0
      %v2537 = vadd.f32 %v2535, %v2536
      %v2538 = vsel %vm1034, %v2327, 0.0
      %v2539 = vadd.f32 %v2537, %v2538
      %v2540 = vsel %vm1034, %v2328, 0.0
      %v2541 = vadd.f32 %v2539, %v2540
      %v2542 = vsel %vm1034, %v2329, 0.0
      %v2543 = vadd.f32 %v2541, %v2542
      %v2544 = vsel %vm1034, %v2330, 0.0
      %v2545 = vadd.f32 %v2543, %v2544
      %v2546 = vsel %vm1034, %v2331, 0.0
      %v2547 = vadd.f32 %v2545, %v2546
      %v2548 = vrot.slane %v2547, 4
      %v2549 = vadd.f32 %v2547, %v2548
      %v2550 = vrot.slane %v2549, 2
      %v2551 = vadd.f32 %v2549, %v2550
      %v2552 = vrot.slane %v2551, 1
      %v2553 = vadd.f32 %v2551, %v2552
      %v2554 = vsel %vm1011, %v2448, 0.0
      %v2555 = vsel %vm1011, %v2450, 0.0
      %v2556 = vadd.f32 %v2554, %v2555
      %v2557 = vsel %vm1011, %v2453, 0.0
      %v2558 = vadd.f32 %v2556, %v2557
      %v2559 = vsel %vm1011, %v2455, 0.0
      %v2560 = vadd.f32 %v2558, %v2559
      %v2561 = vsel %vm1011, %v2458, 0.0
      %v2562 = vadd.f32 %v2560, %v2561
      %v2563 = vsel %vm1011, %v2460, 0.0
      %v2564 = vadd.f32 %v2562, %v2563
      %v2565 = vsel %vm1011, %v2463, 0.0
      %v2566 = vadd.f32 %v2564, %v2565
      %v2567 = vsel %vm1011, %v2465, 0.0
      %v2568 = vadd.f32 %v2566, %v2567
      %v2569 = vrot.slane %v2568, 4
      %v2570 = vadd.f32 %v2568, %v2569
      %v2571 = vrot.slane %v2570, 2
      %v2572 = vadd.f32 %v2570, %v2571
      %v2573 = vrot.slane %v2572, 1
      %v2574 = vadd.f32 %v2572, %v2573
      %2576 = vrot.lane.b32.xlu0 %v2574, 24
      %v2577 = vpop.permute.xlu0 %2576
      %v2579 = vsel %vm1034, %v2553, %v2577
      %v2580 = vmul.f32 %v2324, %v2324
      %v2581 = vmul.f32 %v2325, %v2325
      %v2582 = vmul.f32 %v2326, %v2326
      %v2583 = vmul.f32 %v2327, %v2327
      %v2584 = vmul.f32 %v2328, %v2328
      %v2585 = vmul.f32 %v2329, %v2329
      %v2586 = vmul.f32 %v2330, %v2330
      %v2587 = vmul.f32 %v2331, %v2331
      %v2588 = vsel %vm1034, %v2580, 0.0
      %v2589 = vsel %vm1034, %v2581, 0.0
      %v2590 = vadd.f32 %v2588, %v2589
      %v2591 = vsel %vm1034, %v2582, 0.0
      %v2592 = vadd.f32 %v2590, %v2591
      %v2593 = vsel %vm1034, %v2583, 0.0
      %v2594 = vadd.f32 %v2592, %v2593
      %v2595 = vsel %vm1034, %v2584, 0.0
      %v2596 = vadd.f32 %v2594, %v2595
      %v2597 = vsel %vm1034, %v2585, 0.0
      %v2598 = vadd.f32 %v2596, %v2597
      %v2599 = vsel %vm1034, %v2586, 0.0
      %v2600 = vadd.f32 %v2598, %v2599
      %v2601 = vsel %vm1034, %v2587, 0.0
      %v2602 = vadd.f32 %v2600, %v2601
      %v2603 = vrot.slane %v2602, 4
      %v2604 = vadd.f32 %v2602, %v2603
      %v2605 = vrot.slane %v2604, 2
      %v2606 = vadd.f32 %v2604, %v2605
      %v2607 = vrot.slane %v2606, 1
      %v2608 = vadd.f32 %v2606, %v2607
      %v2609 = vmul.f32 %v2448, %v2448
      %v2610 = vmul.f32 %v2450, %v2450
      %v2611 = vmul.f32 %v2453, %v2453
      %v2612 = vmul.f32 %v2455, %v2455
      %v2613 = vmul.f32 %v2458, %v2458
      %v2614 = vmul.f32 %v2460, %v2460
      %v2615 = vmul.f32 %v2463, %v2463
      %v2616 = vmul.f32 %v2465, %v2465
      %v2617 = vsel %vm1011, %v2609, 0.0
      %v2618 = vsel %vm1011, %v2610, 0.0
      %v2619 = vadd.f32 %v2617, %v2618
      %v2620 = vsel %vm1011, %v2611, 0.0
      %v2621 = vadd.f32 %v2619, %v2620
      %v2622 = vsel %vm1011, %v2612, 0.0
      %v2623 = vadd.f32 %v2621, %v2622
      %v2624 = vsel %vm1011, %v2613, 0.0
      %v2625 = vadd.f32 %v2623, %v2624
      %v2626 = vsel %vm1011, %v2614, 0.0
      %v2627 = vadd.f32 %v2625, %v2626
      %v2628 = vsel %vm1011, %v2615, 0.0
      %v2629 = vadd.f32 %v2627, %v2628
      %v2630 = vsel %vm1011, %v2616, 0.0
      %v2631 = vadd.f32 %v2629, %v2630
      %v2632 = vrot.slane %v2631, 4
      %v2633 = vadd.f32 %v2631, %v2632
      %v2634 = vrot.slane %v2633, 2
      %v2635 = vadd.f32 %v2633, %v2634
      %v2636 = vrot.slane %v2635, 1
      %v2637 = vadd.f32 %v2635, %v2636
      %2639 = vrot.lane.b32.xlu0 %v2637, 24
      %v2640 = vpop.permute.xlu0 %2639
      %v2642 = vsel %vm1034, %v2608, %v2640
      %v2644 = vrot.slane %v2642, 7
      %v2646 = vsel %vm2340, %v2579, %v2644
      %2647 = vst.msk [vmem:[%s319] sm:$0x3] %vm331, %v2646
      %s2648 = smul.u32 8, %s20
      %p2649 = scmp.lt.s32.totalorder %s2648, 15
      %s2650 = scalar_select %p2649, %s2648, 15
      %s2651 = smul.addr %s2650, 4
      %s2652 = scalar_lea.vmem %s7, %s2651
      %p2653 = scmp.lt.s32.totalorder %s20, 1
      %s2654 = scalar_select %p2653, %s20, 1
      %s2655 = smul.addr %s2654, 2
      %s2656 = scalar_lea.vmem %s8, %s2655
      // Predicated region
      $region49: #{inception_model_forward.7} parent=47 // pred_check
        %p2657 = pneg %p190
      $region50: #{inception_model_forward.7} parent=47 // pred_check_branch
        %2659 = sbr.rel (%p2657) target = $region52
      $region51: #{inception_model_forward.7} parent=47 // pred_region
        %s2660 = smul.u32 8, %s20
      $region52: #{inception_model_forward.7} parent=47 // pred_fallthru
        _
      // Predicated region
      $region53: #{inception_model_forward.7} parent=47 // pred_check
        %p2661 = pneg %p216
      $region54: #{inception_model_forward.7} parent=47 // pred_check_branch
        %2663 = sbr.rel (%p2661) target = $region56
      $region55: #{inception_model_forward.7} parent=47 // pred_region
        _
      $region56: #{inception_model_forward.7} parent=47 // pred_fallthru
        _
    $region48: #{inception_model_forward.7} parent=5 // pred_fallthru
      _
    %p2664 = scmp.le.s32.totalorder 2, %s15
    // Predicated region
    $region57: #{inception_model_forward.7} parent=5 // pred_check
      %p2665 = pneg %p2664
    $region58: #{inception_model_forward.7} parent=5 // pred_check_branch
      %2667 = sbr.rel (%p2665) target = $region60
    $region59: #{inception_model_forward.7} parent=5 // pred_region
      %s2668 = ssub.s32 %s15, 2
      // Predicated region
      $region61: #{inception_model_forward.7} parent=59 // pred_check
        %p2669 = pneg %p196
      $region62: #{inception_model_forward.7} parent=59 // pred_check_branch
        %2671 = sbr.rel (%p2669) target = $region64
      $region63: #{inception_model_forward.7} parent=59 // pred_region
        %s2672 = smul.u32 8, %s21
        %p2673 = scmp.lt.s32.totalorder %s2672, 15
        %s2674 = scalar_select %p2673, %s2672, 15
        %s2675 = smul.addr %s2674, 4
        %s2676 = scalar_lea.vmem %s7, %s2675
      $region64: #{inception_model_forward.7} parent=59 // pred_fallthru
        _
      // Predicated region
      $region65: #{inception_model_forward.7} parent=59 // pred_check
        %p2677 = pneg %p222
      $region66: #{inception_model_forward.7} parent=59 // pred_check_branch
        %2679 = sbr.rel (%p2677) target = $region68
      $region67: #{inception_model_forward.7} parent=59 // pred_region
        %p2680 = scmp.lt.s32.totalorder %s21, 1
        %s2681 = scalar_select %p2680, %s21, 1
        %s2682 = smul.addr %s2681, 2
        %s2683 = scalar_lea.vmem %s8, %s2682
      $region68: #{inception_model_forward.7} parent=59 // pred_fallthru
        _
    $region60: #{inception_model_forward.7} parent=5 // pred_fallthru
      _
  $region6: #{inception_model_forward.7} parent=0 // loop_footer
    %s19 = sadd.s32 1, %s15
  $region7: #{inception_model_forward.7} parent=0 // loop_footer_branch
    %14 = sbr.rel target = $region3
  $region8: #{inception_model_forward.7} parent=0 // loop_exit
    _

</llo_original>
